<compile_context>
chip_gen: v5e
topology: v5e:2x2
jax: 0.10.0
libtpu: 0.0.40
codegen_flags: <defaults>
</compile_context>

<pallas_src>
import jax
import jax.numpy as jnp
from jax.experimental import pallas as pl
from jax.experimental.pallas import tpu as pltpu


def _round_up(x, m):
    return ((x + m - 1) // m) * m


# ----------------------------- Pallas kernel --------------------------------

def _stage_kernel(pat_ref, proj_ref, mask_ref, w1_ref, s1_ref, c1_ref,
                  w2_ref, s2_ref, c2_ref, out_ref):
    """One residual stage on one row tile (rows = flattened B*Do*To)."""
    # conv path: bf16 im2col matmul on the MXU, f32 accumulate,
    # folded BN (eval) + Hardtanh(0, 20) epilogue in f32.
    conv = jnp.dot(pat_ref[...], w1_ref[...], preferred_element_type=jnp.float32)
    y1 = jnp.clip(conv * s1_ref[...] + c1_ref[...], 0.0, 20.0)

    # projection path: 1x1 strided conv == plain matmul + folded BN + Hardtanh.
    proj = jnp.dot(proj_ref[...], w2_ref[...], preferred_element_type=jnp.float32)
    y2 = jnp.clip(proj * s2_ref[...] + c2_ref[...], 0.0, 20.0)

    # residual add + MaskConv time masking (precomputed per-row 0/1 mask).
    out_ref[...] = ((y1 + y2) * mask_ref[...]).astype(out_ref.dtype)


def run_stage(patches, proj_in, mask, w1, s1, c1, w2, s2, c2, tile_r, out_dtype):
    rows_p, kp = patches.shape
    cinp = proj_in.shape[1]
    coutp = w1.shape[1]
    grid = (rows_p // tile_r,)

    return pl.pallas_call(
        _stage_kernel,
        out_shape=jax.ShapeDtypeStruct((rows_p, coutp), out_dtype),
        grid=grid,
        in_specs=[
            pl.BlockSpec((tile_r, kp), lambda r: (r, 0)),     # im2col patches
            pl.BlockSpec((tile_r, cinp), lambda r: (r, 0)),   # strided proj input
            pl.BlockSpec((tile_r, 1), lambda r: (r, 0)),      # per-row time mask
            pl.BlockSpec((kp, coutp), lambda r: (0, 0)),      # conv weights
            pl.BlockSpec((1, coutp), lambda r: (0, 0)),       # conv BN scale
            pl.BlockSpec((1, coutp), lambda r: (0, 0)),       # conv BN shift
            pl.BlockSpec((cinp, coutp), lambda r: (0, 0)),    # proj weights
            pl.BlockSpec((1, coutp), lambda r: (0, 0)),       # proj BN scale
            pl.BlockSpec((1, coutp), lambda r: (0, 0)),       # proj BN shift
        ],
        out_specs=pl.BlockSpec((tile_r, coutp), lambda r: (r, 0)),
        compiler_params=pltpu.CompilerParams(
            dimension_semantics=("parallel",),
            vmem_limit_bytes=64 * 1024 * 1024),
    )(patches, proj_in, mask, w1, s1, c1, w2, s2, c2)


# ------------------------------ JAX glue -------------------------------------

def im2col_nhwc(x, kd, kt, sd, st, pd, pt):
    """x: (B, D, T, C) -> patches (B, Do*To, kd*kt*C), tap ordering (kd, kt, C)."""
    B, D, T, C = x.shape
    xp = jnp.pad(x, ((0, 0), (pd, pd), (pt, pt), (0, 0)))
    Do = (D + 2 * pd - kd) // sd + 1
    To = (T + 2 * pt - kt) // st + 1
    cols = []
    for i in range(kd):
        for j in range(kt):
            cols.append(xp[:, i:i + sd * Do:sd, j:j + st * To:st, :])  # (B,Do,To,C)
    pat = jnp.stack(cols, axis=3)                       # (B, Do, To, kd*kt, C)
    return pat.reshape(B, Do * To, kd * kt * C), Do, To


def conv_bn_params(key, cin, cout, kd, kt):
    k = jax.random.split(key, 6)
    w = jax.random.normal(k[0], (cout, cin, kd, kt), jnp.float32)
    w = w * (1.0 / jnp.sqrt(float(cin * kd * kt)))
    b = 0.1 * jax.random.normal(k[1], (cout,), jnp.float32)
    gamma = 1.0 + 0.1 * jax.random.normal(k[2], (cout,), jnp.float32)
    beta = 0.1 * jax.random.normal(k[3], (cout,), jnp.float32)
    mean = 0.1 * jax.random.normal(k[4], (cout,), jnp.float32)
    var = 1.0 + 0.1 * jax.random.uniform(k[5], (cout,), jnp.float32)
    return w, b, gamma, beta, mean, var


def fold_bn(params, eps=1e-5):
    """Fold conv bias + eval-mode BN into per-channel scale/shift.

    Weight is reshaped to (KD*KT*Cin, Cout) matching im2col tap order (kd,kt,C).
    """
    w, b, gamma, beta, mean, var = params
    cout = w.shape[0]
    scale = gamma / jnp.sqrt(var + eps)
    shift = beta + (b - mean) * scale
    w_mat = jnp.transpose(w, (2, 3, 1, 0)).reshape(-1, cout)   # (K, Cout)
    return w_mat, scale, shift


def stage(x, lengths, conv_folded, proj_folded, *, kd, kt, sd, st, pd, pt,
          out_dtype):
    """One residual stage.  x: NHWC (B, D, T, Cin) -> NHWC (B, Do, To, Cout)."""
    B, D, T, Cin = x.shape
    xb = x.astype(jnp.bfloat16)

    patches, Do, To = im2col_nhwc(xb, kd, kt, sd, st, pd, pt)
    proj_in = xb[:, ::sd, ::st, :][:, :Do, :To, :]             # (B, Do, To, Cin)

    w1, s1, c1 = conv_folded
    w2, s2, c2 = proj_folded
    K = w1.shape[0]
    Cout = w1.shape[-1]

    rows = B * Do * To
    Kp = _round_up(K, 128)
    Coutp = _round_up(Cout, 128)
    Cinp = _round_up(Cin, 8)
    tile_r = min(512, _round_up(rows, 8))
    rows_p = _round_up(rows, tile_r)

    # Fold batch into the matmul row dim and zero-pad to TPU-friendly shapes.
    pat = jnp.pad(patches.reshape(rows, K),
                  ((0, rows_p - rows), (0, Kp - K)))
    prj = jnp.pad(proj_in.reshape(rows, Cin),
                  ((0, rows_p - rows), (0, Cinp - Cin)))

    w1p = jnp.pad(w1, ((0, Kp - K), (0, Coutp - Cout))).astype(jnp.bfloat16)
    w2p = jnp.pad(w2, ((0, Cinp - Cin), (0, Coutp - Cout))).astype(jnp.bfloat16)
    s1p = jnp.pad(s1.reshape(1, Cout), ((0, 0), (0, Coutp - Cout)))
    c1p = jnp.pad(c1.reshape(1, Cout), ((0, 0), (0, Coutp - Cout)))
    s2p = jnp.pad(s2.reshape(1, Cout), ((0, 0), (0, Coutp - Cout)))
    c2p = jnp.pad(c2.reshape(1, Cout), ((0, 0), (0, Coutp - Cout)))

    # MaskConv: zero t >= lengths[b] on the output time axis (raw lengths,
    # exactly as the PyTorch spec does -- no per-stage rescaling).
    t_keep = (jnp.arange(To)[None, :] < lengths[:, None]).astype(jnp.float32)
    mask = jnp.broadcast_to(t_keep[:, None, :], (B, Do, To)).reshape(rows, 1)
    mask = jnp.pad(mask, ((0, rows_p - rows), (0, 0)))

    out = run_stage(pat, prj, mask, w1p, s1p, c1p, w2p, s2p, c2p, tile_r,
                    out_dtype)
    return out[:rows, :Cout].reshape(B, Do, To, Cout)


def get_seq_lens(lengths):
    """Matches get_seq_lens over conv1/conv2/conv3 (time-axis params only)."""
    seq = lengths
    for (pad, dil, ksz, stride) in ((5, 1, 11, 2), (5, 1, 11, 1), (5, 1, 11, 1)):
        seq = (seq + 2 * pad - dil * (ksz - 1) - 1) // stride + 1
    return seq.astype(jnp.int32)


def skip_one_step3_forward(x_nchw, lengths, params):
    (c1, p1, c2, p2, c3, p3) = params
    x = jnp.transpose(x_nchw, (0, 2, 3, 1))               # NCHW -> NHWC once
    x = stage(x, lengths, c1, p1, kd=41, kt=11, sd=2, st=2, pd=20, pt=5,
              out_dtype=jnp.bfloat16)
    x = stage(x, lengths, c2, p2, kd=21, kt=11, sd=2, st=1, pd=10, pt=5,
              out_dtype=jnp.bfloat16)
    x = stage(x, lengths, c3, p3, kd=21, kt=11, sd=2, st=1, pd=10, pt=5,
              out_dtype=jnp.float32)
    return jnp.transpose(x, (0, 3, 1, 2)), get_seq_lens(lengths)


# ------------------------------- main -----------------------------------------

if __name__ == "__main__":
    key = jax.random.PRNGKey(0)
    ks = jax.random.split(key, 8)

    # Parameters (deterministic, synthetic).
    params = (
        fold_bn(conv_bn_params(ks[0], 1, 32, 41, 11)),   # conv1
        fold_bn(conv_bn_params(ks[1], 1, 32, 1, 1)),     # projection1
        fold_bn(conv_bn_params(ks[2], 32, 32, 21, 11)),  # conv2
        fold_bn(conv_bn_params(ks[3], 32, 32, 1, 1)),    # projection2
        fold_bn(conv_bn_params(ks[4], 32, 96, 21, 11)),  # conv3
        fold_bn(conv_bn_params(ks[5], 32, 96, 1, 1)),    # projection3
    )

    # Small input: B=2, C=1, D=16 (freq), T=16 (time); lengths along T.
    B, C, D, T = 2, 1, 16, 16
    x = jax.random.normal(ks[6], (B, C, D, T), jnp.float32)
    lengths = jnp.array([16, 5], dtype=jnp.int32)

    fwd = jax.jit(skip_one_step3_forward)
    out, out_lengths = fwd(x, lengths, params)
    jax.block_until_ready(out)
    jax.block_until_ready(out_lengths)

    assert out.shape == (B, 96, 2, 8), out.shape
    assert out_lengths.shape == (B,), out_lengths.shape
    print("KERNEL_OK")
</pallas_src>

<mosaic_0001>
module attributes {stable_mosaic.version = 11 : i64} {
  func.func @_stage_kernel(%arg0: i32, %arg1: memref<128x512xbf16, #tpu.memory_space<vmem>>, %arg2: memref<128x8xbf16, #tpu.memory_space<vmem>>, %arg3: memref<128x1xf32, #tpu.memory_space<vmem>>, %arg4: memref<512x128xbf16, #tpu.memory_space<vmem>>, %arg5: memref<1x128xf32, #tpu.memory_space<vmem>>, %arg6: memref<1x128xf32, #tpu.memory_space<vmem>>, %arg7: memref<8x128xbf16, #tpu.memory_space<vmem>>, %arg8: memref<1x128xf32, #tpu.memory_space<vmem>>, %arg9: memref<1x128xf32, #tpu.memory_space<vmem>>, %arg10: memref<128x128xbf16, #tpu.memory_space<vmem>>) attributes {dimension_semantics = [#tpu.dimension_semantics<parallel>], iteration_bounds = array<i64: 1>, scalar_prefetch = 0 : i64, scratch_operands = 0 : i64, tpu.core_type = #tpu.core_type<tc>, window_params = [{transform_indices = @transform_0, window_bounds = array<i64: 128, 512>}, {transform_indices = @transform_1, window_bounds = array<i64: 128, 8>}, {transform_indices = @transform_2, window_bounds = array<i64: 128, 1>}, {pipeline_mode = #tpu.pipeline_mode<synchronous>, transform_indices = @transform_3, window_bounds = array<i64: 512, 128>}, {pipeline_mode = #tpu.pipeline_mode<synchronous>, transform_indices = @transform_4, window_bounds = array<i64: 1, 128>}, {pipeline_mode = #tpu.pipeline_mode<synchronous>, transform_indices = @transform_5, window_bounds = array<i64: 1, 128>}, {pipeline_mode = #tpu.pipeline_mode<synchronous>, transform_indices = @transform_6, window_bounds = array<i64: 8, 128>}, {pipeline_mode = #tpu.pipeline_mode<synchronous>, transform_indices = @transform_7, window_bounds = array<i64: 1, 128>}, {pipeline_mode = #tpu.pipeline_mode<synchronous>, transform_indices = @transform_8, window_bounds = array<i64: 1, 128>}, {transform_indices = @transform_9, window_bounds = array<i64: 128, 128>}]} {
    %c0 = arith.constant 0 : index
    %c0_0 = arith.constant 0 : index
    %0 = vector.load %arg1[%c0, %c0_0] : memref<128x512xbf16, #tpu.memory_space<vmem>>, vector<128x512xbf16>
    %c0_1 = arith.constant 0 : index
    %c0_2 = arith.constant 0 : index
    %1 = vector.load %arg4[%c0_1, %c0_2] : memref<512x128xbf16, #tpu.memory_space<vmem>>, vector<512x128xbf16>
    %cst = arith.constant dense<0.000000e+00> : vector<128x128xf32>
    %2 = tpu.matmul %0, %1, %cst {dimension_numbers = #tpu.dot_dimension_numbers<[1], [0], [0], [1], [0, 0, 1, 1], [], []>} : vector<128x512xbf16>, vector<512x128xbf16>, vector<128x128xf32> -> vector<128x128xf32>
    %c0_3 = arith.constant 0 : index
    %c0_4 = arith.constant 0 : index
    %3 = vector.load %arg5[%c0_3, %c0_4] : memref<1x128xf32, #tpu.memory_space<vmem>>, vector<1x128xf32>
    %4 = vector.broadcast %3 : vector<1x128xf32> to vector<128x128xf32>
    %5 = arith.mulf %2, %4 : vector<128x128xf32>
    %c0_5 = arith.constant 0 : index
    %c0_6 = arith.constant 0 : index
    %6 = vector.load %arg6[%c0_5, %c0_6] : memref<1x128xf32, #tpu.memory_space<vmem>>, vector<1x128xf32>
    %7 = vector.broadcast %6 : vector<1x128xf32> to vector<128x128xf32>
    %8 = arith.addf %5, %7 : vector<128x128xf32>
    %cst_7 = arith.constant 0.000000e+00 : f32
    %cst_8 = arith.constant 2.000000e+01 : f32
    %9 = vector.broadcast %cst_7 : f32 to vector<128x128xf32>
    %10 = arith.maximumf %9, %8 : vector<128x128xf32>
    %11 = vector.broadcast %cst_8 : f32 to vector<128x128xf32>
    %12 = arith.minimumf %11, %10 : vector<128x128xf32>
    %c0_9 = arith.constant 0 : index
    %c0_10 = arith.constant 0 : index
    %13 = vector.load %arg2[%c0_9, %c0_10] : memref<128x8xbf16, #tpu.memory_space<vmem>>, vector<128x8xbf16>
    %c0_11 = arith.constant 0 : index
    %c0_12 = arith.constant 0 : index
    %14 = vector.load %arg7[%c0_11, %c0_12] : memref<8x128xbf16, #tpu.memory_space<vmem>>, vector<8x128xbf16>
    %cst_13 = arith.constant dense<0.000000e+00> : vector<128x128xf32>
    %15 = tpu.matmul %13, %14, %cst_13 {dimension_numbers = #tpu.dot_dimension_numbers<[1], [0], [0], [1], [0, 0, 1, 1], [], []>} : vector<128x8xbf16>, vector<8x128xbf16>, vector<128x128xf32> -> vector<128x128xf32>
    %c0_14 = arith.constant 0 : index
    %c0_15 = arith.constant 0 : index
    %16 = vector.load %arg8[%c0_14, %c0_15] : memref<1x128xf32, #tpu.memory_space<vmem>>, vector<1x128xf32>
    %17 = vector.broadcast %16 : vector<1x128xf32> to vector<128x128xf32>
    %18 = arith.mulf %15, %17 : vector<128x128xf32>
    %c0_16 = arith.constant 0 : index
    %c0_17 = arith.constant 0 : index
    %19 = vector.load %arg9[%c0_16, %c0_17] : memref<1x128xf32, #tpu.memory_space<vmem>>, vector<1x128xf32>
    %20 = vector.broadcast %19 : vector<1x128xf32> to vector<128x128xf32>
    %21 = arith.addf %18, %20 : vector<128x128xf32>
    %cst_18 = arith.constant 0.000000e+00 : f32
    %cst_19 = arith.constant 2.000000e+01 : f32
    %22 = vector.broadcast %cst_18 : f32 to vector<128x128xf32>
    %23 = arith.maximumf %22, %21 : vector<128x128xf32>
    %24 = vector.broadcast %cst_19 : f32 to vector<128x128xf32>
    %25 = arith.minimumf %24, %23 : vector<128x128xf32>
    %26 = arith.addf %12, %25 : vector<128x128xf32>
    %c0_20 = arith.constant 0 : index
    %c0_21 = arith.constant 0 : index
    %27 = vector.load %arg3[%c0_20, %c0_21] : memref<128x1xf32, #tpu.memory_space<vmem>>, vector<128x1xf32>
    %28 = vector.broadcast %27 : vector<128x1xf32> to vector<128x128xf32>
    %29 = arith.mulf %26, %28 : vector<128x128xf32>
    %30 = arith.truncf %29 : vector<128x128xf32> to vector<128x128xbf16>
    %c0_22 = arith.constant 0 : index
    %c0_23 = arith.constant 0 : index
    %31 = vector.load %arg10[%c0_22, %c0_23] : memref<128x128xbf16, #tpu.memory_space<vmem>>, vector<128x128xbf16>
    tpu.vector_store %arg10[%c0_22, %c0_23], %30 {strides = array<i32>} : memref<128x128xbf16, #tpu.memory_space<vmem>>, vector<128x128xbf16>,
    return
  }
  func.func @transform_0(%arg0: i32) -> (i32, i32) {
    %c0_i32 = arith.constant 0 : i32
    %c0_i32_0 = arith.constant 0 : i32
    return %arg0, %c0_i32 : i32, i32
  }
  func.func @transform_1(%arg0: i32) -> (i32, i32) {
    %c0_i32 = arith.constant 0 : i32
    %c0_i32_0 = arith.constant 0 : i32
    return %arg0, %c0_i32 : i32, i32
  }
  func.func @transform_2(%arg0: i32) -> (i32, i32) {
    %c0_i32 = arith.constant 0 : i32
    %c0_i32_0 = arith.constant 0 : i32
    return %arg0, %c0_i32 : i32, i32
  }
  func.func @transform_3(%arg0: i32) -> (i32, i32) {
    %c0_i32 = arith.constant 0 : i32
    %c0_i32_0 = arith.constant 0 : i32
    %c0_i32_1 = arith.constant 0 : i32
    return %c0_i32, %c0_i32_0 : i32, i32
  }
  func.func @transform_4(%arg0: i32) -> (i32, i32) {
    %c0_i32 = arith.constant 0 : i32
    %c0_i32_0 = arith.constant 0 : i32
    %c0_i32_1 = arith.constant 0 : i32
    return %c0_i32, %c0_i32_0 : i32, i32
  }
  func.func @transform_5(%arg0: i32) -> (i32, i32) {
    %c0_i32 = arith.constant 0 : i32
    %c0_i32_0 = arith.constant 0 : i32
    %c0_i32_1 = arith.constant 0 : i32
    return %c0_i32, %c0_i32_0 : i32, i32
  }
  func.func @transform_6(%arg0: i32) -> (i32, i32) {
    %c0_i32 = arith.constant 0 : i32
    %c0_i32_0 = arith.constant 0 : i32
    %c0_i32_1 = arith.constant 0 : i32
    return %c0_i32, %c0_i32_0 : i32, i32
  }
  func.func @transform_7(%arg0: i32) -> (i32, i32) {
    %c0_i32 = arith.constant 0 : i32
    %c0_i32_0 = arith.constant 0 : i32
    %c0_i32_1 = arith.constant 0 : i32
    return %c0_i32, %c0_i32_0 : i32, i32
  }
  func.func @transform_8(%arg0: i32) -> (i32, i32) {
    %c0_i32 = arith.constant 0 : i32
    %c0_i32_0 = arith.constant 0 : i32
    %c0_i32_1 = arith.constant 0 : i32
    return %c0_i32, %c0_i32_0 : i32, i32
  }
  func.func @transform_9(%arg0: i32) -> (i32, i32) {
    %c0_i32 = arith.constant 0 : i32
    %c0_i32_0 = arith.constant 0 : i32
    return %arg0, %c0_i32 : i32, i32
  }
}

module attributes {stable_mosaic.version = 11 : i64} {
  func.func @_stage_kernel(%arg0: i32, %arg1: memref<64x7424xbf16, #tpu.memory_space<vmem>>, %arg2: memref<64x32xbf16, #tpu.memory_space<vmem>>, %arg3: memref<64x1xf32, #tpu.memory_space<vmem>>, %arg4: memref<7424x128xbf16, #tpu.memory_space<vmem>>, %arg5: memref<1x128xf32, #tpu.memory_space<vmem>>, %arg6: memref<1x128xf32, #tpu.memory_space<vmem>>, %arg7: memref<32x128xbf16, #tpu.memory_space<vmem>>, %arg8: memref<1x128xf32, #tpu.memory_space<vmem>>, %arg9: memref<1x128xf32, #tpu.memory_space<vmem>>, %arg10: memref<64x128xbf16, #tpu.memory_space<vmem>>) attributes {dimension_semantics = [#tpu.dimension_semantics<parallel>], iteration_bounds = array<i64: 1>, scalar_prefetch = 0 : i64, scratch_operands = 0 : i64, tpu.core_type = #tpu.core_type<tc>, window_params = [{transform_indices = @transform_0, window_bounds = array<i64: 64, 7424>}, {transform_indices = @transform_1, window_bounds = array<i64: 64, 32>}, {transform_indices = @transform_2, window_bounds = array<i64: 64, 1>}, {pipeline_mode = #tpu.pipeline_mode<synchronous>, transform_indices = @transform_3, window_bounds = array<i64: 7424, 128>}, {pipeline_mode = #tpu.pipeline_mode<synchronous>, transform_indices = @transform_4, window_bounds = array<i64: 1, 128>}, {pipeline_mode = #tpu.pipeline_mode<synchronous>, transform_indices = @transform_5, window_bounds = array<i64: 1, 128>}, {pipeline_mode = #tpu.pipeline_mode<synchronous>, transform_indices = @transform_6, window_bounds = array<i64: 32, 128>}, {pipeline_mode = #tpu.pipeline_mode<synchronous>, transform_indices = @transform_7, window_bounds = array<i64: 1, 128>}, {pipeline_mode = #tpu.pipeline_mode<synchronous>, transform_indices = @transform_8, window_bounds = array<i64: 1, 128>}, {transform_indices = @transform_9, window_bounds = array<i64: 64, 128>}]} {
    %c0 = arith.constant 0 : index
    %c0_0 = arith.constant 0 : index
    %0 = vector.load %arg1[%c0, %c0_0] : memref<64x7424xbf16, #tpu.memory_space<vmem>>, vector<64x7424xbf16>
    %c0_1 = arith.constant 0 : index
    %c0_2 = arith.constant 0 : index
    %1 = vector.load %arg4[%c0_1, %c0_2] : memref<7424x128xbf16, #tpu.memory_space<vmem>>, vector<7424x128xbf16>
    %cst = arith.constant dense<0.000000e+00> : vector<64x128xf32>
    %2 = tpu.matmul %0, %1, %cst {dimension_numbers = #tpu.dot_dimension_numbers<[1], [0], [0], [1], [0, 0, 1, 1], [], []>} : vector<64x7424xbf16>, vector<7424x128xbf16>, vector<64x128xf32> -> vector<64x128xf32>
    %c0_3 = arith.constant 0 : index
    %c0_4 = arith.constant 0 : index
    %3 = vector.load %arg5[%c0_3, %c0_4] : memref<1x128xf32, #tpu.memory_space<vmem>>, vector<1x128xf32>
    %4 = vector.broadcast %3 : vector<1x128xf32> to vector<64x128xf32>
    %5 = arith.mulf %2, %4 : vector<64x128xf32>
    %c0_5 = arith.constant 0 : index
    %c0_6 = arith.constant 0 : index
    %6 = vector.load %arg6[%c0_5, %c0_6] : memref<1x128xf32, #tpu.memory_space<vmem>>, vector<1x128xf32>
    %7 = vector.broadcast %6 : vector<1x128xf32> to vector<64x128xf32>
    %8 = arith.addf %5, %7 : vector<64x128xf32>
    %cst_7 = arith.constant 0.000000e+00 : f32
    %cst_8 = arith.constant 2.000000e+01 : f32
    %9 = vector.broadcast %cst_7 : f32 to vector<64x128xf32>
    %10 = arith.maximumf %9, %8 : vector<64x128xf32>
    %11 = vector.broadcast %cst_8 : f32 to vector<64x128xf32>
    %12 = arith.minimumf %11, %10 : vector<64x128xf32>
    %c0_9 = arith.constant 0 : index
    %c0_10 = arith.constant 0 : index
    %13 = vector.load %arg2[%c0_9, %c0_10] : memref<64x32xbf16, #tpu.memory_space<vmem>>, vector<64x32xbf16>
    %c0_11 = arith.constant 0 : index
    %c0_12 = arith.constant 0 : index
    %14 = vector.load %arg7[%c0_11, %c0_12] : memref<32x128xbf16, #tpu.memory_space<vmem>>, vector<32x128xbf16>
    %cst_13 = arith.constant dense<0.000000e+00> : vector<64x128xf32>
    %15 = tpu.matmul %13, %14, %cst_13 {dimension_numbers = #tpu.dot_dimension_numbers<[1], [0], [0], [1], [0, 0, 1, 1], [], []>} : vector<64x32xbf16>, vector<32x128xbf16>, vector<64x128xf32> -> vector<64x128xf32>
    %c0_14 = arith.constant 0 : index
    %c0_15 = arith.constant 0 : index
    %16 = vector.load %arg8[%c0_14, %c0_15] : memref<1x128xf32, #tpu.memory_space<vmem>>, vector<1x128xf32>
    %17 = vector.broadcast %16 : vector<1x128xf32> to vector<64x128xf32>
    %18 = arith.mulf %15, %17 : vector<64x128xf32>
    %c0_16 = arith.constant 0 : index
    %c0_17 = arith.constant 0 : index
    %19 = vector.load %arg9[%c0_16, %c0_17] : memref<1x128xf32, #tpu.memory_space<vmem>>, vector<1x128xf32>
    %20 = vector.broadcast %19 : vector<1x128xf32> to vector<64x128xf32>
    %21 = arith.addf %18, %20 : vector<64x128xf32>
    %cst_18 = arith.constant 0.000000e+00 : f32
    %cst_19 = arith.constant 2.000000e+01 : f32
    %22 = vector.broadcast %cst_18 : f32 to vector<64x128xf32>
    %23 = arith.maximumf %22, %21 : vector<64x128xf32>
    %24 = vector.broadcast %cst_19 : f32 to vector<64x128xf32>
    %25 = arith.minimumf %24, %23 : vector<64x128xf32>
    %26 = arith.addf %12, %25 : vector<64x128xf32>
    %c0_20 = arith.constant 0 : index
    %c0_21 = arith.constant 0 : index
    %27 = vector.load %arg3[%c0_20, %c0_21] : memref<64x1xf32, #tpu.memory_space<vmem>>, vector<64x1xf32>
    %28 = vector.broadcast %27 : vector<64x1xf32> to vector<64x128xf32>
    %29 = arith.mulf %26, %28 : vector<64x128xf32>
    %30 = arith.truncf %29 : vector<64x128xf32> to vector<64x128xbf16>
    %c0_22 = arith.constant 0 : index
    %c0_23 = arith.constant 0 : index
    %31 = vector.load %arg10[%c0_22, %c0_23] : memref<64x128xbf16, #tpu.memory_space<vmem>>, vector<64x128xbf16>
    tpu.vector_store %arg10[%c0_22, %c0_23], %30 {strides = array<i32>} : memref<64x128xbf16, #tpu.memory_space<vmem>>, vector<64x128xbf16>,
    return
  }
  func.func @transform_0(%arg0: i32) -> (i32, i32) {
    %c0_i32 = arith.constant 0 : i32
    %c0_i32_0 = arith.constant 0 : i32
    return %arg0, %c0_i32 : i32, i32
  }
  func.func @transform_1(%arg0: i32) -> (i32, i32) {
    %c0_i32 = arith.constant 0 : i32
    %c0_i32_0 = arith.constant 0 : i32
    return %arg0, %c0_i32 : i32, i32
  }
  func.func @transform_2(%arg0: i32) -> (i32, i32) {
    %c0_i32 = arith.constant 0 : i32
    %c0_i32_0 = arith.constant 0 : i32
    return %arg0, %c0_i32 : i32, i32
  }
  func.func @transform_3(%arg0: i32) -> (i32, i32) {
    %c0_i32 = arith.constant 0 : i32
    %c0_i32_0 = arith.constant 0 : i32
    %c0_i32_1 = arith.constant 0 : i32
    return %c0_i32, %c0_i32_0 : i32, i32
  }
  func.func @transform_4(%arg0: i32) -> (i32, i32) {
    %c0_i32 = arith.constant 0 : i32
    %c0_i32_0 = arith.constant 0 : i32
    %c0_i32_1 = arith.constant 0 : i32
    return %c0_i32, %c0_i32_0 : i32, i32
  }
  func.func @transform_5(%arg0: i32) -> (i32, i32) {
    %c0_i32 = arith.constant 0 : i32
    %c0_i32_0 = arith.constant 0 : i32
    %c0_i32_1 = arith.constant 0 : i32
    return %c0_i32, %c0_i32_0 : i32, i32
  }
  func.func @transform_6(%arg0: i32) -> (i32, i32) {
    %c0_i32 = arith.constant 0 : i32
    %c0_i32_0 = arith.constant 0 : i32
    %c0_i32_1 = arith.constant 0 : i32
    return %c0_i32, %c0_i32_0 : i32, i32
  }
  func.func @transform_7(%arg0: i32) -> (i32, i32) {
    %c0_i32 = arith.constant 0 : i32
    %c0_i32_0 = arith.constant 0 : i32
    %c0_i32_1 = arith.constant 0 : i32
    return %c0_i32, %c0_i32_0 : i32, i32
  }
  func.func @transform_8(%arg0: i32) -> (i32, i32) {
    %c0_i32 = arith.constant 0 : i32
    %c0_i32_0 = arith.constant 0 : i32
    %c0_i32_1 = arith.constant 0 : i32
    return %c0_i32, %c0_i32_0 : i32, i32
  }
  func.func @transform_9(%arg0: i32) -> (i32, i32) {
    %c0_i32 = arith.constant 0 : i32
    %c0_i32_0 = arith.constant 0 : i32
    return %arg0, %c0_i32 : i32, i32
  }
}

module attributes {stable_mosaic.version = 11 : i64} {
  func.func @_stage_kernel(%arg0: i32, %arg1: memref<32x7424xbf16, #tpu.memory_space<vmem>>, %arg2: memref<32x32xbf16, #tpu.memory_space<vmem>>, %arg3: memref<32x1xf32, #tpu.memory_space<vmem>>, %arg4: memref<7424x128xbf16, #tpu.memory_space<vmem>>, %arg5: memref<1x128xf32, #tpu.memory_space<vmem>>, %arg6: memref<1x128xf32, #tpu.memory_space<vmem>>, %arg7: memref<32x128xbf16, #tpu.memory_space<vmem>>, %arg8: memref<1x128xf32, #tpu.memory_space<vmem>>, %arg9: memref<1x128xf32, #tpu.memory_space<vmem>>, %arg10: memref<32x128xf32, #tpu.memory_space<vmem>>) attributes {dimension_semantics = [#tpu.dimension_semantics<parallel>], iteration_bounds = array<i64: 1>, scalar_prefetch = 0 : i64, scratch_operands = 0 : i64, tpu.core_type = #tpu.core_type<tc>, window_params = [{transform_indices = @transform_0, window_bounds = array<i64: 32, 7424>}, {transform_indices = @transform_1, window_bounds = array<i64: 32, 32>}, {transform_indices = @transform_2, window_bounds = array<i64: 32, 1>}, {pipeline_mode = #tpu.pipeline_mode<synchronous>, transform_indices = @transform_3, window_bounds = array<i64: 7424, 128>}, {pipeline_mode = #tpu.pipeline_mode<synchronous>, transform_indices = @transform_4, window_bounds = array<i64: 1, 128>}, {pipeline_mode = #tpu.pipeline_mode<synchronous>, transform_indices = @transform_5, window_bounds = array<i64: 1, 128>}, {pipeline_mode = #tpu.pipeline_mode<synchronous>, transform_indices = @transform_6, window_bounds = array<i64: 32, 128>}, {pipeline_mode = #tpu.pipeline_mode<synchronous>, transform_indices = @transform_7, window_bounds = array<i64: 1, 128>}, {pipeline_mode = #tpu.pipeline_mode<synchronous>, transform_indices = @transform_8, window_bounds = array<i64: 1, 128>}, {transform_indices = @transform_9, window_bounds = array<i64: 32, 128>}]} {
    %c0 = arith.constant 0 : index
    %c0_0 = arith.constant 0 : index
    %0 = vector.load %arg1[%c0, %c0_0] : memref<32x7424xbf16, #tpu.memory_space<vmem>>, vector<32x7424xbf16>
    %c0_1 = arith.constant 0 : index
    %c0_2 = arith.constant 0 : index
    %1 = vector.load %arg4[%c0_1, %c0_2] : memref<7424x128xbf16, #tpu.memory_space<vmem>>, vector<7424x128xbf16>
    %cst = arith.constant dense<0.000000e+00> : vector<32x128xf32>
    %2 = tpu.matmul %0, %1, %cst {dimension_numbers = #tpu.dot_dimension_numbers<[1], [0], [0], [1], [0, 0, 1, 1], [], []>} : vector<32x7424xbf16>, vector<7424x128xbf16>, vector<32x128xf32> -> vector<32x128xf32>
    %c0_3 = arith.constant 0 : index
    %c0_4 = arith.constant 0 : index
    %3 = vector.load %arg5[%c0_3, %c0_4] : memref<1x128xf32, #tpu.memory_space<vmem>>, vector<1x128xf32>
    %4 = vector.broadcast %3 : vector<1x128xf32> to vector<32x128xf32>
    %5 = arith.mulf %2, %4 : vector<32x128xf32>
    %c0_5 = arith.constant 0 : index
    %c0_6 = arith.constant 0 : index
    %6 = vector.load %arg6[%c0_5, %c0_6] : memref<1x128xf32, #tpu.memory_space<vmem>>, vector<1x128xf32>
    %7 = vector.broadcast %6 : vector<1x128xf32> to vector<32x128xf32>
    %8 = arith.addf %5, %7 : vector<32x128xf32>
    %cst_7 = arith.constant 0.000000e+00 : f32
    %cst_8 = arith.constant 2.000000e+01 : f32
    %9 = vector.broadcast %cst_7 : f32 to vector<32x128xf32>
    %10 = arith.maximumf %9, %8 : vector<32x128xf32>
    %11 = vector.broadcast %cst_8 : f32 to vector<32x128xf32>
    %12 = arith.minimumf %11, %10 : vector<32x128xf32>
    %c0_9 = arith.constant 0 : index
    %c0_10 = arith.constant 0 : index
    %13 = vector.load %arg2[%c0_9, %c0_10] : memref<32x32xbf16, #tpu.memory_space<vmem>>, vector<32x32xbf16>
    %c0_11 = arith.constant 0 : index
    %c0_12 = arith.constant 0 : index
    %14 = vector.load %arg7[%c0_11, %c0_12] : memref<32x128xbf16, #tpu.memory_space<vmem>>, vector<32x128xbf16>
    %cst_13 = arith.constant dense<0.000000e+00> : vector<32x128xf32>
    %15 = tpu.matmul %13, %14, %cst_13 {dimension_numbers = #tpu.dot_dimension_numbers<[1], [0], [0], [1], [0, 0, 1, 1], [], []>} : vector<32x32xbf16>, vector<32x128xbf16>, vector<32x128xf32> -> vector<32x128xf32>
    %c0_14 = arith.constant 0 : index
    %c0_15 = arith.constant 0 : index
    %16 = vector.load %arg8[%c0_14, %c0_15] : memref<1x128xf32, #tpu.memory_space<vmem>>, vector<1x128xf32>
    %17 = vector.broadcast %16 : vector<1x128xf32> to vector<32x128xf32>
    %18 = arith.mulf %15, %17 : vector<32x128xf32>
    %c0_16 = arith.constant 0 : index
    %c0_17 = arith.constant 0 : index
    %19 = vector.load %arg9[%c0_16, %c0_17] : memref<1x128xf32, #tpu.memory_space<vmem>>, vector<1x128xf32>
    %20 = vector.broadcast %19 : vector<1x128xf32> to vector<32x128xf32>
    %21 = arith.addf %18, %20 : vector<32x128xf32>
    %cst_18 = arith.constant 0.000000e+00 : f32
    %cst_19 = arith.constant 2.000000e+01 : f32
    %22 = vector.broadcast %cst_18 : f32 to vector<32x128xf32>
    %23 = arith.maximumf %22, %21 : vector<32x128xf32>
    %24 = vector.broadcast %cst_19 : f32 to vector<32x128xf32>
    %25 = arith.minimumf %24, %23 : vector<32x128xf32>
    %26 = arith.addf %12, %25 : vector<32x128xf32>
    %c0_20 = arith.constant 0 : index
    %c0_21 = arith.constant 0 : index
    %27 = vector.load %arg3[%c0_20, %c0_21] : memref<32x1xf32, #tpu.memory_space<vmem>>, vector<32x1xf32>
    %28 = vector.broadcast %27 : vector<32x1xf32> to vector<32x128xf32>
    %29 = arith.mulf %26, %28 : vector<32x128xf32>
    %c0_22 = arith.constant 0 : index
    %c0_23 = arith.constant 0 : index
    %30 = vector.load %arg10[%c0_22, %c0_23] : memref<32x128xf32, #tpu.memory_space<vmem>>, vector<32x128xf32>
    tpu.vector_store %arg10[%c0_22, %c0_23], %29 {strides = array<i32>} : memref<32x128xf32, #tpu.memory_space<vmem>>, vector<32x128xf32>,
    return
  }
  func.func @transform_0(%arg0: i32) -> (i32, i32) {
    %c0_i32 = arith.constant 0 : i32
    %c0_i32_0 = arith.constant 0 : i32
    return %arg0, %c0_i32 : i32, i32
  }
  func.func @transform_1(%arg0: i32) -> (i32, i32) {
    %c0_i32 = arith.constant 0 : i32
    %c0_i32_0 = arith.constant 0 : i32
    return %arg0, %c0_i32 : i32, i32
  }
  func.func @transform_2(%arg0: i32) -> (i32, i32) {
    %c0_i32 = arith.constant 0 : i32
    %c0_i32_0 = arith.constant 0 : i32
    return %arg0, %c0_i32 : i32, i32
  }
  func.func @transform_3(%arg0: i32) -> (i32, i32) {
    %c0_i32 = arith.constant 0 : i32
    %c0_i32_0 = arith.constant 0 : i32
    %c0_i32_1 = arith.constant 0 : i32
    return %c0_i32, %c0_i32_0 : i32, i32
  }
  func.func @transform_4(%arg0: i32) -> (i32, i32) {
    %c0_i32 = arith.constant 0 : i32
    %c0_i32_0 = arith.constant 0 : i32
    %c0_i32_1 = arith.constant 0 : i32
    return %c0_i32, %c0_i32_0 : i32, i32
  }
  func.func @transform_5(%arg0: i32) -> (i32, i32) {
    %c0_i32 = arith.constant 0 : i32
    %c0_i32_0 = arith.constant 0 : i32
    %c0_i32_1 = arith.constant 0 : i32
    return %c0_i32, %c0_i32_0 : i32, i32
  }
  func.func @transform_6(%arg0: i32) -> (i32, i32) {
    %c0_i32 = arith.constant 0 : i32
    %c0_i32_0 = arith.constant 0 : i32
    %c0_i32_1 = arith.constant 0 : i32
    return %c0_i32, %c0_i32_0 : i32, i32
  }
  func.func @transform_7(%arg0: i32) -> (i32, i32) {
    %c0_i32 = arith.constant 0 : i32
    %c0_i32_0 = arith.constant 0 : i32
    %c0_i32_1 = arith.constant 0 : i32
    return %c0_i32, %c0_i32_0 : i32, i32
  }
  func.func @transform_8(%arg0: i32) -> (i32, i32) {
    %c0_i32 = arith.constant 0 : i32
    %c0_i32_0 = arith.constant 0 : i32
    %c0_i32_1 = arith.constant 0 : i32
    return %c0_i32, %c0_i32_0 : i32, i32
  }
  func.func @transform_9(%arg0: i32) -> (i32, i32) {
    %c0_i32 = arith.constant 0 : i32
    %c0_i32_0 = arith.constant 0 : i32
    return %arg0, %c0_i32 : i32, i32
  }
}

</mosaic_0001>

<llo_original>
// kernel: skip_one_step3_forward.3
$region0: #{skip_one_step3_forward.3}
  #allocation0 [shape = 'u32[]', space=smem, size = 0x4, offset = 0x4, fixed_abs, tag = 'smem constant byte address 0x4 - core index']
  #allocation1 [shape = 'u32[72,128]{1,0:T(1,128)}', space=vmem, size = 0x9000, scoped, tag = 'internal scratch']
  %s0 = inlined_call_operand.vmem [shape: bf16[128,512], index: 0, kind: input, shape index: {}]
  %s1 = inlined_call_operand.vmem [shape: bf16[128,8], index: 1, kind: input, shape index: {}]
  %s2 = inlined_call_operand.vmem [shape: f32[128,1], index: 2, kind: input, shape index: {}]
  %s3 = inlined_call_operand.vmem [shape: bf16[512,128], index: 3, kind: input, shape index: {}]
  %s4 = inlined_call_operand.vmem [shape: f32[1,128], index: 4, kind: input, shape index: {}]
  %s5 = inlined_call_operand.vmem [shape: f32[1,128], index: 5, kind: input, shape index: {}]
  %s6 = inlined_call_operand.vmem [shape: bf16[8,128], index: 6, kind: input, shape index: {}]
  %s7 = inlined_call_operand.vmem [shape: f32[1,128], index: 7, kind: input, shape index: {}]
  %s8 = inlined_call_operand.vmem [shape: f32[1,128], index: 8, kind: input, shape index: {}]
  %s9 = inlined_call_operand.vmem [shape: bf16[128,128], index: 9, kind: output, shape index: {}]
  %s10 = sld [smem:[#allocation0]]
  $region46: #{skip_one_step3_forward.3} parent=0
    _
  %s12 = ssub.s32 1, %s10
  %s13 = scalar_select 0, %s12, %s10
  // Predicated region
  $region2: #{skip_one_step3_forward.3} parent=0 // pred_check
    _
  $region3: #{skip_one_step3_forward.3} parent=0 // pred_check_branch
    %15 = sbr.rel (0) target = $region5
  $region4: #{skip_one_step3_forward.3} parent=0 // pred_region
    _
  $region5: #{skip_one_step3_forward.3} parent=0 // pred_fallthru
    _
  // Predicated region
  $region6: #{skip_one_step3_forward.3} parent=0 // pred_check
    _
  $region7: #{skip_one_step3_forward.3} parent=0 // pred_check_branch
    %17 = sbr.rel (0) target = $region9
  $region8: #{skip_one_step3_forward.3} parent=0 // pred_region
    _
  $region9: #{skip_one_step3_forward.3} parent=0 // pred_fallthru
    _
  // Predicated region
  $region10: #{skip_one_step3_forward.3} parent=0 // pred_check
    _
  $region11: #{skip_one_step3_forward.3} parent=0 // pred_check_branch
    %19 = sbr.rel (0) target = $region13
  $region12: #{skip_one_step3_forward.3} parent=0 // pred_region
    _
  $region13: #{skip_one_step3_forward.3} parent=0 // pred_fallthru
    _
  // Predicated region
  $region14: #{skip_one_step3_forward.3} parent=0 // pred_check
    _
  $region15: #{skip_one_step3_forward.3} parent=0 // pred_check_branch
    %21 = sbr.rel (0) target = $region17
  $region16: #{skip_one_step3_forward.3} parent=0 // pred_region
    _
  $region17: #{skip_one_step3_forward.3} parent=0 // pred_fallthru
    _
  // Predicated region
  $region18: #{skip_one_step3_forward.3} parent=0 // pred_check
    _
  $region19: #{skip_one_step3_forward.3} parent=0 // pred_check_branch
    %23 = sbr.rel (0) target = $region21
  $region20: #{skip_one_step3_forward.3} parent=0 // pred_region
    _
  $region21: #{skip_one_step3_forward.3} parent=0 // pred_fallthru
    _
  // Predicated region
  $region22: #{skip_one_step3_forward.3} parent=0 // pred_check
    _
  $region23: #{skip_one_step3_forward.3} parent=0 // pred_check_branch
    %25 = sbr.rel (0) target = $region25
  $region24: #{skip_one_step3_forward.3} parent=0 // pred_region
    _
  $region25: #{skip_one_step3_forward.3} parent=0 // pred_fallthru
    _
  // Predicated region
  $region26: #{skip_one_step3_forward.3} parent=0 // pred_check
    _
  $region27: #{skip_one_step3_forward.3} parent=0 // pred_check_branch
    %27 = sbr.rel (0) target = $region29
  $region28: #{skip_one_step3_forward.3} parent=0 // pred_region
    _
  $region29: #{skip_one_step3_forward.3} parent=0 // pred_fallthru
    _
  // Predicated region
  $region30: #{skip_one_step3_forward.3} parent=0 // pred_check
    _
  $region31: #{skip_one_step3_forward.3} parent=0 // pred_check_branch
    %29 = sbr.rel (0) target = $region33
  $region32: #{skip_one_step3_forward.3} parent=0 // pred_region
    _
  $region33: #{skip_one_step3_forward.3} parent=0 // pred_fallthru
    _
  // Predicated region
  $region34: #{skip_one_step3_forward.3} parent=0 // pred_check
    _
  $region35: #{skip_one_step3_forward.3} parent=0 // pred_check_branch
    %31 = sbr.rel (0) target = $region37
  $region36: #{skip_one_step3_forward.3} parent=0 // pred_region
    _
  $region37: #{skip_one_step3_forward.3} parent=0 // pred_fallthru
    _
  %v33 = vld [vmem:[%s0] sm:$0xff]
  %v34 = vld [vmem:[%s0 + $0x8] sm:$0xff]
  %v35 = vld [vmem:[%s0 + $0x10] sm:$0xff]
  %v36 = vld [vmem:[%s0 + $0x18] sm:$0xff]
  %v37 = vld [vmem:[%s0 + $0x20] sm:$0xff]
  %v38 = vld [vmem:[%s0 + $0x28] sm:$0xff]
  %v39 = vld [vmem:[%s0 + $0x30] sm:$0xff]
  %v40 = vld [vmem:[%s0 + $0x38] sm:$0xff]
  %v41 = vld [vmem:[%s0 + $0x40] sm:$0xff]
  %v42 = vld [vmem:[%s0 + $0x48] sm:$0xff]
  %v43 = vld [vmem:[%s0 + $0x50] sm:$0xff]
  %v44 = vld [vmem:[%s0 + $0x58] sm:$0xff]
  %v45 = vld [vmem:[%s0 + $0x60] sm:$0xff]
  %v46 = vld [vmem:[%s0 + $0x68] sm:$0xff]
  %v47 = vld [vmem:[%s0 + $0x70] sm:$0xff]
  %v48 = vld [vmem:[%s0 + $0x78] sm:$0xff]
  %v49 = vld [vmem:[%s0 + $0x80] sm:$0xff]
  %v50 = vld [vmem:[%s0 + $0x88] sm:$0xff]
  %v51 = vld [vmem:[%s0 + $0x90] sm:$0xff]
  %v52 = vld [vmem:[%s0 + $0x98] sm:$0xff]
  %v53 = vld [vmem:[%s0 + $0xa0] sm:$0xff]
  %v54 = vld [vmem:[%s0 + $0xa8] sm:$0xff]
  %v55 = vld [vmem:[%s0 + $0xb0] sm:$0xff]
  %v56 = vld [vmem:[%s0 + $0xb8] sm:$0xff]
  %v57 = vld [vmem:[%s0 + $0xc0] sm:$0xff]
  %v58 = vld [vmem:[%s0 + $0xc8] sm:$0xff]
  %v59 = vld [vmem:[%s0 + $0xd0] sm:$0xff]
  %v60 = vld [vmem:[%s0 + $0xd8] sm:$0xff]
  %v61 = vld [vmem:[%s0 + $0xe0] sm:$0xff]
  %v62 = vld [vmem:[%s0 + $0xe8] sm:$0xff]
  %v63 = vld [vmem:[%s0 + $0xf0] sm:$0xff]
  %v64 = vld [vmem:[%s0 + $0xf8] sm:$0xff]
  %v65 = vld [vmem:[%s3] sm:$0xf]
  %v66 = vld [vmem:[%s3 + $0x4] sm:$0xf]
  %v67 = vld [vmem:[%s3 + $0x8] sm:$0xf]
  %v68 = vld [vmem:[%s3 + $0xc] sm:$0xf]
  %v69 = vld [vmem:[%s3 + $0x10] sm:$0xf]
  %v70 = vld [vmem:[%s3 + $0x14] sm:$0xf]
  %v71 = vld [vmem:[%s3 + $0x18] sm:$0xf]
  %v72 = vld [vmem:[%s3 + $0x1c] sm:$0xf]
  %v73 = vld [vmem:[%s3 + $0x20] sm:$0xf]
  %v74 = vld [vmem:[%s3 + $0x24] sm:$0xf]
  %v75 = vld [vmem:[%s3 + $0x28] sm:$0xf]
  %v76 = vld [vmem:[%s3 + $0x2c] sm:$0xf]
  %v77 = vld [vmem:[%s3 + $0x30] sm:$0xf]
  %v78 = vld [vmem:[%s3 + $0x34] sm:$0xf]
  %v79 = vld [vmem:[%s3 + $0x38] sm:$0xf]
  %v80 = vld [vmem:[%s3 + $0x3c] sm:$0xf]
  %v81 = vld [vmem:[%s3 + $0x40] sm:$0xf]
  %v82 = vld [vmem:[%s3 + $0x44] sm:$0xf]
  %v83 = vld [vmem:[%s3 + $0x48] sm:$0xf]
  %v84 = vld [vmem:[%s3 + $0x4c] sm:$0xf]
  %v85 = vld [vmem:[%s3 + $0x50] sm:$0xf]
  %v86 = vld [vmem:[%s3 + $0x54] sm:$0xf]
  %v87 = vld [vmem:[%s3 + $0x58] sm:$0xf]
  %v88 = vld [vmem:[%s3 + $0x5c] sm:$0xf]
  %v89 = vld [vmem:[%s3 + $0x60] sm:$0xf]
  %v90 = vld [vmem:[%s3 + $0x64] sm:$0xf]
  %v91 = vld [vmem:[%s3 + $0x68] sm:$0xf]
  %v92 = vld [vmem:[%s3 + $0x6c] sm:$0xf]
  %v93 = vld [vmem:[%s3 + $0x70] sm:$0xf]
  %v94 = vld [vmem:[%s3 + $0x74] sm:$0xf]
  %v95 = vld [vmem:[%s3 + $0x78] sm:$0xf]
  %v96 = vld [vmem:[%s3 + $0x7c] sm:$0xf]
  %v97 = vld [vmem:[%s3 + $0x80] sm:$0xf]
  %v98 = vld [vmem:[%s3 + $0x84] sm:$0xf]
  %v99 = vld [vmem:[%s3 + $0x88] sm:$0xf]
  %v100 = vld [vmem:[%s3 + $0x8c] sm:$0xf]
  %v101 = vld [vmem:[%s3 + $0x90] sm:$0xf]
  %v102 = vld [vmem:[%s3 + $0x94] sm:$0xf]
  %v103 = vld [vmem:[%s3 + $0x98] sm:$0xf]
  %v104 = vld [vmem:[%s3 + $0x9c] sm:$0xf]
  %v105 = vld [vmem:[%s3 + $0xa0] sm:$0xf]
  %v106 = vld [vmem:[%s3 + $0xa4] sm:$0xf]
  %v107 = vld [vmem:[%s3 + $0xa8] sm:$0xf]
  %v108 = vld [vmem:[%s3 + $0xac] sm:$0xf]
  %v109 = vld [vmem:[%s3 + $0xb0] sm:$0xf]
  %v110 = vld [vmem:[%s3 + $0xb4] sm:$0xf]
  %v111 = vld [vmem:[%s3 + $0xb8] sm:$0xf]
  %v112 = vld [vmem:[%s3 + $0xbc] sm:$0xf]
  %v113 = vld [vmem:[%s3 + $0xc0] sm:$0xf]
  %v114 = vld [vmem:[%s3 + $0xc4] sm:$0xf]
  %v115 = vld [vmem:[%s3 + $0xc8] sm:$0xf]
  %v116 = vld [vmem:[%s3 + $0xcc] sm:$0xf]
  %v117 = vld [vmem:[%s3 + $0xd0] sm:$0xf]
  %v118 = vld [vmem:[%s3 + $0xd4] sm:$0xf]
  %v119 = vld [vmem:[%s3 + $0xd8] sm:$0xf]
  %v120 = vld [vmem:[%s3 + $0xdc] sm:$0xf]
  %v121 = vld [vmem:[%s3 + $0xe0] sm:$0xf]
  %v122 = vld [vmem:[%s3 + $0xe4] sm:$0xf]
  %v123 = vld [vmem:[%s3 + $0xe8] sm:$0xf]
  %v124 = vld [vmem:[%s3 + $0xec] sm:$0xf]
  %v125 = vld [vmem:[%s3 + $0xf0] sm:$0xf]
  %v126 = vld [vmem:[%s3 + $0xf4] sm:$0xf]
  %v127 = vld [vmem:[%s3 + $0xf8] sm:$0xf]
  %v128 = vld [vmem:[%s3 + $0xfc] sm:$0xf]
  %v161 = vunpack.c.l.b16 %v33
  %v162 = vunpack.c.h.b16 %v33
  %v163 = vunpack.c.l.b16 %v34
  %v164 = vunpack.c.h.b16 %v34
  %v165 = vunpack.c.l.b16 %v35
  %v166 = vunpack.c.h.b16 %v35
  %v167 = vunpack.c.l.b16 %v36
  %v168 = vunpack.c.h.b16 %v36
  %v169 = vunpack.c.l.b16 %v37
  %v170 = vunpack.c.h.b16 %v37
  %v171 = vunpack.c.l.b16 %v38
  %v172 = vunpack.c.h.b16 %v38
  %v173 = vunpack.c.l.b16 %v39
  %v174 = vunpack.c.h.b16 %v39
  %v175 = vunpack.c.l.b16 %v40
  %v176 = vunpack.c.h.b16 %v40
  %v177 = vunpack.c.l.b16 %v41
  %v178 = vunpack.c.h.b16 %v41
  %v179 = vunpack.c.l.b16 %v42
  %v180 = vunpack.c.h.b16 %v42
  %v181 = vunpack.c.l.b16 %v43
  %v182 = vunpack.c.h.b16 %v43
  %v183 = vunpack.c.l.b16 %v44
  %v184 = vunpack.c.h.b16 %v44
  %v185 = vunpack.c.l.b16 %v45
  %v186 = vunpack.c.h.b16 %v45
  %v187 = vunpack.c.l.b16 %v46
  %v188 = vunpack.c.h.b16 %v46
  %v189 = vunpack.c.l.b16 %v47
  %v190 = vunpack.c.h.b16 %v47
  %v191 = vunpack.c.l.b16 %v48
  %v192 = vunpack.c.h.b16 %v48
  %v193 = vunpack.c.l.b16 %v49
  %v194 = vunpack.c.h.b16 %v49
  %v195 = vunpack.c.l.b16 %v50
  %v196 = vunpack.c.h.b16 %v50
  %v197 = vunpack.c.l.b16 %v51
  %v198 = vunpack.c.h.b16 %v51
  %v199 = vunpack.c.l.b16 %v52
  %v200 = vunpack.c.h.b16 %v52
  %v201 = vunpack.c.l.b16 %v53
  %v202 = vunpack.c.h.b16 %v53
  %v203 = vunpack.c.l.b16 %v54
  %v204 = vunpack.c.h.b16 %v54
  %v205 = vunpack.c.l.b16 %v55
  %v206 = vunpack.c.h.b16 %v55
  %v207 = vunpack.c.l.b16 %v56
  %v208 = vunpack.c.h.b16 %v56
  %v209 = vunpack.c.l.b16 %v57
  %v210 = vunpack.c.h.b16 %v57
  %v211 = vunpack.c.l.b16 %v58
  %v212 = vunpack.c.h.b16 %v58
  %v213 = vunpack.c.l.b16 %v59
  %v214 = vunpack.c.h.b16 %v59
  %v215 = vunpack.c.l.b16 %v60
  %v216 = vunpack.c.h.b16 %v60
  %v217 = vunpack.c.l.b16 %v61
  %v218 = vunpack.c.h.b16 %v61
  %v219 = vunpack.c.l.b16 %v62
  %v220 = vunpack.c.h.b16 %v62
  %v221 = vunpack.c.l.b16 %v63
  %v222 = vunpack.c.h.b16 %v63
  %v223 = vunpack.c.l.b16 %v64
  %v224 = vunpack.c.h.b16 %v64
  %v225 = vpack.c.b16 %v165, %v161
  %v226 = vpack.c.b16 %v166, %v162
  %v227 = vpack.c.b16 %v167, %v163
  %v228 = vpack.c.b16 %v168, %v164
  %v229 = vpack.c.b16 %v173, %v169
  %v230 = vpack.c.b16 %v174, %v170
  %v231 = vpack.c.b16 %v175, %v171
  %v232 = vpack.c.b16 %v176, %v172
  %v233 = vpack.c.b16 %v181, %v177
  %v234 = vpack.c.b16 %v182, %v178
  %v235 = vpack.c.b16 %v183, %v179
  %v236 = vpack.c.b16 %v184, %v180
  %v237 = vpack.c.b16 %v189, %v185
  %v238 = vpack.c.b16 %v190, %v186
  %v239 = vpack.c.b16 %v191, %v187
  %v240 = vpack.c.b16 %v192, %v188
  %v241 = vpack.c.b16 %v197, %v193
  %v242 = vpack.c.b16 %v198, %v194
  %v243 = vpack.c.b16 %v199, %v195
  %v244 = vpack.c.b16 %v200, %v196
  %v245 = vpack.c.b16 %v205, %v201
  %v246 = vpack.c.b16 %v206, %v202
  %v247 = vpack.c.b16 %v207, %v203
  %v248 = vpack.c.b16 %v208, %v204
  %v249 = vpack.c.b16 %v213, %v209
  %v250 = vpack.c.b16 %v214, %v210
  %v251 = vpack.c.b16 %v215, %v211
  %v252 = vpack.c.b16 %v216, %v212
  %v253 = vpack.c.b16 %v221, %v217
  %v254 = vpack.c.b16 %v222, %v218
  %v255 = vpack.c.b16 %v223, %v219
  %v256 = vpack.c.b16 %v224, %v220
  %v353 = vunpack.c.l.b16 %v65
  %v354 = vunpack.c.l.b16 %v66
  %v355 = vunpack.c.l.b16 %v67
  %v356 = vunpack.c.l.b16 %v68
  %v357 = vunpack.c.l.b16 %v69
  %v358 = vunpack.c.l.b16 %v70
  %v359 = vunpack.c.l.b16 %v71
  %v360 = vunpack.c.l.b16 %v72
  %v361 = vunpack.c.l.b16 %v73
  %v362 = vunpack.c.l.b16 %v74
  %v363 = vunpack.c.l.b16 %v75
  %v364 = vunpack.c.l.b16 %v76
  %v365 = vunpack.c.l.b16 %v77
  %v366 = vunpack.c.l.b16 %v78
  %v367 = vunpack.c.l.b16 %v79
  %v368 = vunpack.c.l.b16 %v80
  %v369 = vunpack.c.l.b16 %v81
  %v370 = vunpack.c.l.b16 %v82
  %v371 = vunpack.c.l.b16 %v83
  %v372 = vunpack.c.l.b16 %v84
  %v373 = vunpack.c.l.b16 %v85
  %v374 = vunpack.c.l.b16 %v86
  %v375 = vunpack.c.l.b16 %v87
  %v376 = vunpack.c.l.b16 %v88
  %v377 = vunpack.c.l.b16 %v89
  %v378 = vunpack.c.l.b16 %v90
  %v379 = vunpack.c.l.b16 %v91
  %v380 = vunpack.c.l.b16 %v92
  %v381 = vunpack.c.l.b16 %v93
  %v382 = vunpack.c.l.b16 %v94
  %v383 = vunpack.c.l.b16 %v95
  %v384 = vunpack.c.l.b16 %v96
  %v385 = vunpack.c.l.b16 %v97
  %v386 = vunpack.c.l.b16 %v98
  %v387 = vunpack.c.l.b16 %v99
  %v388 = vunpack.c.l.b16 %v100
  %v389 = vunpack.c.l.b16 %v101
  %v390 = vunpack.c.l.b16 %v102
  %v391 = vunpack.c.l.b16 %v103
  %v392 = vunpack.c.l.b16 %v104
  %v393 = vunpack.c.l.b16 %v105
  %v394 = vunpack.c.l.b16 %v106
  %v395 = vunpack.c.l.b16 %v107
  %v396 = vunpack.c.l.b16 %v108
  %v397 = vunpack.c.l.b16 %v109
  %v398 = vunpack.c.l.b16 %v110
  %v399 = vunpack.c.l.b16 %v111
  %v400 = vunpack.c.l.b16 %v112
  %v401 = vunpack.c.l.b16 %v113
  %v402 = vunpack.c.l.b16 %v114
  %v403 = vunpack.c.l.b16 %v115
  %v404 = vunpack.c.l.b16 %v116
  %v405 = vunpack.c.l.b16 %v117
  %v406 = vunpack.c.l.b16 %v118
  %v407 = vunpack.c.l.b16 %v119
  %v408 = vunpack.c.l.b16 %v120
  %v409 = vunpack.c.l.b16 %v121
  %v410 = vunpack.c.l.b16 %v122
  %v411 = vunpack.c.l.b16 %v123
  %v412 = vunpack.c.l.b16 %v124
  %v413 = vunpack.c.l.b16 %v125
  %v414 = vunpack.c.l.b16 %v126
  %v415 = vunpack.c.l.b16 %v127
  %v416 = vunpack.c.l.b16 %v128
  %v417 = vpack.c.b16 %v354, %v353
  %v418 = vpack.c.b16 %v356, %v355
  %v419 = vpack.c.b16 %v358, %v357
  %v420 = vpack.c.b16 %v360, %v359
  %v421 = vpack.c.b16 %v362, %v361
  %v422 = vpack.c.b16 %v364, %v363
  %v423 = vpack.c.b16 %v366, %v365
  %v424 = vpack.c.b16 %v368, %v367
  %v425 = vpack.c.b16 %v370, %v369
  %v426 = vpack.c.b16 %v372, %v371
  %v427 = vpack.c.b16 %v374, %v373
  %v428 = vpack.c.b16 %v376, %v375
  %v429 = vpack.c.b16 %v378, %v377
  %v430 = vpack.c.b16 %v380, %v379
  %v431 = vpack.c.b16 %v382, %v381
  %v432 = vpack.c.b16 %v384, %v383
  %v433 = vpack.c.b16 %v386, %v385
  %v434 = vpack.c.b16 %v388, %v387
  %v435 = vpack.c.b16 %v390, %v389
  %v436 = vpack.c.b16 %v392, %v391
  %v437 = vpack.c.b16 %v394, %v393
  %v438 = vpack.c.b16 %v396, %v395
  %v439 = vpack.c.b16 %v398, %v397
  %v440 = vpack.c.b16 %v400, %v399
  %v441 = vpack.c.b16 %v402, %v401
  %v442 = vpack.c.b16 %v404, %v403
  %v443 = vpack.c.b16 %v406, %v405
  %v444 = vpack.c.b16 %v408, %v407
  %v445 = vpack.c.b16 %v410, %v409
  %v446 = vpack.c.b16 %v412, %v411
  %v447 = vpack.c.b16 %v414, %v413
  %v448 = vpack.c.b16 %v416, %v415
  %481 = vmatpush.bf16.msra.mxu0 %v424
  %482 = vmatpush.bf16.msra.mxu0 %v423
  %483 = vmatpush.bf16.msra.mxu0 %v422
  %484 = vmatpush.bf16.msra.mxu0 %v421
  %485 = vmatpush.bf16.msra.mxu0 %v420
  %486 = vmatpush.bf16.msra.mxu0 %v419
  %487 = vmatpush.bf16.msra.mxu0 %v418
  %488 = vmatpush.bf16.msra.mxu0 %v417
  %489 = vmatmul.bf16.gmra.mxu0 %v225
  %v490 = vpop.f32.mrf.mxu0
  %v491 = vadd.f32 0.0, %v490
  %v492 = vpop.f32.mrf.mxu0
  %v493 = vadd.f32 0.0, %v492
  %494 = vmatmul.bf16.gmra.mxu0 %v229
  %v495 = vpop.f32.mrf.mxu0
  %v496 = vadd.f32 0.0, %v495
  %v497 = vpop.f32.mrf.mxu0
  %v498 = vadd.f32 0.0, %v497
  %499 = vmatmul.bf16.gmra.mxu0 %v233
  %v500 = vpop.f32.mrf.mxu0
  %v501 = vadd.f32 0.0, %v500
  %v502 = vpop.f32.mrf.mxu0
  %v503 = vadd.f32 0.0, %v502
  %504 = vmatmul.bf16.gmra.mxu0 %v237
  %v505 = vpop.f32.mrf.mxu0
  %v506 = vadd.f32 0.0, %v505
  %v507 = vpop.f32.mrf.mxu0
  %v508 = vadd.f32 0.0, %v507
  %509 = vmatmul.bf16.gmra.mxu0 %v241
  %v510 = vpop.f32.mrf.mxu0
  %v511 = vadd.f32 0.0, %v510
  %v512 = vpop.f32.mrf.mxu0
  %v513 = vadd.f32 0.0, %v512
  %514 = vmatmul.bf16.gmra.mxu0 %v245
  %v515 = vpop.f32.mrf.mxu0
  %v516 = vadd.f32 0.0, %v515
  %v517 = vpop.f32.mrf.mxu0
  %v518 = vadd.f32 0.0, %v517
  %519 = vmatmul.bf16.gmra.mxu0 %v249
  %v520 = vpop.f32.mrf.mxu0
  %v521 = vadd.f32 0.0, %v520
  %v522 = vpop.f32.mrf.mxu0
  %v523 = vadd.f32 0.0, %v522
  %524 = vmatmul.bf16.gmra.mxu0 %v253
  %v525 = vpop.f32.mrf.mxu0
  %v526 = vadd.f32 0.0, %v525
  %v527 = vpop.f32.mrf.mxu0
  %v528 = vadd.f32 0.0, %v527
  %529 = vdwg.mxu0
  %530 = vmatpush.bf16.msra.mxu0 %v432
  %531 = vmatpush.bf16.msra.mxu0 %v431
  %532 = vmatpush.bf16.msra.mxu0 %v430
  %533 = vmatpush.bf16.msra.mxu0 %v429
  %534 = vmatpush.bf16.msra.mxu0 %v428
  %535 = vmatpush.bf16.msra.mxu0 %v427
  %536 = vmatpush.bf16.msra.mxu0 %v426
  %537 = vmatpush.bf16.msra.mxu0 %v425
  %538 = vmatmul.bf16.gmra.mxu0 %v226
  %v539 = vpop.f32.mrf.mxu0
  %v540 = vadd.f32 %v491, %v539
  %v541 = vpop.f32.mrf.mxu0
  %v542 = vadd.f32 %v493, %v541
  %543 = vmatmul.bf16.gmra.mxu0 %v230
  %v544 = vpop.f32.mrf.mxu0
  %v545 = vadd.f32 %v496, %v544
  %v546 = vpop.f32.mrf.mxu0
  %v547 = vadd.f32 %v498, %v546
  %548 = vmatmul.bf16.gmra.mxu0 %v234
  %v549 = vpop.f32.mrf.mxu0
  %v550 = vadd.f32 %v501, %v549
  %v551 = vpop.f32.mrf.mxu0
  %v552 = vadd.f32 %v503, %v551
  %553 = vmatmul.bf16.gmra.mxu0 %v238
  %v554 = vpop.f32.mrf.mxu0
  %v555 = vadd.f32 %v506, %v554
  %v556 = vpop.f32.mrf.mxu0
  %v557 = vadd.f32 %v508, %v556
  %558 = vmatmul.bf16.gmra.mxu0 %v242
  %v559 = vpop.f32.mrf.mxu0
  %v560 = vadd.f32 %v511, %v559
  %v561 = vpop.f32.mrf.mxu0
  %v562 = vadd.f32 %v513, %v561
  %563 = vmatmul.bf16.gmra.mxu0 %v246
  %v564 = vpop.f32.mrf.mxu0
  %v565 = vadd.f32 %v516, %v564
  %v566 = vpop.f32.mrf.mxu0
  %v567 = vadd.f32 %v518, %v566
  %568 = vmatmul.bf16.gmra.mxu0 %v250
  %v569 = vpop.f32.mrf.mxu0
  %v570 = vadd.f32 %v521, %v569
  %v571 = vpop.f32.mrf.mxu0
  %v572 = vadd.f32 %v523, %v571
  %573 = vmatmul.bf16.gmra.mxu0 %v254
  %v574 = vpop.f32.mrf.mxu0
  %v575 = vadd.f32 %v526, %v574
  %v576 = vpop.f32.mrf.mxu0
  %v577 = vadd.f32 %v528, %v576
  %578 = vdwg.mxu0
  %579 = vmatpush.bf16.msra.mxu0 %v440
  %580 = vmatpush.bf16.msra.mxu0 %v439
  %581 = vmatpush.bf16.msra.mxu0 %v438
  %582 = vmatpush.bf16.msra.mxu0 %v437
  %583 = vmatpush.bf16.msra.mxu0 %v436
  %584 = vmatpush.bf16.msra.mxu0 %v435
  %585 = vmatpush.bf16.msra.mxu0 %v434
  %586 = vmatpush.bf16.msra.mxu0 %v433
  %587 = vmatmul.bf16.gmra.mxu0 %v227
  %v588 = vpop.f32.mrf.mxu0
  %v589 = vadd.f32 %v540, %v588
  %v590 = vpop.f32.mrf.mxu0
  %v591 = vadd.f32 %v542, %v590
  %592 = vmatmul.bf16.gmra.mxu0 %v231
  %v593 = vpop.f32.mrf.mxu0
  %v594 = vadd.f32 %v545, %v593
  %v595 = vpop.f32.mrf.mxu0
  %v596 = vadd.f32 %v547, %v595
  %597 = vmatmul.bf16.gmra.mxu0 %v235
  %v598 = vpop.f32.mrf.mxu0
  %v599 = vadd.f32 %v550, %v598
  %v600 = vpop.f32.mrf.mxu0
  %v601 = vadd.f32 %v552, %v600
  %602 = vmatmul.bf16.gmra.mxu0 %v239
  %v603 = vpop.f32.mrf.mxu0
  %v604 = vadd.f32 %v555, %v603
  %v605 = vpop.f32.mrf.mxu0
  %v606 = vadd.f32 %v557, %v605
  %607 = vmatmul.bf16.gmra.mxu0 %v243
  %v608 = vpop.f32.mrf.mxu0
  %v609 = vadd.f32 %v560, %v608
  %v610 = vpop.f32.mrf.mxu0
  %v611 = vadd.f32 %v562, %v610
  %612 = vmatmul.bf16.gmra.mxu0 %v247
  %v613 = vpop.f32.mrf.mxu0
  %v614 = vadd.f32 %v565, %v613
  %v615 = vpop.f32.mrf.mxu0
  %v616 = vadd.f32 %v567, %v615
  %617 = vmatmul.bf16.gmra.mxu0 %v251
  %v618 = vpop.f32.mrf.mxu0
  %v619 = vadd.f32 %v570, %v618
  %v620 = vpop.f32.mrf.mxu0
  %v621 = vadd.f32 %v572, %v620
  %622 = vmatmul.bf16.gmra.mxu0 %v255
  %v623 = vpop.f32.mrf.mxu0
  %v624 = vadd.f32 %v575, %v623
  %v625 = vpop.f32.mrf.mxu0
  %v626 = vadd.f32 %v577, %v625
  %627 = vdwg.mxu0
  %628 = vmatpush.bf16.msra.mxu0 %v448
  %629 = vmatpush.bf16.msra.mxu0 %v447
  %630 = vmatpush.bf16.msra.mxu0 %v446
  %631 = vmatpush.bf16.msra.mxu0 %v445
  %632 = vmatpush.bf16.msra.mxu0 %v444
  %633 = vmatpush.bf16.msra.mxu0 %v443
  %634 = vmatpush.bf16.msra.mxu0 %v442
  %635 = vmatpush.bf16.msra.mxu0 %v441
  %636 = vmatmul.bf16.gmra.mxu0 %v228
  %v637 = vpop.f32.mrf.mxu0
  %v638 = vadd.f32 %v589, %v637
  %v639 = vpop.f32.mrf.mxu0
  %v640 = vadd.f32 %v591, %v639
  %641 = vmatmul.bf16.gmra.mxu0 %v232
  %v642 = vpop.f32.mrf.mxu0
  %v643 = vadd.f32 %v594, %v642
  %v644 = vpop.f32.mrf.mxu0
  %v645 = vadd.f32 %v596, %v644
  %646 = vmatmul.bf16.gmra.mxu0 %v236
  %v647 = vpop.f32.mrf.mxu0
  %v648 = vadd.f32 %v599, %v647
  %v649 = vpop.f32.mrf.mxu0
  %v650 = vadd.f32 %v601, %v649
  %651 = vmatmul.bf16.gmra.mxu0 %v240
  %v652 = vpop.f32.mrf.mxu0
  %v653 = vadd.f32 %v604, %v652
  %v654 = vpop.f32.mrf.mxu0
  %v655 = vadd.f32 %v606, %v654
  %656 = vmatmul.bf16.gmra.mxu0 %v244
  %v657 = vpop.f32.mrf.mxu0
  %v658 = vadd.f32 %v609, %v657
  %v659 = vpop.f32.mrf.mxu0
  %v660 = vadd.f32 %v611, %v659
  %661 = vmatmul.bf16.gmra.mxu0 %v248
  %v662 = vpop.f32.mrf.mxu0
  %v663 = vadd.f32 %v614, %v662
  %v664 = vpop.f32.mrf.mxu0
  %v665 = vadd.f32 %v616, %v664
  %666 = vmatmul.bf16.gmra.mxu0 %v252
  %v667 = vpop.f32.mrf.mxu0
  %v668 = vadd.f32 %v619, %v667
  %v669 = vpop.f32.mrf.mxu0
  %v670 = vadd.f32 %v621, %v669
  %671 = vmatmul.bf16.gmra.mxu0 %v256
  %v672 = vpop.f32.mrf.mxu0
  %v673 = vadd.f32 %v624, %v672
  %v674 = vpop.f32.mrf.mxu0
  %v675 = vadd.f32 %v626, %v674
  %676 = vdwg.mxu0
  %v677 = vld [vmem:[%s4] sm:$0x1]
  %v679 = vperm.slane %v677, 0
  %v681 = vmul.f32 %v638, %v679
  %v682 = vmul.f32 %v640, %v679
  %v683 = vmul.f32 %v643, %v679
  %v684 = vmul.f32 %v645, %v679
  %v685 = vmul.f32 %v648, %v679
  %v686 = vmul.f32 %v650, %v679
  %v687 = vmul.f32 %v653, %v679
  %v688 = vmul.f32 %v655, %v679
  %v689 = vmul.f32 %v658, %v679
  %v690 = vmul.f32 %v660, %v679
  %v691 = vmul.f32 %v663, %v679
  %v692 = vmul.f32 %v665, %v679
  %v693 = vmul.f32 %v668, %v679
  %v694 = vmul.f32 %v670, %v679
  %v695 = vmul.f32 %v673, %v679
  %v696 = vmul.f32 %v675, %v679
  %v697 = vld [vmem:[%s5] sm:$0x1]
  %v699 = vperm.slane %v697, 0
  %v701 = vadd.f32 %v681, %v699
  %v702 = vadd.f32 %v682, %v699
  %v703 = vadd.f32 %v683, %v699
  %v704 = vadd.f32 %v684, %v699
  %v705 = vadd.f32 %v685, %v699
  %v706 = vadd.f32 %v686, %v699
  %v707 = vadd.f32 %v687, %v699
  %v708 = vadd.f32 %v688, %v699
  %v709 = vadd.f32 %v689, %v699
  %v710 = vadd.f32 %v690, %v699
  %v711 = vadd.f32 %v691, %v699
  %v712 = vadd.f32 %v692, %v699
  %v713 = vadd.f32 %v693, %v699
  %v714 = vadd.f32 %v694, %v699
  %v715 = vadd.f32 %v695, %v699
  %v716 = vadd.f32 %v696, %v699
  %v717 = vmax.f32 %v701, 0.0
  %v718 = vmax.f32 %v702, 0.0
  %v719 = vmax.f32 %v703, 0.0
  %v720 = vmax.f32 %v704, 0.0
  %v721 = vmax.f32 %v705, 0.0
  %v722 = vmax.f32 %v706, 0.0
  %v723 = vmax.f32 %v707, 0.0
  %v724 = vmax.f32 %v708, 0.0
  %v725 = vmax.f32 %v709, 0.0
  %v726 = vmax.f32 %v710, 0.0
  %v727 = vmax.f32 %v711, 0.0
  %v728 = vmax.f32 %v712, 0.0
  %v729 = vmax.f32 %v713, 0.0
  %v730 = vmax.f32 %v714, 0.0
  %v731 = vmax.f32 %v715, 0.0
  %v732 = vmax.f32 %v716, 0.0
  %v733 = vmin.f32 %v717, 20.0
  %v734 = vmin.f32 %v718, 20.0
  %v735 = vmin.f32 %v719, 20.0
  %v736 = vmin.f32 %v720, 20.0
  %v737 = vmin.f32 %v721, 20.0
  %v738 = vmin.f32 %v722, 20.0
  %v739 = vmin.f32 %v723, 20.0
  %v740 = vmin.f32 %v724, 20.0
  %v741 = vmin.f32 %v725, 20.0
  %v742 = vmin.f32 %v726, 20.0
  %v743 = vmin.f32 %v727, 20.0
  %v744 = vmin.f32 %v728, 20.0
  %v745 = vmin.f32 %v729, 20.0
  %v746 = vmin.f32 %v730, 20.0
  %v747 = vmin.f32 %v731, 20.0
  %v748 = vmin.f32 %v732, 20.0
  %v749 = vld [vmem:[%s1] sm:$0xf]
  %v750 = vld [vmem:[%s1 + $0x4] sm:$0xf]
  %v751 = vld [vmem:[%s1 + $0x8] sm:$0xf]
  %v752 = vld [vmem:[%s1 + $0xc] sm:$0xf]
  %v753 = vld [vmem:[%s1 + $0x10] sm:$0xf]
  %v754 = vld [vmem:[%s1 + $0x14] sm:$0xf]
  %v755 = vld [vmem:[%s1 + $0x18] sm:$0xf]
  %v756 = vld [vmem:[%s1 + $0x1c] sm:$0xf]
  %v757 = vld [vmem:[%s1 + $0x20] sm:$0xf]
  %v758 = vld [vmem:[%s1 + $0x24] sm:$0xf]
  %v759 = vld [vmem:[%s1 + $0x28] sm:$0xf]
  %v760 = vld [vmem:[%s1 + $0x2c] sm:$0xf]
  %v761 = vld [vmem:[%s1 + $0x30] sm:$0xf]
  %v762 = vld [vmem:[%s1 + $0x34] sm:$0xf]
  %v763 = vld [vmem:[%s1 + $0x38] sm:$0xf]
  %v764 = vld [vmem:[%s1 + $0x3c] sm:$0xf]
  %v765 = vld [vmem:[%s6] sm:$0xf]
  %v782 = vunpack.c.l.b16 %v749
  %v783 = vunpack.c.l.b16 %v750
  %v784 = vunpack.c.l.b16 %v751
  %v785 = vunpack.c.l.b16 %v752
  %v786 = vunpack.c.l.b16 %v753
  %v787 = vunpack.c.l.b16 %v754
  %v788 = vunpack.c.l.b16 %v755
  %v789 = vunpack.c.l.b16 %v756
  %v790 = vunpack.c.l.b16 %v757
  %v791 = vunpack.c.l.b16 %v758
  %v792 = vunpack.c.l.b16 %v759
  %v793 = vunpack.c.l.b16 %v760
  %v794 = vunpack.c.l.b16 %v761
  %v795 = vunpack.c.l.b16 %v762
  %v796 = vunpack.c.l.b16 %v763
  %v797 = vunpack.c.l.b16 %v764
  %v798 = vpack.c.b16 %v783, %v782
  %v799 = vpack.c.b16 %v785, %v784
  %v800 = vpack.c.b16 %v787, %v786
  %v801 = vpack.c.b16 %v789, %v788
  %v802 = vpack.c.b16 %v791, %v790
  %v803 = vpack.c.b16 %v793, %v792
  %v804 = vpack.c.b16 %v795, %v794
  %v805 = vpack.c.b16 %v797, %v796
  %vm806 = vcmask 64512
  %v808 = vsel %vm806, %v798, 0
  %v811 = vsel %vm806, %v799, 0
  %v814 = vsel %vm806, %v800, 0
  %v817 = vsel %vm806, %v801, 0
  %v820 = vsel %vm806, %v802, 0
  %v823 = vsel %vm806, %v803, 0
  %v826 = vsel %vm806, %v804, 0
  %v829 = vsel %vm806, %v805, 0
  %vm831 = vcmask 1043456
  %v833 = vsel %vm831, %v765, 0
  %835 = vmatpush.bf16.msra.mxu0 0
  %836 = vmatpush.bf16.msra.mxu0 0
  %837 = vmatpush.bf16.msra.mxu0 0
  %838 = vmatpush.bf16.msra.mxu0 0
  %839 = vmatpush.bf16.msra.mxu0 0
  %840 = vmatpush.bf16.msra.mxu0 0
  %841 = vmatpush.bf16.msra.mxu0 0
  %842 = vmatpush.bf16.msra.mxu0 %v833
  %843 = vmatmul.bf16.gmra.mxu0 %v808
  %v844 = vpop.f32.mrf.mxu0
  %v845 = vadd.f32 0.0, %v844
  %v846 = vpop.f32.mrf.mxu0
  %v847 = vadd.f32 0.0, %v846
  %848 = vmatmul.bf16.gmra.mxu0 %v811
  %v849 = vpop.f32.mrf.mxu0
  %v850 = vadd.f32 0.0, %v849
  %v851 = vpop.f32.mrf.mxu0
  %v852 = vadd.f32 0.0, %v851
  %853 = vmatmul.bf16.gmra.mxu0 %v814
  %v854 = vpop.f32.mrf.mxu0
  %v855 = vadd.f32 0.0, %v854
  %v856 = vpop.f32.mrf.mxu0
  %v857 = vadd.f32 0.0, %v856
  %858 = vmatmul.bf16.gmra.mxu0 %v817
  %v859 = vpop.f32.mrf.mxu0
  %v860 = vadd.f32 0.0, %v859
  %v861 = vpop.f32.mrf.mxu0
  %v862 = vadd.f32 0.0, %v861
  %863 = vmatmul.bf16.gmra.mxu0 %v820
  %v864 = vpop.f32.mrf.mxu0
  %v865 = vadd.f32 0.0, %v864
  %v866 = vpop.f32.mrf.mxu0
  %v867 = vadd.f32 0.0, %v866
  %868 = vmatmul.bf16.gmra.mxu0 %v823
  %v869 = vpop.f32.mrf.mxu0
  %v870 = vadd.f32 0.0, %v869
  %v871 = vpop.f32.mrf.mxu0
  %v872 = vadd.f32 0.0, %v871
  %873 = vmatmul.bf16.gmra.mxu0 %v826
  %v874 = vpop.f32.mrf.mxu0
  %v875 = vadd.f32 0.0, %v874
  %v876 = vpop.f32.mrf.mxu0
  %v877 = vadd.f32 0.0, %v876
  %878 = vmatmul.bf16.gmra.mxu0 %v829
  %v879 = vpop.f32.mrf.mxu0
  %v880 = vadd.f32 0.0, %v879
  %v881 = vpop.f32.mrf.mxu0
  %v882 = vadd.f32 0.0, %v881
  %883 = vdwg.mxu0
  %v884 = vld [vmem:[%s7] sm:$0x1]
  %v886 = vperm.slane %v884, 0
  %v888 = vmul.f32 %v845, %v886
  %v889 = vmul.f32 %v847, %v886
  %v890 = vmul.f32 %v850, %v886
  %v891 = vmul.f32 %v852, %v886
  %v892 = vmul.f32 %v855, %v886
  %v893 = vmul.f32 %v857, %v886
  %v894 = vmul.f32 %v860, %v886
  %v895 = vmul.f32 %v862, %v886
  %v896 = vmul.f32 %v865, %v886
  %v897 = vmul.f32 %v867, %v886
  %v898 = vmul.f32 %v870, %v886
  %v899 = vmul.f32 %v872, %v886
  %v900 = vmul.f32 %v875, %v886
  %v901 = vmul.f32 %v877, %v886
  %v902 = vmul.f32 %v880, %v886
  %v903 = vmul.f32 %v882, %v886
  %v904 = vld [vmem:[%s8] sm:$0x1]
  %v906 = vperm.slane %v904, 0
  %v908 = vadd.f32 %v888, %v906
  %v909 = vadd.f32 %v889, %v906
  %v910 = vadd.f32 %v890, %v906
  %v911 = vadd.f32 %v891, %v906
  %v912 = vadd.f32 %v892, %v906
  %v913 = vadd.f32 %v893, %v906
  %v914 = vadd.f32 %v894, %v906
  %v915 = vadd.f32 %v895, %v906
  %v916 = vadd.f32 %v896, %v906
  %v917 = vadd.f32 %v897, %v906
  %v918 = vadd.f32 %v898, %v906
  %v919 = vadd.f32 %v899, %v906
  %v920 = vadd.f32 %v900, %v906
  %v921 = vadd.f32 %v901, %v906
  %v922 = vadd.f32 %v902, %v906
  %v923 = vadd.f32 %v903, %v906
  %v924 = vmax.f32 %v908, 0.0
  %v925 = vmax.f32 %v909, 0.0
  %v926 = vmax.f32 %v910, 0.0
  %v927 = vmax.f32 %v911, 0.0
  %v928 = vmax.f32 %v912, 0.0
  %v929 = vmax.f32 %v913, 0.0
  %v930 = vmax.f32 %v914, 0.0
  %v931 = vmax.f32 %v915, 0.0
  %v932 = vmax.f32 %v916, 0.0
  %v933 = vmax.f32 %v917, 0.0
  %v934 = vmax.f32 %v918, 0.0
  %v935 = vmax.f32 %v919, 0.0
  %v936 = vmax.f32 %v920, 0.0
  %v937 = vmax.f32 %v921, 0.0
  %v938 = vmax.f32 %v922, 0.0
  %v939 = vmax.f32 %v923, 0.0
  %v940 = vmin.f32 %v924, 20.0
  %v941 = vmin.f32 %v925, 20.0
  %v942 = vmin.f32 %v926, 20.0
  %v943 = vmin.f32 %v927, 20.0
  %v944 = vmin.f32 %v928, 20.0
  %v945 = vmin.f32 %v929, 20.0
  %v946 = vmin.f32 %v930, 20.0
  %v947 = vmin.f32 %v931, 20.0
  %v948 = vmin.f32 %v932, 20.0
  %v949 = vmin.f32 %v933, 20.0
  %v950 = vmin.f32 %v934, 20.0
  %v951 = vmin.f32 %v935, 20.0
  %v952 = vmin.f32 %v936, 20.0
  %v953 = vmin.f32 %v937, 20.0
  %v954 = vmin.f32 %v938, 20.0
  %v955 = vmin.f32 %v939, 20.0
  %v956 = vadd.f32 %v733, %v940
  %v957 = vadd.f32 %v734, %v941
  %v958 = vadd.f32 %v735, %v942
  %v959 = vadd.f32 %v736, %v943
  %v960 = vadd.f32 %v737, %v944
  %v961 = vadd.f32 %v738, %v945
  %v962 = vadd.f32 %v739, %v946
  %v963 = vadd.f32 %v740, %v947
  %v964 = vadd.f32 %v741, %v948
  %v965 = vadd.f32 %v742, %v949
  %v966 = vadd.f32 %v743, %v950
  %v967 = vadd.f32 %v744, %v951
  %v968 = vadd.f32 %v745, %v952
  %v969 = vadd.f32 %v746, %v953
  %v970 = vadd.f32 %v747, %v954
  %v971 = vadd.f32 %v748, %v955
  %v972 = vld [vmem:[%s2] sm:$0xff]
  %v973 = vld [vmem:[%s2 + $0x8] sm:$0xff]
  %v974 = vld [vmem:[%s2 + $0x10] sm:$0xff]
  %v975 = vld [vmem:[%s2 + $0x18] sm:$0xff]
  %v976 = vld [vmem:[%s2 + $0x20] sm:$0xff]
  %v977 = vld [vmem:[%s2 + $0x28] sm:$0xff]
  %v978 = vld [vmem:[%s2 + $0x30] sm:$0xff]
  %v979 = vld [vmem:[%s2 + $0x38] sm:$0xff]
  %v980 = vld [vmem:[%s2 + $0x40] sm:$0xff]
  %v981 = vld [vmem:[%s2 + $0x48] sm:$0xff]
  %v982 = vld [vmem:[%s2 + $0x50] sm:$0xff]
  %v983 = vld [vmem:[%s2 + $0x58] sm:$0xff]
  %v984 = vld [vmem:[%s2 + $0x60] sm:$0xff]
  %v985 = vld [vmem:[%s2 + $0x68] sm:$0xff]
  %v986 = vld [vmem:[%s2 + $0x70] sm:$0xff]
  %v987 = vld [vmem:[%s2 + $0x78] sm:$0xff]
  %989 = vset.pattern.permute.xlu0 0
  %990 = vperm.xlu0 %989, %v972
  %v991 = vpop.permute.xlu0 %990
  %994 = vset.pattern.permute.xlu0 0
  %995 = vperm.xlu0 %994, %v973
  %v996 = vpop.permute.xlu0 %995
  %999 = vset.pattern.permute.xlu0 0
  %1000 = vperm.xlu0 %999, %v974
  %v1001 = vpop.permute.xlu0 %1000
  %1004 = vset.pattern.permute.xlu0 0
  %1005 = vperm.xlu0 %1004, %v975
  %v1006 = vpop.permute.xlu0 %1005
  %1009 = vset.pattern.permute.xlu0 0
  %1010 = vperm.xlu0 %1009, %v976
  %v1011 = vpop.permute.xlu0 %1010
  %1014 = vset.pattern.permute.xlu0 0
  %1015 = vperm.xlu0 %1014, %v977
  %v1016 = vpop.permute.xlu0 %1015
  %1019 = vset.pattern.permute.xlu0 0
  %1020 = vperm.xlu0 %1019, %v978
  %v1021 = vpop.permute.xlu0 %1020
  %1024 = vset.pattern.permute.xlu0 0
  %1025 = vperm.xlu0 %1024, %v979
  %v1026 = vpop.permute.xlu0 %1025
  %1029 = vset.pattern.permute.xlu0 0
  %1030 = vperm.xlu0 %1029, %v980
  %v1031 = vpop.permute.xlu0 %1030
  %1034 = vset.pattern.permute.xlu0 0
  %1035 = vperm.xlu0 %1034, %v981
  %v1036 = vpop.permute.xlu0 %1035
  %1039 = vset.pattern.permute.xlu0 0
  %1040 = vperm.xlu0 %1039, %v982
  %v1041 = vpop.permute.xlu0 %1040
  %1044 = vset.pattern.permute.xlu0 0
  %1045 = vperm.xlu0 %1044, %v983
  %v1046 = vpop.permute.xlu0 %1045
  %1049 = vset.pattern.permute.xlu0 0
  %1050 = vperm.xlu0 %1049, %v984
  %v1051 = vpop.permute.xlu0 %1050
  %1054 = vset.pattern.permute.xlu0 0
  %1055 = vperm.xlu0 %1054, %v985
  %v1056 = vpop.permute.xlu0 %1055
  %1059 = vset.pattern.permute.xlu0 0
  %1060 = vperm.xlu0 %1059, %v986
  %v1061 = vpop.permute.xlu0 %1060
  %1064 = vset.pattern.permute.xlu0 0
  %1065 = vperm.xlu0 %1064, %v987
  %v1066 = vpop.permute.xlu0 %1065
  %v1068 = vmul.f32 %v956, %v991
  %v1069 = vmul.f32 %v957, %v996
  %v1070 = vmul.f32 %v958, %v1001
  %v1071 = vmul.f32 %v959, %v1006
  %v1072 = vmul.f32 %v960, %v1011
  %v1073 = vmul.f32 %v961, %v1016
  %v1074 = vmul.f32 %v962, %v1021
  %v1075 = vmul.f32 %v963, %v1026
  %v1076 = vmul.f32 %v964, %v1031
  %v1077 = vmul.f32 %v965, %v1036
  %v1078 = vmul.f32 %v966, %v1041
  %v1079 = vmul.f32 %v967, %v1046
  %v1080 = vmul.f32 %v968, %v1051
  %v1081 = vmul.f32 %v969, %v1056
  %v1082 = vmul.f32 %v970, %v1061
  %v1083 = vmul.f32 %v971, %v1066
  %v1084 = vpack.c.bf16 %v1068, %v1068
  %v1085 = vpack.c.bf16 %v1069, %v1069
  %v1086 = vpack.c.bf16 %v1070, %v1070
  %v1087 = vpack.c.bf16 %v1071, %v1071
  %v1088 = vpack.c.bf16 %v1072, %v1072
  %v1089 = vpack.c.bf16 %v1073, %v1073
  %v1090 = vpack.c.bf16 %v1074, %v1074
  %v1091 = vpack.c.bf16 %v1075, %v1075
  %v1092 = vpack.c.bf16 %v1076, %v1076
  %v1093 = vpack.c.bf16 %v1077, %v1077
  %v1094 = vpack.c.bf16 %v1078, %v1078
  %v1095 = vpack.c.bf16 %v1079, %v1079
  %v1096 = vpack.c.bf16 %v1080, %v1080
  %v1097 = vpack.c.bf16 %v1081, %v1081
  %v1098 = vpack.c.bf16 %v1082, %v1082
  %v1099 = vpack.c.bf16 %v1083, %v1083
  %1100 = vst [vmem:[%s9] sm:$0xf] %v1084
  %1101 = vst [vmem:[%s9 + $0x4] sm:$0xf] %v1085
  %1102 = vst [vmem:[%s9 + $0x8] sm:$0xf] %v1086
  %1103 = vst [vmem:[%s9 + $0xc] sm:$0xf] %v1087
  %1104 = vst [vmem:[%s9 + $0x10] sm:$0xf] %v1088
  %1105 = vst [vmem:[%s9 + $0x14] sm:$0xf] %v1089
  %1106 = vst [vmem:[%s9 + $0x18] sm:$0xf] %v1090
  %1107 = vst [vmem:[%s9 + $0x1c] sm:$0xf] %v1091
  %1108 = vst [vmem:[%s9 + $0x20] sm:$0xf] %v1092
  %1109 = vst [vmem:[%s9 + $0x24] sm:$0xf] %v1093
  %1110 = vst [vmem:[%s9 + $0x28] sm:$0xf] %v1094
  %1111 = vst [vmem:[%s9 + $0x2c] sm:$0xf] %v1095
  %1112 = vst [vmem:[%s9 + $0x30] sm:$0xf] %v1096
  %1113 = vst [vmem:[%s9 + $0x34] sm:$0xf] %v1097
  %1114 = vst [vmem:[%s9 + $0x38] sm:$0xf] %v1098
  %1115 = vst [vmem:[%s9 + $0x3c] sm:$0xf] %v1099
  // Predicated region
  $region38: #{skip_one_step3_forward.3} parent=0 // pred_check
    _
  $region39: #{skip_one_step3_forward.3} parent=0 // pred_check_branch
    %1117 = sbr.rel (0) target = $region41
  $region40: #{skip_one_step3_forward.3} parent=0 // pred_region
    _
  $region41: #{skip_one_step3_forward.3} parent=0 // pred_fallthru
    _
  // Predicated region
  $region42: #{skip_one_step3_forward.3} parent=0 // pred_check
    _
  $region43: #{skip_one_step3_forward.3} parent=0 // pred_check_branch
    %1119 = sbr.rel (0) target = $region45
  $region44: #{skip_one_step3_forward.3} parent=0 // pred_region
    _
  $region45: #{skip_one_step3_forward.3} parent=0 // pred_fallthru
    _

// kernel: skip_one_step3_forward.4
$region0: #{skip_one_step3_forward.4}
  #allocation0 [shape = 'u32[]', space=smem, size = 0x4, offset = 0x4, fixed_abs, tag = 'smem constant byte address 0x4 - core index']
  #allocation1 [shape = 'u32[72,128]{1,0:T(1,128)}', space=vmem, size = 0x9000, scoped, tag = 'internal scratch']
  %s0 = inlined_call_operand.vmem [shape: bf16[64,7424], index: 0, kind: input, shape index: {}]
  %s1 = inlined_call_operand.vmem [shape: bf16[64,32], index: 1, kind: input, shape index: {}]
  %s2 = inlined_call_operand.vmem [shape: f32[64,1], index: 2, kind: input, shape index: {}]
  %s3 = inlined_call_operand.vmem [shape: bf16[7424,128], index: 3, kind: input, shape index: {}]
  %s4 = inlined_call_operand.vmem [shape: f32[1,128], index: 4, kind: input, shape index: {}]
  %s5 = inlined_call_operand.vmem [shape: f32[1,128], index: 5, kind: input, shape index: {}]
  %s6 = inlined_call_operand.vmem [shape: bf16[32,128], index: 6, kind: input, shape index: {}]
  %s7 = inlined_call_operand.vmem [shape: f32[1,128], index: 7, kind: input, shape index: {}]
  %s8 = inlined_call_operand.vmem [shape: f32[1,128], index: 8, kind: input, shape index: {}]
  %s9 = inlined_call_operand.vmem [shape: bf16[64,128], index: 9, kind: output, shape index: {}]
  %s10 = sld [smem:[#allocation0]]
  $region46: #{skip_one_step3_forward.4} parent=0
    _
  %s12 = ssub.s32 1, %s10
  %s13 = scalar_select 0, %s12, %s10
  // Predicated region
  $region2: #{skip_one_step3_forward.4} parent=0 // pred_check
    _
  $region3: #{skip_one_step3_forward.4} parent=0 // pred_check_branch
    %15 = sbr.rel (0) target = $region5
  $region4: #{skip_one_step3_forward.4} parent=0 // pred_region
    _
  $region5: #{skip_one_step3_forward.4} parent=0 // pred_fallthru
    _
  // Predicated region
  $region6: #{skip_one_step3_forward.4} parent=0 // pred_check
    _
  $region7: #{skip_one_step3_forward.4} parent=0 // pred_check_branch
    %17 = sbr.rel (0) target = $region9
  $region8: #{skip_one_step3_forward.4} parent=0 // pred_region
    _
  $region9: #{skip_one_step3_forward.4} parent=0 // pred_fallthru
    _
  // Predicated region
  $region10: #{skip_one_step3_forward.4} parent=0 // pred_check
    _
  $region11: #{skip_one_step3_forward.4} parent=0 // pred_check_branch
    %19 = sbr.rel (0) target = $region13
  $region12: #{skip_one_step3_forward.4} parent=0 // pred_region
    _
  $region13: #{skip_one_step3_forward.4} parent=0 // pred_fallthru
    _
  // Predicated region
  $region14: #{skip_one_step3_forward.4} parent=0 // pred_check
    _
  $region15: #{skip_one_step3_forward.4} parent=0 // pred_check_branch
    %21 = sbr.rel (0) target = $region17
  $region16: #{skip_one_step3_forward.4} parent=0 // pred_region
    _
  $region17: #{skip_one_step3_forward.4} parent=0 // pred_fallthru
    _
  // Predicated region
  $region18: #{skip_one_step3_forward.4} parent=0 // pred_check
    _
  $region19: #{skip_one_step3_forward.4} parent=0 // pred_check_branch
    %23 = sbr.rel (0) target = $region21
  $region20: #{skip_one_step3_forward.4} parent=0 // pred_region
    _
  $region21: #{skip_one_step3_forward.4} parent=0 // pred_fallthru
    _
  // Predicated region
  $region22: #{skip_one_step3_forward.4} parent=0 // pred_check
    _
  $region23: #{skip_one_step3_forward.4} parent=0 // pred_check_branch
    %25 = sbr.rel (0) target = $region25
  $region24: #{skip_one_step3_forward.4} parent=0 // pred_region
    _
  $region25: #{skip_one_step3_forward.4} parent=0 // pred_fallthru
    _
  // Predicated region
  $region26: #{skip_one_step3_forward.4} parent=0 // pred_check
    _
  $region27: #{skip_one_step3_forward.4} parent=0 // pred_check_branch
    %27 = sbr.rel (0) target = $region29
  $region28: #{skip_one_step3_forward.4} parent=0 // pred_region
    _
  $region29: #{skip_one_step3_forward.4} parent=0 // pred_fallthru
    _
  // Predicated region
  $region30: #{skip_one_step3_forward.4} parent=0 // pred_check
    _
  $region31: #{skip_one_step3_forward.4} parent=0 // pred_check_branch
    %29 = sbr.rel (0) target = $region33
  $region32: #{skip_one_step3_forward.4} parent=0 // pred_region
    _
  $region33: #{skip_one_step3_forward.4} parent=0 // pred_fallthru
    _
  // Predicated region
  $region34: #{skip_one_step3_forward.4} parent=0 // pred_check
    _
  $region35: #{skip_one_step3_forward.4} parent=0 // pred_check_branch
    %31 = sbr.rel (0) target = $region37
  $region36: #{skip_one_step3_forward.4} parent=0 // pred_region
    _
  $region37: #{skip_one_step3_forward.4} parent=0 // pred_fallthru
    _
  %v33 = vld [vmem:[%s0] sm:$0xff]
  %v34 = vld [vmem:[%s0 + $0x8] sm:$0xff]
  %v35 = vld [vmem:[%s0 + $0x10] sm:$0xff]
  %v36 = vld [vmem:[%s0 + $0x18] sm:$0xff]
  %v37 = vld [vmem:[%s0 + $0x20] sm:$0xff]
  %v38 = vld [vmem:[%s0 + $0x28] sm:$0xff]
  %v39 = vld [vmem:[%s0 + $0x30] sm:$0xff]
  %v40 = vld [vmem:[%s0 + $0x38] sm:$0xff]
  %v41 = vld [vmem:[%s0 + $0x40] sm:$0xff]
  %v42 = vld [vmem:[%s0 + $0x48] sm:$0xff]
  %v43 = vld [vmem:[%s0 + $0x50] sm:$0xff]
  %v44 = vld [vmem:[%s0 + $0x58] sm:$0xff]
  %v45 = vld [vmem:[%s0 + $0x60] sm:$0xff]
  %v46 = vld [vmem:[%s0 + $0x68] sm:$0xff]
  %v47 = vld [vmem:[%s0 + $0x70] sm:$0xff]
  %v48 = vld [vmem:[%s0 + $0x78] sm:$0xff]
  %v49 = vld [vmem:[%s0 + $0x80] sm:$0xff]
  %v50 = vld [vmem:[%s0 + $0x88] sm:$0xff]
  %v51 = vld [vmem:[%s0 + $0x90] sm:$0xff]
  %v52 = vld [vmem:[%s0 + $0x98] sm:$0xff]
  %v53 = vld [vmem:[%s0 + $0xa0] sm:$0xff]
  %v54 = vld [vmem:[%s0 + $0xa8] sm:$0xff]
  %v55 = vld [vmem:[%s0 + $0xb0] sm:$0xff]
  %v56 = vld [vmem:[%s0 + $0xb8] sm:$0xff]
  %v57 = vld [vmem:[%s0 + $0xc0] sm:$0xff]
  %v58 = vld [vmem:[%s0 + $0xc8] sm:$0xff]
  %v59 = vld [vmem:[%s0 + $0xd0] sm:$0xff]
  %v60 = vld [vmem:[%s0 + $0xd8] sm:$0xff]
  %v61 = vld [vmem:[%s0 + $0xe0] sm:$0xff]
  %v62 = vld [vmem:[%s0 + $0xe8] sm:$0xff]
  %v63 = vld [vmem:[%s0 + $0xf0] sm:$0xff]
  %v64 = vld [vmem:[%s0 + $0xf8] sm:$0xff]
  %v65 = vld [vmem:[%s0 + $0x100] sm:$0xff]
  %v66 = vld [vmem:[%s0 + $0x108] sm:$0xff]
  %v67 = vld [vmem:[%s0 + $0x110] sm:$0xff]
  %v68 = vld [vmem:[%s0 + $0x118] sm:$0xff]
  %v69 = vld [vmem:[%s0 + $0x120] sm:$0xff]
  %v70 = vld [vmem:[%s0 + $0x128] sm:$0xff]
  %v71 = vld [vmem:[%s0 + $0x130] sm:$0xff]
  %v72 = vld [vmem:[%s0 + $0x138] sm:$0xff]
  %v73 = vld [vmem:[%s0 + $0x140] sm:$0xff]
  %v74 = vld [vmem:[%s0 + $0x148] sm:$0xff]
  %v75 = vld [vmem:[%s0 + $0x150] sm:$0xff]
  %v76 = vld [vmem:[%s0 + $0x158] sm:$0xff]
  %v77 = vld [vmem:[%s0 + $0x160] sm:$0xff]
  %v78 = vld [vmem:[%s0 + $0x168] sm:$0xff]
  %v79 = vld [vmem:[%s0 + $0x170] sm:$0xff]
  %v80 = vld [vmem:[%s0 + $0x178] sm:$0xff]
  %v81 = vld [vmem:[%s0 + $0x180] sm:$0xff]
  %v82 = vld [vmem:[%s0 + $0x188] sm:$0xff]
  %v83 = vld [vmem:[%s0 + $0x190] sm:$0xff]
  %v84 = vld [vmem:[%s0 + $0x198] sm:$0xff]
  %v85 = vld [vmem:[%s0 + $0x1a0] sm:$0xff]
  %v86 = vld [vmem:[%s0 + $0x1a8] sm:$0xff]
  %v87 = vld [vmem:[%s0 + $0x1b0] sm:$0xff]
  %v88 = vld [vmem:[%s0 + $0x1b8] sm:$0xff]
  %v89 = vld [vmem:[%s0 + $0x1c0] sm:$0xff]
  %v90 = vld [vmem:[%s0 + $0x1c8] sm:$0xff]
  %v91 = vld [vmem:[%s0 + $0x1d0] sm:$0xff]
  %v92 = vld [vmem:[%s0 + $0x1d8] sm:$0xff]
  %v93 = vld [vmem:[%s0 + $0x1e0] sm:$0xff]
  %v94 = vld [vmem:[%s0 + $0x1e8] sm:$0xff]
  %v95 = vld [vmem:[%s0 + $0x1f0] sm:$0xff]
  %v96 = vld [vmem:[%s0 + $0x1f8] sm:$0xff]
  %v97 = vld [vmem:[%s0 + $0x200] sm:$0xff]
  %v98 = vld [vmem:[%s0 + $0x208] sm:$0xff]
  %v99 = vld [vmem:[%s0 + $0x210] sm:$0xff]
  %v100 = vld [vmem:[%s0 + $0x218] sm:$0xff]
  %v101 = vld [vmem:[%s0 + $0x220] sm:$0xff]
  %v102 = vld [vmem:[%s0 + $0x228] sm:$0xff]
  %v103 = vld [vmem:[%s0 + $0x230] sm:$0xff]
  %v104 = vld [vmem:[%s0 + $0x238] sm:$0xff]
  %v105 = vld [vmem:[%s0 + $0x240] sm:$0xff]
  %v106 = vld [vmem:[%s0 + $0x248] sm:$0xff]
  %v107 = vld [vmem:[%s0 + $0x250] sm:$0xff]
  %v108 = vld [vmem:[%s0 + $0x258] sm:$0xff]
  %v109 = vld [vmem:[%s0 + $0x260] sm:$0xff]
  %v110 = vld [vmem:[%s0 + $0x268] sm:$0xff]
  %v111 = vld [vmem:[%s0 + $0x270] sm:$0xff]
  %v112 = vld [vmem:[%s0 + $0x278] sm:$0xff]
  %v113 = vld [vmem:[%s0 + $0x280] sm:$0xff]
  %v114 = vld [vmem:[%s0 + $0x288] sm:$0xff]
  %v115 = vld [vmem:[%s0 + $0x290] sm:$0xff]
  %v116 = vld [vmem:[%s0 + $0x298] sm:$0xff]
  %v117 = vld [vmem:[%s0 + $0x2a0] sm:$0xff]
  %v118 = vld [vmem:[%s0 + $0x2a8] sm:$0xff]
  %v119 = vld [vmem:[%s0 + $0x2b0] sm:$0xff]
  %v120 = vld [vmem:[%s0 + $0x2b8] sm:$0xff]
  %v121 = vld [vmem:[%s0 + $0x2c0] sm:$0xff]
  %v122 = vld [vmem:[%s0 + $0x2c8] sm:$0xff]
  %v123 = vld [vmem:[%s0 + $0x2d0] sm:$0xff]
  %v124 = vld [vmem:[%s0 + $0x2d8] sm:$0xff]
  %v125 = vld [vmem:[%s0 + $0x2e0] sm:$0xff]
  %v126 = vld [vmem:[%s0 + $0x2e8] sm:$0xff]
  %v127 = vld [vmem:[%s0 + $0x2f0] sm:$0xff]
  %v128 = vld [vmem:[%s0 + $0x2f8] sm:$0xff]
  %v129 = vld [vmem:[%s0 + $0x300] sm:$0xff]
  %v130 = vld [vmem:[%s0 + $0x308] sm:$0xff]
  %v131 = vld [vmem:[%s0 + $0x310] sm:$0xff]
  %v132 = vld [vmem:[%s0 + $0x318] sm:$0xff]
  %v133 = vld [vmem:[%s0 + $0x320] sm:$0xff]
  %v134 = vld [vmem:[%s0 + $0x328] sm:$0xff]
  %v135 = vld [vmem:[%s0 + $0x330] sm:$0xff]
  %v136 = vld [vmem:[%s0 + $0x338] sm:$0xff]
  %v137 = vld [vmem:[%s0 + $0x340] sm:$0xff]
  %v138 = vld [vmem:[%s0 + $0x348] sm:$0xff]
  %v139 = vld [vmem:[%s0 + $0x350] sm:$0xff]
  %v140 = vld [vmem:[%s0 + $0x358] sm:$0xff]
  %v141 = vld [vmem:[%s0 + $0x360] sm:$0xff]
  %v142 = vld [vmem:[%s0 + $0x368] sm:$0xff]
  %v143 = vld [vmem:[%s0 + $0x370] sm:$0xff]
  %v144 = vld [vmem:[%s0 + $0x378] sm:$0xff]
  %v145 = vld [vmem:[%s0 + $0x380] sm:$0xff]
  %v146 = vld [vmem:[%s0 + $0x388] sm:$0xff]
  %v147 = vld [vmem:[%s0 + $0x390] sm:$0xff]
  %v148 = vld [vmem:[%s0 + $0x398] sm:$0xff]
  %v149 = vld [vmem:[%s0 + $0x3a0] sm:$0xff]
  %v150 = vld [vmem:[%s0 + $0x3a8] sm:$0xff]
  %v151 = vld [vmem:[%s0 + $0x3b0] sm:$0xff]
  %v152 = vld [vmem:[%s0 + $0x3b8] sm:$0xff]
  %v153 = vld [vmem:[%s0 + $0x3c0] sm:$0xff]
  %v154 = vld [vmem:[%s0 + $0x3c8] sm:$0xff]
  %v155 = vld [vmem:[%s0 + $0x3d0] sm:$0xff]
  %v156 = vld [vmem:[%s0 + $0x3d8] sm:$0xff]
  %v157 = vld [vmem:[%s0 + $0x3e0] sm:$0xff]
  %v158 = vld [vmem:[%s0 + $0x3e8] sm:$0xff]
  %v159 = vld [vmem:[%s0 + $0x3f0] sm:$0xff]
  %v160 = vld [vmem:[%s0 + $0x3f8] sm:$0xff]
  %v161 = vld [vmem:[%s0 + $0x400] sm:$0xff]
  %v162 = vld [vmem:[%s0 + $0x408] sm:$0xff]
  %v163 = vld [vmem:[%s0 + $0x410] sm:$0xff]
  %v164 = vld [vmem:[%s0 + $0x418] sm:$0xff]
  %v165 = vld [vmem:[%s0 + $0x420] sm:$0xff]
  %v166 = vld [vmem:[%s0 + $0x428] sm:$0xff]
  %v167 = vld [vmem:[%s0 + $0x430] sm:$0xff]
  %v168 = vld [vmem:[%s0 + $0x438] sm:$0xff]
  %v169 = vld [vmem:[%s0 + $0x440] sm:$0xff]
  %v170 = vld [vmem:[%s0 + $0x448] sm:$0xff]
  %v171 = vld [vmem:[%s0 + $0x450] sm:$0xff]
  %v172 = vld [vmem:[%s0 + $0x458] sm:$0xff]
  %v173 = vld [vmem:[%s0 + $0x460] sm:$0xff]
  %v174 = vld [vmem:[%s0 + $0x468] sm:$0xff]
  %v175 = vld [vmem:[%s0 + $0x470] sm:$0xff]
  %v176 = vld [vmem:[%s0 + $0x478] sm:$0xff]
  %v177 = vld [vmem:[%s0 + $0x480] sm:$0xff]
  %v178 = vld [vmem:[%s0 + $0x488] sm:$0xff]
  %v179 = vld [vmem:[%s0 + $0x490] sm:$0xff]
  %v180 = vld [vmem:[%s0 + $0x498] sm:$0xff]
  %v181 = vld [vmem:[%s0 + $0x4a0] sm:$0xff]
  %v182 = vld [vmem:[%s0 + $0x4a8] sm:$0xff]
  %v183 = vld [vmem:[%s0 + $0x4b0] sm:$0xff]
  %v184 = vld [vmem:[%s0 + $0x4b8] sm:$0xff]
  %v185 = vld [vmem:[%s0 + $0x4c0] sm:$0xff]
  %v186 = vld [vmem:[%s0 + $0x4c8] sm:$0xff]
  %v187 = vld [vmem:[%s0 + $0x4d0] sm:$0xff]
  %v188 = vld [vmem:[%s0 + $0x4d8] sm:$0xff]
  %v189 = vld [vmem:[%s0 + $0x4e0] sm:$0xff]
  %v190 = vld [vmem:[%s0 + $0x4e8] sm:$0xff]
  %v191 = vld [vmem:[%s0 + $0x4f0] sm:$0xff]
  %v192 = vld [vmem:[%s0 + $0x4f8] sm:$0xff]
  %v193 = vld [vmem:[%s0 + $0x500] sm:$0xff]
  %v194 = vld [vmem:[%s0 + $0x508] sm:$0xff]
  %v195 = vld [vmem:[%s0 + $0x510] sm:$0xff]
  %v196 = vld [vmem:[%s0 + $0x518] sm:$0xff]
  %v197 = vld [vmem:[%s0 + $0x520] sm:$0xff]
  %v198 = vld [vmem:[%s0 + $0x528] sm:$0xff]
  %v199 = vld [vmem:[%s0 + $0x530] sm:$0xff]
  %v200 = vld [vmem:[%s0 + $0x538] sm:$0xff]
  %v201 = vld [vmem:[%s0 + $0x540] sm:$0xff]
  %v202 = vld [vmem:[%s0 + $0x548] sm:$0xff]
  %v203 = vld [vmem:[%s0 + $0x550] sm:$0xff]
  %v204 = vld [vmem:[%s0 + $0x558] sm:$0xff]
  %v205 = vld [vmem:[%s0 + $0x560] sm:$0xff]
  %v206 = vld [vmem:[%s0 + $0x568] sm:$0xff]
  %v207 = vld [vmem:[%s0 + $0x570] sm:$0xff]
  %v208 = vld [vmem:[%s0 + $0x578] sm:$0xff]
  %v209 = vld [vmem:[%s0 + $0x580] sm:$0xff]
  %v210 = vld [vmem:[%s0 + $0x588] sm:$0xff]
  %v211 = vld [vmem:[%s0 + $0x590] sm:$0xff]
  %v212 = vld [vmem:[%s0 + $0x598] sm:$0xff]
  %v213 = vld [vmem:[%s0 + $0x5a0] sm:$0xff]
  %v214 = vld [vmem:[%s0 + $0x5a8] sm:$0xff]
  %v215 = vld [vmem:[%s0 + $0x5b0] sm:$0xff]
  %v216 = vld [vmem:[%s0 + $0x5b8] sm:$0xff]
  %v217 = vld [vmem:[%s0 + $0x5c0] sm:$0xff]
  %v218 = vld [vmem:[%s0 + $0x5c8] sm:$0xff]
  %v219 = vld [vmem:[%s0 + $0x5d0] sm:$0xff]
  %v220 = vld [vmem:[%s0 + $0x5d8] sm:$0xff]
  %v221 = vld [vmem:[%s0 + $0x5e0] sm:$0xff]
  %v222 = vld [vmem:[%s0 + $0x5e8] sm:$0xff]
  %v223 = vld [vmem:[%s0 + $0x5f0] sm:$0xff]
  %v224 = vld [vmem:[%s0 + $0x5f8] sm:$0xff]
  %v225 = vld [vmem:[%s0 + $0x600] sm:$0xff]
  %v226 = vld [vmem:[%s0 + $0x608] sm:$0xff]
  %v227 = vld [vmem:[%s0 + $0x610] sm:$0xff]
  %v228 = vld [vmem:[%s0 + $0x618] sm:$0xff]
  %v229 = vld [vmem:[%s0 + $0x620] sm:$0xff]
  %v230 = vld [vmem:[%s0 + $0x628] sm:$0xff]
  %v231 = vld [vmem:[%s0 + $0x630] sm:$0xff]
  %v232 = vld [vmem:[%s0 + $0x638] sm:$0xff]
  %v233 = vld [vmem:[%s0 + $0x640] sm:$0xff]
  %v234 = vld [vmem:[%s0 + $0x648] sm:$0xff]
  %v235 = vld [vmem:[%s0 + $0x650] sm:$0xff]
  %v236 = vld [vmem:[%s0 + $0x658] sm:$0xff]
  %v237 = vld [vmem:[%s0 + $0x660] sm:$0xff]
  %v238 = vld [vmem:[%s0 + $0x668] sm:$0xff]
  %v239 = vld [vmem:[%s0 + $0x670] sm:$0xff]
  %v240 = vld [vmem:[%s0 + $0x678] sm:$0xff]
  %v241 = vld [vmem:[%s0 + $0x680] sm:$0xff]
  %v242 = vld [vmem:[%s0 + $0x688] sm:$0xff]
  %v243 = vld [vmem:[%s0 + $0x690] sm:$0xff]
  %v244 = vld [vmem:[%s0 + $0x698] sm:$0xff]
  %v245 = vld [vmem:[%s0 + $0x6a0] sm:$0xff]
  %v246 = vld [vmem:[%s0 + $0x6a8] sm:$0xff]
  %v247 = vld [vmem:[%s0 + $0x6b0] sm:$0xff]
  %v248 = vld [vmem:[%s0 + $0x6b8] sm:$0xff]
  %v249 = vld [vmem:[%s0 + $0x6c0] sm:$0xff]
  %v250 = vld [vmem:[%s0 + $0x6c8] sm:$0xff]
  %v251 = vld [vmem:[%s0 + $0x6d0] sm:$0xff]
  %v252 = vld [vmem:[%s0 + $0x6d8] sm:$0xff]
  %v253 = vld [vmem:[%s0 + $0x6e0] sm:$0xff]
  %v254 = vld [vmem:[%s0 + $0x6e8] sm:$0xff]
  %v255 = vld [vmem:[%s0 + $0x6f0] sm:$0xff]
  %v256 = vld [vmem:[%s0 + $0x6f8] sm:$0xff]
  %v257 = vld [vmem:[%s0 + $0x700] sm:$0xff]
  %v258 = vld [vmem:[%s0 + $0x708] sm:$0xff]
  %v259 = vld [vmem:[%s0 + $0x710] sm:$0xff]
  %v260 = vld [vmem:[%s0 + $0x718] sm:$0xff]
  %v261 = vld [vmem:[%s0 + $0x720] sm:$0xff]
  %v262 = vld [vmem:[%s0 + $0x728] sm:$0xff]
  %v263 = vld [vmem:[%s0 + $0x730] sm:$0xff]
  %v264 = vld [vmem:[%s0 + $0x738] sm:$0xff]
  %v265 = vld [vmem:[%s3] sm:$0xf]
  %v266 = vld [vmem:[%s3 + $0x4] sm:$0xf]
  %v267 = vld [vmem:[%s3 + $0x8] sm:$0xf]
  %v268 = vld [vmem:[%s3 + $0xc] sm:$0xf]
  %v269 = vld [vmem:[%s3 + $0x10] sm:$0xf]
  %v270 = vld [vmem:[%s3 + $0x14] sm:$0xf]
  %v271 = vld [vmem:[%s3 + $0x18] sm:$0xf]
  %v272 = vld [vmem:[%s3 + $0x1c] sm:$0xf]
  %v273 = vld [vmem:[%s3 + $0x20] sm:$0xf]
  %v274 = vld [vmem:[%s3 + $0x24] sm:$0xf]
  %v275 = vld [vmem:[%s3 + $0x28] sm:$0xf]
  %v276 = vld [vmem:[%s3 + $0x2c] sm:$0xf]
  %v277 = vld [vmem:[%s3 + $0x30] sm:$0xf]
  %v278 = vld [vmem:[%s3 + $0x34] sm:$0xf]
  %v279 = vld [vmem:[%s3 + $0x38] sm:$0xf]
  %v280 = vld [vmem:[%s3 + $0x3c] sm:$0xf]
  %v281 = vld [vmem:[%s3 + $0x40] sm:$0xf]
  %v282 = vld [vmem:[%s3 + $0x44] sm:$0xf]
  %v283 = vld [vmem:[%s3 + $0x48] sm:$0xf]
  %v284 = vld [vmem:[%s3 + $0x4c] sm:$0xf]
  %v285 = vld [vmem:[%s3 + $0x50] sm:$0xf]
  %v286 = vld [vmem:[%s3 + $0x54] sm:$0xf]
  %v287 = vld [vmem:[%s3 + $0x58] sm:$0xf]
  %v288 = vld [vmem:[%s3 + $0x5c] sm:$0xf]
  %v289 = vld [vmem:[%s3 + $0x60] sm:$0xf]
  %v290 = vld [vmem:[%s3 + $0x64] sm:$0xf]
  %v291 = vld [vmem:[%s3 + $0x68] sm:$0xf]
  %v292 = vld [vmem:[%s3 + $0x6c] sm:$0xf]
  %v293 = vld [vmem:[%s3 + $0x70] sm:$0xf]
  %v294 = vld [vmem:[%s3 + $0x74] sm:$0xf]
  %v295 = vld [vmem:[%s3 + $0x78] sm:$0xf]
  %v296 = vld [vmem:[%s3 + $0x7c] sm:$0xf]
  %v297 = vld [vmem:[%s3 + $0x80] sm:$0xf]
  %v298 = vld [vmem:[%s3 + $0x84] sm:$0xf]
  %v299 = vld [vmem:[%s3 + $0x88] sm:$0xf]
  %v300 = vld [vmem:[%s3 + $0x8c] sm:$0xf]
  %v301 = vld [vmem:[%s3 + $0x90] sm:$0xf]
  %v302 = vld [vmem:[%s3 + $0x94] sm:$0xf]
  %v303 = vld [vmem:[%s3 + $0x98] sm:$0xf]
  %v304 = vld [vmem:[%s3 + $0x9c] sm:$0xf]
  %v305 = vld [vmem:[%s3 + $0xa0] sm:$0xf]
  %v306 = vld [vmem:[%s3 + $0xa4] sm:$0xf]
  %v307 = vld [vmem:[%s3 + $0xa8] sm:$0xf]
  %v308 = vld [vmem:[%s3 + $0xac] sm:$0xf]
  %v309 = vld [vmem:[%s3 + $0xb0] sm:$0xf]
  %v310 = vld [vmem:[%s3 + $0xb4] sm:$0xf]
  %v311 = vld [vmem:[%s3 + $0xb8] sm:$0xf]
  %v312 = vld [vmem:[%s3 + $0xbc] sm:$0xf]
  %v313 = vld [vmem:[%s3 + $0xc0] sm:$0xf]
  %v314 = vld [vmem:[%s3 + $0xc4] sm:$0xf]
  %v315 = vld [vmem:[%s3 + $0xc8] sm:$0xf]
  %v316 = vld [vmem:[%s3 + $0xcc] sm:$0xf]
  %v317 = vld [vmem:[%s3 + $0xd0] sm:$0xf]
  %v318 = vld [vmem:[%s3 + $0xd4] sm:$0xf]
  %v319 = vld [vmem:[%s3 + $0xd8] sm:$0xf]
  %v320 = vld [vmem:[%s3 + $0xdc] sm:$0xf]
  %v321 = vld [vmem:[%s3 + $0xe0] sm:$0xf]
  %v322 = vld [vmem:[%s3 + $0xe4] sm:$0xf]
  %v323 = vld [vmem:[%s3 + $0xe8] sm:$0xf]
  %v324 = vld [vmem:[%s3 + $0xec] sm:$0xf]
  %v325 = vld [vmem:[%s3 + $0xf0] sm:$0xf]
  %v326 = vld [vmem:[%s3 + $0xf4] sm:$0xf]
  %v327 = vld [vmem:[%s3 + $0xf8] sm:$0xf]
  %v328 = vld [vmem:[%s3 + $0xfc] sm:$0xf]
  %v329 = vld [vmem:[%s3 + $0x100] sm:$0xf]
  %v330 = vld [vmem:[%s3 + $0x104] sm:$0xf]
  %v331 = vld [vmem:[%s3 + $0x108] sm:$0xf]
  %v332 = vld [vmem:[%s3 + $0x10c] sm:$0xf]
  %v333 = vld [vmem:[%s3 + $0x110] sm:$0xf]
  %v334 = vld [vmem:[%s3 + $0x114] sm:$0xf]
  %v335 = vld [vmem:[%s3 + $0x118] sm:$0xf]
  %v336 = vld [vmem:[%s3 + $0x11c] sm:$0xf]
  %v337 = vld [vmem:[%s3 + $0x120] sm:$0xf]
  %v338 = vld [vmem:[%s3 + $0x124] sm:$0xf]
  %v339 = vld [vmem:[%s3 + $0x128] sm:$0xf]
  %v340 = vld [vmem:[%s3 + $0x12c] sm:$0xf]
  %v341 = vld [vmem:[%s3 + $0x130] sm:$0xf]
  %v342 = vld [vmem:[%s3 + $0x134] sm:$0xf]
  %v343 = vld [vmem:[%s3 + $0x138] sm:$0xf]
  %v344 = vld [vmem:[%s3 + $0x13c] sm:$0xf]
  %v345 = vld [vmem:[%s3 + $0x140] sm:$0xf]
  %v346 = vld [vmem:[%s3 + $0x144] sm:$0xf]
  %v347 = vld [vmem:[%s3 + $0x148] sm:$0xf]
  %v348 = vld [vmem:[%s3 + $0x14c] sm:$0xf]
  %v349 = vld [vmem:[%s3 + $0x150] sm:$0xf]
  %v350 = vld [vmem:[%s3 + $0x154] sm:$0xf]
  %v351 = vld [vmem:[%s3 + $0x158] sm:$0xf]
  %v352 = vld [vmem:[%s3 + $0x15c] sm:$0xf]
  %v353 = vld [vmem:[%s3 + $0x160] sm:$0xf]
  %v354 = vld [vmem:[%s3 + $0x164] sm:$0xf]
  %v355 = vld [vmem:[%s3 + $0x168] sm:$0xf]
  %v356 = vld [vmem:[%s3 + $0x16c] sm:$0xf]
  %v357 = vld [vmem:[%s3 + $0x170] sm:$0xf]
  %v358 = vld [vmem:[%s3 + $0x174] sm:$0xf]
  %v359 = vld [vmem:[%s3 + $0x178] sm:$0xf]
  %v360 = vld [vmem:[%s3 + $0x17c] sm:$0xf]
  %v361 = vld [vmem:[%s3 + $0x180] sm:$0xf]
  %v362 = vld [vmem:[%s3 + $0x184] sm:$0xf]
  %v363 = vld [vmem:[%s3 + $0x188] sm:$0xf]
  %v364 = vld [vmem:[%s3 + $0x18c] sm:$0xf]
  %v365 = vld [vmem:[%s3 + $0x190] sm:$0xf]
  %v366 = vld [vmem:[%s3 + $0x194] sm:$0xf]
  %v367 = vld [vmem:[%s3 + $0x198] sm:$0xf]
  %v368 = vld [vmem:[%s3 + $0x19c] sm:$0xf]
  %v369 = vld [vmem:[%s3 + $0x1a0] sm:$0xf]
  %v370 = vld [vmem:[%s3 + $0x1a4] sm:$0xf]
  %v371 = vld [vmem:[%s3 + $0x1a8] sm:$0xf]
  %v372 = vld [vmem:[%s3 + $0x1ac] sm:$0xf]
  %v373 = vld [vmem:[%s3 + $0x1b0] sm:$0xf]
  %v374 = vld [vmem:[%s3 + $0x1b4] sm:$0xf]
  %v375 = vld [vmem:[%s3 + $0x1b8] sm:$0xf]
  %v376 = vld [vmem:[%s3 + $0x1bc] sm:$0xf]
  %v377 = vld [vmem:[%s3 + $0x1c0] sm:$0xf]
  %v378 = vld [vmem:[%s3 + $0x1c4] sm:$0xf]
  %v379 = vld [vmem:[%s3 + $0x1c8] sm:$0xf]
  %v380 = vld [vmem:[%s3 + $0x1cc] sm:$0xf]
  %v381 = vld [vmem:[%s3 + $0x1d0] sm:$0xf]
  %v382 = vld [vmem:[%s3 + $0x1d4] sm:$0xf]
  %v383 = vld [vmem:[%s3 + $0x1d8] sm:$0xf]
  %v384 = vld [vmem:[%s3 + $0x1dc] sm:$0xf]
  %v385 = vld [vmem:[%s3 + $0x1e0] sm:$0xf]
  %v386 = vld [vmem:[%s3 + $0x1e4] sm:$0xf]
  %v387 = vld [vmem:[%s3 + $0x1e8] sm:$0xf]
  %v388 = vld [vmem:[%s3 + $0x1ec] sm:$0xf]
  %v389 = vld [vmem:[%s3 + $0x1f0] sm:$0xf]
  %v390 = vld [vmem:[%s3 + $0x1f4] sm:$0xf]
  %v391 = vld [vmem:[%s3 + $0x1f8] sm:$0xf]
  %v392 = vld [vmem:[%s3 + $0x1fc] sm:$0xf]
  %v393 = vld [vmem:[%s3 + $0x200] sm:$0xf]
  %v394 = vld [vmem:[%s3 + $0x204] sm:$0xf]
  %v395 = vld [vmem:[%s3 + $0x208] sm:$0xf]
  %v396 = vld [vmem:[%s3 + $0x20c] sm:$0xf]
  %v397 = vld [vmem:[%s3 + $0x210] sm:$0xf]
  %v398 = vld [vmem:[%s3 + $0x214] sm:$0xf]
  %v399 = vld [vmem:[%s3 + $0x218] sm:$0xf]
  %v400 = vld [vmem:[%s3 + $0x21c] sm:$0xf]
  %v401 = vld [vmem:[%s3 + $0x220] sm:$0xf]
  %v402 = vld [vmem:[%s3 + $0x224] sm:$0xf]
  %v403 = vld [vmem:[%s3 + $0x228] sm:$0xf]
  %v404 = vld [vmem:[%s3 + $0x22c] sm:$0xf]
  %v405 = vld [vmem:[%s3 + $0x230] sm:$0xf]
  %v406 = vld [vmem:[%s3 + $0x234] sm:$0xf]
  %v407 = vld [vmem:[%s3 + $0x238] sm:$0xf]
  %v408 = vld [vmem:[%s3 + $0x23c] sm:$0xf]
  %v409 = vld [vmem:[%s3 + $0x240] sm:$0xf]
  %v410 = vld [vmem:[%s3 + $0x244] sm:$0xf]
  %v411 = vld [vmem:[%s3 + $0x248] sm:$0xf]
  %v412 = vld [vmem:[%s3 + $0x24c] sm:$0xf]
  %v413 = vld [vmem:[%s3 + $0x250] sm:$0xf]
  %v414 = vld [vmem:[%s3 + $0x254] sm:$0xf]
  %v415 = vld [vmem:[%s3 + $0x258] sm:$0xf]
  %v416 = vld [vmem:[%s3 + $0x25c] sm:$0xf]
  %v417 = vld [vmem:[%s3 + $0x260] sm:$0xf]
  %v418 = vld [vmem:[%s3 + $0x264] sm:$0xf]
  %v419 = vld [vmem:[%s3 + $0x268] sm:$0xf]
  %v420 = vld [vmem:[%s3 + $0x26c] sm:$0xf]
  %v421 = vld [vmem:[%s3 + $0x270] sm:$0xf]
  %v422 = vld [vmem:[%s3 + $0x274] sm:$0xf]
  %v423 = vld [vmem:[%s3 + $0x278] sm:$0xf]
  %v424 = vld [vmem:[%s3 + $0x27c] sm:$0xf]
  %v425 = vld [vmem:[%s3 + $0x280] sm:$0xf]
  %v426 = vld [vmem:[%s3 + $0x284] sm:$0xf]
  %v427 = vld [vmem:[%s3 + $0x288] sm:$0xf]
  %v428 = vld [vmem:[%s3 + $0x28c] sm:$0xf]
  %v429 = vld [vmem:[%s3 + $0x290] sm:$0xf]
  %v430 = vld [vmem:[%s3 + $0x294] sm:$0xf]
  %v431 = vld [vmem:[%s3 + $0x298] sm:$0xf]
  %v432 = vld [vmem:[%s3 + $0x29c] sm:$0xf]
  %v433 = vld [vmem:[%s3 + $0x2a0] sm:$0xf]
  %v434 = vld [vmem:[%s3 + $0x2a4] sm:$0xf]
  %v435 = vld [vmem:[%s3 + $0x2a8] sm:$0xf]
  %v436 = vld [vmem:[%s3 + $0x2ac] sm:$0xf]
  %v437 = vld [vmem:[%s3 + $0x2b0] sm:$0xf]
  %v438 = vld [vmem:[%s3 + $0x2b4] sm:$0xf]
  %v439 = vld [vmem:[%s3 + $0x2b8] sm:$0xf]
  %v440 = vld [vmem:[%s3 + $0x2bc] sm:$0xf]
  %v441 = vld [vmem:[%s3 + $0x2c0] sm:$0xf]
  %v442 = vld [vmem:[%s3 + $0x2c4] sm:$0xf]
  %v443 = vld [vmem:[%s3 + $0x2c8] sm:$0xf]
  %v444 = vld [vmem:[%s3 + $0x2cc] sm:$0xf]
  %v445 = vld [vmem:[%s3 + $0x2d0] sm:$0xf]
  %v446 = vld [vmem:[%s3 + $0x2d4] sm:$0xf]
  %v447 = vld [vmem:[%s3 + $0x2d8] sm:$0xf]
  %v448 = vld [vmem:[%s3 + $0x2dc] sm:$0xf]
  %v449 = vld [vmem:[%s3 + $0x2e0] sm:$0xf]
  %v450 = vld [vmem:[%s3 + $0x2e4] sm:$0xf]
  %v451 = vld [vmem:[%s3 + $0x2e8] sm:$0xf]
  %v452 = vld [vmem:[%s3 + $0x2ec] sm:$0xf]
  %v453 = vld [vmem:[%s3 + $0x2f0] sm:$0xf]
  %v454 = vld [vmem:[%s3 + $0x2f4] sm:$0xf]
  %v455 = vld [vmem:[%s3 + $0x2f8] sm:$0xf]
  %v456 = vld [vmem:[%s3 + $0x2fc] sm:$0xf]
  %v457 = vld [vmem:[%s3 + $0x300] sm:$0xf]
  %v458 = vld [vmem:[%s3 + $0x304] sm:$0xf]
  %v459 = vld [vmem:[%s3 + $0x308] sm:$0xf]
  %v460 = vld [vmem:[%s3 + $0x30c] sm:$0xf]
  %v461 = vld [vmem:[%s3 + $0x310] sm:$0xf]
  %v462 = vld [vmem:[%s3 + $0x314] sm:$0xf]
  %v463 = vld [vmem:[%s3 + $0x318] sm:$0xf]
  %v464 = vld [vmem:[%s3 + $0x31c] sm:$0xf]
  %v465 = vld [vmem:[%s3 + $0x320] sm:$0xf]
  %v466 = vld [vmem:[%s3 + $0x324] sm:$0xf]
  %v467 = vld [vmem:[%s3 + $0x328] sm:$0xf]
  %v468 = vld [vmem:[%s3 + $0x32c] sm:$0xf]
  %v469 = vld [vmem:[%s3 + $0x330] sm:$0xf]
  %v470 = vld [vmem:[%s3 + $0x334] sm:$0xf]
  %v471 = vld [vmem:[%s3 + $0x338] sm:$0xf]
  %v472 = vld [vmem:[%s3 + $0x33c] sm:$0xf]
  %v473 = vld [vmem:[%s3 + $0x340] sm:$0xf]
  %v474 = vld [vmem:[%s3 + $0x344] sm:$0xf]
  %v475 = vld [vmem:[%s3 + $0x348] sm:$0xf]
  %v476 = vld [vmem:[%s3 + $0x34c] sm:$0xf]
  %v477 = vld [vmem:[%s3 + $0x350] sm:$0xf]
  %v478 = vld [vmem:[%s3 + $0x354] sm:$0xf]
  %v479 = vld [vmem:[%s3 + $0x358] sm:$0xf]
  %v480 = vld [vmem:[%s3 + $0x35c] sm:$0xf]
  %v481 = vld [vmem:[%s3 + $0x360] sm:$0xf]
  %v482 = vld [vmem:[%s3 + $0x364] sm:$0xf]
  %v483 = vld [vmem:[%s3 + $0x368] sm:$0xf]
  %v484 = vld [vmem:[%s3 + $0x36c] sm:$0xf]
  %v485 = vld [vmem:[%s3 + $0x370] sm:$0xf]
  %v486 = vld [vmem:[%s3 + $0x374] sm:$0xf]
  %v487 = vld [vmem:[%s3 + $0x378] sm:$0xf]
  %v488 = vld [vmem:[%s3 + $0x37c] sm:$0xf]
  %v489 = vld [vmem:[%s3 + $0x380] sm:$0xf]
  %v490 = vld [vmem:[%s3 + $0x384] sm:$0xf]
  %v491 = vld [vmem:[%s3 + $0x388] sm:$0xf]
  %v492 = vld [vmem:[%s3 + $0x38c] sm:$0xf]
  %v493 = vld [vmem:[%s3 + $0x390] sm:$0xf]
  %v494 = vld [vmem:[%s3 + $0x394] sm:$0xf]
  %v495 = vld [vmem:[%s3 + $0x398] sm:$0xf]
  %v496 = vld [vmem:[%s3 + $0x39c] sm:$0xf]
  %v497 = vld [vmem:[%s3 + $0x3a0] sm:$0xf]
  %v498 = vld [vmem:[%s3 + $0x3a4] sm:$0xf]
  %v499 = vld [vmem:[%s3 + $0x3a8] sm:$0xf]
  %v500 = vld [vmem:[%s3 + $0x3ac] sm:$0xf]
  %v501 = vld [vmem:[%s3 + $0x3b0] sm:$0xf]
  %v502 = vld [vmem:[%s3 + $0x3b4] sm:$0xf]
  %v503 = vld [vmem:[%s3 + $0x3b8] sm:$0xf]
  %v504 = vld [vmem:[%s3 + $0x3bc] sm:$0xf]
  %v505 = vld [vmem:[%s3 + $0x3c0] sm:$0xf]
  %v506 = vld [vmem:[%s3 + $0x3c4] sm:$0xf]
  %v507 = vld [vmem:[%s3 + $0x3c8] sm:$0xf]
  %v508 = vld [vmem:[%s3 + $0x3cc] sm:$0xf]
  %v509 = vld [vmem:[%s3 + $0x3d0] sm:$0xf]
  %v510 = vld [vmem:[%s3 + $0x3d4] sm:$0xf]
  %v511 = vld [vmem:[%s3 + $0x3d8] sm:$0xf]
  %v512 = vld [vmem:[%s3 + $0x3dc] sm:$0xf]
  %v513 = vld [vmem:[%s3 + $0x3e0] sm:$0xf]
  %v514 = vld [vmem:[%s3 + $0x3e4] sm:$0xf]
  %v515 = vld [vmem:[%s3 + $0x3e8] sm:$0xf]
  %v516 = vld [vmem:[%s3 + $0x3ec] sm:$0xf]
  %v517 = vld [vmem:[%s3 + $0x3f0] sm:$0xf]
  %v518 = vld [vmem:[%s3 + $0x3f4] sm:$0xf]
  %v519 = vld [vmem:[%s3 + $0x3f8] sm:$0xf]
  %v520 = vld [vmem:[%s3 + $0x3fc] sm:$0xf]
  %v521 = vld [vmem:[%s3 + $0x400] sm:$0xf]
  %v522 = vld [vmem:[%s3 + $0x404] sm:$0xf]
  %v523 = vld [vmem:[%s3 + $0x408] sm:$0xf]
  %v524 = vld [vmem:[%s3 + $0x40c] sm:$0xf]
  %v525 = vld [vmem:[%s3 + $0x410] sm:$0xf]
  %v526 = vld [vmem:[%s3 + $0x414] sm:$0xf]
  %v527 = vld [vmem:[%s3 + $0x418] sm:$0xf]
  %v528 = vld [vmem:[%s3 + $0x41c] sm:$0xf]
  %v529 = vld [vmem:[%s3 + $0x420] sm:$0xf]
  %v530 = vld [vmem:[%s3 + $0x424] sm:$0xf]
  %v531 = vld [vmem:[%s3 + $0x428] sm:$0xf]
  %v532 = vld [vmem:[%s3 + $0x42c] sm:$0xf]
  %v533 = vld [vmem:[%s3 + $0x430] sm:$0xf]
  %v534 = vld [vmem:[%s3 + $0x434] sm:$0xf]
  %v535 = vld [vmem:[%s3 + $0x438] sm:$0xf]
  %v536 = vld [vmem:[%s3 + $0x43c] sm:$0xf]
  %v537 = vld [vmem:[%s3 + $0x440] sm:$0xf]
  %v538 = vld [vmem:[%s3 + $0x444] sm:$0xf]
  %v539 = vld [vmem:[%s3 + $0x448] sm:$0xf]
  %v540 = vld [vmem:[%s3 + $0x44c] sm:$0xf]
  %v541 = vld [vmem:[%s3 + $0x450] sm:$0xf]
  %v542 = vld [vmem:[%s3 + $0x454] sm:$0xf]
  %v543 = vld [vmem:[%s3 + $0x458] sm:$0xf]
  %v544 = vld [vmem:[%s3 + $0x45c] sm:$0xf]
  %v545 = vld [vmem:[%s3 + $0x460] sm:$0xf]
  %v546 = vld [vmem:[%s3 + $0x464] sm:$0xf]
  %v547 = vld [vmem:[%s3 + $0x468] sm:$0xf]
  %v548 = vld [vmem:[%s3 + $0x46c] sm:$0xf]
  %v549 = vld [vmem:[%s3 + $0x470] sm:$0xf]
  %v550 = vld [vmem:[%s3 + $0x474] sm:$0xf]
  %v551 = vld [vmem:[%s3 + $0x478] sm:$0xf]
  %v552 = vld [vmem:[%s3 + $0x47c] sm:$0xf]
  %v553 = vld [vmem:[%s3 + $0x480] sm:$0xf]
  %v554 = vld [vmem:[%s3 + $0x484] sm:$0xf]
  %v555 = vld [vmem:[%s3 + $0x488] sm:$0xf]
  %v556 = vld [vmem:[%s3 + $0x48c] sm:$0xf]
  %v557 = vld [vmem:[%s3 + $0x490] sm:$0xf]
  %v558 = vld [vmem:[%s3 + $0x494] sm:$0xf]
  %v559 = vld [vmem:[%s3 + $0x498] sm:$0xf]
  %v560 = vld [vmem:[%s3 + $0x49c] sm:$0xf]
  %v561 = vld [vmem:[%s3 + $0x4a0] sm:$0xf]
  %v562 = vld [vmem:[%s3 + $0x4a4] sm:$0xf]
  %v563 = vld [vmem:[%s3 + $0x4a8] sm:$0xf]
  %v564 = vld [vmem:[%s3 + $0x4ac] sm:$0xf]
  %v565 = vld [vmem:[%s3 + $0x4b0] sm:$0xf]
  %v566 = vld [vmem:[%s3 + $0x4b4] sm:$0xf]
  %v567 = vld [vmem:[%s3 + $0x4b8] sm:$0xf]
  %v568 = vld [vmem:[%s3 + $0x4bc] sm:$0xf]
  %v569 = vld [vmem:[%s3 + $0x4c0] sm:$0xf]
  %v570 = vld [vmem:[%s3 + $0x4c4] sm:$0xf]
  %v571 = vld [vmem:[%s3 + $0x4c8] sm:$0xf]
  %v572 = vld [vmem:[%s3 + $0x4cc] sm:$0xf]
  %v573 = vld [vmem:[%s3 + $0x4d0] sm:$0xf]
  %v574 = vld [vmem:[%s3 + $0x4d4] sm:$0xf]
  %v575 = vld [vmem:[%s3 + $0x4d8] sm:$0xf]
  %v576 = vld [vmem:[%s3 + $0x4dc] sm:$0xf]
  %v577 = vld [vmem:[%s3 + $0x4e0] sm:$0xf]
  %v578 = vld [vmem:[%s3 + $0x4e4] sm:$0xf]
  %v579 = vld [vmem:[%s3 + $0x4e8] sm:$0xf]
  %v580 = vld [vmem:[%s3 + $0x4ec] sm:$0xf]
  %v581 = vld [vmem:[%s3 + $0x4f0] sm:$0xf]
  %v582 = vld [vmem:[%s3 + $0x4f4] sm:$0xf]
  %v583 = vld [vmem:[%s3 + $0x4f8] sm:$0xf]
  %v584 = vld [vmem:[%s3 + $0x4fc] sm:$0xf]
  %v585 = vld [vmem:[%s3 + $0x500] sm:$0xf]
  %v586 = vld [vmem:[%s3 + $0x504] sm:$0xf]
  %v587 = vld [vmem:[%s3 + $0x508] sm:$0xf]
  %v588 = vld [vmem:[%s3 + $0x50c] sm:$0xf]
  %v589 = vld [vmem:[%s3 + $0x510] sm:$0xf]
  %v590 = vld [vmem:[%s3 + $0x514] sm:$0xf]
  %v591 = vld [vmem:[%s3 + $0x518] sm:$0xf]
  %v592 = vld [vmem:[%s3 + $0x51c] sm:$0xf]
  %v593 = vld [vmem:[%s3 + $0x520] sm:$0xf]
  %v594 = vld [vmem:[%s3 + $0x524] sm:$0xf]
  %v595 = vld [vmem:[%s3 + $0x528] sm:$0xf]
  %v596 = vld [vmem:[%s3 + $0x52c] sm:$0xf]
  %v597 = vld [vmem:[%s3 + $0x530] sm:$0xf]
  %v598 = vld [vmem:[%s3 + $0x534] sm:$0xf]
  %v599 = vld [vmem:[%s3 + $0x538] sm:$0xf]
  %v600 = vld [vmem:[%s3 + $0x53c] sm:$0xf]
  %v601 = vld [vmem:[%s3 + $0x540] sm:$0xf]
  %v602 = vld [vmem:[%s3 + $0x544] sm:$0xf]
  %v603 = vld [vmem:[%s3 + $0x548] sm:$0xf]
  %v604 = vld [vmem:[%s3 + $0x54c] sm:$0xf]
  %v605 = vld [vmem:[%s3 + $0x550] sm:$0xf]
  %v606 = vld [vmem:[%s3 + $0x554] sm:$0xf]
  %v607 = vld [vmem:[%s3 + $0x558] sm:$0xf]
  %v608 = vld [vmem:[%s3 + $0x55c] sm:$0xf]
  %v609 = vld [vmem:[%s3 + $0x560] sm:$0xf]
  %v610 = vld [vmem:[%s3 + $0x564] sm:$0xf]
  %v611 = vld [vmem:[%s3 + $0x568] sm:$0xf]
  %v612 = vld [vmem:[%s3 + $0x56c] sm:$0xf]
  %v613 = vld [vmem:[%s3 + $0x570] sm:$0xf]
  %v614 = vld [vmem:[%s3 + $0x574] sm:$0xf]
  %v615 = vld [vmem:[%s3 + $0x578] sm:$0xf]
  %v616 = vld [vmem:[%s3 + $0x57c] sm:$0xf]
  %v617 = vld [vmem:[%s3 + $0x580] sm:$0xf]
  %v618 = vld [vmem:[%s3 + $0x584] sm:$0xf]
  %v619 = vld [vmem:[%s3 + $0x588] sm:$0xf]
  %v620 = vld [vmem:[%s3 + $0x58c] sm:$0xf]
  %v621 = vld [vmem:[%s3 + $0x590] sm:$0xf]
  %v622 = vld [vmem:[%s3 + $0x594] sm:$0xf]
  %v623 = vld [vmem:[%s3 + $0x598] sm:$0xf]
  %v624 = vld [vmem:[%s3 + $0x59c] sm:$0xf]
  %v625 = vld [vmem:[%s3 + $0x5a0] sm:$0xf]
  %v626 = vld [vmem:[%s3 + $0x5a4] sm:$0xf]
  %v627 = vld [vmem:[%s3 + $0x5a8] sm:$0xf]
  %v628 = vld [vmem:[%s3 + $0x5ac] sm:$0xf]
  %v629 = vld [vmem:[%s3 + $0x5b0] sm:$0xf]
  %v630 = vld [vmem:[%s3 + $0x5b4] sm:$0xf]
  %v631 = vld [vmem:[%s3 + $0x5b8] sm:$0xf]
  %v632 = vld [vmem:[%s3 + $0x5bc] sm:$0xf]
  %v633 = vld [vmem:[%s3 + $0x5c0] sm:$0xf]
  %v634 = vld [vmem:[%s3 + $0x5c4] sm:$0xf]
  %v635 = vld [vmem:[%s3 + $0x5c8] sm:$0xf]
  %v636 = vld [vmem:[%s3 + $0x5cc] sm:$0xf]
  %v637 = vld [vmem:[%s3 + $0x5d0] sm:$0xf]
  %v638 = vld [vmem:[%s3 + $0x5d4] sm:$0xf]
  %v639 = vld [vmem:[%s3 + $0x5d8] sm:$0xf]
  %v640 = vld [vmem:[%s3 + $0x5dc] sm:$0xf]
  %v641 = vld [vmem:[%s3 + $0x5e0] sm:$0xf]
  %v642 = vld [vmem:[%s3 + $0x5e4] sm:$0xf]
  %v643 = vld [vmem:[%s3 + $0x5e8] sm:$0xf]
  %v644 = vld [vmem:[%s3 + $0x5ec] sm:$0xf]
  %v645 = vld [vmem:[%s3 + $0x5f0] sm:$0xf]
  %v646 = vld [vmem:[%s3 + $0x5f4] sm:$0xf]
  %v647 = vld [vmem:[%s3 + $0x5f8] sm:$0xf]
  %v648 = vld [vmem:[%s3 + $0x5fc] sm:$0xf]
  %v649 = vld [vmem:[%s3 + $0x600] sm:$0xf]
  %v650 = vld [vmem:[%s3 + $0x604] sm:$0xf]
  %v651 = vld [vmem:[%s3 + $0x608] sm:$0xf]
  %v652 = vld [vmem:[%s3 + $0x60c] sm:$0xf]
  %v653 = vld [vmem:[%s3 + $0x610] sm:$0xf]
  %v654 = vld [vmem:[%s3 + $0x614] sm:$0xf]
  %v655 = vld [vmem:[%s3 + $0x618] sm:$0xf]
  %v656 = vld [vmem:[%s3 + $0x61c] sm:$0xf]
  %v657 = vld [vmem:[%s3 + $0x620] sm:$0xf]
  %v658 = vld [vmem:[%s3 + $0x624] sm:$0xf]
  %v659 = vld [vmem:[%s3 + $0x628] sm:$0xf]
  %v660 = vld [vmem:[%s3 + $0x62c] sm:$0xf]
  %v661 = vld [vmem:[%s3 + $0x630] sm:$0xf]
  %v662 = vld [vmem:[%s3 + $0x634] sm:$0xf]
  %v663 = vld [vmem:[%s3 + $0x638] sm:$0xf]
  %v664 = vld [vmem:[%s3 + $0x63c] sm:$0xf]
  %v665 = vld [vmem:[%s3 + $0x640] sm:$0xf]
  %v666 = vld [vmem:[%s3 + $0x644] sm:$0xf]
  %v667 = vld [vmem:[%s3 + $0x648] sm:$0xf]
  %v668 = vld [vmem:[%s3 + $0x64c] sm:$0xf]
  %v669 = vld [vmem:[%s3 + $0x650] sm:$0xf]
  %v670 = vld [vmem:[%s3 + $0x654] sm:$0xf]
  %v671 = vld [vmem:[%s3 + $0x658] sm:$0xf]
  %v672 = vld [vmem:[%s3 + $0x65c] sm:$0xf]
  %v673 = vld [vmem:[%s3 + $0x660] sm:$0xf]
  %v674 = vld [vmem:[%s3 + $0x664] sm:$0xf]
  %v675 = vld [vmem:[%s3 + $0x668] sm:$0xf]
  %v676 = vld [vmem:[%s3 + $0x66c] sm:$0xf]
  %v677 = vld [vmem:[%s3 + $0x670] sm:$0xf]
  %v678 = vld [vmem:[%s3 + $0x674] sm:$0xf]
  %v679 = vld [vmem:[%s3 + $0x678] sm:$0xf]
  %v680 = vld [vmem:[%s3 + $0x67c] sm:$0xf]
  %v681 = vld [vmem:[%s3 + $0x680] sm:$0xf]
  %v682 = vld [vmem:[%s3 + $0x684] sm:$0xf]
  %v683 = vld [vmem:[%s3 + $0x688] sm:$0xf]
  %v684 = vld [vmem:[%s3 + $0x68c] sm:$0xf]
  %v685 = vld [vmem:[%s3 + $0x690] sm:$0xf]
  %v686 = vld [vmem:[%s3 + $0x694] sm:$0xf]
  %v687 = vld [vmem:[%s3 + $0x698] sm:$0xf]
  %v688 = vld [vmem:[%s3 + $0x69c] sm:$0xf]
  %v689 = vld [vmem:[%s3 + $0x6a0] sm:$0xf]
  %v690 = vld [vmem:[%s3 + $0x6a4] sm:$0xf]
  %v691 = vld [vmem:[%s3 + $0x6a8] sm:$0xf]
  %v692 = vld [vmem:[%s3 + $0x6ac] sm:$0xf]
  %v693 = vld [vmem:[%s3 + $0x6b0] sm:$0xf]
  %v694 = vld [vmem:[%s3 + $0x6b4] sm:$0xf]
  %v695 = vld [vmem:[%s3 + $0x6b8] sm:$0xf]
  %v696 = vld [vmem:[%s3 + $0x6bc] sm:$0xf]
  %v697 = vld [vmem:[%s3 + $0x6c0] sm:$0xf]
  %v698 = vld [vmem:[%s3 + $0x6c4] sm:$0xf]
  %v699 = vld [vmem:[%s3 + $0x6c8] sm:$0xf]
  %v700 = vld [vmem:[%s3 + $0x6cc] sm:$0xf]
  %v701 = vld [vmem:[%s3 + $0x6d0] sm:$0xf]
  %v702 = vld [vmem:[%s3 + $0x6d4] sm:$0xf]
  %v703 = vld [vmem:[%s3 + $0x6d8] sm:$0xf]
  %v704 = vld [vmem:[%s3 + $0x6dc] sm:$0xf]
  %v705 = vld [vmem:[%s3 + $0x6e0] sm:$0xf]
  %v706 = vld [vmem:[%s3 + $0x6e4] sm:$0xf]
  %v707 = vld [vmem:[%s3 + $0x6e8] sm:$0xf]
  %v708 = vld [vmem:[%s3 + $0x6ec] sm:$0xf]
  %v709 = vld [vmem:[%s3 + $0x6f0] sm:$0xf]
  %v710 = vld [vmem:[%s3 + $0x6f4] sm:$0xf]
  %v711 = vld [vmem:[%s3 + $0x6f8] sm:$0xf]
  %v712 = vld [vmem:[%s3 + $0x6fc] sm:$0xf]
  %v713 = vld [vmem:[%s3 + $0x700] sm:$0xf]
  %v714 = vld [vmem:[%s3 + $0x704] sm:$0xf]
  %v715 = vld [vmem:[%s3 + $0x708] sm:$0xf]
  %v716 = vld [vmem:[%s3 + $0x70c] sm:$0xf]
  %v717 = vld [vmem:[%s3 + $0x710] sm:$0xf]
  %v718 = vld [vmem:[%s3 + $0x714] sm:$0xf]
  %v719 = vld [vmem:[%s3 + $0x718] sm:$0xf]
  %v720 = vld [vmem:[%s3 + $0x71c] sm:$0xf]
  %v721 = vld [vmem:[%s3 + $0x720] sm:$0xf]
  %v722 = vld [vmem:[%s3 + $0x724] sm:$0xf]
  %v723 = vld [vmem:[%s3 + $0x728] sm:$0xf]
  %v724 = vld [vmem:[%s3 + $0x72c] sm:$0xf]
  %v725 = vld [vmem:[%s3 + $0x730] sm:$0xf]
  %v726 = vld [vmem:[%s3 + $0x734] sm:$0xf]
  %v727 = vld [vmem:[%s3 + $0x738] sm:$0xf]
  %v728 = vld [vmem:[%s3 + $0x73c] sm:$0xf]
  %v729 = vld [vmem:[%s3 + $0x740] sm:$0xf]
  %v730 = vld [vmem:[%s3 + $0x744] sm:$0xf]
  %v731 = vld [vmem:[%s3 + $0x748] sm:$0xf]
  %v732 = vld [vmem:[%s3 + $0x74c] sm:$0xf]
  %v733 = vld [vmem:[%s3 + $0x750] sm:$0xf]
  %v734 = vld [vmem:[%s3 + $0x754] sm:$0xf]
  %v735 = vld [vmem:[%s3 + $0x758] sm:$0xf]
  %v736 = vld [vmem:[%s3 + $0x75c] sm:$0xf]
  %v737 = vld [vmem:[%s3 + $0x760] sm:$0xf]
  %v738 = vld [vmem:[%s3 + $0x764] sm:$0xf]
  %v739 = vld [vmem:[%s3 + $0x768] sm:$0xf]
  %v740 = vld [vmem:[%s3 + $0x76c] sm:$0xf]
  %v741 = vld [vmem:[%s3 + $0x770] sm:$0xf]
  %v742 = vld [vmem:[%s3 + $0x774] sm:$0xf]
  %v743 = vld [vmem:[%s3 + $0x778] sm:$0xf]
  %v744 = vld [vmem:[%s3 + $0x77c] sm:$0xf]
  %v745 = vld [vmem:[%s3 + $0x780] sm:$0xf]
  %v746 = vld [vmem:[%s3 + $0x784] sm:$0xf]
  %v747 = vld [vmem:[%s3 + $0x788] sm:$0xf]
  %v748 = vld [vmem:[%s3 + $0x78c] sm:$0xf]
  %v749 = vld [vmem:[%s3 + $0x790] sm:$0xf]
  %v750 = vld [vmem:[%s3 + $0x794] sm:$0xf]
  %v751 = vld [vmem:[%s3 + $0x798] sm:$0xf]
  %v752 = vld [vmem:[%s3 + $0x79c] sm:$0xf]
  %v753 = vld [vmem:[%s3 + $0x7a0] sm:$0xf]
  %v754 = vld [vmem:[%s3 + $0x7a4] sm:$0xf]
  %v755 = vld [vmem:[%s3 + $0x7a8] sm:$0xf]
  %v756 = vld [vmem:[%s3 + $0x7ac] sm:$0xf]
  %v757 = vld [vmem:[%s3 + $0x7b0] sm:$0xf]
  %v758 = vld [vmem:[%s3 + $0x7b4] sm:$0xf]
  %v759 = vld [vmem:[%s3 + $0x7b8] sm:$0xf]
  %v760 = vld [vmem:[%s3 + $0x7bc] sm:$0xf]
  %v761 = vld [vmem:[%s3 + $0x7c0] sm:$0xf]
  %v762 = vld [vmem:[%s3 + $0x7c4] sm:$0xf]
  %v763 = vld [vmem:[%s3 + $0x7c8] sm:$0xf]
  %v764 = vld [vmem:[%s3 + $0x7cc] sm:$0xf]
  %v765 = vld [vmem:[%s3 + $0x7d0] sm:$0xf]
  %v766 = vld [vmem:[%s3 + $0x7d4] sm:$0xf]
  %v767 = vld [vmem:[%s3 + $0x7d8] sm:$0xf]
  %v768 = vld [vmem:[%s3 + $0x7dc] sm:$0xf]
  %v769 = vld [vmem:[%s3 + $0x7e0] sm:$0xf]
  %v770 = vld [vmem:[%s3 + $0x7e4] sm:$0xf]
  %v771 = vld [vmem:[%s3 + $0x7e8] sm:$0xf]
  %v772 = vld [vmem:[%s3 + $0x7ec] sm:$0xf]
  %v773 = vld [vmem:[%s3 + $0x7f0] sm:$0xf]
  %v774 = vld [vmem:[%s3 + $0x7f4] sm:$0xf]
  %v775 = vld [vmem:[%s3 + $0x7f8] sm:$0xf]
  %v776 = vld [vmem:[%s3 + $0x7fc] sm:$0xf]
  %v777 = vld [vmem:[%s3 + $0x800] sm:$0xf]
  %v778 = vld [vmem:[%s3 + $0x804] sm:$0xf]
  %v779 = vld [vmem:[%s3 + $0x808] sm:$0xf]
  %v780 = vld [vmem:[%s3 + $0x80c] sm:$0xf]
  %v781 = vld [vmem:[%s3 + $0x810] sm:$0xf]
  %v782 = vld [vmem:[%s3 + $0x814] sm:$0xf]
  %v783 = vld [vmem:[%s3 + $0x818] sm:$0xf]
  %v784 = vld [vmem:[%s3 + $0x81c] sm:$0xf]
  %v785 = vld [vmem:[%s3 + $0x820] sm:$0xf]
  %v786 = vld [vmem:[%s3 + $0x824] sm:$0xf]
  %v787 = vld [vmem:[%s3 + $0x828] sm:$0xf]
  %v788 = vld [vmem:[%s3 + $0x82c] sm:$0xf]
  %v789 = vld [vmem:[%s3 + $0x830] sm:$0xf]
  %v790 = vld [vmem:[%s3 + $0x834] sm:$0xf]
  %v791 = vld [vmem:[%s3 + $0x838] sm:$0xf]
  %v792 = vld [vmem:[%s3 + $0x83c] sm:$0xf]
  %v793 = vld [vmem:[%s3 + $0x840] sm:$0xf]
  %v794 = vld [vmem:[%s3 + $0x844] sm:$0xf]
  %v795 = vld [vmem:[%s3 + $0x848] sm:$0xf]
  %v796 = vld [vmem:[%s3 + $0x84c] sm:$0xf]
  %v797 = vld [vmem:[%s3 + $0x850] sm:$0xf]
  %v798 = vld [vmem:[%s3 + $0x854] sm:$0xf]
  %v799 = vld [vmem:[%s3 + $0x858] sm:$0xf]
  %v800 = vld [vmem:[%s3 + $0x85c] sm:$0xf]
  %v801 = vld [vmem:[%s3 + $0x860] sm:$0xf]
  %v802 = vld [vmem:[%s3 + $0x864] sm:$0xf]
  %v803 = vld [vmem:[%s3 + $0x868] sm:$0xf]
  %v804 = vld [vmem:[%s3 + $0x86c] sm:$0xf]
  %v805 = vld [vmem:[%s3 + $0x870] sm:$0xf]
  %v806 = vld [vmem:[%s3 + $0x874] sm:$0xf]
  %v807 = vld [vmem:[%s3 + $0x878] sm:$0xf]
  %v808 = vld [vmem:[%s3 + $0x87c] sm:$0xf]
  %v809 = vld [vmem:[%s3 + $0x880] sm:$0xf]
  %v810 = vld [vmem:[%s3 + $0x884] sm:$0xf]
  %v811 = vld [vmem:[%s3 + $0x888] sm:$0xf]
  %v812 = vld [vmem:[%s3 + $0x88c] sm:$0xf]
  %v813 = vld [vmem:[%s3 + $0x890] sm:$0xf]
  %v814 = vld [vmem:[%s3 + $0x894] sm:$0xf]
  %v815 = vld [vmem:[%s3 + $0x898] sm:$0xf]
  %v816 = vld [vmem:[%s3 + $0x89c] sm:$0xf]
  %v817 = vld [vmem:[%s3 + $0x8a0] sm:$0xf]
  %v818 = vld [vmem:[%s3 + $0x8a4] sm:$0xf]
  %v819 = vld [vmem:[%s3 + $0x8a8] sm:$0xf]
  %v820 = vld [vmem:[%s3 + $0x8ac] sm:$0xf]
  %v821 = vld [vmem:[%s3 + $0x8b0] sm:$0xf]
  %v822 = vld [vmem:[%s3 + $0x8b4] sm:$0xf]
  %v823 = vld [vmem:[%s3 + $0x8b8] sm:$0xf]
  %v824 = vld [vmem:[%s3 + $0x8bc] sm:$0xf]
  %v825 = vld [vmem:[%s3 + $0x8c0] sm:$0xf]
  %v826 = vld [vmem:[%s3 + $0x8c4] sm:$0xf]
  %v827 = vld [vmem:[%s3 + $0x8c8] sm:$0xf]
  %v828 = vld [vmem:[%s3 + $0x8cc] sm:$0xf]
  %v829 = vld [vmem:[%s3 + $0x8d0] sm:$0xf]
  %v830 = vld [vmem:[%s3 + $0x8d4] sm:$0xf]
  %v831 = vld [vmem:[%s3 + $0x8d8] sm:$0xf]
  %v832 = vld [vmem:[%s3 + $0x8dc] sm:$0xf]
  %v833 = vld [vmem:[%s3 + $0x8e0] sm:$0xf]
  %v834 = vld [vmem:[%s3 + $0x8e4] sm:$0xf]
  %v835 = vld [vmem:[%s3 + $0x8e8] sm:$0xf]
  %v836 = vld [vmem:[%s3 + $0x8ec] sm:$0xf]
  %v837 = vld [vmem:[%s3 + $0x8f0] sm:$0xf]
  %v838 = vld [vmem:[%s3 + $0x8f4] sm:$0xf]
  %v839 = vld [vmem:[%s3 + $0x8f8] sm:$0xf]
  %v840 = vld [vmem:[%s3 + $0x8fc] sm:$0xf]
  %v841 = vld [vmem:[%s3 + $0x900] sm:$0xf]
  %v842 = vld [vmem:[%s3 + $0x904] sm:$0xf]
  %v843 = vld [vmem:[%s3 + $0x908] sm:$0xf]
  %v844 = vld [vmem:[%s3 + $0x90c] sm:$0xf]
  %v845 = vld [vmem:[%s3 + $0x910] sm:$0xf]
  %v846 = vld [vmem:[%s3 + $0x914] sm:$0xf]
  %v847 = vld [vmem:[%s3 + $0x918] sm:$0xf]
  %v848 = vld [vmem:[%s3 + $0x91c] sm:$0xf]
  %v849 = vld [vmem:[%s3 + $0x920] sm:$0xf]
  %v850 = vld [vmem:[%s3 + $0x924] sm:$0xf]
  %v851 = vld [vmem:[%s3 + $0x928] sm:$0xf]
  %v852 = vld [vmem:[%s3 + $0x92c] sm:$0xf]
  %v853 = vld [vmem:[%s3 + $0x930] sm:$0xf]
  %v854 = vld [vmem:[%s3 + $0x934] sm:$0xf]
  %v855 = vld [vmem:[%s3 + $0x938] sm:$0xf]
  %v856 = vld [vmem:[%s3 + $0x93c] sm:$0xf]
  %v857 = vld [vmem:[%s3 + $0x940] sm:$0xf]
  %v858 = vld [vmem:[%s3 + $0x944] sm:$0xf]
  %v859 = vld [vmem:[%s3 + $0x948] sm:$0xf]
  %v860 = vld [vmem:[%s3 + $0x94c] sm:$0xf]
  %v861 = vld [vmem:[%s3 + $0x950] sm:$0xf]
  %v862 = vld [vmem:[%s3 + $0x954] sm:$0xf]
  %v863 = vld [vmem:[%s3 + $0x958] sm:$0xf]
  %v864 = vld [vmem:[%s3 + $0x95c] sm:$0xf]
  %v865 = vld [vmem:[%s3 + $0x960] sm:$0xf]
  %v866 = vld [vmem:[%s3 + $0x964] sm:$0xf]
  %v867 = vld [vmem:[%s3 + $0x968] sm:$0xf]
  %v868 = vld [vmem:[%s3 + $0x96c] sm:$0xf]
  %v869 = vld [vmem:[%s3 + $0x970] sm:$0xf]
  %v870 = vld [vmem:[%s3 + $0x974] sm:$0xf]
  %v871 = vld [vmem:[%s3 + $0x978] sm:$0xf]
  %v872 = vld [vmem:[%s3 + $0x97c] sm:$0xf]
  %v873 = vld [vmem:[%s3 + $0x980] sm:$0xf]
  %v874 = vld [vmem:[%s3 + $0x984] sm:$0xf]
  %v875 = vld [vmem:[%s3 + $0x988] sm:$0xf]
  %v876 = vld [vmem:[%s3 + $0x98c] sm:$0xf]
  %v877 = vld [vmem:[%s3 + $0x990] sm:$0xf]
  %v878 = vld [vmem:[%s3 + $0x994] sm:$0xf]
  %v879 = vld [vmem:[%s3 + $0x998] sm:$0xf]
  %v880 = vld [vmem:[%s3 + $0x99c] sm:$0xf]
  %v881 = vld [vmem:[%s3 + $0x9a0] sm:$0xf]
  %v882 = vld [vmem:[%s3 + $0x9a4] sm:$0xf]
  %v883 = vld [vmem:[%s3 + $0x9a8] sm:$0xf]
  %v884 = vld [vmem:[%s3 + $0x9ac] sm:$0xf]
  %v885 = vld [vmem:[%s3 + $0x9b0] sm:$0xf]
  %v886 = vld [vmem:[%s3 + $0x9b4] sm:$0xf]
  %v887 = vld [vmem:[%s3 + $0x9b8] sm:$0xf]
  %v888 = vld [vmem:[%s3 + $0x9bc] sm:$0xf]
  %v889 = vld [vmem:[%s3 + $0x9c0] sm:$0xf]
  %v890 = vld [vmem:[%s3 + $0x9c4] sm:$0xf]
  %v891 = vld [vmem:[%s3 + $0x9c8] sm:$0xf]
  %v892 = vld [vmem:[%s3 + $0x9cc] sm:$0xf]
  %v893 = vld [vmem:[%s3 + $0x9d0] sm:$0xf]
  %v894 = vld [vmem:[%s3 + $0x9d4] sm:$0xf]
  %v895 = vld [vmem:[%s3 + $0x9d8] sm:$0xf]
  %v896 = vld [vmem:[%s3 + $0x9dc] sm:$0xf]
  %v897 = vld [vmem:[%s3 + $0x9e0] sm:$0xf]
  %v898 = vld [vmem:[%s3 + $0x9e4] sm:$0xf]
  %v899 = vld [vmem:[%s3 + $0x9e8] sm:$0xf]
  %v900 = vld [vmem:[%s3 + $0x9ec] sm:$0xf]
  %v901 = vld [vmem:[%s3 + $0x9f0] sm:$0xf]
  %v902 = vld [vmem:[%s3 + $0x9f4] sm:$0xf]
  %v903 = vld [vmem:[%s3 + $0x9f8] sm:$0xf]
  %v904 = vld [vmem:[%s3 + $0x9fc] sm:$0xf]
  %v905 = vld [vmem:[%s3 + $0xa00] sm:$0xf]
  %v906 = vld [vmem:[%s3 + $0xa04] sm:$0xf]
  %v907 = vld [vmem:[%s3 + $0xa08] sm:$0xf]
  %v908 = vld [vmem:[%s3 + $0xa0c] sm:$0xf]
  %v909 = vld [vmem:[%s3 + $0xa10] sm:$0xf]
  %v910 = vld [vmem:[%s3 + $0xa14] sm:$0xf]
  %v911 = vld [vmem:[%s3 + $0xa18] sm:$0xf]
  %v912 = vld [vmem:[%s3 + $0xa1c] sm:$0xf]
  %v913 = vld [vmem:[%s3 + $0xa20] sm:$0xf]
  %v914 = vld [vmem:[%s3 + $0xa24] sm:$0xf]
  %v915 = vld [vmem:[%s3 + $0xa28] sm:$0xf]
  %v916 = vld [vmem:[%s3 + $0xa2c] sm:$0xf]
  %v917 = vld [vmem:[%s3 + $0xa30] sm:$0xf]
  %v918 = vld [vmem:[%s3 + $0xa34] sm:$0xf]
  %v919 = vld [vmem:[%s3 + $0xa38] sm:$0xf]
  %v920 = vld [vmem:[%s3 + $0xa3c] sm:$0xf]
  %v921 = vld [vmem:[%s3 + $0xa40] sm:$0xf]
  %v922 = vld [vmem:[%s3 + $0xa44] sm:$0xf]
  %v923 = vld [vmem:[%s3 + $0xa48] sm:$0xf]
  %v924 = vld [vmem:[%s3 + $0xa4c] sm:$0xf]
  %v925 = vld [vmem:[%s3 + $0xa50] sm:$0xf]
  %v926 = vld [vmem:[%s3 + $0xa54] sm:$0xf]
  %v927 = vld [vmem:[%s3 + $0xa58] sm:$0xf]
  %v928 = vld [vmem:[%s3 + $0xa5c] sm:$0xf]
  %v929 = vld [vmem:[%s3 + $0xa60] sm:$0xf]
  %v930 = vld [vmem:[%s3 + $0xa64] sm:$0xf]
  %v931 = vld [vmem:[%s3 + $0xa68] sm:$0xf]
  %v932 = vld [vmem:[%s3 + $0xa6c] sm:$0xf]
  %v933 = vld [vmem:[%s3 + $0xa70] sm:$0xf]
  %v934 = vld [vmem:[%s3 + $0xa74] sm:$0xf]
  %v935 = vld [vmem:[%s3 + $0xa78] sm:$0xf]
  %v936 = vld [vmem:[%s3 + $0xa7c] sm:$0xf]
  %v937 = vld [vmem:[%s3 + $0xa80] sm:$0xf]
  %v938 = vld [vmem:[%s3 + $0xa84] sm:$0xf]
  %v939 = vld [vmem:[%s3 + $0xa88] sm:$0xf]
  %v940 = vld [vmem:[%s3 + $0xa8c] sm:$0xf]
  %v941 = vld [vmem:[%s3 + $0xa90] sm:$0xf]
  %v942 = vld [vmem:[%s3 + $0xa94] sm:$0xf]
  %v943 = vld [vmem:[%s3 + $0xa98] sm:$0xf]
  %v944 = vld [vmem:[%s3 + $0xa9c] sm:$0xf]
  %v945 = vld [vmem:[%s3 + $0xaa0] sm:$0xf]
  %v946 = vld [vmem:[%s3 + $0xaa4] sm:$0xf]
  %v947 = vld [vmem:[%s3 + $0xaa8] sm:$0xf]
  %v948 = vld [vmem:[%s3 + $0xaac] sm:$0xf]
  %v949 = vld [vmem:[%s3 + $0xab0] sm:$0xf]
  %v950 = vld [vmem:[%s3 + $0xab4] sm:$0xf]
  %v951 = vld [vmem:[%s3 + $0xab8] sm:$0xf]
  %v952 = vld [vmem:[%s3 + $0xabc] sm:$0xf]
  %v953 = vld [vmem:[%s3 + $0xac0] sm:$0xf]
  %v954 = vld [vmem:[%s3 + $0xac4] sm:$0xf]
  %v955 = vld [vmem:[%s3 + $0xac8] sm:$0xf]
  %v956 = vld [vmem:[%s3 + $0xacc] sm:$0xf]
  %v957 = vld [vmem:[%s3 + $0xad0] sm:$0xf]
  %v958 = vld [vmem:[%s3 + $0xad4] sm:$0xf]
  %v959 = vld [vmem:[%s3 + $0xad8] sm:$0xf]
  %v960 = vld [vmem:[%s3 + $0xadc] sm:$0xf]
  %v961 = vld [vmem:[%s3 + $0xae0] sm:$0xf]
  %v962 = vld [vmem:[%s3 + $0xae4] sm:$0xf]
  %v963 = vld [vmem:[%s3 + $0xae8] sm:$0xf]
  %v964 = vld [vmem:[%s3 + $0xaec] sm:$0xf]
  %v965 = vld [vmem:[%s3 + $0xaf0] sm:$0xf]
  %v966 = vld [vmem:[%s3 + $0xaf4] sm:$0xf]
  %v967 = vld [vmem:[%s3 + $0xaf8] sm:$0xf]
  %v968 = vld [vmem:[%s3 + $0xafc] sm:$0xf]
  %v969 = vld [vmem:[%s3 + $0xb00] sm:$0xf]
  %v970 = vld [vmem:[%s3 + $0xb04] sm:$0xf]
  %v971 = vld [vmem:[%s3 + $0xb08] sm:$0xf]
  %v972 = vld [vmem:[%s3 + $0xb0c] sm:$0xf]
  %v973 = vld [vmem:[%s3 + $0xb10] sm:$0xf]
  %v974 = vld [vmem:[%s3 + $0xb14] sm:$0xf]
  %v975 = vld [vmem:[%s3 + $0xb18] sm:$0xf]
  %v976 = vld [vmem:[%s3 + $0xb1c] sm:$0xf]
  %v977 = vld [vmem:[%s3 + $0xb20] sm:$0xf]
  %v978 = vld [vmem:[%s3 + $0xb24] sm:$0xf]
  %v979 = vld [vmem:[%s3 + $0xb28] sm:$0xf]
  %v980 = vld [vmem:[%s3 + $0xb2c] sm:$0xf]
  %v981 = vld [vmem:[%s3 + $0xb30] sm:$0xf]
  %v982 = vld [vmem:[%s3 + $0xb34] sm:$0xf]
  %v983 = vld [vmem:[%s3 + $0xb38] sm:$0xf]
  %v984 = vld [vmem:[%s3 + $0xb3c] sm:$0xf]
  %v985 = vld [vmem:[%s3 + $0xb40] sm:$0xf]
  %v986 = vld [vmem:[%s3 + $0xb44] sm:$0xf]
  %v987 = vld [vmem:[%s3 + $0xb48] sm:$0xf]
  %v988 = vld [vmem:[%s3 + $0xb4c] sm:$0xf]
  %v989 = vld [vmem:[%s3 + $0xb50] sm:$0xf]
  %v990 = vld [vmem:[%s3 + $0xb54] sm:$0xf]
  %v991 = vld [vmem:[%s3 + $0xb58] sm:$0xf]
  %v992 = vld [vmem:[%s3 + $0xb5c] sm:$0xf]
  %v993 = vld [vmem:[%s3 + $0xb60] sm:$0xf]
  %v994 = vld [vmem:[%s3 + $0xb64] sm:$0xf]
  %v995 = vld [vmem:[%s3 + $0xb68] sm:$0xf]
  %v996 = vld [vmem:[%s3 + $0xb6c] sm:$0xf]
  %v997 = vld [vmem:[%s3 + $0xb70] sm:$0xf]
  %v998 = vld [vmem:[%s3 + $0xb74] sm:$0xf]
  %v999 = vld [vmem:[%s3 + $0xb78] sm:$0xf]
  %v1000 = vld [vmem:[%s3 + $0xb7c] sm:$0xf]
  %v1001 = vld [vmem:[%s3 + $0xb80] sm:$0xf]
  %v1002 = vld [vmem:[%s3 + $0xb84] sm:$0xf]
  %v1003 = vld [vmem:[%s3 + $0xb88] sm:$0xf]
  %v1004 = vld [vmem:[%s3 + $0xb8c] sm:$0xf]
  %v1005 = vld [vmem:[%s3 + $0xb90] sm:$0xf]
  %v1006 = vld [vmem:[%s3 + $0xb94] sm:$0xf]
  %v1007 = vld [vmem:[%s3 + $0xb98] sm:$0xf]
  %v1008 = vld [vmem:[%s3 + $0xb9c] sm:$0xf]
  %v1009 = vld [vmem:[%s3 + $0xba0] sm:$0xf]
  %v1010 = vld [vmem:[%s3 + $0xba4] sm:$0xf]
  %v1011 = vld [vmem:[%s3 + $0xba8] sm:$0xf]
  %v1012 = vld [vmem:[%s3 + $0xbac] sm:$0xf]
  %v1013 = vld [vmem:[%s3 + $0xbb0] sm:$0xf]
  %v1014 = vld [vmem:[%s3 + $0xbb4] sm:$0xf]
  %v1015 = vld [vmem:[%s3 + $0xbb8] sm:$0xf]
  %v1016 = vld [vmem:[%s3 + $0xbbc] sm:$0xf]
  %v1017 = vld [vmem:[%s3 + $0xbc0] sm:$0xf]
  %v1018 = vld [vmem:[%s3 + $0xbc4] sm:$0xf]
  %v1019 = vld [vmem:[%s3 + $0xbc8] sm:$0xf]
  %v1020 = vld [vmem:[%s3 + $0xbcc] sm:$0xf]
  %v1021 = vld [vmem:[%s3 + $0xbd0] sm:$0xf]
  %v1022 = vld [vmem:[%s3 + $0xbd4] sm:$0xf]
  %v1023 = vld [vmem:[%s3 + $0xbd8] sm:$0xf]
  %v1024 = vld [vmem:[%s3 + $0xbdc] sm:$0xf]
  %v1025 = vld [vmem:[%s3 + $0xbe0] sm:$0xf]
  %v1026 = vld [vmem:[%s3 + $0xbe4] sm:$0xf]
  %v1027 = vld [vmem:[%s3 + $0xbe8] sm:$0xf]
  %v1028 = vld [vmem:[%s3 + $0xbec] sm:$0xf]
  %v1029 = vld [vmem:[%s3 + $0xbf0] sm:$0xf]
  %v1030 = vld [vmem:[%s3 + $0xbf4] sm:$0xf]
  %v1031 = vld [vmem:[%s3 + $0xbf8] sm:$0xf]
  %v1032 = vld [vmem:[%s3 + $0xbfc] sm:$0xf]
  %v1033 = vld [vmem:[%s3 + $0xc00] sm:$0xf]
  %v1034 = vld [vmem:[%s3 + $0xc04] sm:$0xf]
  %v1035 = vld [vmem:[%s3 + $0xc08] sm:$0xf]
  %v1036 = vld [vmem:[%s3 + $0xc0c] sm:$0xf]
  %v1037 = vld [vmem:[%s3 + $0xc10] sm:$0xf]
  %v1038 = vld [vmem:[%s3 + $0xc14] sm:$0xf]
  %v1039 = vld [vmem:[%s3 + $0xc18] sm:$0xf]
  %v1040 = vld [vmem:[%s3 + $0xc1c] sm:$0xf]
  %v1041 = vld [vmem:[%s3 + $0xc20] sm:$0xf]
  %v1042 = vld [vmem:[%s3 + $0xc24] sm:$0xf]
  %v1043 = vld [vmem:[%s3 + $0xc28] sm:$0xf]
  %v1044 = vld [vmem:[%s3 + $0xc2c] sm:$0xf]
  %v1045 = vld [vmem:[%s3 + $0xc30] sm:$0xf]
  %v1046 = vld [vmem:[%s3 + $0xc34] sm:$0xf]
  %v1047 = vld [vmem:[%s3 + $0xc38] sm:$0xf]
  %v1048 = vld [vmem:[%s3 + $0xc3c] sm:$0xf]
  %v1049 = vld [vmem:[%s3 + $0xc40] sm:$0xf]
  %v1050 = vld [vmem:[%s3 + $0xc44] sm:$0xf]
  %v1051 = vld [vmem:[%s3 + $0xc48] sm:$0xf]
  %v1052 = vld [vmem:[%s3 + $0xc4c] sm:$0xf]
  %v1053 = vld [vmem:[%s3 + $0xc50] sm:$0xf]
  %v1054 = vld [vmem:[%s3 + $0xc54] sm:$0xf]
  %v1055 = vld [vmem:[%s3 + $0xc58] sm:$0xf]
  %v1056 = vld [vmem:[%s3 + $0xc5c] sm:$0xf]
  %v1057 = vld [vmem:[%s3 + $0xc60] sm:$0xf]
  %v1058 = vld [vmem:[%s3 + $0xc64] sm:$0xf]
  %v1059 = vld [vmem:[%s3 + $0xc68] sm:$0xf]
  %v1060 = vld [vmem:[%s3 + $0xc6c] sm:$0xf]
  %v1061 = vld [vmem:[%s3 + $0xc70] sm:$0xf]
  %v1062 = vld [vmem:[%s3 + $0xc74] sm:$0xf]
  %v1063 = vld [vmem:[%s3 + $0xc78] sm:$0xf]
  %v1064 = vld [vmem:[%s3 + $0xc7c] sm:$0xf]
  %v1065 = vld [vmem:[%s3 + $0xc80] sm:$0xf]
  %v1066 = vld [vmem:[%s3 + $0xc84] sm:$0xf]
  %v1067 = vld [vmem:[%s3 + $0xc88] sm:$0xf]
  %v1068 = vld [vmem:[%s3 + $0xc8c] sm:$0xf]
  %v1069 = vld [vmem:[%s3 + $0xc90] sm:$0xf]
  %v1070 = vld [vmem:[%s3 + $0xc94] sm:$0xf]
  %v1071 = vld [vmem:[%s3 + $0xc98] sm:$0xf]
  %v1072 = vld [vmem:[%s3 + $0xc9c] sm:$0xf]
  %v1073 = vld [vmem:[%s3 + $0xca0] sm:$0xf]
  %v1074 = vld [vmem:[%s3 + $0xca4] sm:$0xf]
  %v1075 = vld [vmem:[%s3 + $0xca8] sm:$0xf]
  %v1076 = vld [vmem:[%s3 + $0xcac] sm:$0xf]
  %v1077 = vld [vmem:[%s3 + $0xcb0] sm:$0xf]
  %v1078 = vld [vmem:[%s3 + $0xcb4] sm:$0xf]
  %v1079 = vld [vmem:[%s3 + $0xcb8] sm:$0xf]
  %v1080 = vld [vmem:[%s3 + $0xcbc] sm:$0xf]
  %v1081 = vld [vmem:[%s3 + $0xcc0] sm:$0xf]
  %v1082 = vld [vmem:[%s3 + $0xcc4] sm:$0xf]
  %v1083 = vld [vmem:[%s3 + $0xcc8] sm:$0xf]
  %v1084 = vld [vmem:[%s3 + $0xccc] sm:$0xf]
  %v1085 = vld [vmem:[%s3 + $0xcd0] sm:$0xf]
  %v1086 = vld [vmem:[%s3 + $0xcd4] sm:$0xf]
  %v1087 = vld [vmem:[%s3 + $0xcd8] sm:$0xf]
  %v1088 = vld [vmem:[%s3 + $0xcdc] sm:$0xf]
  %v1089 = vld [vmem:[%s3 + $0xce0] sm:$0xf]
  %v1090 = vld [vmem:[%s3 + $0xce4] sm:$0xf]
  %v1091 = vld [vmem:[%s3 + $0xce8] sm:$0xf]
  %v1092 = vld [vmem:[%s3 + $0xcec] sm:$0xf]
  %v1093 = vld [vmem:[%s3 + $0xcf0] sm:$0xf]
  %v1094 = vld [vmem:[%s3 + $0xcf4] sm:$0xf]
  %v1095 = vld [vmem:[%s3 + $0xcf8] sm:$0xf]
  %v1096 = vld [vmem:[%s3 + $0xcfc] sm:$0xf]
  %v1097 = vld [vmem:[%s3 + $0xd00] sm:$0xf]
  %v1098 = vld [vmem:[%s3 + $0xd04] sm:$0xf]
  %v1099 = vld [vmem:[%s3 + $0xd08] sm:$0xf]
  %v1100 = vld [vmem:[%s3 + $0xd0c] sm:$0xf]
  %v1101 = vld [vmem:[%s3 + $0xd10] sm:$0xf]
  %v1102 = vld [vmem:[%s3 + $0xd14] sm:$0xf]
  %v1103 = vld [vmem:[%s3 + $0xd18] sm:$0xf]
  %v1104 = vld [vmem:[%s3 + $0xd1c] sm:$0xf]
  %v1105 = vld [vmem:[%s3 + $0xd20] sm:$0xf]
  %v1106 = vld [vmem:[%s3 + $0xd24] sm:$0xf]
  %v1107 = vld [vmem:[%s3 + $0xd28] sm:$0xf]
  %v1108 = vld [vmem:[%s3 + $0xd2c] sm:$0xf]
  %v1109 = vld [vmem:[%s3 + $0xd30] sm:$0xf]
  %v1110 = vld [vmem:[%s3 + $0xd34] sm:$0xf]
  %v1111 = vld [vmem:[%s3 + $0xd38] sm:$0xf]
  %v1112 = vld [vmem:[%s3 + $0xd3c] sm:$0xf]
  %v1113 = vld [vmem:[%s3 + $0xd40] sm:$0xf]
  %v1114 = vld [vmem:[%s3 + $0xd44] sm:$0xf]
  %v1115 = vld [vmem:[%s3 + $0xd48] sm:$0xf]
  %v1116 = vld [vmem:[%s3 + $0xd4c] sm:$0xf]
  %v1117 = vld [vmem:[%s3 + $0xd50] sm:$0xf]
  %v1118 = vld [vmem:[%s3 + $0xd54] sm:$0xf]
  %v1119 = vld [vmem:[%s3 + $0xd58] sm:$0xf]
  %v1120 = vld [vmem:[%s3 + $0xd5c] sm:$0xf]
  %v1121 = vld [vmem:[%s3 + $0xd60] sm:$0xf]
  %v1122 = vld [vmem:[%s3 + $0xd64] sm:$0xf]
  %v1123 = vld [vmem:[%s3 + $0xd68] sm:$0xf]
  %v1124 = vld [vmem:[%s3 + $0xd6c] sm:$0xf]
  %v1125 = vld [vmem:[%s3 + $0xd70] sm:$0xf]
  %v1126 = vld [vmem:[%s3 + $0xd74] sm:$0xf]
  %v1127 = vld [vmem:[%s3 + $0xd78] sm:$0xf]
  %v1128 = vld [vmem:[%s3 + $0xd7c] sm:$0xf]
  %v1129 = vld [vmem:[%s3 + $0xd80] sm:$0xf]
  %v1130 = vld [vmem:[%s3 + $0xd84] sm:$0xf]
  %v1131 = vld [vmem:[%s3 + $0xd88] sm:$0xf]
  %v1132 = vld [vmem:[%s3 + $0xd8c] sm:$0xf]
  %v1133 = vld [vmem:[%s3 + $0xd90] sm:$0xf]
  %v1134 = vld [vmem:[%s3 + $0xd94] sm:$0xf]
  %v1135 = vld [vmem:[%s3 + $0xd98] sm:$0xf]
  %v1136 = vld [vmem:[%s3 + $0xd9c] sm:$0xf]
  %v1137 = vld [vmem:[%s3 + $0xda0] sm:$0xf]
  %v1138 = vld [vmem:[%s3 + $0xda4] sm:$0xf]
  %v1139 = vld [vmem:[%s3 + $0xda8] sm:$0xf]
  %v1140 = vld [vmem:[%s3 + $0xdac] sm:$0xf]
  %v1141 = vld [vmem:[%s3 + $0xdb0] sm:$0xf]
  %v1142 = vld [vmem:[%s3 + $0xdb4] sm:$0xf]
  %v1143 = vld [vmem:[%s3 + $0xdb8] sm:$0xf]
  %v1144 = vld [vmem:[%s3 + $0xdbc] sm:$0xf]
  %v1145 = vld [vmem:[%s3 + $0xdc0] sm:$0xf]
  %v1146 = vld [vmem:[%s3 + $0xdc4] sm:$0xf]
  %v1147 = vld [vmem:[%s3 + $0xdc8] sm:$0xf]
  %v1148 = vld [vmem:[%s3 + $0xdcc] sm:$0xf]
  %v1149 = vld [vmem:[%s3 + $0xdd0] sm:$0xf]
  %v1150 = vld [vmem:[%s3 + $0xdd4] sm:$0xf]
  %v1151 = vld [vmem:[%s3 + $0xdd8] sm:$0xf]
  %v1152 = vld [vmem:[%s3 + $0xddc] sm:$0xf]
  %v1153 = vld [vmem:[%s3 + $0xde0] sm:$0xf]
  %v1154 = vld [vmem:[%s3 + $0xde4] sm:$0xf]
  %v1155 = vld [vmem:[%s3 + $0xde8] sm:$0xf]
  %v1156 = vld [vmem:[%s3 + $0xdec] sm:$0xf]
  %v1157 = vld [vmem:[%s3 + $0xdf0] sm:$0xf]
  %v1158 = vld [vmem:[%s3 + $0xdf4] sm:$0xf]
  %v1159 = vld [vmem:[%s3 + $0xdf8] sm:$0xf]
  %v1160 = vld [vmem:[%s3 + $0xdfc] sm:$0xf]
  %v1161 = vld [vmem:[%s3 + $0xe00] sm:$0xf]
  %v1162 = vld [vmem:[%s3 + $0xe04] sm:$0xf]
  %v1163 = vld [vmem:[%s3 + $0xe08] sm:$0xf]
  %v1164 = vld [vmem:[%s3 + $0xe0c] sm:$0xf]
  %v1165 = vld [vmem:[%s3 + $0xe10] sm:$0xf]
  %v1166 = vld [vmem:[%s3 + $0xe14] sm:$0xf]
  %v1167 = vld [vmem:[%s3 + $0xe18] sm:$0xf]
  %v1168 = vld [vmem:[%s3 + $0xe1c] sm:$0xf]
  %v1169 = vld [vmem:[%s3 + $0xe20] sm:$0xf]
  %v1170 = vld [vmem:[%s3 + $0xe24] sm:$0xf]
  %v1171 = vld [vmem:[%s3 + $0xe28] sm:$0xf]
  %v1172 = vld [vmem:[%s3 + $0xe2c] sm:$0xf]
  %v1173 = vld [vmem:[%s3 + $0xe30] sm:$0xf]
  %v1174 = vld [vmem:[%s3 + $0xe34] sm:$0xf]
  %v1175 = vld [vmem:[%s3 + $0xe38] sm:$0xf]
  %v1176 = vld [vmem:[%s3 + $0xe3c] sm:$0xf]
  %v1177 = vld [vmem:[%s3 + $0xe40] sm:$0xf]
  %v1178 = vld [vmem:[%s3 + $0xe44] sm:$0xf]
  %v1179 = vld [vmem:[%s3 + $0xe48] sm:$0xf]
  %v1180 = vld [vmem:[%s3 + $0xe4c] sm:$0xf]
  %v1181 = vld [vmem:[%s3 + $0xe50] sm:$0xf]
  %v1182 = vld [vmem:[%s3 + $0xe54] sm:$0xf]
  %v1183 = vld [vmem:[%s3 + $0xe58] sm:$0xf]
  %v1184 = vld [vmem:[%s3 + $0xe5c] sm:$0xf]
  %v1185 = vld [vmem:[%s3 + $0xe60] sm:$0xf]
  %v1186 = vld [vmem:[%s3 + $0xe64] sm:$0xf]
  %v1187 = vld [vmem:[%s3 + $0xe68] sm:$0xf]
  %v1188 = vld [vmem:[%s3 + $0xe6c] sm:$0xf]
  %v1189 = vld [vmem:[%s3 + $0xe70] sm:$0xf]
  %v1190 = vld [vmem:[%s3 + $0xe74] sm:$0xf]
  %v1191 = vld [vmem:[%s3 + $0xe78] sm:$0xf]
  %v1192 = vld [vmem:[%s3 + $0xe7c] sm:$0xf]
  %v1425 = vunpack.c.l.b16 %v33
  %v1426 = vunpack.c.h.b16 %v33
  %v1427 = vunpack.c.l.b16 %v34
  %v1428 = vunpack.c.h.b16 %v34
  %v1429 = vunpack.c.l.b16 %v35
  %v1430 = vunpack.c.h.b16 %v35
  %v1431 = vunpack.c.l.b16 %v36
  %v1432 = vunpack.c.h.b16 %v36
  %v1433 = vunpack.c.l.b16 %v37
  %v1434 = vunpack.c.h.b16 %v37
  %v1435 = vunpack.c.l.b16 %v38
  %v1436 = vunpack.c.h.b16 %v38
  %v1437 = vunpack.c.l.b16 %v39
  %v1438 = vunpack.c.h.b16 %v39
  %v1439 = vunpack.c.l.b16 %v40
  %v1440 = vunpack.c.h.b16 %v40
  %v1441 = vunpack.c.l.b16 %v41
  %v1442 = vunpack.c.h.b16 %v41
  %v1443 = vunpack.c.l.b16 %v42
  %v1444 = vunpack.c.h.b16 %v42
  %v1445 = vunpack.c.l.b16 %v43
  %v1446 = vunpack.c.h.b16 %v43
  %v1447 = vunpack.c.l.b16 %v44
  %v1448 = vunpack.c.h.b16 %v44
  %v1449 = vunpack.c.l.b16 %v45
  %v1450 = vunpack.c.h.b16 %v45
  %v1451 = vunpack.c.l.b16 %v46
  %v1452 = vunpack.c.h.b16 %v46
  %v1453 = vunpack.c.l.b16 %v47
  %v1454 = vunpack.c.h.b16 %v47
  %v1455 = vunpack.c.l.b16 %v48
  %v1456 = vunpack.c.h.b16 %v48
  %v1457 = vunpack.c.l.b16 %v49
  %v1458 = vunpack.c.h.b16 %v49
  %v1459 = vunpack.c.l.b16 %v50
  %v1460 = vunpack.c.h.b16 %v50
  %v1461 = vunpack.c.l.b16 %v51
  %v1462 = vunpack.c.h.b16 %v51
  %v1463 = vunpack.c.l.b16 %v52
  %v1464 = vunpack.c.h.b16 %v52
  %v1465 = vunpack.c.l.b16 %v53
  %v1466 = vunpack.c.h.b16 %v53
  %v1467 = vunpack.c.l.b16 %v54
  %v1468 = vunpack.c.h.b16 %v54
  %v1469 = vunpack.c.l.b16 %v55
  %v1470 = vunpack.c.h.b16 %v55
  %v1471 = vunpack.c.l.b16 %v56
  %v1472 = vunpack.c.h.b16 %v56
  %v1473 = vunpack.c.l.b16 %v57
  %v1474 = vunpack.c.h.b16 %v57
  %v1475 = vunpack.c.l.b16 %v58
  %v1476 = vunpack.c.h.b16 %v58
  %v1477 = vunpack.c.l.b16 %v59
  %v1478 = vunpack.c.h.b16 %v59
  %v1479 = vunpack.c.l.b16 %v60
  %v1480 = vunpack.c.h.b16 %v60
  %v1481 = vunpack.c.l.b16 %v61
  %v1482 = vunpack.c.h.b16 %v61
  %v1483 = vunpack.c.l.b16 %v62
  %v1484 = vunpack.c.h.b16 %v62
  %v1485 = vunpack.c.l.b16 %v63
  %v1486 = vunpack.c.h.b16 %v63
  %v1487 = vunpack.c.l.b16 %v64
  %v1488 = vunpack.c.h.b16 %v64
  %v1489 = vunpack.c.l.b16 %v65
  %v1490 = vunpack.c.h.b16 %v65
  %v1491 = vunpack.c.l.b16 %v66
  %v1492 = vunpack.c.h.b16 %v66
  %v1493 = vunpack.c.l.b16 %v67
  %v1494 = vunpack.c.h.b16 %v67
  %v1495 = vunpack.c.l.b16 %v68
  %v1496 = vunpack.c.h.b16 %v68
  %v1497 = vunpack.c.l.b16 %v69
  %v1498 = vunpack.c.h.b16 %v69
  %v1499 = vunpack.c.l.b16 %v70
  %v1500 = vunpack.c.h.b16 %v70
  %v1501 = vunpack.c.l.b16 %v71
  %v1502 = vunpack.c.h.b16 %v71
  %v1503 = vunpack.c.l.b16 %v72
  %v1504 = vunpack.c.h.b16 %v72
  %v1505 = vunpack.c.l.b16 %v73
  %v1506 = vunpack.c.h.b16 %v73
  %v1507 = vunpack.c.l.b16 %v74
  %v1508 = vunpack.c.h.b16 %v74
  %v1509 = vunpack.c.l.b16 %v75
  %v1510 = vunpack.c.h.b16 %v75
  %v1511 = vunpack.c.l.b16 %v76
  %v1512 = vunpack.c.h.b16 %v76
  %v1513 = vunpack.c.l.b16 %v77
  %v1514 = vunpack.c.h.b16 %v77
  %v1515 = vunpack.c.l.b16 %v78
  %v1516 = vunpack.c.h.b16 %v78
  %v1517 = vunpack.c.l.b16 %v79
  %v1518 = vunpack.c.h.b16 %v79
  %v1519 = vunpack.c.l.b16 %v80
  %v1520 = vunpack.c.h.b16 %v80
  %v1521 = vunpack.c.l.b16 %v81
  %v1522 = vunpack.c.h.b16 %v81
  %v1523 = vunpack.c.l.b16 %v82
  %v1524 = vunpack.c.h.b16 %v82
  %v1525 = vunpack.c.l.b16 %v83
  %v1526 = vunpack.c.h.b16 %v83
  %v1527 = vunpack.c.l.b16 %v84
  %v1528 = vunpack.c.h.b16 %v84
  %v1529 = vunpack.c.l.b16 %v85
  %v1530 = vunpack.c.h.b16 %v85
  %v1531 = vunpack.c.l.b16 %v86
  %v1532 = vunpack.c.h.b16 %v86
  %v1533 = vunpack.c.l.b16 %v87
  %v1534 = vunpack.c.h.b16 %v87
  %v1535 = vunpack.c.l.b16 %v88
  %v1536 = vunpack.c.h.b16 %v88
  %v1537 = vunpack.c.l.b16 %v89
  %v1538 = vunpack.c.h.b16 %v89
  %v1539 = vunpack.c.l.b16 %v90
  %v1540 = vunpack.c.h.b16 %v90
  %v1541 = vunpack.c.l.b16 %v91
  %v1542 = vunpack.c.h.b16 %v91
  %v1543 = vunpack.c.l.b16 %v92
  %v1544 = vunpack.c.h.b16 %v92
  %v1545 = vunpack.c.l.b16 %v93
  %v1546 = vunpack.c.h.b16 %v93
  %v1547 = vunpack.c.l.b16 %v94
  %v1548 = vunpack.c.h.b16 %v94
  %v1549 = vunpack.c.l.b16 %v95
  %v1550 = vunpack.c.h.b16 %v95
  %v1551 = vunpack.c.l.b16 %v96
  %v1552 = vunpack.c.h.b16 %v96
  %v1553 = vunpack.c.l.b16 %v97
  %v1554 = vunpack.c.h.b16 %v97
  %v1555 = vunpack.c.l.b16 %v98
  %v1556 = vunpack.c.h.b16 %v98
  %v1557 = vunpack.c.l.b16 %v99
  %v1558 = vunpack.c.h.b16 %v99
  %v1559 = vunpack.c.l.b16 %v100
  %v1560 = vunpack.c.h.b16 %v100
  %v1561 = vunpack.c.l.b16 %v101
  %v1562 = vunpack.c.h.b16 %v101
  %v1563 = vunpack.c.l.b16 %v102
  %v1564 = vunpack.c.h.b16 %v102
  %v1565 = vunpack.c.l.b16 %v103
  %v1566 = vunpack.c.h.b16 %v103
  %v1567 = vunpack.c.l.b16 %v104
  %v1568 = vunpack.c.h.b16 %v104
  %v1569 = vunpack.c.l.b16 %v105
  %v1570 = vunpack.c.h.b16 %v105
  %v1571 = vunpack.c.l.b16 %v106
  %v1572 = vunpack.c.h.b16 %v106
  %v1573 = vunpack.c.l.b16 %v107
  %v1574 = vunpack.c.h.b16 %v107
  %v1575 = vunpack.c.l.b16 %v108
  %v1576 = vunpack.c.h.b16 %v108
  %v1577 = vunpack.c.l.b16 %v109
  %v1578 = vunpack.c.h.b16 %v109
  %v1579 = vunpack.c.l.b16 %v110
  %v1580 = vunpack.c.h.b16 %v110
  %v1581 = vunpack.c.l.b16 %v111
  %v1582 = vunpack.c.h.b16 %v111
  %v1583 = vunpack.c.l.b16 %v112
  %v1584 = vunpack.c.h.b16 %v112
  %v1585 = vunpack.c.l.b16 %v113
  %v1586 = vunpack.c.h.b16 %v113
  %v1587 = vunpack.c.l.b16 %v114
  %v1588 = vunpack.c.h.b16 %v114
  %v1589 = vunpack.c.l.b16 %v115
  %v1590 = vunpack.c.h.b16 %v115
  %v1591 = vunpack.c.l.b16 %v116
  %v1592 = vunpack.c.h.b16 %v116
  %v1593 = vunpack.c.l.b16 %v117
  %v1594 = vunpack.c.h.b16 %v117
  %v1595 = vunpack.c.l.b16 %v118
  %v1596 = vunpack.c.h.b16 %v118
  %v1597 = vunpack.c.l.b16 %v119
  %v1598 = vunpack.c.h.b16 %v119
  %v1599 = vunpack.c.l.b16 %v120
  %v1600 = vunpack.c.h.b16 %v120
  %v1601 = vunpack.c.l.b16 %v121
  %v1602 = vunpack.c.h.b16 %v121
  %v1603 = vunpack.c.l.b16 %v122
  %v1604 = vunpack.c.h.b16 %v122
  %v1605 = vunpack.c.l.b16 %v123
  %v1606 = vunpack.c.h.b16 %v123
  %v1607 = vunpack.c.l.b16 %v124
  %v1608 = vunpack.c.h.b16 %v124
  %v1609 = vunpack.c.l.b16 %v125
  %v1610 = vunpack.c.h.b16 %v125
  %v1611 = vunpack.c.l.b16 %v126
  %v1612 = vunpack.c.h.b16 %v126
  %v1613 = vunpack.c.l.b16 %v127
  %v1614 = vunpack.c.h.b16 %v127
  %v1615 = vunpack.c.l.b16 %v128
  %v1616 = vunpack.c.h.b16 %v128
  %v1617 = vunpack.c.l.b16 %v129
  %v1618 = vunpack.c.h.b16 %v129
  %v1619 = vunpack.c.l.b16 %v130
  %v1620 = vunpack.c.h.b16 %v130
  %v1621 = vunpack.c.l.b16 %v131
  %v1622 = vunpack.c.h.b16 %v131
  %v1623 = vunpack.c.l.b16 %v132
  %v1624 = vunpack.c.h.b16 %v132
  %v1625 = vunpack.c.l.b16 %v133
  %v1626 = vunpack.c.h.b16 %v133
  %v1627 = vunpack.c.l.b16 %v134
  %v1628 = vunpack.c.h.b16 %v134
  %v1629 = vunpack.c.l.b16 %v135
  %v1630 = vunpack.c.h.b16 %v135
  %v1631 = vunpack.c.l.b16 %v136
  %v1632 = vunpack.c.h.b16 %v136
  %v1633 = vunpack.c.l.b16 %v137
  %v1634 = vunpack.c.h.b16 %v137
  %v1635 = vunpack.c.l.b16 %v138
  %v1636 = vunpack.c.h.b16 %v138
  %v1637 = vunpack.c.l.b16 %v139
  %v1638 = vunpack.c.h.b16 %v139
  %v1639 = vunpack.c.l.b16 %v140
  %v1640 = vunpack.c.h.b16 %v140
  %v1641 = vunpack.c.l.b16 %v141
  %v1642 = vunpack.c.h.b16 %v141
  %v1643 = vunpack.c.l.b16 %v142
  %v1644 = vunpack.c.h.b16 %v142
  %v1645 = vunpack.c.l.b16 %v143
  %v1646 = vunpack.c.h.b16 %v143
  %v1647 = vunpack.c.l.b16 %v144
  %v1648 = vunpack.c.h.b16 %v144
  %v1649 = vunpack.c.l.b16 %v145
  %v1650 = vunpack.c.h.b16 %v145
  %v1651 = vunpack.c.l.b16 %v146
  %v1652 = vunpack.c.h.b16 %v146
  %v1653 = vunpack.c.l.b16 %v147
  %v1654 = vunpack.c.h.b16 %v147
  %v1655 = vunpack.c.l.b16 %v148
  %v1656 = vunpack.c.h.b16 %v148
  %v1657 = vunpack.c.l.b16 %v149
  %v1658 = vunpack.c.h.b16 %v149
  %v1659 = vunpack.c.l.b16 %v150
  %v1660 = vunpack.c.h.b16 %v150
  %v1661 = vunpack.c.l.b16 %v151
  %v1662 = vunpack.c.h.b16 %v151
  %v1663 = vunpack.c.l.b16 %v152
  %v1664 = vunpack.c.h.b16 %v152
  %v1665 = vunpack.c.l.b16 %v153
  %v1666 = vunpack.c.h.b16 %v153
  %v1667 = vunpack.c.l.b16 %v154
  %v1668 = vunpack.c.h.b16 %v154
  %v1669 = vunpack.c.l.b16 %v155
  %v1670 = vunpack.c.h.b16 %v155
  %v1671 = vunpack.c.l.b16 %v156
  %v1672 = vunpack.c.h.b16 %v156
  %v1673 = vunpack.c.l.b16 %v157
  %v1674 = vunpack.c.h.b16 %v157
  %v1675 = vunpack.c.l.b16 %v158
  %v1676 = vunpack.c.h.b16 %v158
  %v1677 = vunpack.c.l.b16 %v159
  %v1678 = vunpack.c.h.b16 %v159
  %v1679 = vunpack.c.l.b16 %v160
  %v1680 = vunpack.c.h.b16 %v160
  %v1681 = vunpack.c.l.b16 %v161
  %v1682 = vunpack.c.h.b16 %v161
  %v1683 = vunpack.c.l.b16 %v162
  %v1684 = vunpack.c.h.b16 %v162
  %v1685 = vunpack.c.l.b16 %v163
  %v1686 = vunpack.c.h.b16 %v163
  %v1687 = vunpack.c.l.b16 %v164
  %v1688 = vunpack.c.h.b16 %v164
  %v1689 = vunpack.c.l.b16 %v165
  %v1690 = vunpack.c.h.b16 %v165
  %v1691 = vunpack.c.l.b16 %v166
  %v1692 = vunpack.c.h.b16 %v166
  %v1693 = vunpack.c.l.b16 %v167
  %v1694 = vunpack.c.h.b16 %v167
  %v1695 = vunpack.c.l.b16 %v168
  %v1696 = vunpack.c.h.b16 %v168
  %v1697 = vunpack.c.l.b16 %v169
  %v1698 = vunpack.c.h.b16 %v169
  %v1699 = vunpack.c.l.b16 %v170
  %v1700 = vunpack.c.h.b16 %v170
  %v1701 = vunpack.c.l.b16 %v171
  %v1702 = vunpack.c.h.b16 %v171
  %v1703 = vunpack.c.l.b16 %v172
  %v1704 = vunpack.c.h.b16 %v172
  %v1705 = vunpack.c.l.b16 %v173
  %v1706 = vunpack.c.h.b16 %v173
  %v1707 = vunpack.c.l.b16 %v174
  %v1708 = vunpack.c.h.b16 %v174
  %v1709 = vunpack.c.l.b16 %v175
  %v1710 = vunpack.c.h.b16 %v175
  %v1711 = vunpack.c.l.b16 %v176
  %v1712 = vunpack.c.h.b16 %v176
  %v1713 = vunpack.c.l.b16 %v177
  %v1714 = vunpack.c.h.b16 %v177
  %v1715 = vunpack.c.l.b16 %v178
  %v1716 = vunpack.c.h.b16 %v178
  %v1717 = vunpack.c.l.b16 %v179
  %v1718 = vunpack.c.h.b16 %v179
  %v1719 = vunpack.c.l.b16 %v180
  %v1720 = vunpack.c.h.b16 %v180
  %v1721 = vunpack.c.l.b16 %v181
  %v1722 = vunpack.c.h.b16 %v181
  %v1723 = vunpack.c.l.b16 %v182
  %v1724 = vunpack.c.h.b16 %v182
  %v1725 = vunpack.c.l.b16 %v183
  %v1726 = vunpack.c.h.b16 %v183
  %v1727 = vunpack.c.l.b16 %v184
  %v1728 = vunpack.c.h.b16 %v184
  %v1729 = vunpack.c.l.b16 %v185
  %v1730 = vunpack.c.h.b16 %v185
  %v1731 = vunpack.c.l.b16 %v186
  %v1732 = vunpack.c.h.b16 %v186
  %v1733 = vunpack.c.l.b16 %v187
  %v1734 = vunpack.c.h.b16 %v187
  %v1735 = vunpack.c.l.b16 %v188
  %v1736 = vunpack.c.h.b16 %v188
  %v1737 = vunpack.c.l.b16 %v189
  %v1738 = vunpack.c.h.b16 %v189
  %v1739 = vunpack.c.l.b16 %v190
  %v1740 = vunpack.c.h.b16 %v190
  %v1741 = vunpack.c.l.b16 %v191
  %v1742 = vunpack.c.h.b16 %v191
  %v1743 = vunpack.c.l.b16 %v192
  %v1744 = vunpack.c.h.b16 %v192
  %v1745 = vunpack.c.l.b16 %v193
  %v1746 = vunpack.c.h.b16 %v193
  %v1747 = vunpack.c.l.b16 %v194
  %v1748 = vunpack.c.h.b16 %v194
  %v1749 = vunpack.c.l.b16 %v195
  %v1750 = vunpack.c.h.b16 %v195
  %v1751 = vunpack.c.l.b16 %v196
  %v1752 = vunpack.c.h.b16 %v196
  %v1753 = vunpack.c.l.b16 %v197
  %v1754 = vunpack.c.h.b16 %v197
  %v1755 = vunpack.c.l.b16 %v198
  %v1756 = vunpack.c.h.b16 %v198
  %v1757 = vunpack.c.l.b16 %v199
  %v1758 = vunpack.c.h.b16 %v199
  %v1759 = vunpack.c.l.b16 %v200
  %v1760 = vunpack.c.h.b16 %v200
  %v1761 = vunpack.c.l.b16 %v201
  %v1762 = vunpack.c.h.b16 %v201
  %v1763 = vunpack.c.l.b16 %v202
  %v1764 = vunpack.c.h.b16 %v202
  %v1765 = vunpack.c.l.b16 %v203
  %v1766 = vunpack.c.h.b16 %v203
  %v1767 = vunpack.c.l.b16 %v204
  %v1768 = vunpack.c.h.b16 %v204
  %v1769 = vunpack.c.l.b16 %v205
  %v1770 = vunpack.c.h.b16 %v205
  %v1771 = vunpack.c.l.b16 %v206
  %v1772 = vunpack.c.h.b16 %v206
  %v1773 = vunpack.c.l.b16 %v207
  %v1774 = vunpack.c.h.b16 %v207
  %v1775 = vunpack.c.l.b16 %v208
  %v1776 = vunpack.c.h.b16 %v208
  %v1777 = vunpack.c.l.b16 %v209
  %v1778 = vunpack.c.h.b16 %v209
  %v1779 = vunpack.c.l.b16 %v210
  %v1780 = vunpack.c.h.b16 %v210
  %v1781 = vunpack.c.l.b16 %v211
  %v1782 = vunpack.c.h.b16 %v211
  %v1783 = vunpack.c.l.b16 %v212
  %v1784 = vunpack.c.h.b16 %v212
  %v1785 = vunpack.c.l.b16 %v213
  %v1786 = vunpack.c.h.b16 %v213
  %v1787 = vunpack.c.l.b16 %v214
  %v1788 = vunpack.c.h.b16 %v214
  %v1789 = vunpack.c.l.b16 %v215
  %v1790 = vunpack.c.h.b16 %v215
  %v1791 = vunpack.c.l.b16 %v216
  %v1792 = vunpack.c.h.b16 %v216
  %v1793 = vunpack.c.l.b16 %v217
  %v1794 = vunpack.c.h.b16 %v217
  %v1795 = vunpack.c.l.b16 %v218
  %v1796 = vunpack.c.h.b16 %v218
  %v1797 = vunpack.c.l.b16 %v219
  %v1798 = vunpack.c.h.b16 %v219
  %v1799 = vunpack.c.l.b16 %v220
  %v1800 = vunpack.c.h.b16 %v220
  %v1801 = vunpack.c.l.b16 %v221
  %v1802 = vunpack.c.h.b16 %v221
  %v1803 = vunpack.c.l.b16 %v222
  %v1804 = vunpack.c.h.b16 %v222
  %v1805 = vunpack.c.l.b16 %v223
  %v1806 = vunpack.c.h.b16 %v223
  %v1807 = vunpack.c.l.b16 %v224
  %v1808 = vunpack.c.h.b16 %v224
  %v1809 = vunpack.c.l.b16 %v225
  %v1810 = vunpack.c.h.b16 %v225
  %v1811 = vunpack.c.l.b16 %v226
  %v1812 = vunpack.c.h.b16 %v226
  %v1813 = vunpack.c.l.b16 %v227
  %v1814 = vunpack.c.h.b16 %v227
  %v1815 = vunpack.c.l.b16 %v228
  %v1816 = vunpack.c.h.b16 %v228
  %v1817 = vunpack.c.l.b16 %v229
  %v1818 = vunpack.c.h.b16 %v229
  %v1819 = vunpack.c.l.b16 %v230
  %v1820 = vunpack.c.h.b16 %v230
  %v1821 = vunpack.c.l.b16 %v231
  %v1822 = vunpack.c.h.b16 %v231
  %v1823 = vunpack.c.l.b16 %v232
  %v1824 = vunpack.c.h.b16 %v232
  %v1825 = vunpack.c.l.b16 %v233
  %v1826 = vunpack.c.h.b16 %v233
  %v1827 = vunpack.c.l.b16 %v234
  %v1828 = vunpack.c.h.b16 %v234
  %v1829 = vunpack.c.l.b16 %v235
  %v1830 = vunpack.c.h.b16 %v235
  %v1831 = vunpack.c.l.b16 %v236
  %v1832 = vunpack.c.h.b16 %v236
  %v1833 = vunpack.c.l.b16 %v237
  %v1834 = vunpack.c.h.b16 %v237
  %v1835 = vunpack.c.l.b16 %v238
  %v1836 = vunpack.c.h.b16 %v238
  %v1837 = vunpack.c.l.b16 %v239
  %v1838 = vunpack.c.h.b16 %v239
  %v1839 = vunpack.c.l.b16 %v240
  %v1840 = vunpack.c.h.b16 %v240
  %v1841 = vunpack.c.l.b16 %v241
  %v1842 = vunpack.c.h.b16 %v241
  %v1843 = vunpack.c.l.b16 %v242
  %v1844 = vunpack.c.h.b16 %v242
  %v1845 = vunpack.c.l.b16 %v243
  %v1846 = vunpack.c.h.b16 %v243
  %v1847 = vunpack.c.l.b16 %v244
  %v1848 = vunpack.c.h.b16 %v244
  %v1849 = vunpack.c.l.b16 %v245
  %v1850 = vunpack.c.h.b16 %v245
  %v1851 = vunpack.c.l.b16 %v246
  %v1852 = vunpack.c.h.b16 %v246
  %v1853 = vunpack.c.l.b16 %v247
  %v1854 = vunpack.c.h.b16 %v247
  %v1855 = vunpack.c.l.b16 %v248
  %v1856 = vunpack.c.h.b16 %v248
  %v1857 = vunpack.c.l.b16 %v249
  %v1858 = vunpack.c.h.b16 %v249
  %v1859 = vunpack.c.l.b16 %v250
  %v1860 = vunpack.c.h.b16 %v250
  %v1861 = vunpack.c.l.b16 %v251
  %v1862 = vunpack.c.h.b16 %v251
  %v1863 = vunpack.c.l.b16 %v252
  %v1864 = vunpack.c.h.b16 %v252
  %v1865 = vunpack.c.l.b16 %v253
  %v1866 = vunpack.c.h.b16 %v253
  %v1867 = vunpack.c.l.b16 %v254
  %v1868 = vunpack.c.h.b16 %v254
  %v1869 = vunpack.c.l.b16 %v255
  %v1870 = vunpack.c.h.b16 %v255
  %v1871 = vunpack.c.l.b16 %v256
  %v1872 = vunpack.c.h.b16 %v256
  %v1873 = vunpack.c.l.b16 %v257
  %v1874 = vunpack.c.h.b16 %v257
  %v1875 = vunpack.c.l.b16 %v258
  %v1876 = vunpack.c.h.b16 %v258
  %v1877 = vunpack.c.l.b16 %v259
  %v1878 = vunpack.c.h.b16 %v259
  %v1879 = vunpack.c.l.b16 %v260
  %v1880 = vunpack.c.h.b16 %v260
  %v1881 = vunpack.c.l.b16 %v261
  %v1882 = vunpack.c.h.b16 %v261
  %v1883 = vunpack.c.l.b16 %v262
  %v1884 = vunpack.c.h.b16 %v262
  %v1885 = vunpack.c.l.b16 %v263
  %v1886 = vunpack.c.h.b16 %v263
  %v1887 = vunpack.c.l.b16 %v264
  %v1888 = vunpack.c.h.b16 %v264
  %v1889 = vpack.c.b16 %v1483, %v1425
  %v1890 = vpack.c.b16 %v1484, %v1426
  %v1891 = vpack.c.b16 %v1485, %v1427
  %v1892 = vpack.c.b16 %v1486, %v1428
  %v1893 = vpack.c.b16 %v1487, %v1429
  %v1894 = vpack.c.b16 %v1488, %v1430
  %v1895 = vpack.c.b16 %v1489, %v1431
  %v1896 = vpack.c.b16 %v1490, %v1432
  %v1897 = vpack.c.b16 %v1491, %v1433
  %v1898 = vpack.c.b16 %v1492, %v1434
  %v1899 = vpack.c.b16 %v1493, %v1435
  %v1900 = vpack.c.b16 %v1494, %v1436
  %v1901 = vpack.c.b16 %v1495, %v1437
  %v1902 = vpack.c.b16 %v1496, %v1438
  %v1903 = vpack.c.b16 %v1497, %v1439
  %v1904 = vpack.c.b16 %v1498, %v1440
  %v1905 = vpack.c.b16 %v1499, %v1441
  %v1906 = vpack.c.b16 %v1500, %v1442
  %v1907 = vpack.c.b16 %v1501, %v1443
  %v1908 = vpack.c.b16 %v1502, %v1444
  %v1909 = vpack.c.b16 %v1503, %v1445
  %v1910 = vpack.c.b16 %v1504, %v1446
  %v1911 = vpack.c.b16 %v1505, %v1447
  %v1912 = vpack.c.b16 %v1506, %v1448
  %v1913 = vpack.c.b16 %v1507, %v1449
  %v1914 = vpack.c.b16 %v1508, %v1450
  %v1915 = vpack.c.b16 %v1509, %v1451
  %v1916 = vpack.c.b16 %v1510, %v1452
  %v1917 = vpack.c.b16 %v1511, %v1453
  %v1918 = vpack.c.b16 %v1512, %v1454
  %v1919 = vpack.c.b16 %v1513, %v1455
  %v1920 = vpack.c.b16 %v1514, %v1456
  %v1921 = vpack.c.b16 %v1515, %v1457
  %v1922 = vpack.c.b16 %v1516, %v1458
  %v1923 = vpack.c.b16 %v1517, %v1459
  %v1924 = vpack.c.b16 %v1518, %v1460
  %v1925 = vpack.c.b16 %v1519, %v1461
  %v1926 = vpack.c.b16 %v1520, %v1462
  %v1927 = vpack.c.b16 %v1521, %v1463
  %v1928 = vpack.c.b16 %v1522, %v1464
  %v1929 = vpack.c.b16 %v1523, %v1465
  %v1930 = vpack.c.b16 %v1524, %v1466
  %v1931 = vpack.c.b16 %v1525, %v1467
  %v1932 = vpack.c.b16 %v1526, %v1468
  %v1933 = vpack.c.b16 %v1527, %v1469
  %v1934 = vpack.c.b16 %v1528, %v1470
  %v1935 = vpack.c.b16 %v1529, %v1471
  %v1936 = vpack.c.b16 %v1530, %v1472
  %v1937 = vpack.c.b16 %v1531, %v1473
  %v1938 = vpack.c.b16 %v1532, %v1474
  %v1939 = vpack.c.b16 %v1533, %v1475
  %v1940 = vpack.c.b16 %v1534, %v1476
  %v1941 = vpack.c.b16 %v1535, %v1477
  %v1942 = vpack.c.b16 %v1536, %v1478
  %v1943 = vpack.c.b16 %v1537, %v1479
  %v1944 = vpack.c.b16 %v1538, %v1480
  %v1945 = vpack.c.b16 %v1539, %v1481
  %v1946 = vpack.c.b16 %v1540, %v1482
  %v1947 = vpack.c.b16 %v1599, %v1541
  %v1948 = vpack.c.b16 %v1600, %v1542
  %v1949 = vpack.c.b16 %v1601, %v1543
  %v1950 = vpack.c.b16 %v1602, %v1544
  %v1951 = vpack.c.b16 %v1603, %v1545
  %v1952 = vpack.c.b16 %v1604, %v1546
  %v1953 = vpack.c.b16 %v1605, %v1547
  %v1954 = vpack.c.b16 %v1606, %v1548
  %v1955 = vpack.c.b16 %v1607, %v1549
  %v1956 = vpack.c.b16 %v1608, %v1550
  %v1957 = vpack.c.b16 %v1609, %v1551
  %v1958 = vpack.c.b16 %v1610, %v1552
  %v1959 = vpack.c.b16 %v1611, %v1553
  %v1960 = vpack.c.b16 %v1612, %v1554
  %v1961 = vpack.c.b16 %v1613, %v1555
  %v1962 = vpack.c.b16 %v1614, %v1556
  %v1963 = vpack.c.b16 %v1615, %v1557
  %v1964 = vpack.c.b16 %v1616, %v1558
  %v1965 = vpack.c.b16 %v1617, %v1559
  %v1966 = vpack.c.b16 %v1618, %v1560
  %v1967 = vpack.c.b16 %v1619, %v1561
  %v1968 = vpack.c.b16 %v1620, %v1562
  %v1969 = vpack.c.b16 %v1621, %v1563
  %v1970 = vpack.c.b16 %v1622, %v1564
  %v1971 = vpack.c.b16 %v1623, %v1565
  %v1972 = vpack.c.b16 %v1624, %v1566
  %v1973 = vpack.c.b16 %v1625, %v1567
  %v1974 = vpack.c.b16 %v1626, %v1568
  %v1975 = vpack.c.b16 %v1627, %v1569
  %v1976 = vpack.c.b16 %v1628, %v1570
  %v1977 = vpack.c.b16 %v1629, %v1571
  %v1978 = vpack.c.b16 %v1630, %v1572
  %v1979 = vpack.c.b16 %v1631, %v1573
  %v1980 = vpack.c.b16 %v1632, %v1574
  %v1981 = vpack.c.b16 %v1633, %v1575
  %v1982 = vpack.c.b16 %v1634, %v1576
  %v1983 = vpack.c.b16 %v1635, %v1577
  %v1984 = vpack.c.b16 %v1636, %v1578
  %v1985 = vpack.c.b16 %v1637, %v1579
  %v1986 = vpack.c.b16 %v1638, %v1580
  %v1987 = vpack.c.b16 %v1639, %v1581
  %v1988 = vpack.c.b16 %v1640, %v1582
  %v1989 = vpack.c.b16 %v1641, %v1583
  %v1990 = vpack.c.b16 %v1642, %v1584
  %v1991 = vpack.c.b16 %v1643, %v1585
  %v1992 = vpack.c.b16 %v1644, %v1586
  %v1993 = vpack.c.b16 %v1645, %v1587
  %v1994 = vpack.c.b16 %v1646, %v1588
  %v1995 = vpack.c.b16 %v1647, %v1589
  %v1996 = vpack.c.b16 %v1648, %v1590
  %v1997 = vpack.c.b16 %v1649, %v1591
  %v1998 = vpack.c.b16 %v1650, %v1592
  %v1999 = vpack.c.b16 %v1651, %v1593
  %v2000 = vpack.c.b16 %v1652, %v1594
  %v2001 = vpack.c.b16 %v1653, %v1595
  %v2002 = vpack.c.b16 %v1654, %v1596
  %v2003 = vpack.c.b16 %v1655, %v1597
  %v2004 = vpack.c.b16 %v1656, %v1598
  %v2005 = vpack.c.b16 %v1715, %v1657
  %v2006 = vpack.c.b16 %v1716, %v1658
  %v2007 = vpack.c.b16 %v1717, %v1659
  %v2008 = vpack.c.b16 %v1718, %v1660
  %v2009 = vpack.c.b16 %v1719, %v1661
  %v2010 = vpack.c.b16 %v1720, %v1662
  %v2011 = vpack.c.b16 %v1721, %v1663
  %v2012 = vpack.c.b16 %v1722, %v1664
  %v2013 = vpack.c.b16 %v1723, %v1665
  %v2014 = vpack.c.b16 %v1724, %v1666
  %v2015 = vpack.c.b16 %v1725, %v1667
  %v2016 = vpack.c.b16 %v1726, %v1668
  %v2017 = vpack.c.b16 %v1727, %v1669
  %v2018 = vpack.c.b16 %v1728, %v1670
  %v2019 = vpack.c.b16 %v1729, %v1671
  %v2020 = vpack.c.b16 %v1730, %v1672
  %v2021 = vpack.c.b16 %v1731, %v1673
  %v2022 = vpack.c.b16 %v1732, %v1674
  %v2023 = vpack.c.b16 %v1733, %v1675
  %v2024 = vpack.c.b16 %v1734, %v1676
  %v2025 = vpack.c.b16 %v1735, %v1677
  %v2026 = vpack.c.b16 %v1736, %v1678
  %v2027 = vpack.c.b16 %v1737, %v1679
  %v2028 = vpack.c.b16 %v1738, %v1680
  %v2029 = vpack.c.b16 %v1739, %v1681
  %v2030 = vpack.c.b16 %v1740, %v1682
  %v2031 = vpack.c.b16 %v1741, %v1683
  %v2032 = vpack.c.b16 %v1742, %v1684
  %v2033 = vpack.c.b16 %v1743, %v1685
  %v2034 = vpack.c.b16 %v1744, %v1686
  %v2035 = vpack.c.b16 %v1745, %v1687
  %v2036 = vpack.c.b16 %v1746, %v1688
  %v2037 = vpack.c.b16 %v1747, %v1689
  %v2038 = vpack.c.b16 %v1748, %v1690
  %v2039 = vpack.c.b16 %v1749, %v1691
  %v2040 = vpack.c.b16 %v1750, %v1692
  %v2041 = vpack.c.b16 %v1751, %v1693
  %v2042 = vpack.c.b16 %v1752, %v1694
  %v2043 = vpack.c.b16 %v1753, %v1695
  %v2044 = vpack.c.b16 %v1754, %v1696
  %v2045 = vpack.c.b16 %v1755, %v1697
  %v2046 = vpack.c.b16 %v1756, %v1698
  %v2047 = vpack.c.b16 %v1757, %v1699
  %v2048 = vpack.c.b16 %v1758, %v1700
  %v2049 = vpack.c.b16 %v1759, %v1701
  %v2050 = vpack.c.b16 %v1760, %v1702
  %v2051 = vpack.c.b16 %v1761, %v1703
  %v2052 = vpack.c.b16 %v1762, %v1704
  %v2053 = vpack.c.b16 %v1763, %v1705
  %v2054 = vpack.c.b16 %v1764, %v1706
  %v2055 = vpack.c.b16 %v1765, %v1707
  %v2056 = vpack.c.b16 %v1766, %v1708
  %v2057 = vpack.c.b16 %v1767, %v1709
  %v2058 = vpack.c.b16 %v1768, %v1710
  %v2059 = vpack.c.b16 %v1769, %v1711
  %v2060 = vpack.c.b16 %v1770, %v1712
  %v2061 = vpack.c.b16 %v1771, %v1713
  %v2062 = vpack.c.b16 %v1772, %v1714
  %v2063 = vpack.c.b16 %v1831, %v1773
  %v2064 = vpack.c.b16 %v1832, %v1774
  %v2065 = vpack.c.b16 %v1833, %v1775
  %v2066 = vpack.c.b16 %v1834, %v1776
  %v2067 = vpack.c.b16 %v1835, %v1777
  %v2068 = vpack.c.b16 %v1836, %v1778
  %v2069 = vpack.c.b16 %v1837, %v1779
  %v2070 = vpack.c.b16 %v1838, %v1780
  %v2071 = vpack.c.b16 %v1839, %v1781
  %v2072 = vpack.c.b16 %v1840, %v1782
  %v2073 = vpack.c.b16 %v1841, %v1783
  %v2074 = vpack.c.b16 %v1842, %v1784
  %v2075 = vpack.c.b16 %v1843, %v1785
  %v2076 = vpack.c.b16 %v1844, %v1786
  %v2077 = vpack.c.b16 %v1845, %v1787
  %v2078 = vpack.c.b16 %v1846, %v1788
  %v2079 = vpack.c.b16 %v1847, %v1789
  %v2080 = vpack.c.b16 %v1848, %v1790
  %v2081 = vpack.c.b16 %v1849, %v1791
  %v2082 = vpack.c.b16 %v1850, %v1792
  %v2083 = vpack.c.b16 %v1851, %v1793
  %v2084 = vpack.c.b16 %v1852, %v1794
  %v2085 = vpack.c.b16 %v1853, %v1795
  %v2086 = vpack.c.b16 %v1854, %v1796
  %v2087 = vpack.c.b16 %v1855, %v1797
  %v2088 = vpack.c.b16 %v1856, %v1798
  %v2089 = vpack.c.b16 %v1857, %v1799
  %v2090 = vpack.c.b16 %v1858, %v1800
  %v2091 = vpack.c.b16 %v1859, %v1801
  %v2092 = vpack.c.b16 %v1860, %v1802
  %v2093 = vpack.c.b16 %v1861, %v1803
  %v2094 = vpack.c.b16 %v1862, %v1804
  %v2095 = vpack.c.b16 %v1863, %v1805
  %v2096 = vpack.c.b16 %v1864, %v1806
  %v2097 = vpack.c.b16 %v1865, %v1807
  %v2098 = vpack.c.b16 %v1866, %v1808
  %v2099 = vpack.c.b16 %v1867, %v1809
  %v2100 = vpack.c.b16 %v1868, %v1810
  %v2101 = vpack.c.b16 %v1869, %v1811
  %v2102 = vpack.c.b16 %v1870, %v1812
  %v2103 = vpack.c.b16 %v1871, %v1813
  %v2104 = vpack.c.b16 %v1872, %v1814
  %v2105 = vpack.c.b16 %v1873, %v1815
  %v2106 = vpack.c.b16 %v1874, %v1816
  %v2107 = vpack.c.b16 %v1875, %v1817
  %v2108 = vpack.c.b16 %v1876, %v1818
  %v2109 = vpack.c.b16 %v1877, %v1819
  %v2110 = vpack.c.b16 %v1878, %v1820
  %v2111 = vpack.c.b16 %v1879, %v1821
  %v2112 = vpack.c.b16 %v1880, %v1822
  %v2113 = vpack.c.b16 %v1881, %v1823
  %v2114 = vpack.c.b16 %v1882, %v1824
  %v2115 = vpack.c.b16 %v1883, %v1825
  %v2116 = vpack.c.b16 %v1884, %v1826
  %v2117 = vpack.c.b16 %v1885, %v1827
  %v2118 = vpack.c.b16 %v1886, %v1828
  %v2119 = vpack.c.b16 %v1887, %v1829
  %v2120 = vpack.c.b16 %v1888, %v1830
  %v3281 = vunpack.c.l.b16 %v265
  %v3282 = vunpack.c.l.b16 %v266
  %v3283 = vunpack.c.l.b16 %v267
  %v3284 = vunpack.c.l.b16 %v268
  %v3285 = vunpack.c.l.b16 %v269
  %v3286 = vunpack.c.l.b16 %v270
  %v3287 = vunpack.c.l.b16 %v271
  %v3288 = vunpack.c.l.b16 %v272
  %v3289 = vunpack.c.l.b16 %v273
  %v3290 = vunpack.c.l.b16 %v274
  %v3291 = vunpack.c.l.b16 %v275
  %v3292 = vunpack.c.l.b16 %v276
  %v3293 = vunpack.c.l.b16 %v277
  %v3294 = vunpack.c.l.b16 %v278
  %v3295 = vunpack.c.l.b16 %v279
  %v3296 = vunpack.c.l.b16 %v280
  %v3297 = vunpack.c.l.b16 %v281
  %v3298 = vunpack.c.l.b16 %v282
  %v3299 = vunpack.c.l.b16 %v283
  %v3300 = vunpack.c.l.b16 %v284
  %v3301 = vunpack.c.l.b16 %v285
  %v3302 = vunpack.c.l.b16 %v286
  %v3303 = vunpack.c.l.b16 %v287
  %v3304 = vunpack.c.l.b16 %v288
  %v3305 = vunpack.c.l.b16 %v289
  %v3306 = vunpack.c.l.b16 %v290
  %v3307 = vunpack.c.l.b16 %v291
  %v3308 = vunpack.c.l.b16 %v292
  %v3309 = vunpack.c.l.b16 %v293
  %v3310 = vunpack.c.l.b16 %v294
  %v3311 = vunpack.c.l.b16 %v295
  %v3312 = vunpack.c.l.b16 %v296
  %v3313 = vunpack.c.l.b16 %v297
  %v3314 = vunpack.c.l.b16 %v298
  %v3315 = vunpack.c.l.b16 %v299
  %v3316 = vunpack.c.l.b16 %v300
  %v3317 = vunpack.c.l.b16 %v301
  %v3318 = vunpack.c.l.b16 %v302
  %v3319 = vunpack.c.l.b16 %v303
  %v3320 = vunpack.c.l.b16 %v304
  %v3321 = vunpack.c.l.b16 %v305
  %v3322 = vunpack.c.l.b16 %v306
  %v3323 = vunpack.c.l.b16 %v307
  %v3324 = vunpack.c.l.b16 %v308
  %v3325 = vunpack.c.l.b16 %v309
  %v3326 = vunpack.c.l.b16 %v310
  %v3327 = vunpack.c.l.b16 %v311
  %v3328 = vunpack.c.l.b16 %v312
  %v3329 = vunpack.c.l.b16 %v313
  %v3330 = vunpack.c.l.b16 %v314
  %v3331 = vunpack.c.l.b16 %v315
  %v3332 = vunpack.c.l.b16 %v316
  %v3333 = vunpack.c.l.b16 %v317
  %v3334 = vunpack.c.l.b16 %v318
  %v3335 = vunpack.c.l.b16 %v319
  %v3336 = vunpack.c.l.b16 %v320
  %v3337 = vunpack.c.l.b16 %v321
  %v3338 = vunpack.c.l.b16 %v322
  %v3339 = vunpack.c.l.b16 %v323
  %v3340 = vunpack.c.l.b16 %v324
  %v3341 = vunpack.c.l.b16 %v325
  %v3342 = vunpack.c.l.b16 %v326
  %v3343 = vunpack.c.l.b16 %v327
  %v3344 = vunpack.c.l.b16 %v328
  %v3345 = vunpack.c.l.b16 %v329
  %v3346 = vunpack.c.l.b16 %v330
  %v3347 = vunpack.c.l.b16 %v331
  %v3348 = vunpack.c.l.b16 %v332
  %v3349 = vunpack.c.l.b16 %v333
  %v3350 = vunpack.c.l.b16 %v334
  %v3351 = vunpack.c.l.b16 %v335
  %v3352 = vunpack.c.l.b16 %v336
  %v3353 = vunpack.c.l.b16 %v337
  %v3354 = vunpack.c.l.b16 %v338
  %v3355 = vunpack.c.l.b16 %v339
  %v3356 = vunpack.c.l.b16 %v340
  %v3357 = vunpack.c.l.b16 %v341
  %v3358 = vunpack.c.l.b16 %v342
  %v3359 = vunpack.c.l.b16 %v343
  %v3360 = vunpack.c.l.b16 %v344
  %v3361 = vunpack.c.l.b16 %v345
  %v3362 = vunpack.c.l.b16 %v346
  %v3363 = vunpack.c.l.b16 %v347
  %v3364 = vunpack.c.l.b16 %v348
  %v3365 = vunpack.c.l.b16 %v349
  %v3366 = vunpack.c.l.b16 %v350
  %v3367 = vunpack.c.l.b16 %v351
  %v3368 = vunpack.c.l.b16 %v352
  %v3369 = vunpack.c.l.b16 %v353
  %v3370 = vunpack.c.l.b16 %v354
  %v3371 = vunpack.c.l.b16 %v355
  %v3372 = vunpack.c.l.b16 %v356
  %v3373 = vunpack.c.l.b16 %v357
  %v3374 = vunpack.c.l.b16 %v358
  %v3375 = vunpack.c.l.b16 %v359
  %v3376 = vunpack.c.l.b16 %v360
  %v3377 = vunpack.c.l.b16 %v361
  %v3378 = vunpack.c.l.b16 %v362
  %v3379 = vunpack.c.l.b16 %v363
  %v3380 = vunpack.c.l.b16 %v364
  %v3381 = vunpack.c.l.b16 %v365
  %v3382 = vunpack.c.l.b16 %v366
  %v3383 = vunpack.c.l.b16 %v367
  %v3384 = vunpack.c.l.b16 %v368
  %v3385 = vunpack.c.l.b16 %v369
  %v3386 = vunpack.c.l.b16 %v370
  %v3387 = vunpack.c.l.b16 %v371
  %v3388 = vunpack.c.l.b16 %v372
  %v3389 = vunpack.c.l.b16 %v373
  %v3390 = vunpack.c.l.b16 %v374
  %v3391 = vunpack.c.l.b16 %v375
  %v3392 = vunpack.c.l.b16 %v376
  %v3393 = vunpack.c.l.b16 %v377
  %v3394 = vunpack.c.l.b16 %v378
  %v3395 = vunpack.c.l.b16 %v379
  %v3396 = vunpack.c.l.b16 %v380
  %v3397 = vunpack.c.l.b16 %v381
  %v3398 = vunpack.c.l.b16 %v382
  %v3399 = vunpack.c.l.b16 %v383
  %v3400 = vunpack.c.l.b16 %v384
  %v3401 = vunpack.c.l.b16 %v385
  %v3402 = vunpack.c.l.b16 %v386
  %v3403 = vunpack.c.l.b16 %v387
  %v3404 = vunpack.c.l.b16 %v388
  %v3405 = vunpack.c.l.b16 %v389
  %v3406 = vunpack.c.l.b16 %v390
  %v3407 = vunpack.c.l.b16 %v391
  %v3408 = vunpack.c.l.b16 %v392
  %v3409 = vunpack.c.l.b16 %v393
  %v3410 = vunpack.c.l.b16 %v394
  %v3411 = vunpack.c.l.b16 %v395
  %v3412 = vunpack.c.l.b16 %v396
  %v3413 = vunpack.c.l.b16 %v397
  %v3414 = vunpack.c.l.b16 %v398
  %v3415 = vunpack.c.l.b16 %v399
  %v3416 = vunpack.c.l.b16 %v400
  %v3417 = vunpack.c.l.b16 %v401
  %v3418 = vunpack.c.l.b16 %v402
  %v3419 = vunpack.c.l.b16 %v403
  %v3420 = vunpack.c.l.b16 %v404
  %v3421 = vunpack.c.l.b16 %v405
  %v3422 = vunpack.c.l.b16 %v406
  %v3423 = vunpack.c.l.b16 %v407
  %v3424 = vunpack.c.l.b16 %v408
  %v3425 = vunpack.c.l.b16 %v409
  %v3426 = vunpack.c.l.b16 %v410
  %v3427 = vunpack.c.l.b16 %v411
  %v3428 = vunpack.c.l.b16 %v412
  %v3429 = vunpack.c.l.b16 %v413
  %v3430 = vunpack.c.l.b16 %v414
  %v3431 = vunpack.c.l.b16 %v415
  %v3432 = vunpack.c.l.b16 %v416
  %v3433 = vunpack.c.l.b16 %v417
  %v3434 = vunpack.c.l.b16 %v418
  %v3435 = vunpack.c.l.b16 %v419
  %v3436 = vunpack.c.l.b16 %v420
  %v3437 = vunpack.c.l.b16 %v421
  %v3438 = vunpack.c.l.b16 %v422
  %v3439 = vunpack.c.l.b16 %v423
  %v3440 = vunpack.c.l.b16 %v424
  %v3441 = vunpack.c.l.b16 %v425
  %v3442 = vunpack.c.l.b16 %v426
  %v3443 = vunpack.c.l.b16 %v427
  %v3444 = vunpack.c.l.b16 %v428
  %v3445 = vunpack.c.l.b16 %v429
  %v3446 = vunpack.c.l.b16 %v430
  %v3447 = vunpack.c.l.b16 %v431
  %v3448 = vunpack.c.l.b16 %v432
  %v3449 = vunpack.c.l.b16 %v433
  %v3450 = vunpack.c.l.b16 %v434
  %v3451 = vunpack.c.l.b16 %v435
  %v3452 = vunpack.c.l.b16 %v436
  %v3453 = vunpack.c.l.b16 %v437
  %v3454 = vunpack.c.l.b16 %v438
  %v3455 = vunpack.c.l.b16 %v439
  %v3456 = vunpack.c.l.b16 %v440
  %v3457 = vunpack.c.l.b16 %v441
  %v3458 = vunpack.c.l.b16 %v442
  %v3459 = vunpack.c.l.b16 %v443
  %v3460 = vunpack.c.l.b16 %v444
  %v3461 = vunpack.c.l.b16 %v445
  %v3462 = vunpack.c.l.b16 %v446
  %v3463 = vunpack.c.l.b16 %v447
  %v3464 = vunpack.c.l.b16 %v448
  %v3465 = vunpack.c.l.b16 %v449
  %v3466 = vunpack.c.l.b16 %v450
  %v3467 = vunpack.c.l.b16 %v451
  %v3468 = vunpack.c.l.b16 %v452
  %v3469 = vunpack.c.l.b16 %v453
  %v3470 = vunpack.c.l.b16 %v454
  %v3471 = vunpack.c.l.b16 %v455
  %v3472 = vunpack.c.l.b16 %v456
  %v3473 = vunpack.c.l.b16 %v457
  %v3474 = vunpack.c.l.b16 %v458
  %v3475 = vunpack.c.l.b16 %v459
  %v3476 = vunpack.c.l.b16 %v460
  %v3477 = vunpack.c.l.b16 %v461
  %v3478 = vunpack.c.l.b16 %v462
  %v3479 = vunpack.c.l.b16 %v463
  %v3480 = vunpack.c.l.b16 %v464
  %v3481 = vunpack.c.l.b16 %v465
  %v3482 = vunpack.c.l.b16 %v466
  %v3483 = vunpack.c.l.b16 %v467
  %v3484 = vunpack.c.l.b16 %v468
  %v3485 = vunpack.c.l.b16 %v469
  %v3486 = vunpack.c.l.b16 %v470
  %v3487 = vunpack.c.l.b16 %v471
  %v3488 = vunpack.c.l.b16 %v472
  %v3489 = vunpack.c.l.b16 %v473
  %v3490 = vunpack.c.l.b16 %v474
  %v3491 = vunpack.c.l.b16 %v475
  %v3492 = vunpack.c.l.b16 %v476
  %v3493 = vunpack.c.l.b16 %v477
  %v3494 = vunpack.c.l.b16 %v478
  %v3495 = vunpack.c.l.b16 %v479
  %v3496 = vunpack.c.l.b16 %v480
  %v3497 = vunpack.c.l.b16 %v481
  %v3498 = vunpack.c.l.b16 %v482
  %v3499 = vunpack.c.l.b16 %v483
  %v3500 = vunpack.c.l.b16 %v484
  %v3501 = vunpack.c.l.b16 %v485
  %v3502 = vunpack.c.l.b16 %v486
  %v3503 = vunpack.c.l.b16 %v487
  %v3504 = vunpack.c.l.b16 %v488
  %v3505 = vunpack.c.l.b16 %v489
  %v3506 = vunpack.c.l.b16 %v490
  %v3507 = vunpack.c.l.b16 %v491
  %v3508 = vunpack.c.l.b16 %v492
  %v3509 = vunpack.c.l.b16 %v493
  %v3510 = vunpack.c.l.b16 %v494
  %v3511 = vunpack.c.l.b16 %v495
  %v3512 = vunpack.c.l.b16 %v496
  %v3513 = vunpack.c.l.b16 %v497
  %v3514 = vunpack.c.l.b16 %v498
  %v3515 = vunpack.c.l.b16 %v499
  %v3516 = vunpack.c.l.b16 %v500
  %v3517 = vunpack.c.l.b16 %v501
  %v3518 = vunpack.c.l.b16 %v502
  %v3519 = vunpack.c.l.b16 %v503
  %v3520 = vunpack.c.l.b16 %v504
  %v3521 = vunpack.c.l.b16 %v505
  %v3522 = vunpack.c.l.b16 %v506
  %v3523 = vunpack.c.l.b16 %v507
  %v3524 = vunpack.c.l.b16 %v508
  %v3525 = vunpack.c.l.b16 %v509
  %v3526 = vunpack.c.l.b16 %v510
  %v3527 = vunpack.c.l.b16 %v511
  %v3528 = vunpack.c.l.b16 %v512
  %v3529 = vunpack.c.l.b16 %v513
  %v3530 = vunpack.c.l.b16 %v514
  %v3531 = vunpack.c.l.b16 %v515
  %v3532 = vunpack.c.l.b16 %v516
  %v3533 = vunpack.c.l.b16 %v517
  %v3534 = vunpack.c.l.b16 %v518
  %v3535 = vunpack.c.l.b16 %v519
  %v3536 = vunpack.c.l.b16 %v520
  %v3537 = vunpack.c.l.b16 %v521
  %v3538 = vunpack.c.l.b16 %v522
  %v3539 = vunpack.c.l.b16 %v523
  %v3540 = vunpack.c.l.b16 %v524
  %v3541 = vunpack.c.l.b16 %v525
  %v3542 = vunpack.c.l.b16 %v526
  %v3543 = vunpack.c.l.b16 %v527
  %v3544 = vunpack.c.l.b16 %v528
  %v3545 = vunpack.c.l.b16 %v529
  %v3546 = vunpack.c.l.b16 %v530
  %v3547 = vunpack.c.l.b16 %v531
  %v3548 = vunpack.c.l.b16 %v532
  %v3549 = vunpack.c.l.b16 %v533
  %v3550 = vunpack.c.l.b16 %v534
  %v3551 = vunpack.c.l.b16 %v535
  %v3552 = vunpack.c.l.b16 %v536
  %v3553 = vunpack.c.l.b16 %v537
  %v3554 = vunpack.c.l.b16 %v538
  %v3555 = vunpack.c.l.b16 %v539
  %v3556 = vunpack.c.l.b16 %v540
  %v3557 = vunpack.c.l.b16 %v541
  %v3558 = vunpack.c.l.b16 %v542
  %v3559 = vunpack.c.l.b16 %v543
  %v3560 = vunpack.c.l.b16 %v544
  %v3561 = vunpack.c.l.b16 %v545
  %v3562 = vunpack.c.l.b16 %v546
  %v3563 = vunpack.c.l.b16 %v547
  %v3564 = vunpack.c.l.b16 %v548
  %v3565 = vunpack.c.l.b16 %v549
  %v3566 = vunpack.c.l.b16 %v550
  %v3567 = vunpack.c.l.b16 %v551
  %v3568 = vunpack.c.l.b16 %v552
  %v3569 = vunpack.c.l.b16 %v553
  %v3570 = vunpack.c.l.b16 %v554
  %v3571 = vunpack.c.l.b16 %v555
  %v3572 = vunpack.c.l.b16 %v556
  %v3573 = vunpack.c.l.b16 %v557
  %v3574 = vunpack.c.l.b16 %v558
  %v3575 = vunpack.c.l.b16 %v559
  %v3576 = vunpack.c.l.b16 %v560
  %v3577 = vunpack.c.l.b16 %v561
  %v3578 = vunpack.c.l.b16 %v562
  %v3579 = vunpack.c.l.b16 %v563
  %v3580 = vunpack.c.l.b16 %v564
  %v3581 = vunpack.c.l.b16 %v565
  %v3582 = vunpack.c.l.b16 %v566
  %v3583 = vunpack.c.l.b16 %v567
  %v3584 = vunpack.c.l.b16 %v568
  %v3585 = vunpack.c.l.b16 %v569
  %v3586 = vunpack.c.l.b16 %v570
  %v3587 = vunpack.c.l.b16 %v571
  %v3588 = vunpack.c.l.b16 %v572
  %v3589 = vunpack.c.l.b16 %v573
  %v3590 = vunpack.c.l.b16 %v574
  %v3591 = vunpack.c.l.b16 %v575
  %v3592 = vunpack.c.l.b16 %v576
  %v3593 = vunpack.c.l.b16 %v577
  %v3594 = vunpack.c.l.b16 %v578
  %v3595 = vunpack.c.l.b16 %v579
  %v3596 = vunpack.c.l.b16 %v580
  %v3597 = vunpack.c.l.b16 %v581
  %v3598 = vunpack.c.l.b16 %v582
  %v3599 = vunpack.c.l.b16 %v583
  %v3600 = vunpack.c.l.b16 %v584
  %v3601 = vunpack.c.l.b16 %v585
  %v3602 = vunpack.c.l.b16 %v586
  %v3603 = vunpack.c.l.b16 %v587
  %v3604 = vunpack.c.l.b16 %v588
  %v3605 = vunpack.c.l.b16 %v589
  %v3606 = vunpack.c.l.b16 %v590
  %v3607 = vunpack.c.l.b16 %v591
  %v3608 = vunpack.c.l.b16 %v592
  %v3609 = vunpack.c.l.b16 %v593
  %v3610 = vunpack.c.l.b16 %v594
  %v3611 = vunpack.c.l.b16 %v595
  %v3612 = vunpack.c.l.b16 %v596
  %v3613 = vunpack.c.l.b16 %v597
  %v3614 = vunpack.c.l.b16 %v598
  %v3615 = vunpack.c.l.b16 %v599
  %v3616 = vunpack.c.l.b16 %v600
  %v3617 = vunpack.c.l.b16 %v601
  %v3618 = vunpack.c.l.b16 %v602
  %v3619 = vunpack.c.l.b16 %v603
  %v3620 = vunpack.c.l.b16 %v604
  %v3621 = vunpack.c.l.b16 %v605
  %v3622 = vunpack.c.l.b16 %v606
  %v3623 = vunpack.c.l.b16 %v607
  %v3624 = vunpack.c.l.b16 %v608
  %v3625 = vunpack.c.l.b16 %v609
  %v3626 = vunpack.c.l.b16 %v610
  %v3627 = vunpack.c.l.b16 %v611
  %v3628 = vunpack.c.l.b16 %v612
  %v3629 = vunpack.c.l.b16 %v613
  %v3630 = vunpack.c.l.b16 %v614
  %v3631 = vunpack.c.l.b16 %v615
  %v3632 = vunpack.c.l.b16 %v616
  %v3633 = vunpack.c.l.b16 %v617
  %v3634 = vunpack.c.l.b16 %v618
  %v3635 = vunpack.c.l.b16 %v619
  %v3636 = vunpack.c.l.b16 %v620
  %v3637 = vunpack.c.l.b16 %v621
  %v3638 = vunpack.c.l.b16 %v622
  %v3639 = vunpack.c.l.b16 %v623
  %v3640 = vunpack.c.l.b16 %v624
  %v3641 = vunpack.c.l.b16 %v625
  %v3642 = vunpack.c.l.b16 %v626
  %v3643 = vunpack.c.l.b16 %v627
  %v3644 = vunpack.c.l.b16 %v628
  %v3645 = vunpack.c.l.b16 %v629
  %v3646 = vunpack.c.l.b16 %v630
  %v3647 = vunpack.c.l.b16 %v631
  %v3648 = vunpack.c.l.b16 %v632
  %v3649 = vunpack.c.l.b16 %v633
  %v3650 = vunpack.c.l.b16 %v634
  %v3651 = vunpack.c.l.b16 %v635
  %v3652 = vunpack.c.l.b16 %v636
  %v3653 = vunpack.c.l.b16 %v637
  %v3654 = vunpack.c.l.b16 %v638
  %v3655 = vunpack.c.l.b16 %v639
  %v3656 = vunpack.c.l.b16 %v640
  %v3657 = vunpack.c.l.b16 %v641
  %v3658 = vunpack.c.l.b16 %v642
  %v3659 = vunpack.c.l.b16 %v643
  %v3660 = vunpack.c.l.b16 %v644
  %v3661 = vunpack.c.l.b16 %v645
  %v3662 = vunpack.c.l.b16 %v646
  %v3663 = vunpack.c.l.b16 %v647
  %v3664 = vunpack.c.l.b16 %v648
  %v3665 = vunpack.c.l.b16 %v649
  %v3666 = vunpack.c.l.b16 %v650
  %v3667 = vunpack.c.l.b16 %v651
  %v3668 = vunpack.c.l.b16 %v652
  %v3669 = vunpack.c.l.b16 %v653
  %v3670 = vunpack.c.l.b16 %v654
  %v3671 = vunpack.c.l.b16 %v655
  %v3672 = vunpack.c.l.b16 %v656
  %v3673 = vunpack.c.l.b16 %v657
  %v3674 = vunpack.c.l.b16 %v658
  %v3675 = vunpack.c.l.b16 %v659
  %v3676 = vunpack.c.l.b16 %v660
  %v3677 = vunpack.c.l.b16 %v661
  %v3678 = vunpack.c.l.b16 %v662
  %v3679 = vunpack.c.l.b16 %v663
  %v3680 = vunpack.c.l.b16 %v664
  %v3681 = vunpack.c.l.b16 %v665
  %v3682 = vunpack.c.l.b16 %v666
  %v3683 = vunpack.c.l.b16 %v667
  %v3684 = vunpack.c.l.b16 %v668
  %v3685 = vunpack.c.l.b16 %v669
  %v3686 = vunpack.c.l.b16 %v670
  %v3687 = vunpack.c.l.b16 %v671
  %v3688 = vunpack.c.l.b16 %v672
  %v3689 = vunpack.c.l.b16 %v673
  %v3690 = vunpack.c.l.b16 %v674
  %v3691 = vunpack.c.l.b16 %v675
  %v3692 = vunpack.c.l.b16 %v676
  %v3693 = vunpack.c.l.b16 %v677
  %v3694 = vunpack.c.l.b16 %v678
  %v3695 = vunpack.c.l.b16 %v679
  %v3696 = vunpack.c.l.b16 %v680
  %v3697 = vunpack.c.l.b16 %v681
  %v3698 = vunpack.c.l.b16 %v682
  %v3699 = vunpack.c.l.b16 %v683
  %v3700 = vunpack.c.l.b16 %v684
  %v3701 = vunpack.c.l.b16 %v685
  %v3702 = vunpack.c.l.b16 %v686
  %v3703 = vunpack.c.l.b16 %v687
  %v3704 = vunpack.c.l.b16 %v688
  %v3705 = vunpack.c.l.b16 %v689
  %v3706 = vunpack.c.l.b16 %v690
  %v3707 = vunpack.c.l.b16 %v691
  %v3708 = vunpack.c.l.b16 %v692
  %v3709 = vunpack.c.l.b16 %v693
  %v3710 = vunpack.c.l.b16 %v694
  %v3711 = vunpack.c.l.b16 %v695
  %v3712 = vunpack.c.l.b16 %v696
  %v3713 = vunpack.c.l.b16 %v697
  %v3714 = vunpack.c.l.b16 %v698
  %v3715 = vunpack.c.l.b16 %v699
  %v3716 = vunpack.c.l.b16 %v700
  %v3717 = vunpack.c.l.b16 %v701
  %v3718 = vunpack.c.l.b16 %v702
  %v3719 = vunpack.c.l.b16 %v703
  %v3720 = vunpack.c.l.b16 %v704
  %v3721 = vunpack.c.l.b16 %v705
  %v3722 = vunpack.c.l.b16 %v706
  %v3723 = vunpack.c.l.b16 %v707
  %v3724 = vunpack.c.l.b16 %v708
  %v3725 = vunpack.c.l.b16 %v709
  %v3726 = vunpack.c.l.b16 %v710
  %v3727 = vunpack.c.l.b16 %v711
  %v3728 = vunpack.c.l.b16 %v712
  %v3729 = vunpack.c.l.b16 %v713
  %v3730 = vunpack.c.l.b16 %v714
  %v3731 = vunpack.c.l.b16 %v715
  %v3732 = vunpack.c.l.b16 %v716
  %v3733 = vunpack.c.l.b16 %v717
  %v3734 = vunpack.c.l.b16 %v718
  %v3735 = vunpack.c.l.b16 %v719
  %v3736 = vunpack.c.l.b16 %v720
  %v3737 = vunpack.c.l.b16 %v721
  %v3738 = vunpack.c.l.b16 %v722
  %v3739 = vunpack.c.l.b16 %v723
  %v3740 = vunpack.c.l.b16 %v724
  %v3741 = vunpack.c.l.b16 %v725
  %v3742 = vunpack.c.l.b16 %v726
  %v3743 = vunpack.c.l.b16 %v727
  %v3744 = vunpack.c.l.b16 %v728
  %v3745 = vunpack.c.l.b16 %v729
  %v3746 = vunpack.c.l.b16 %v730
  %v3747 = vunpack.c.l.b16 %v731
  %v3748 = vunpack.c.l.b16 %v732
  %v3749 = vunpack.c.l.b16 %v733
  %v3750 = vunpack.c.l.b16 %v734
  %v3751 = vunpack.c.l.b16 %v735
  %v3752 = vunpack.c.l.b16 %v736
  %v3753 = vunpack.c.l.b16 %v737
  %v3754 = vunpack.c.l.b16 %v738
  %v3755 = vunpack.c.l.b16 %v739
  %v3756 = vunpack.c.l.b16 %v740
  %v3757 = vunpack.c.l.b16 %v741
  %v3758 = vunpack.c.l.b16 %v742
  %v3759 = vunpack.c.l.b16 %v743
  %v3760 = vunpack.c.l.b16 %v744
  %v3761 = vunpack.c.l.b16 %v745
  %v3762 = vunpack.c.l.b16 %v746
  %v3763 = vunpack.c.l.b16 %v747
  %v3764 = vunpack.c.l.b16 %v748
  %v3765 = vunpack.c.l.b16 %v749
  %v3766 = vunpack.c.l.b16 %v750
  %v3767 = vunpack.c.l.b16 %v751
  %v3768 = vunpack.c.l.b16 %v752
  %v3769 = vunpack.c.l.b16 %v753
  %v3770 = vunpack.c.l.b16 %v754
  %v3771 = vunpack.c.l.b16 %v755
  %v3772 = vunpack.c.l.b16 %v756
  %v3773 = vunpack.c.l.b16 %v757
  %v3774 = vunpack.c.l.b16 %v758
  %v3775 = vunpack.c.l.b16 %v759
  %v3776 = vunpack.c.l.b16 %v760
  %v3777 = vunpack.c.l.b16 %v761
  %v3778 = vunpack.c.l.b16 %v762
  %v3779 = vunpack.c.l.b16 %v763
  %v3780 = vunpack.c.l.b16 %v764
  %v3781 = vunpack.c.l.b16 %v765
  %v3782 = vunpack.c.l.b16 %v766
  %v3783 = vunpack.c.l.b16 %v767
  %v3784 = vunpack.c.l.b16 %v768
  %v3785 = vunpack.c.l.b16 %v769
  %v3786 = vunpack.c.l.b16 %v770
  %v3787 = vunpack.c.l.b16 %v771
  %v3788 = vunpack.c.l.b16 %v772
  %v3789 = vunpack.c.l.b16 %v773
  %v3790 = vunpack.c.l.b16 %v774
  %v3791 = vunpack.c.l.b16 %v775
  %v3792 = vunpack.c.l.b16 %v776
  %v3793 = vunpack.c.l.b16 %v777
  %v3794 = vunpack.c.l.b16 %v778
  %v3795 = vunpack.c.l.b16 %v779
  %v3796 = vunpack.c.l.b16 %v780
  %v3797 = vunpack.c.l.b16 %v781
  %v3798 = vunpack.c.l.b16 %v782
  %v3799 = vunpack.c.l.b16 %v783
  %v3800 = vunpack.c.l.b16 %v784
  %v3801 = vunpack.c.l.b16 %v785
  %v3802 = vunpack.c.l.b16 %v786
  %v3803 = vunpack.c.l.b16 %v787
  %v3804 = vunpack.c.l.b16 %v788
  %v3805 = vunpack.c.l.b16 %v789
  %v3806 = vunpack.c.l.b16 %v790
  %v3807 = vunpack.c.l.b16 %v791
  %v3808 = vunpack.c.l.b16 %v792
  %v3809 = vunpack.c.l.b16 %v793
  %v3810 = vunpack.c.l.b16 %v794
  %v3811 = vunpack.c.l.b16 %v795
  %v3812 = vunpack.c.l.b16 %v796
  %v3813 = vunpack.c.l.b16 %v797
  %v3814 = vunpack.c.l.b16 %v798
  %v3815 = vunpack.c.l.b16 %v799
  %v3816 = vunpack.c.l.b16 %v800
  %v3817 = vunpack.c.l.b16 %v801
  %v3818 = vunpack.c.l.b16 %v802
  %v3819 = vunpack.c.l.b16 %v803
  %v3820 = vunpack.c.l.b16 %v804
  %v3821 = vunpack.c.l.b16 %v805
  %v3822 = vunpack.c.l.b16 %v806
  %v3823 = vunpack.c.l.b16 %v807
  %v3824 = vunpack.c.l.b16 %v808
  %v3825 = vunpack.c.l.b16 %v809
  %v3826 = vunpack.c.l.b16 %v810
  %v3827 = vunpack.c.l.b16 %v811
  %v3828 = vunpack.c.l.b16 %v812
  %v3829 = vunpack.c.l.b16 %v813
  %v3830 = vunpack.c.l.b16 %v814
  %v3831 = vunpack.c.l.b16 %v815
  %v3832 = vunpack.c.l.b16 %v816
  %v3833 = vunpack.c.l.b16 %v817
  %v3834 = vunpack.c.l.b16 %v818
  %v3835 = vunpack.c.l.b16 %v819
  %v3836 = vunpack.c.l.b16 %v820
  %v3837 = vunpack.c.l.b16 %v821
  %v3838 = vunpack.c.l.b16 %v822
  %v3839 = vunpack.c.l.b16 %v823
  %v3840 = vunpack.c.l.b16 %v824
  %v3841 = vunpack.c.l.b16 %v825
  %v3842 = vunpack.c.l.b16 %v826
  %v3843 = vunpack.c.l.b16 %v827
  %v3844 = vunpack.c.l.b16 %v828
  %v3845 = vunpack.c.l.b16 %v829
  %v3846 = vunpack.c.l.b16 %v830
  %v3847 = vunpack.c.l.b16 %v831
  %v3848 = vunpack.c.l.b16 %v832
  %v3849 = vunpack.c.l.b16 %v833
  %v3850 = vunpack.c.l.b16 %v834
  %v3851 = vunpack.c.l.b16 %v835
  %v3852 = vunpack.c.l.b16 %v836
  %v3853 = vunpack.c.l.b16 %v837
  %v3854 = vunpack.c.l.b16 %v838
  %v3855 = vunpack.c.l.b16 %v839
  %v3856 = vunpack.c.l.b16 %v840
  %v3857 = vunpack.c.l.b16 %v841
  %v3858 = vunpack.c.l.b16 %v842
  %v3859 = vunpack.c.l.b16 %v843
  %v3860 = vunpack.c.l.b16 %v844
  %v3861 = vunpack.c.l.b16 %v845
  %v3862 = vunpack.c.l.b16 %v846
  %v3863 = vunpack.c.l.b16 %v847
  %v3864 = vunpack.c.l.b16 %v848
  %v3865 = vunpack.c.l.b16 %v849
  %v3866 = vunpack.c.l.b16 %v850
  %v3867 = vunpack.c.l.b16 %v851
  %v3868 = vunpack.c.l.b16 %v852
  %v3869 = vunpack.c.l.b16 %v853
  %v3870 = vunpack.c.l.b16 %v854
  %v3871 = vunpack.c.l.b16 %v855
  %v3872 = vunpack.c.l.b16 %v856
  %v3873 = vunpack.c.l.b16 %v857
  %v3874 = vunpack.c.l.b16 %v858
  %v3875 = vunpack.c.l.b16 %v859
  %v3876 = vunpack.c.l.b16 %v860
  %v3877 = vunpack.c.l.b16 %v861
  %v3878 = vunpack.c.l.b16 %v862
  %v3879 = vunpack.c.l.b16 %v863
  %v3880 = vunpack.c.l.b16 %v864
  %v3881 = vunpack.c.l.b16 %v865
  %v3882 = vunpack.c.l.b16 %v866
  %v3883 = vunpack.c.l.b16 %v867
  %v3884 = vunpack.c.l.b16 %v868
  %v3885 = vunpack.c.l.b16 %v869
  %v3886 = vunpack.c.l.b16 %v870
  %v3887 = vunpack.c.l.b16 %v871
  %v3888 = vunpack.c.l.b16 %v872
  %v3889 = vunpack.c.l.b16 %v873
  %v3890 = vunpack.c.l.b16 %v874
  %v3891 = vunpack.c.l.b16 %v875
  %v3892 = vunpack.c.l.b16 %v876
  %v3893 = vunpack.c.l.b16 %v877
  %v3894 = vunpack.c.l.b16 %v878
  %v3895 = vunpack.c.l.b16 %v879
  %v3896 = vunpack.c.l.b16 %v880
  %v3897 = vunpack.c.l.b16 %v881
  %v3898 = vunpack.c.l.b16 %v882
  %v3899 = vunpack.c.l.b16 %v883
  %v3900 = vunpack.c.l.b16 %v884
  %v3901 = vunpack.c.l.b16 %v885
  %v3902 = vunpack.c.l.b16 %v886
  %v3903 = vunpack.c.l.b16 %v887
  %v3904 = vunpack.c.l.b16 %v888
  %v3905 = vunpack.c.l.b16 %v889
  %v3906 = vunpack.c.l.b16 %v890
  %v3907 = vunpack.c.l.b16 %v891
  %v3908 = vunpack.c.l.b16 %v892
  %v3909 = vunpack.c.l.b16 %v893
  %v3910 = vunpack.c.l.b16 %v894
  %v3911 = vunpack.c.l.b16 %v895
  %v3912 = vunpack.c.l.b16 %v896
  %v3913 = vunpack.c.l.b16 %v897
  %v3914 = vunpack.c.l.b16 %v898
  %v3915 = vunpack.c.l.b16 %v899
  %v3916 = vunpack.c.l.b16 %v900
  %v3917 = vunpack.c.l.b16 %v901
  %v3918 = vunpack.c.l.b16 %v902
  %v3919 = vunpack.c.l.b16 %v903
  %v3920 = vunpack.c.l.b16 %v904
  %v3921 = vunpack.c.l.b16 %v905
  %v3922 = vunpack.c.l.b16 %v906
  %v3923 = vunpack.c.l.b16 %v907
  %v3924 = vunpack.c.l.b16 %v908
  %v3925 = vunpack.c.l.b16 %v909
  %v3926 = vunpack.c.l.b16 %v910
  %v3927 = vunpack.c.l.b16 %v911
  %v3928 = vunpack.c.l.b16 %v912
  %v3929 = vunpack.c.l.b16 %v913
  %v3930 = vunpack.c.l.b16 %v914
  %v3931 = vunpack.c.l.b16 %v915
  %v3932 = vunpack.c.l.b16 %v916
  %v3933 = vunpack.c.l.b16 %v917
  %v3934 = vunpack.c.l.b16 %v918
  %v3935 = vunpack.c.l.b16 %v919
  %v3936 = vunpack.c.l.b16 %v920
  %v3937 = vunpack.c.l.b16 %v921
  %v3938 = vunpack.c.l.b16 %v922
  %v3939 = vunpack.c.l.b16 %v923
  %v3940 = vunpack.c.l.b16 %v924
  %v3941 = vunpack.c.l.b16 %v925
  %v3942 = vunpack.c.l.b16 %v926
  %v3943 = vunpack.c.l.b16 %v927
  %v3944 = vunpack.c.l.b16 %v928
  %v3945 = vunpack.c.l.b16 %v929
  %v3946 = vunpack.c.l.b16 %v930
  %v3947 = vunpack.c.l.b16 %v931
  %v3948 = vunpack.c.l.b16 %v932
  %v3949 = vunpack.c.l.b16 %v933
  %v3950 = vunpack.c.l.b16 %v934
  %v3951 = vunpack.c.l.b16 %v935
  %v3952 = vunpack.c.l.b16 %v936
  %v3953 = vunpack.c.l.b16 %v937
  %v3954 = vunpack.c.l.b16 %v938
  %v3955 = vunpack.c.l.b16 %v939
  %v3956 = vunpack.c.l.b16 %v940
  %v3957 = vunpack.c.l.b16 %v941
  %v3958 = vunpack.c.l.b16 %v942
  %v3959 = vunpack.c.l.b16 %v943
  %v3960 = vunpack.c.l.b16 %v944
  %v3961 = vunpack.c.l.b16 %v945
  %v3962 = vunpack.c.l.b16 %v946
  %v3963 = vunpack.c.l.b16 %v947
  %v3964 = vunpack.c.l.b16 %v948
  %v3965 = vunpack.c.l.b16 %v949
  %v3966 = vunpack.c.l.b16 %v950
  %v3967 = vunpack.c.l.b16 %v951
  %v3968 = vunpack.c.l.b16 %v952
  %v3969 = vunpack.c.l.b16 %v953
  %v3970 = vunpack.c.l.b16 %v954
  %v3971 = vunpack.c.l.b16 %v955
  %v3972 = vunpack.c.l.b16 %v956
  %v3973 = vunpack.c.l.b16 %v957
  %v3974 = vunpack.c.l.b16 %v958
  %v3975 = vunpack.c.l.b16 %v959
  %v3976 = vunpack.c.l.b16 %v960
  %v3977 = vunpack.c.l.b16 %v961
  %v3978 = vunpack.c.l.b16 %v962
  %v3979 = vunpack.c.l.b16 %v963
  %v3980 = vunpack.c.l.b16 %v964
  %v3981 = vunpack.c.l.b16 %v965
  %v3982 = vunpack.c.l.b16 %v966
  %v3983 = vunpack.c.l.b16 %v967
  %v3984 = vunpack.c.l.b16 %v968
  %v3985 = vunpack.c.l.b16 %v969
  %v3986 = vunpack.c.l.b16 %v970
  %v3987 = vunpack.c.l.b16 %v971
  %v3988 = vunpack.c.l.b16 %v972
  %v3989 = vunpack.c.l.b16 %v973
  %v3990 = vunpack.c.l.b16 %v974
  %v3991 = vunpack.c.l.b16 %v975
  %v3992 = vunpack.c.l.b16 %v976
  %v3993 = vunpack.c.l.b16 %v977
  %v3994 = vunpack.c.l.b16 %v978
  %v3995 = vunpack.c.l.b16 %v979
  %v3996 = vunpack.c.l.b16 %v980
  %v3997 = vunpack.c.l.b16 %v981
  %v3998 = vunpack.c.l.b16 %v982
  %v3999 = vunpack.c.l.b16 %v983
  %v4000 = vunpack.c.l.b16 %v984
  %v4001 = vunpack.c.l.b16 %v985
  %v4002 = vunpack.c.l.b16 %v986
  %v4003 = vunpack.c.l.b16 %v987
  %v4004 = vunpack.c.l.b16 %v988
  %v4005 = vunpack.c.l.b16 %v989
  %v4006 = vunpack.c.l.b16 %v990
  %v4007 = vunpack.c.l.b16 %v991
  %v4008 = vunpack.c.l.b16 %v992
  %v4009 = vunpack.c.l.b16 %v993
  %v4010 = vunpack.c.l.b16 %v994
  %v4011 = vunpack.c.l.b16 %v995
  %v4012 = vunpack.c.l.b16 %v996
  %v4013 = vunpack.c.l.b16 %v997
  %v4014 = vunpack.c.l.b16 %v998
  %v4015 = vunpack.c.l.b16 %v999
  %v4016 = vunpack.c.l.b16 %v1000
  %v4017 = vunpack.c.l.b16 %v1001
  %v4018 = vunpack.c.l.b16 %v1002
  %v4019 = vunpack.c.l.b16 %v1003
  %v4020 = vunpack.c.l.b16 %v1004
  %v4021 = vunpack.c.l.b16 %v1005
  %v4022 = vunpack.c.l.b16 %v1006
  %v4023 = vunpack.c.l.b16 %v1007
  %v4024 = vunpack.c.l.b16 %v1008
  %v4025 = vunpack.c.l.b16 %v1009
  %v4026 = vunpack.c.l.b16 %v1010
  %v4027 = vunpack.c.l.b16 %v1011
  %v4028 = vunpack.c.l.b16 %v1012
  %v4029 = vunpack.c.l.b16 %v1013
  %v4030 = vunpack.c.l.b16 %v1014
  %v4031 = vunpack.c.l.b16 %v1015
  %v4032 = vunpack.c.l.b16 %v1016
  %v4033 = vunpack.c.l.b16 %v1017
  %v4034 = vunpack.c.l.b16 %v1018
  %v4035 = vunpack.c.l.b16 %v1019
  %v4036 = vunpack.c.l.b16 %v1020
  %v4037 = vunpack.c.l.b16 %v1021
  %v4038 = vunpack.c.l.b16 %v1022
  %v4039 = vunpack.c.l.b16 %v1023
  %v4040 = vunpack.c.l.b16 %v1024
  %v4041 = vunpack.c.l.b16 %v1025
  %v4042 = vunpack.c.l.b16 %v1026
  %v4043 = vunpack.c.l.b16 %v1027
  %v4044 = vunpack.c.l.b16 %v1028
  %v4045 = vunpack.c.l.b16 %v1029
  %v4046 = vunpack.c.l.b16 %v1030
  %v4047 = vunpack.c.l.b16 %v1031
  %v4048 = vunpack.c.l.b16 %v1032
  %v4049 = vunpack.c.l.b16 %v1033
  %v4050 = vunpack.c.l.b16 %v1034
  %v4051 = vunpack.c.l.b16 %v1035
  %v4052 = vunpack.c.l.b16 %v1036
  %v4053 = vunpack.c.l.b16 %v1037
  %v4054 = vunpack.c.l.b16 %v1038
  %v4055 = vunpack.c.l.b16 %v1039
  %v4056 = vunpack.c.l.b16 %v1040
  %v4057 = vunpack.c.l.b16 %v1041
  %v4058 = vunpack.c.l.b16 %v1042
  %v4059 = vunpack.c.l.b16 %v1043
  %v4060 = vunpack.c.l.b16 %v1044
  %v4061 = vunpack.c.l.b16 %v1045
  %v4062 = vunpack.c.l.b16 %v1046
  %v4063 = vunpack.c.l.b16 %v1047
  %v4064 = vunpack.c.l.b16 %v1048
  %v4065 = vunpack.c.l.b16 %v1049
  %v4066 = vunpack.c.l.b16 %v1050
  %v4067 = vunpack.c.l.b16 %v1051
  %v4068 = vunpack.c.l.b16 %v1052
  %v4069 = vunpack.c.l.b16 %v1053
  %v4070 = vunpack.c.l.b16 %v1054
  %v4071 = vunpack.c.l.b16 %v1055
  %v4072 = vunpack.c.l.b16 %v1056
  %v4073 = vunpack.c.l.b16 %v1057
  %v4074 = vunpack.c.l.b16 %v1058
  %v4075 = vunpack.c.l.b16 %v1059
  %v4076 = vunpack.c.l.b16 %v1060
  %v4077 = vunpack.c.l.b16 %v1061
  %v4078 = vunpack.c.l.b16 %v1062
  %v4079 = vunpack.c.l.b16 %v1063
  %v4080 = vunpack.c.l.b16 %v1064
  %v4081 = vunpack.c.l.b16 %v1065
  %v4082 = vunpack.c.l.b16 %v1066
  %v4083 = vunpack.c.l.b16 %v1067
  %v4084 = vunpack.c.l.b16 %v1068
  %v4085 = vunpack.c.l.b16 %v1069
  %v4086 = vunpack.c.l.b16 %v1070
  %v4087 = vunpack.c.l.b16 %v1071
  %v4088 = vunpack.c.l.b16 %v1072
  %v4089 = vunpack.c.l.b16 %v1073
  %v4090 = vunpack.c.l.b16 %v1074
  %v4091 = vunpack.c.l.b16 %v1075
  %v4092 = vunpack.c.l.b16 %v1076
  %v4093 = vunpack.c.l.b16 %v1077
  %v4094 = vunpack.c.l.b16 %v1078
  %v4095 = vunpack.c.l.b16 %v1079
  %v4096 = vunpack.c.l.b16 %v1080
  %v4097 = vunpack.c.l.b16 %v1081
  %v4098 = vunpack.c.l.b16 %v1082
  %v4099 = vunpack.c.l.b16 %v1083
  %v4100 = vunpack.c.l.b16 %v1084
  %v4101 = vunpack.c.l.b16 %v1085
  %v4102 = vunpack.c.l.b16 %v1086
  %v4103 = vunpack.c.l.b16 %v1087
  %v4104 = vunpack.c.l.b16 %v1088
  %v4105 = vunpack.c.l.b16 %v1089
  %v4106 = vunpack.c.l.b16 %v1090
  %v4107 = vunpack.c.l.b16 %v1091
  %v4108 = vunpack.c.l.b16 %v1092
  %v4109 = vunpack.c.l.b16 %v1093
  %v4110 = vunpack.c.l.b16 %v1094
  %v4111 = vunpack.c.l.b16 %v1095
  %v4112 = vunpack.c.l.b16 %v1096
  %v4113 = vunpack.c.l.b16 %v1097
  %v4114 = vunpack.c.l.b16 %v1098
  %v4115 = vunpack.c.l.b16 %v1099
  %v4116 = vunpack.c.l.b16 %v1100
  %v4117 = vunpack.c.l.b16 %v1101
  %v4118 = vunpack.c.l.b16 %v1102
  %v4119 = vunpack.c.l.b16 %v1103
  %v4120 = vunpack.c.l.b16 %v1104
  %v4121 = vunpack.c.l.b16 %v1105
  %v4122 = vunpack.c.l.b16 %v1106
  %v4123 = vunpack.c.l.b16 %v1107
  %v4124 = vunpack.c.l.b16 %v1108
  %v4125 = vunpack.c.l.b16 %v1109
  %v4126 = vunpack.c.l.b16 %v1110
  %v4127 = vunpack.c.l.b16 %v1111
  %v4128 = vunpack.c.l.b16 %v1112
  %v4129 = vunpack.c.l.b16 %v1113
  %v4130 = vunpack.c.l.b16 %v1114
  %v4131 = vunpack.c.l.b16 %v1115
  %v4132 = vunpack.c.l.b16 %v1116
  %v4133 = vunpack.c.l.b16 %v1117
  %v4134 = vunpack.c.l.b16 %v1118
  %v4135 = vunpack.c.l.b16 %v1119
  %v4136 = vunpack.c.l.b16 %v1120
  %v4137 = vunpack.c.l.b16 %v1121
  %v4138 = vunpack.c.l.b16 %v1122
  %v4139 = vunpack.c.l.b16 %v1123
  %v4140 = vunpack.c.l.b16 %v1124
  %v4141 = vunpack.c.l.b16 %v1125
  %v4142 = vunpack.c.l.b16 %v1126
  %v4143 = vunpack.c.l.b16 %v1127
  %v4144 = vunpack.c.l.b16 %v1128
  %v4145 = vunpack.c.l.b16 %v1129
  %v4146 = vunpack.c.l.b16 %v1130
  %v4147 = vunpack.c.l.b16 %v1131
  %v4148 = vunpack.c.l.b16 %v1132
  %v4149 = vunpack.c.l.b16 %v1133
  %v4150 = vunpack.c.l.b16 %v1134
  %v4151 = vunpack.c.l.b16 %v1135
  %v4152 = vunpack.c.l.b16 %v1136
  %v4153 = vunpack.c.l.b16 %v1137
  %v4154 = vunpack.c.l.b16 %v1138
  %v4155 = vunpack.c.l.b16 %v1139
  %v4156 = vunpack.c.l.b16 %v1140
  %v4157 = vunpack.c.l.b16 %v1141
  %v4158 = vunpack.c.l.b16 %v1142
  %v4159 = vunpack.c.l.b16 %v1143
  %v4160 = vunpack.c.l.b16 %v1144
  %v4161 = vunpack.c.l.b16 %v1145
  %v4162 = vunpack.c.l.b16 %v1146
  %v4163 = vunpack.c.l.b16 %v1147
  %v4164 = vunpack.c.l.b16 %v1148
  %v4165 = vunpack.c.l.b16 %v1149
  %v4166 = vunpack.c.l.b16 %v1150
  %v4167 = vunpack.c.l.b16 %v1151
  %v4168 = vunpack.c.l.b16 %v1152
  %v4169 = vunpack.c.l.b16 %v1153
  %v4170 = vunpack.c.l.b16 %v1154
  %v4171 = vunpack.c.l.b16 %v1155
  %v4172 = vunpack.c.l.b16 %v1156
  %v4173 = vunpack.c.l.b16 %v1157
  %v4174 = vunpack.c.l.b16 %v1158
  %v4175 = vunpack.c.l.b16 %v1159
  %v4176 = vunpack.c.l.b16 %v1160
  %v4177 = vunpack.c.l.b16 %v1161
  %v4178 = vunpack.c.l.b16 %v1162
  %v4179 = vunpack.c.l.b16 %v1163
  %v4180 = vunpack.c.l.b16 %v1164
  %v4181 = vunpack.c.l.b16 %v1165
  %v4182 = vunpack.c.l.b16 %v1166
  %v4183 = vunpack.c.l.b16 %v1167
  %v4184 = vunpack.c.l.b16 %v1168
  %v4185 = vunpack.c.l.b16 %v1169
  %v4186 = vunpack.c.l.b16 %v1170
  %v4187 = vunpack.c.l.b16 %v1171
  %v4188 = vunpack.c.l.b16 %v1172
  %v4189 = vunpack.c.l.b16 %v1173
  %v4190 = vunpack.c.l.b16 %v1174
  %v4191 = vunpack.c.l.b16 %v1175
  %v4192 = vunpack.c.l.b16 %v1176
  %v4193 = vunpack.c.l.b16 %v1177
  %v4194 = vunpack.c.l.b16 %v1178
  %v4195 = vunpack.c.l.b16 %v1179
  %v4196 = vunpack.c.l.b16 %v1180
  %v4197 = vunpack.c.l.b16 %v1181
  %v4198 = vunpack.c.l.b16 %v1182
  %v4199 = vunpack.c.l.b16 %v1183
  %v4200 = vunpack.c.l.b16 %v1184
  %v4201 = vunpack.c.l.b16 %v1185
  %v4202 = vunpack.c.l.b16 %v1186
  %v4203 = vunpack.c.l.b16 %v1187
  %v4204 = vunpack.c.l.b16 %v1188
  %v4205 = vunpack.c.l.b16 %v1189
  %v4206 = vunpack.c.l.b16 %v1190
  %v4207 = vunpack.c.l.b16 %v1191
  %v4208 = vunpack.c.l.b16 %v1192
  %v4209 = vpack.c.b16 %v3282, %v3281
  %v4210 = vpack.c.b16 %v3284, %v3283
  %v4211 = vpack.c.b16 %v3286, %v3285
  %v4212 = vpack.c.b16 %v3288, %v3287
  %v4213 = vpack.c.b16 %v3290, %v3289
  %v4214 = vpack.c.b16 %v3292, %v3291
  %v4215 = vpack.c.b16 %v3294, %v3293
  %v4216 = vpack.c.b16 %v3296, %v3295
  %v4217 = vpack.c.b16 %v3298, %v3297
  %v4218 = vpack.c.b16 %v3300, %v3299
  %v4219 = vpack.c.b16 %v3302, %v3301
  %v4220 = vpack.c.b16 %v3304, %v3303
  %v4221 = vpack.c.b16 %v3306, %v3305
  %v4222 = vpack.c.b16 %v3308, %v3307
  %v4223 = vpack.c.b16 %v3310, %v3309
  %v4224 = vpack.c.b16 %v3312, %v3311
  %v4225 = vpack.c.b16 %v3314, %v3313
  %v4226 = vpack.c.b16 %v3316, %v3315
  %v4227 = vpack.c.b16 %v3318, %v3317
  %v4228 = vpack.c.b16 %v3320, %v3319
  %v4229 = vpack.c.b16 %v3322, %v3321
  %v4230 = vpack.c.b16 %v3324, %v3323
  %v4231 = vpack.c.b16 %v3326, %v3325
  %v4232 = vpack.c.b16 %v3328, %v3327
  %v4233 = vpack.c.b16 %v3330, %v3329
  %v4234 = vpack.c.b16 %v3332, %v3331
  %v4235 = vpack.c.b16 %v3334, %v3333
  %v4236 = vpack.c.b16 %v3336, %v3335
  %v4237 = vpack.c.b16 %v3338, %v3337
  %v4238 = vpack.c.b16 %v3340, %v3339
  %v4239 = vpack.c.b16 %v3342, %v3341
  %v4240 = vpack.c.b16 %v3344, %v3343
  %v4241 = vpack.c.b16 %v3346, %v3345
  %v4242 = vpack.c.b16 %v3348, %v3347
  %v4243 = vpack.c.b16 %v3350, %v3349
  %v4244 = vpack.c.b16 %v3352, %v3351
  %v4245 = vpack.c.b16 %v3354, %v3353
  %v4246 = vpack.c.b16 %v3356, %v3355
  %v4247 = vpack.c.b16 %v3358, %v3357
  %v4248 = vpack.c.b16 %v3360, %v3359
  %v4249 = vpack.c.b16 %v3362, %v3361
  %v4250 = vpack.c.b16 %v3364, %v3363
  %v4251 = vpack.c.b16 %v3366, %v3365
  %v4252 = vpack.c.b16 %v3368, %v3367
  %v4253 = vpack.c.b16 %v3370, %v3369
  %v4254 = vpack.c.b16 %v3372, %v3371
  %v4255 = vpack.c.b16 %v3374, %v3373
  %v4256 = vpack.c.b16 %v3376, %v3375
  %v4257 = vpack.c.b16 %v3378, %v3377
  %v4258 = vpack.c.b16 %v3380, %v3379
  %v4259 = vpack.c.b16 %v3382, %v3381
  %v4260 = vpack.c.b16 %v3384, %v3383
  %v4261 = vpack.c.b16 %v3386, %v3385
  %v4262 = vpack.c.b16 %v3388, %v3387
  %v4263 = vpack.c.b16 %v3390, %v3389
  %v4264 = vpack.c.b16 %v3392, %v3391
  %v4265 = vpack.c.b16 %v3394, %v3393
  %v4266 = vpack.c.b16 %v3396, %v3395
  %v4267 = vpack.c.b16 %v3398, %v3397
  %v4268 = vpack.c.b16 %v3400, %v3399
  %v4269 = vpack.c.b16 %v3402, %v3401
  %v4270 = vpack.c.b16 %v3404, %v3403
  %v4271 = vpack.c.b16 %v3406, %v3405
  %v4272 = vpack.c.b16 %v3408, %v3407
  %v4273 = vpack.c.b16 %v3410, %v3409
  %v4274 = vpack.c.b16 %v3412, %v3411
  %v4275 = vpack.c.b16 %v3414, %v3413
  %v4276 = vpack.c.b16 %v3416, %v3415
  %v4277 = vpack.c.b16 %v3418, %v3417
  %v4278 = vpack.c.b16 %v3420, %v3419
  %v4279 = vpack.c.b16 %v3422, %v3421
  %v4280 = vpack.c.b16 %v3424, %v3423
  %v4281 = vpack.c.b16 %v3426, %v3425
  %v4282 = vpack.c.b16 %v3428, %v3427
  %v4283 = vpack.c.b16 %v3430, %v3429
  %v4284 = vpack.c.b16 %v3432, %v3431
  %v4285 = vpack.c.b16 %v3434, %v3433
  %v4286 = vpack.c.b16 %v3436, %v3435
  %v4287 = vpack.c.b16 %v3438, %v3437
  %v4288 = vpack.c.b16 %v3440, %v3439
  %v4289 = vpack.c.b16 %v3442, %v3441
  %v4290 = vpack.c.b16 %v3444, %v3443
  %v4291 = vpack.c.b16 %v3446, %v3445
  %v4292 = vpack.c.b16 %v3448, %v3447
  %v4293 = vpack.c.b16 %v3450, %v3449
  %v4294 = vpack.c.b16 %v3452, %v3451
  %v4295 = vpack.c.b16 %v3454, %v3453
  %v4296 = vpack.c.b16 %v3456, %v3455
  %v4297 = vpack.c.b16 %v3458, %v3457
  %v4298 = vpack.c.b16 %v3460, %v3459
  %v4299 = vpack.c.b16 %v3462, %v3461
  %v4300 = vpack.c.b16 %v3464, %v3463
  %v4301 = vpack.c.b16 %v3466, %v3465
  %v4302 = vpack.c.b16 %v3468, %v3467
  %v4303 = vpack.c.b16 %v3470, %v3469
  %v4304 = vpack.c.b16 %v3472, %v3471
  %v4305 = vpack.c.b16 %v3474, %v3473
  %v4306 = vpack.c.b16 %v3476, %v3475
  %v4307 = vpack.c.b16 %v3478, %v3477
  %v4308 = vpack.c.b16 %v3480, %v3479
  %v4309 = vpack.c.b16 %v3482, %v3481
  %v4310 = vpack.c.b16 %v3484, %v3483
  %v4311 = vpack.c.b16 %v3486, %v3485
  %v4312 = vpack.c.b16 %v3488, %v3487
  %v4313 = vpack.c.b16 %v3490, %v3489
  %v4314 = vpack.c.b16 %v3492, %v3491
  %v4315 = vpack.c.b16 %v3494, %v3493
  %v4316 = vpack.c.b16 %v3496, %v3495
  %v4317 = vpack.c.b16 %v3498, %v3497
  %v4318 = vpack.c.b16 %v3500, %v3499
  %v4319 = vpack.c.b16 %v3502, %v3501
  %v4320 = vpack.c.b16 %v3504, %v3503
  %v4321 = vpack.c.b16 %v3506, %v3505
  %v4322 = vpack.c.b16 %v3508, %v3507
  %v4323 = vpack.c.b16 %v3510, %v3509
  %v4324 = vpack.c.b16 %v3512, %v3511
  %v4325 = vpack.c.b16 %v3514, %v3513
  %v4326 = vpack.c.b16 %v3516, %v3515
  %v4327 = vpack.c.b16 %v3518, %v3517
  %v4328 = vpack.c.b16 %v3520, %v3519
  %v4329 = vpack.c.b16 %v3522, %v3521
  %v4330 = vpack.c.b16 %v3524, %v3523
  %v4331 = vpack.c.b16 %v3526, %v3525
  %v4332 = vpack.c.b16 %v3528, %v3527
  %v4333 = vpack.c.b16 %v3530, %v3529
  %v4334 = vpack.c.b16 %v3532, %v3531
  %v4335 = vpack.c.b16 %v3534, %v3533
  %v4336 = vpack.c.b16 %v3536, %v3535
  %v4337 = vpack.c.b16 %v3538, %v3537
  %v4338 = vpack.c.b16 %v3540, %v3539
  %v4339 = vpack.c.b16 %v3542, %v3541
  %v4340 = vpack.c.b16 %v3544, %v3543
  %v4341 = vpack.c.b16 %v3546, %v3545
  %v4342 = vpack.c.b16 %v3548, %v3547
  %v4343 = vpack.c.b16 %v3550, %v3549
  %v4344 = vpack.c.b16 %v3552, %v3551
  %v4345 = vpack.c.b16 %v3554, %v3553
  %v4346 = vpack.c.b16 %v3556, %v3555
  %v4347 = vpack.c.b16 %v3558, %v3557
  %v4348 = vpack.c.b16 %v3560, %v3559
  %v4349 = vpack.c.b16 %v3562, %v3561
  %v4350 = vpack.c.b16 %v3564, %v3563
  %v4351 = vpack.c.b16 %v3566, %v3565
  %v4352 = vpack.c.b16 %v3568, %v3567
  %v4353 = vpack.c.b16 %v3570, %v3569
  %v4354 = vpack.c.b16 %v3572, %v3571
  %v4355 = vpack.c.b16 %v3574, %v3573
  %v4356 = vpack.c.b16 %v3576, %v3575
  %v4357 = vpack.c.b16 %v3578, %v3577
  %v4358 = vpack.c.b16 %v3580, %v3579
  %v4359 = vpack.c.b16 %v3582, %v3581
  %v4360 = vpack.c.b16 %v3584, %v3583
  %v4361 = vpack.c.b16 %v3586, %v3585
  %v4362 = vpack.c.b16 %v3588, %v3587
  %v4363 = vpack.c.b16 %v3590, %v3589
  %v4364 = vpack.c.b16 %v3592, %v3591
  %v4365 = vpack.c.b16 %v3594, %v3593
  %v4366 = vpack.c.b16 %v3596, %v3595
  %v4367 = vpack.c.b16 %v3598, %v3597
  %v4368 = vpack.c.b16 %v3600, %v3599
  %v4369 = vpack.c.b16 %v3602, %v3601
  %v4370 = vpack.c.b16 %v3604, %v3603
  %v4371 = vpack.c.b16 %v3606, %v3605
  %v4372 = vpack.c.b16 %v3608, %v3607
  %v4373 = vpack.c.b16 %v3610, %v3609
  %v4374 = vpack.c.b16 %v3612, %v3611
  %v4375 = vpack.c.b16 %v3614, %v3613
  %v4376 = vpack.c.b16 %v3616, %v3615
  %v4377 = vpack.c.b16 %v3618, %v3617
  %v4378 = vpack.c.b16 %v3620, %v3619
  %v4379 = vpack.c.b16 %v3622, %v3621
  %v4380 = vpack.c.b16 %v3624, %v3623
  %v4381 = vpack.c.b16 %v3626, %v3625
  %v4382 = vpack.c.b16 %v3628, %v3627
  %v4383 = vpack.c.b16 %v3630, %v3629
  %v4384 = vpack.c.b16 %v3632, %v3631
  %v4385 = vpack.c.b16 %v3634, %v3633
  %v4386 = vpack.c.b16 %v3636, %v3635
  %v4387 = vpack.c.b16 %v3638, %v3637
  %v4388 = vpack.c.b16 %v3640, %v3639
  %v4389 = vpack.c.b16 %v3642, %v3641
  %v4390 = vpack.c.b16 %v3644, %v3643
  %v4391 = vpack.c.b16 %v3646, %v3645
  %v4392 = vpack.c.b16 %v3648, %v3647
  %v4393 = vpack.c.b16 %v3650, %v3649
  %v4394 = vpack.c.b16 %v3652, %v3651
  %v4395 = vpack.c.b16 %v3654, %v3653
  %v4396 = vpack.c.b16 %v3656, %v3655
  %v4397 = vpack.c.b16 %v3658, %v3657
  %v4398 = vpack.c.b16 %v3660, %v3659
  %v4399 = vpack.c.b16 %v3662, %v3661
  %v4400 = vpack.c.b16 %v3664, %v3663
  %v4401 = vpack.c.b16 %v3666, %v3665
  %v4402 = vpack.c.b16 %v3668, %v3667
  %v4403 = vpack.c.b16 %v3670, %v3669
  %v4404 = vpack.c.b16 %v3672, %v3671
  %v4405 = vpack.c.b16 %v3674, %v3673
  %v4406 = vpack.c.b16 %v3676, %v3675
  %v4407 = vpack.c.b16 %v3678, %v3677
  %v4408 = vpack.c.b16 %v3680, %v3679
  %v4409 = vpack.c.b16 %v3682, %v3681
  %v4410 = vpack.c.b16 %v3684, %v3683
  %v4411 = vpack.c.b16 %v3686, %v3685
  %v4412 = vpack.c.b16 %v3688, %v3687
  %v4413 = vpack.c.b16 %v3690, %v3689
  %v4414 = vpack.c.b16 %v3692, %v3691
  %v4415 = vpack.c.b16 %v3694, %v3693
  %v4416 = vpack.c.b16 %v3696, %v3695
  %v4417 = vpack.c.b16 %v3698, %v3697
  %v4418 = vpack.c.b16 %v3700, %v3699
  %v4419 = vpack.c.b16 %v3702, %v3701
  %v4420 = vpack.c.b16 %v3704, %v3703
  %v4421 = vpack.c.b16 %v3706, %v3705
  %v4422 = vpack.c.b16 %v3708, %v3707
  %v4423 = vpack.c.b16 %v3710, %v3709
  %v4424 = vpack.c.b16 %v3712, %v3711
  %v4425 = vpack.c.b16 %v3714, %v3713
  %v4426 = vpack.c.b16 %v3716, %v3715
  %v4427 = vpack.c.b16 %v3718, %v3717
  %v4428 = vpack.c.b16 %v3720, %v3719
  %v4429 = vpack.c.b16 %v3722, %v3721
  %v4430 = vpack.c.b16 %v3724, %v3723
  %v4431 = vpack.c.b16 %v3726, %v3725
  %v4432 = vpack.c.b16 %v3728, %v3727
  %v4433 = vpack.c.b16 %v3730, %v3729
  %v4434 = vpack.c.b16 %v3732, %v3731
  %v4435 = vpack.c.b16 %v3734, %v3733
  %v4436 = vpack.c.b16 %v3736, %v3735
  %v4437 = vpack.c.b16 %v3738, %v3737
  %v4438 = vpack.c.b16 %v3740, %v3739
  %v4439 = vpack.c.b16 %v3742, %v3741
  %v4440 = vpack.c.b16 %v3744, %v3743
  %v4441 = vpack.c.b16 %v3746, %v3745
  %v4442 = vpack.c.b16 %v3748, %v3747
  %v4443 = vpack.c.b16 %v3750, %v3749
  %v4444 = vpack.c.b16 %v3752, %v3751
  %v4445 = vpack.c.b16 %v3754, %v3753
  %v4446 = vpack.c.b16 %v3756, %v3755
  %v4447 = vpack.c.b16 %v3758, %v3757
  %v4448 = vpack.c.b16 %v3760, %v3759
  %v4449 = vpack.c.b16 %v3762, %v3761
  %v4450 = vpack.c.b16 %v3764, %v3763
  %v4451 = vpack.c.b16 %v3766, %v3765
  %v4452 = vpack.c.b16 %v3768, %v3767
  %v4453 = vpack.c.b16 %v3770, %v3769
  %v4454 = vpack.c.b16 %v3772, %v3771
  %v4455 = vpack.c.b16 %v3774, %v3773
  %v4456 = vpack.c.b16 %v3776, %v3775
  %v4457 = vpack.c.b16 %v3778, %v3777
  %v4458 = vpack.c.b16 %v3780, %v3779
  %v4459 = vpack.c.b16 %v3782, %v3781
  %v4460 = vpack.c.b16 %v3784, %v3783
  %v4461 = vpack.c.b16 %v3786, %v3785
  %v4462 = vpack.c.b16 %v3788, %v3787
  %v4463 = vpack.c.b16 %v3790, %v3789
  %v4464 = vpack.c.b16 %v3792, %v3791
  %v4465 = vpack.c.b16 %v3794, %v3793
  %v4466 = vpack.c.b16 %v3796, %v3795
  %v4467 = vpack.c.b16 %v3798, %v3797
  %v4468 = vpack.c.b16 %v3800, %v3799
  %v4469 = vpack.c.b16 %v3802, %v3801
  %v4470 = vpack.c.b16 %v3804, %v3803
  %v4471 = vpack.c.b16 %v3806, %v3805
  %v4472 = vpack.c.b16 %v3808, %v3807
  %v4473 = vpack.c.b16 %v3810, %v3809
  %v4474 = vpack.c.b16 %v3812, %v3811
  %v4475 = vpack.c.b16 %v3814, %v3813
  %v4476 = vpack.c.b16 %v3816, %v3815
  %v4477 = vpack.c.b16 %v3818, %v3817
  %v4478 = vpack.c.b16 %v3820, %v3819
  %v4479 = vpack.c.b16 %v3822, %v3821
  %v4480 = vpack.c.b16 %v3824, %v3823
  %v4481 = vpack.c.b16 %v3826, %v3825
  %v4482 = vpack.c.b16 %v3828, %v3827
  %v4483 = vpack.c.b16 %v3830, %v3829
  %v4484 = vpack.c.b16 %v3832, %v3831
  %v4485 = vpack.c.b16 %v3834, %v3833
  %v4486 = vpack.c.b16 %v3836, %v3835
  %v4487 = vpack.c.b16 %v3838, %v3837
  %v4488 = vpack.c.b16 %v3840, %v3839
  %v4489 = vpack.c.b16 %v3842, %v3841
  %v4490 = vpack.c.b16 %v3844, %v3843
  %v4491 = vpack.c.b16 %v3846, %v3845
  %v4492 = vpack.c.b16 %v3848, %v3847
  %v4493 = vpack.c.b16 %v3850, %v3849
  %v4494 = vpack.c.b16 %v3852, %v3851
  %v4495 = vpack.c.b16 %v3854, %v3853
  %v4496 = vpack.c.b16 %v3856, %v3855
  %v4497 = vpack.c.b16 %v3858, %v3857
  %v4498 = vpack.c.b16 %v3860, %v3859
  %v4499 = vpack.c.b16 %v3862, %v3861
  %v4500 = vpack.c.b16 %v3864, %v3863
  %v4501 = vpack.c.b16 %v3866, %v3865
  %v4502 = vpack.c.b16 %v3868, %v3867
  %v4503 = vpack.c.b16 %v3870, %v3869
  %v4504 = vpack.c.b16 %v3872, %v3871
  %v4505 = vpack.c.b16 %v3874, %v3873
  %v4506 = vpack.c.b16 %v3876, %v3875
  %v4507 = vpack.c.b16 %v3878, %v3877
  %v4508 = vpack.c.b16 %v3880, %v3879
  %v4509 = vpack.c.b16 %v3882, %v3881
  %v4510 = vpack.c.b16 %v3884, %v3883
  %v4511 = vpack.c.b16 %v3886, %v3885
  %v4512 = vpack.c.b16 %v3888, %v3887
  %v4513 = vpack.c.b16 %v3890, %v3889
  %v4514 = vpack.c.b16 %v3892, %v3891
  %v4515 = vpack.c.b16 %v3894, %v3893
  %v4516 = vpack.c.b16 %v3896, %v3895
  %v4517 = vpack.c.b16 %v3898, %v3897
  %v4518 = vpack.c.b16 %v3900, %v3899
  %v4519 = vpack.c.b16 %v3902, %v3901
  %v4520 = vpack.c.b16 %v3904, %v3903
  %v4521 = vpack.c.b16 %v3906, %v3905
  %v4522 = vpack.c.b16 %v3908, %v3907
  %v4523 = vpack.c.b16 %v3910, %v3909
  %v4524 = vpack.c.b16 %v3912, %v3911
  %v4525 = vpack.c.b16 %v3914, %v3913
  %v4526 = vpack.c.b16 %v3916, %v3915
  %v4527 = vpack.c.b16 %v3918, %v3917
  %v4528 = vpack.c.b16 %v3920, %v3919
  %v4529 = vpack.c.b16 %v3922, %v3921
  %v4530 = vpack.c.b16 %v3924, %v3923
  %v4531 = vpack.c.b16 %v3926, %v3925
  %v4532 = vpack.c.b16 %v3928, %v3927
  %v4533 = vpack.c.b16 %v3930, %v3929
  %v4534 = vpack.c.b16 %v3932, %v3931
  %v4535 = vpack.c.b16 %v3934, %v3933
  %v4536 = vpack.c.b16 %v3936, %v3935
  %v4537 = vpack.c.b16 %v3938, %v3937
  %v4538 = vpack.c.b16 %v3940, %v3939
  %v4539 = vpack.c.b16 %v3942, %v3941
  %v4540 = vpack.c.b16 %v3944, %v3943
  %v4541 = vpack.c.b16 %v3946, %v3945
  %v4542 = vpack.c.b16 %v3948, %v3947
  %v4543 = vpack.c.b16 %v3950, %v3949
  %v4544 = vpack.c.b16 %v3952, %v3951
  %v4545 = vpack.c.b16 %v3954, %v3953
  %v4546 = vpack.c.b16 %v3956, %v3955
  %v4547 = vpack.c.b16 %v3958, %v3957
  %v4548 = vpack.c.b16 %v3960, %v3959
  %v4549 = vpack.c.b16 %v3962, %v3961
  %v4550 = vpack.c.b16 %v3964, %v3963
  %v4551 = vpack.c.b16 %v3966, %v3965
  %v4552 = vpack.c.b16 %v3968, %v3967
  %v4553 = vpack.c.b16 %v3970, %v3969
  %v4554 = vpack.c.b16 %v3972, %v3971
  %v4555 = vpack.c.b16 %v3974, %v3973
  %v4556 = vpack.c.b16 %v3976, %v3975
  %v4557 = vpack.c.b16 %v3978, %v3977
  %v4558 = vpack.c.b16 %v3980, %v3979
  %v4559 = vpack.c.b16 %v3982, %v3981
  %v4560 = vpack.c.b16 %v3984, %v3983
  %v4561 = vpack.c.b16 %v3986, %v3985
  %v4562 = vpack.c.b16 %v3988, %v3987
  %v4563 = vpack.c.b16 %v3990, %v3989
  %v4564 = vpack.c.b16 %v3992, %v3991
  %v4565 = vpack.c.b16 %v3994, %v3993
  %v4566 = vpack.c.b16 %v3996, %v3995
  %v4567 = vpack.c.b16 %v3998, %v3997
  %v4568 = vpack.c.b16 %v4000, %v3999
  %v4569 = vpack.c.b16 %v4002, %v4001
  %v4570 = vpack.c.b16 %v4004, %v4003
  %v4571 = vpack.c.b16 %v4006, %v4005
  %v4572 = vpack.c.b16 %v4008, %v4007
  %v4573 = vpack.c.b16 %v4010, %v4009
  %v4574 = vpack.c.b16 %v4012, %v4011
  %v4575 = vpack.c.b16 %v4014, %v4013
  %v4576 = vpack.c.b16 %v4016, %v4015
  %v4577 = vpack.c.b16 %v4018, %v4017
  %v4578 = vpack.c.b16 %v4020, %v4019
  %v4579 = vpack.c.b16 %v4022, %v4021
  %v4580 = vpack.c.b16 %v4024, %v4023
  %v4581 = vpack.c.b16 %v4026, %v4025
  %v4582 = vpack.c.b16 %v4028, %v4027
  %v4583 = vpack.c.b16 %v4030, %v4029
  %v4584 = vpack.c.b16 %v4032, %v4031
  %v4585 = vpack.c.b16 %v4034, %v4033
  %v4586 = vpack.c.b16 %v4036, %v4035
  %v4587 = vpack.c.b16 %v4038, %v4037
  %v4588 = vpack.c.b16 %v4040, %v4039
  %v4589 = vpack.c.b16 %v4042, %v4041
  %v4590 = vpack.c.b16 %v4044, %v4043
  %v4591 = vpack.c.b16 %v4046, %v4045
  %v4592 = vpack.c.b16 %v4048, %v4047
  %v4593 = vpack.c.b16 %v4050, %v4049
  %v4594 = vpack.c.b16 %v4052, %v4051
  %v4595 = vpack.c.b16 %v4054, %v4053
  %v4596 = vpack.c.b16 %v4056, %v4055
  %v4597 = vpack.c.b16 %v4058, %v4057
  %v4598 = vpack.c.b16 %v4060, %v4059
  %v4599 = vpack.c.b16 %v4062, %v4061
  %v4600 = vpack.c.b16 %v4064, %v4063
  %v4601 = vpack.c.b16 %v4066, %v4065
  %v4602 = vpack.c.b16 %v4068, %v4067
  %v4603 = vpack.c.b16 %v4070, %v4069
  %v4604 = vpack.c.b16 %v4072, %v4071
  %v4605 = vpack.c.b16 %v4074, %v4073
  %v4606 = vpack.c.b16 %v4076, %v4075
  %v4607 = vpack.c.b16 %v4078, %v4077
  %v4608 = vpack.c.b16 %v4080, %v4079
  %v4609 = vpack.c.b16 %v4082, %v4081
  %v4610 = vpack.c.b16 %v4084, %v4083
  %v4611 = vpack.c.b16 %v4086, %v4085
  %v4612 = vpack.c.b16 %v4088, %v4087
  %v4613 = vpack.c.b16 %v4090, %v4089
  %v4614 = vpack.c.b16 %v4092, %v4091
  %v4615 = vpack.c.b16 %v4094, %v4093
  %v4616 = vpack.c.b16 %v4096, %v4095
  %v4617 = vpack.c.b16 %v4098, %v4097
  %v4618 = vpack.c.b16 %v4100, %v4099
  %v4619 = vpack.c.b16 %v4102, %v4101
  %v4620 = vpack.c.b16 %v4104, %v4103
  %v4621 = vpack.c.b16 %v4106, %v4105
  %v4622 = vpack.c.b16 %v4108, %v4107
  %v4623 = vpack.c.b16 %v4110, %v4109
  %v4624 = vpack.c.b16 %v4112, %v4111
  %v4625 = vpack.c.b16 %v4114, %v4113
  %v4626 = vpack.c.b16 %v4116, %v4115
  %v4627 = vpack.c.b16 %v4118, %v4117
  %v4628 = vpack.c.b16 %v4120, %v4119
  %v4629 = vpack.c.b16 %v4122, %v4121
  %v4630 = vpack.c.b16 %v4124, %v4123
  %v4631 = vpack.c.b16 %v4126, %v4125
  %v4632 = vpack.c.b16 %v4128, %v4127
  %v4633 = vpack.c.b16 %v4130, %v4129
  %v4634 = vpack.c.b16 %v4132, %v4131
  %v4635 = vpack.c.b16 %v4134, %v4133
  %v4636 = vpack.c.b16 %v4136, %v4135
  %v4637 = vpack.c.b16 %v4138, %v4137
  %v4638 = vpack.c.b16 %v4140, %v4139
  %v4639 = vpack.c.b16 %v4142, %v4141
  %v4640 = vpack.c.b16 %v4144, %v4143
  %v4641 = vpack.c.b16 %v4146, %v4145
  %v4642 = vpack.c.b16 %v4148, %v4147
  %v4643 = vpack.c.b16 %v4150, %v4149
  %v4644 = vpack.c.b16 %v4152, %v4151
  %v4645 = vpack.c.b16 %v4154, %v4153
  %v4646 = vpack.c.b16 %v4156, %v4155
  %v4647 = vpack.c.b16 %v4158, %v4157
  %v4648 = vpack.c.b16 %v4160, %v4159
  %v4649 = vpack.c.b16 %v4162, %v4161
  %v4650 = vpack.c.b16 %v4164, %v4163
  %v4651 = vpack.c.b16 %v4166, %v4165
  %v4652 = vpack.c.b16 %v4168, %v4167
  %v4653 = vpack.c.b16 %v4170, %v4169
  %v4654 = vpack.c.b16 %v4172, %v4171
  %v4655 = vpack.c.b16 %v4174, %v4173
  %v4656 = vpack.c.b16 %v4176, %v4175
  %v4657 = vpack.c.b16 %v4178, %v4177
  %v4658 = vpack.c.b16 %v4180, %v4179
  %v4659 = vpack.c.b16 %v4182, %v4181
  %v4660 = vpack.c.b16 %v4184, %v4183
  %v4661 = vpack.c.b16 %v4186, %v4185
  %v4662 = vpack.c.b16 %v4188, %v4187
  %v4663 = vpack.c.b16 %v4190, %v4189
  %v4664 = vpack.c.b16 %v4192, %v4191
  %v4665 = vpack.c.b16 %v4194, %v4193
  %v4666 = vpack.c.b16 %v4196, %v4195
  %v4667 = vpack.c.b16 %v4198, %v4197
  %v4668 = vpack.c.b16 %v4200, %v4199
  %v4669 = vpack.c.b16 %v4202, %v4201
  %v4670 = vpack.c.b16 %v4204, %v4203
  %v4671 = vpack.c.b16 %v4206, %v4205
  %v4672 = vpack.c.b16 %v4208, %v4207
  %5137 = vmatpush.bf16.msra.mxu0 %v4216
  %5138 = vmatpush.bf16.msra.mxu0 %v4215
  %5139 = vmatpush.bf16.msra.mxu0 %v4214
  %5140 = vmatpush.bf16.msra.mxu0 %v4213
  %5141 = vmatpush.bf16.msra.mxu0 %v4212
  %5142 = vmatpush.bf16.msra.mxu0 %v4211
  %5143 = vmatpush.bf16.msra.mxu0 %v4210
  %5144 = vmatpush.bf16.msra.mxu0 %v4209
  %5145 = vmatmul.bf16.gmra.mxu0 %v1889
  %v5146 = vpop.f32.mrf.mxu0
  %v5147 = vadd.f32 0.0, %v5146
  %v5148 = vpop.f32.mrf.mxu0
  %v5149 = vadd.f32 0.0, %v5148
  %5150 = vmatmul.bf16.gmra.mxu0 %v1947
  %v5151 = vpop.f32.mrf.mxu0
  %v5152 = vadd.f32 0.0, %v5151
  %v5153 = vpop.f32.mrf.mxu0
  %v5154 = vadd.f32 0.0, %v5153
  %5155 = vmatmul.bf16.gmra.mxu0 %v2005
  %v5156 = vpop.f32.mrf.mxu0
  %v5157 = vadd.f32 0.0, %v5156
  %v5158 = vpop.f32.mrf.mxu0
  %v5159 = vadd.f32 0.0, %v5158
  %5160 = vmatmul.bf16.gmra.mxu0 %v2063
  %v5161 = vpop.f32.mrf.mxu0
  %v5162 = vadd.f32 0.0, %v5161
  %v5163 = vpop.f32.mrf.mxu0
  %v5164 = vadd.f32 0.0, %v5163
  %5165 = vdwg.mxu0
  %5166 = vmatpush.bf16.msra.mxu0 %v4224
  %5167 = vmatpush.bf16.msra.mxu0 %v4223
  %5168 = vmatpush.bf16.msra.mxu0 %v4222
  %5169 = vmatpush.bf16.msra.mxu0 %v4221
  %5170 = vmatpush.bf16.msra.mxu0 %v4220
  %5171 = vmatpush.bf16.msra.mxu0 %v4219
  %5172 = vmatpush.bf16.msra.mxu0 %v4218
  %5173 = vmatpush.bf16.msra.mxu0 %v4217
  %5174 = vmatmul.bf16.gmra.mxu0 %v1890
  %v5175 = vpop.f32.mrf.mxu0
  %v5176 = vadd.f32 %v5147, %v5175
  %v5177 = vpop.f32.mrf.mxu0
  %v5178 = vadd.f32 %v5149, %v5177
  %5179 = vmatmul.bf16.gmra.mxu0 %v1948
  %v5180 = vpop.f32.mrf.mxu0
  %v5181 = vadd.f32 %v5152, %v5180
  %v5182 = vpop.f32.mrf.mxu0
  %v5183 = vadd.f32 %v5154, %v5182
  %5184 = vmatmul.bf16.gmra.mxu0 %v2006
  %v5185 = vpop.f32.mrf.mxu0
  %v5186 = vadd.f32 %v5157, %v5185
  %v5187 = vpop.f32.mrf.mxu0
  %v5188 = vadd.f32 %v5159, %v5187
  %5189 = vmatmul.bf16.gmra.mxu0 %v2064
  %v5190 = vpop.f32.mrf.mxu0
  %v5191 = vadd.f32 %v5162, %v5190
  %v5192 = vpop.f32.mrf.mxu0
  %v5193 = vadd.f32 %v5164, %v5192
  %5194 = vdwg.mxu0
  %5195 = vmatpush.bf16.msra.mxu0 %v4232
  %5196 = vmatpush.bf16.msra.mxu0 %v4231
  %5197 = vmatpush.bf16.msra.mxu0 %v4230
  %5198 = vmatpush.bf16.msra.mxu0 %v4229
  %5199 = vmatpush.bf16.msra.mxu0 %v4228
  %5200 = vmatpush.bf16.msra.mxu0 %v4227
  %5201 = vmatpush.bf16.msra.mxu0 %v4226
  %5202 = vmatpush.bf16.msra.mxu0 %v4225
  %5203 = vmatmul.bf16.gmra.mxu0 %v1891
  %v5204 = vpop.f32.mrf.mxu0
  %v5205 = vadd.f32 %v5176, %v5204
  %v5206 = vpop.f32.mrf.mxu0
  %v5207 = vadd.f32 %v5178, %v5206
  %5208 = vmatmul.bf16.gmra.mxu0 %v1949
  %v5209 = vpop.f32.mrf.mxu0
  %v5210 = vadd.f32 %v5181, %v5209
  %v5211 = vpop.f32.mrf.mxu0
  %v5212 = vadd.f32 %v5183, %v5211
  %5213 = vmatmul.bf16.gmra.mxu0 %v2007
  %v5214 = vpop.f32.mrf.mxu0
  %v5215 = vadd.f32 %v5186, %v5214
  %v5216 = vpop.f32.mrf.mxu0
  %v5217 = vadd.f32 %v5188, %v5216
  %5218 = vmatmul.bf16.gmra.mxu0 %v2065
  %v5219 = vpop.f32.mrf.mxu0
  %v5220 = vadd.f32 %v5191, %v5219
  %v5221 = vpop.f32.mrf.mxu0
  %v5222 = vadd.f32 %v5193, %v5221
  %5223 = vdwg.mxu0
  %5224 = vmatpush.bf16.msra.mxu0 %v4240
  %5225 = vmatpush.bf16.msra.mxu0 %v4239
  %5226 = vmatpush.bf16.msra.mxu0 %v4238
  %5227 = vmatpush.bf16.msra.mxu0 %v4237
  %5228 = vmatpush.bf16.msra.mxu0 %v4236
  %5229 = vmatpush.bf16.msra.mxu0 %v4235
  %5230 = vmatpush.bf16.msra.mxu0 %v4234
  %5231 = vmatpush.bf16.msra.mxu0 %v4233
  %5232 = vmatmul.bf16.gmra.mxu0 %v1892
  %v5233 = vpop.f32.mrf.mxu0
  %v5234 = vadd.f32 %v5205, %v5233
  %v5235 = vpop.f32.mrf.mxu0
  %v5236 = vadd.f32 %v5207, %v5235
  %5237 = vmatmul.bf16.gmra.mxu0 %v1950
  %v5238 = vpop.f32.mrf.mxu0
  %v5239 = vadd.f32 %v5210, %v5238
  %v5240 = vpop.f32.mrf.mxu0
  %v5241 = vadd.f32 %v5212, %v5240
  %5242 = vmatmul.bf16.gmra.mxu0 %v2008
  %v5243 = vpop.f32.mrf.mxu0
  %v5244 = vadd.f32 %v5215, %v5243
  %v5245 = vpop.f32.mrf.mxu0
  %v5246 = vadd.f32 %v5217, %v5245
  %5247 = vmatmul.bf16.gmra.mxu0 %v2066
  %v5248 = vpop.f32.mrf.mxu0
  %v5249 = vadd.f32 %v5220, %v5248
  %v5250 = vpop.f32.mrf.mxu0
  %v5251 = vadd.f32 %v5222, %v5250
  %5252 = vdwg.mxu0
  %5253 = vmatpush.bf16.msra.mxu0 %v4248
  %5254 = vmatpush.bf16.msra.mxu0 %v4247
  %5255 = vmatpush.bf16.msra.mxu0 %v4246
  %5256 = vmatpush.bf16.msra.mxu0 %v4245
  %5257 = vmatpush.bf16.msra.mxu0 %v4244
  %5258 = vmatpush.bf16.msra.mxu0 %v4243
  %5259 = vmatpush.bf16.msra.mxu0 %v4242
  %5260 = vmatpush.bf16.msra.mxu0 %v4241
  %5261 = vmatmul.bf16.gmra.mxu0 %v1893
  %v5262 = vpop.f32.mrf.mxu0
  %v5263 = vadd.f32 %v5234, %v5262
  %v5264 = vpop.f32.mrf.mxu0
  %v5265 = vadd.f32 %v5236, %v5264
  %5266 = vmatmul.bf16.gmra.mxu0 %v1951
  %v5267 = vpop.f32.mrf.mxu0
  %v5268 = vadd.f32 %v5239, %v5267
  %v5269 = vpop.f32.mrf.mxu0
  %v5270 = vadd.f32 %v5241, %v5269
  %5271 = vmatmul.bf16.gmra.mxu0 %v2009
  %v5272 = vpop.f32.mrf.mxu0
  %v5273 = vadd.f32 %v5244, %v5272
  %v5274 = vpop.f32.mrf.mxu0
  %v5275 = vadd.f32 %v5246, %v5274
  %5276 = vmatmul.bf16.gmra.mxu0 %v2067
  %v5277 = vpop.f32.mrf.mxu0
  %v5278 = vadd.f32 %v5249, %v5277
  %v5279 = vpop.f32.mrf.mxu0
  %v5280 = vadd.f32 %v5251, %v5279
  %5281 = vdwg.mxu0
  %5282 = vmatpush.bf16.msra.mxu0 %v4256
  %5283 = vmatpush.bf16.msra.mxu0 %v4255
  %5284 = vmatpush.bf16.msra.mxu0 %v4254
  %5285 = vmatpush.bf16.msra.mxu0 %v4253
  %5286 = vmatpush.bf16.msra.mxu0 %v4252
  %5287 = vmatpush.bf16.msra.mxu0 %v4251
  %5288 = vmatpush.bf16.msra.mxu0 %v4250
  %5289 = vmatpush.bf16.msra.mxu0 %v4249
  %5290 = vmatmul.bf16.gmra.mxu0 %v1894
  %v5291 = vpop.f32.mrf.mxu0
  %v5292 = vadd.f32 %v5263, %v5291
  %v5293 = vpop.f32.mrf.mxu0
  %v5294 = vadd.f32 %v5265, %v5293
  %5295 = vmatmul.bf16.gmra.mxu0 %v1952
  %v5296 = vpop.f32.mrf.mxu0
  %v5297 = vadd.f32 %v5268, %v5296
  %v5298 = vpop.f32.mrf.mxu0
  %v5299 = vadd.f32 %v5270, %v5298
  %5300 = vmatmul.bf16.gmra.mxu0 %v2010
  %v5301 = vpop.f32.mrf.mxu0
  %v5302 = vadd.f32 %v5273, %v5301
  %v5303 = vpop.f32.mrf.mxu0
  %v5304 = vadd.f32 %v5275, %v5303
  %5305 = vmatmul.bf16.gmra.mxu0 %v2068
  %v5306 = vpop.f32.mrf.mxu0
  %v5307 = vadd.f32 %v5278, %v5306
  %v5308 = vpop.f32.mrf.mxu0
  %v5309 = vadd.f32 %v5280, %v5308
  %5310 = vdwg.mxu0
  %5311 = vmatpush.bf16.msra.mxu0 %v4264
  %5312 = vmatpush.bf16.msra.mxu0 %v4263
  %5313 = vmatpush.bf16.msra.mxu0 %v4262
  %5314 = vmatpush.bf16.msra.mxu0 %v4261
  %5315 = vmatpush.bf16.msra.mxu0 %v4260
  %5316 = vmatpush.bf16.msra.mxu0 %v4259
  %5317 = vmatpush.bf16.msra.mxu0 %v4258
  %5318 = vmatpush.bf16.msra.mxu0 %v4257
  %5319 = vmatmul.bf16.gmra.mxu0 %v1895
  %v5320 = vpop.f32.mrf.mxu0
  %v5321 = vadd.f32 %v5292, %v5320
  %v5322 = vpop.f32.mrf.mxu0
  %v5323 = vadd.f32 %v5294, %v5322
  %5324 = vmatmul.bf16.gmra.mxu0 %v1953
  %v5325 = vpop.f32.mrf.mxu0
  %v5326 = vadd.f32 %v5297, %v5325
  %v5327 = vpop.f32.mrf.mxu0
  %v5328 = vadd.f32 %v5299, %v5327
  %5329 = vmatmul.bf16.gmra.mxu0 %v2011
  %v5330 = vpop.f32.mrf.mxu0
  %v5331 = vadd.f32 %v5302, %v5330
  %v5332 = vpop.f32.mrf.mxu0
  %v5333 = vadd.f32 %v5304, %v5332
  %5334 = vmatmul.bf16.gmra.mxu0 %v2069
  %v5335 = vpop.f32.mrf.mxu0
  %v5336 = vadd.f32 %v5307, %v5335
  %v5337 = vpop.f32.mrf.mxu0
  %v5338 = vadd.f32 %v5309, %v5337
  %5339 = vdwg.mxu0
  %5340 = vmatpush.bf16.msra.mxu0 %v4272
  %5341 = vmatpush.bf16.msra.mxu0 %v4271
  %5342 = vmatpush.bf16.msra.mxu0 %v4270
  %5343 = vmatpush.bf16.msra.mxu0 %v4269
  %5344 = vmatpush.bf16.msra.mxu0 %v4268
  %5345 = vmatpush.bf16.msra.mxu0 %v4267
  %5346 = vmatpush.bf16.msra.mxu0 %v4266
  %5347 = vmatpush.bf16.msra.mxu0 %v4265
  %5348 = vmatmul.bf16.gmra.mxu0 %v1896
  %v5349 = vpop.f32.mrf.mxu0
  %v5350 = vadd.f32 %v5321, %v5349
  %v5351 = vpop.f32.mrf.mxu0
  %v5352 = vadd.f32 %v5323, %v5351
  %5353 = vmatmul.bf16.gmra.mxu0 %v1954
  %v5354 = vpop.f32.mrf.mxu0
  %v5355 = vadd.f32 %v5326, %v5354
  %v5356 = vpop.f32.mrf.mxu0
  %v5357 = vadd.f32 %v5328, %v5356
  %5358 = vmatmul.bf16.gmra.mxu0 %v2012
  %v5359 = vpop.f32.mrf.mxu0
  %v5360 = vadd.f32 %v5331, %v5359
  %v5361 = vpop.f32.mrf.mxu0
  %v5362 = vadd.f32 %v5333, %v5361
  %5363 = vmatmul.bf16.gmra.mxu0 %v2070
  %v5364 = vpop.f32.mrf.mxu0
  %v5365 = vadd.f32 %v5336, %v5364
  %v5366 = vpop.f32.mrf.mxu0
  %v5367 = vadd.f32 %v5338, %v5366
  %5368 = vdwg.mxu0
  %5369 = vmatpush.bf16.msra.mxu0 %v4280
  %5370 = vmatpush.bf16.msra.mxu0 %v4279
  %5371 = vmatpush.bf16.msra.mxu0 %v4278
  %5372 = vmatpush.bf16.msra.mxu0 %v4277
  %5373 = vmatpush.bf16.msra.mxu0 %v4276
  %5374 = vmatpush.bf16.msra.mxu0 %v4275
  %5375 = vmatpush.bf16.msra.mxu0 %v4274
  %5376 = vmatpush.bf16.msra.mxu0 %v4273
  %5377 = vmatmul.bf16.gmra.mxu0 %v1897
  %v5378 = vpop.f32.mrf.mxu0
  %v5379 = vadd.f32 %v5350, %v5378
  %v5380 = vpop.f32.mrf.mxu0
  %v5381 = vadd.f32 %v5352, %v5380
  %5382 = vmatmul.bf16.gmra.mxu0 %v1955
  %v5383 = vpop.f32.mrf.mxu0
  %v5384 = vadd.f32 %v5355, %v5383
  %v5385 = vpop.f32.mrf.mxu0
  %v5386 = vadd.f32 %v5357, %v5385
  %5387 = vmatmul.bf16.gmra.mxu0 %v2013
  %v5388 = vpop.f32.mrf.mxu0
  %v5389 = vadd.f32 %v5360, %v5388
  %v5390 = vpop.f32.mrf.mxu0
  %v5391 = vadd.f32 %v5362, %v5390
  %5392 = vmatmul.bf16.gmra.mxu0 %v2071
  %v5393 = vpop.f32.mrf.mxu0
  %v5394 = vadd.f32 %v5365, %v5393
  %v5395 = vpop.f32.mrf.mxu0
  %v5396 = vadd.f32 %v5367, %v5395
  %5397 = vdwg.mxu0
  %5398 = vmatpush.bf16.msra.mxu0 %v4288
  %5399 = vmatpush.bf16.msra.mxu0 %v4287
  %5400 = vmatpush.bf16.msra.mxu0 %v4286
  %5401 = vmatpush.bf16.msra.mxu0 %v4285
  %5402 = vmatpush.bf16.msra.mxu0 %v4284
  %5403 = vmatpush.bf16.msra.mxu0 %v4283
  %5404 = vmatpush.bf16.msra.mxu0 %v4282
  %5405 = vmatpush.bf16.msra.mxu0 %v4281
  %5406 = vmatmul.bf16.gmra.mxu0 %v1898
  %v5407 = vpop.f32.mrf.mxu0
  %v5408 = vadd.f32 %v5379, %v5407
  %v5409 = vpop.f32.mrf.mxu0
  %v5410 = vadd.f32 %v5381, %v5409
  %5411 = vmatmul.bf16.gmra.mxu0 %v1956
  %v5412 = vpop.f32.mrf.mxu0
  %v5413 = vadd.f32 %v5384, %v5412
  %v5414 = vpop.f32.mrf.mxu0
  %v5415 = vadd.f32 %v5386, %v5414
  %5416 = vmatmul.bf16.gmra.mxu0 %v2014
  %v5417 = vpop.f32.mrf.mxu0
  %v5418 = vadd.f32 %v5389, %v5417
  %v5419 = vpop.f32.mrf.mxu0
  %v5420 = vadd.f32 %v5391, %v5419
  %5421 = vmatmul.bf16.gmra.mxu0 %v2072
  %v5422 = vpop.f32.mrf.mxu0
  %v5423 = vadd.f32 %v5394, %v5422
  %v5424 = vpop.f32.mrf.mxu0
  %v5425 = vadd.f32 %v5396, %v5424
  %5426 = vdwg.mxu0
  %5427 = vmatpush.bf16.msra.mxu0 %v4296
  %5428 = vmatpush.bf16.msra.mxu0 %v4295
  %5429 = vmatpush.bf16.msra.mxu0 %v4294
  %5430 = vmatpush.bf16.msra.mxu0 %v4293
  %5431 = vmatpush.bf16.msra.mxu0 %v4292
  %5432 = vmatpush.bf16.msra.mxu0 %v4291
  %5433 = vmatpush.bf16.msra.mxu0 %v4290
  %5434 = vmatpush.bf16.msra.mxu0 %v4289
  %5435 = vmatmul.bf16.gmra.mxu0 %v1899
  %v5436 = vpop.f32.mrf.mxu0
  %v5437 = vadd.f32 %v5408, %v5436
  %v5438 = vpop.f32.mrf.mxu0
  %v5439 = vadd.f32 %v5410, %v5438
  %5440 = vmatmul.bf16.gmra.mxu0 %v1957
  %v5441 = vpop.f32.mrf.mxu0
  %v5442 = vadd.f32 %v5413, %v5441
  %v5443 = vpop.f32.mrf.mxu0
  %v5444 = vadd.f32 %v5415, %v5443
  %5445 = vmatmul.bf16.gmra.mxu0 %v2015
  %v5446 = vpop.f32.mrf.mxu0
  %v5447 = vadd.f32 %v5418, %v5446
  %v5448 = vpop.f32.mrf.mxu0
  %v5449 = vadd.f32 %v5420, %v5448
  %5450 = vmatmul.bf16.gmra.mxu0 %v2073
  %v5451 = vpop.f32.mrf.mxu0
  %v5452 = vadd.f32 %v5423, %v5451
  %v5453 = vpop.f32.mrf.mxu0
  %v5454 = vadd.f32 %v5425, %v5453
  %5455 = vdwg.mxu0
  %5456 = vmatpush.bf16.msra.mxu0 %v4304
  %5457 = vmatpush.bf16.msra.mxu0 %v4303
  %5458 = vmatpush.bf16.msra.mxu0 %v4302
  %5459 = vmatpush.bf16.msra.mxu0 %v4301
  %5460 = vmatpush.bf16.msra.mxu0 %v4300
  %5461 = vmatpush.bf16.msra.mxu0 %v4299
  %5462 = vmatpush.bf16.msra.mxu0 %v4298
  %5463 = vmatpush.bf16.msra.mxu0 %v4297
  %5464 = vmatmul.bf16.gmra.mxu0 %v1900
  %v5465 = vpop.f32.mrf.mxu0
  %v5466 = vadd.f32 %v5437, %v5465
  %v5467 = vpop.f32.mrf.mxu0
  %v5468 = vadd.f32 %v5439, %v5467
  %5469 = vmatmul.bf16.gmra.mxu0 %v1958
  %v5470 = vpop.f32.mrf.mxu0
  %v5471 = vadd.f32 %v5442, %v5470
  %v5472 = vpop.f32.mrf.mxu0
  %v5473 = vadd.f32 %v5444, %v5472
  %5474 = vmatmul.bf16.gmra.mxu0 %v2016
  %v5475 = vpop.f32.mrf.mxu0
  %v5476 = vadd.f32 %v5447, %v5475
  %v5477 = vpop.f32.mrf.mxu0
  %v5478 = vadd.f32 %v5449, %v5477
  %5479 = vmatmul.bf16.gmra.mxu0 %v2074
  %v5480 = vpop.f32.mrf.mxu0
  %v5481 = vadd.f32 %v5452, %v5480
  %v5482 = vpop.f32.mrf.mxu0
  %v5483 = vadd.f32 %v5454, %v5482
  %5484 = vdwg.mxu0
  %5485 = vmatpush.bf16.msra.mxu0 %v4312
  %5486 = vmatpush.bf16.msra.mxu0 %v4311
  %5487 = vmatpush.bf16.msra.mxu0 %v4310
  %5488 = vmatpush.bf16.msra.mxu0 %v4309
  %5489 = vmatpush.bf16.msra.mxu0 %v4308
  %5490 = vmatpush.bf16.msra.mxu0 %v4307
  %5491 = vmatpush.bf16.msra.mxu0 %v4306
  %5492 = vmatpush.bf16.msra.mxu0 %v4305
  %5493 = vmatmul.bf16.gmra.mxu0 %v1901
  %v5494 = vpop.f32.mrf.mxu0
  %v5495 = vadd.f32 %v5466, %v5494
  %v5496 = vpop.f32.mrf.mxu0
  %v5497 = vadd.f32 %v5468, %v5496
  %5498 = vmatmul.bf16.gmra.mxu0 %v1959
  %v5499 = vpop.f32.mrf.mxu0
  %v5500 = vadd.f32 %v5471, %v5499
  %v5501 = vpop.f32.mrf.mxu0
  %v5502 = vadd.f32 %v5473, %v5501
  %5503 = vmatmul.bf16.gmra.mxu0 %v2017
  %v5504 = vpop.f32.mrf.mxu0
  %v5505 = vadd.f32 %v5476, %v5504
  %v5506 = vpop.f32.mrf.mxu0
  %v5507 = vadd.f32 %v5478, %v5506
  %5508 = vmatmul.bf16.gmra.mxu0 %v2075
  %v5509 = vpop.f32.mrf.mxu0
  %v5510 = vadd.f32 %v5481, %v5509
  %v5511 = vpop.f32.mrf.mxu0
  %v5512 = vadd.f32 %v5483, %v5511
  %5513 = vdwg.mxu0
  %5514 = vmatpush.bf16.msra.mxu0 %v4320
  %5515 = vmatpush.bf16.msra.mxu0 %v4319
  %5516 = vmatpush.bf16.msra.mxu0 %v4318
  %5517 = vmatpush.bf16.msra.mxu0 %v4317
  %5518 = vmatpush.bf16.msra.mxu0 %v4316
  %5519 = vmatpush.bf16.msra.mxu0 %v4315
  %5520 = vmatpush.bf16.msra.mxu0 %v4314
  %5521 = vmatpush.bf16.msra.mxu0 %v4313
  %5522 = vmatmul.bf16.gmra.mxu0 %v1902
  %v5523 = vpop.f32.mrf.mxu0
  %v5524 = vadd.f32 %v5495, %v5523
  %v5525 = vpop.f32.mrf.mxu0
  %v5526 = vadd.f32 %v5497, %v5525
  %5527 = vmatmul.bf16.gmra.mxu0 %v1960
  %v5528 = vpop.f32.mrf.mxu0
  %v5529 = vadd.f32 %v5500, %v5528
  %v5530 = vpop.f32.mrf.mxu0
  %v5531 = vadd.f32 %v5502, %v5530
  %5532 = vmatmul.bf16.gmra.mxu0 %v2018
  %v5533 = vpop.f32.mrf.mxu0
  %v5534 = vadd.f32 %v5505, %v5533
  %v5535 = vpop.f32.mrf.mxu0
  %v5536 = vadd.f32 %v5507, %v5535
  %5537 = vmatmul.bf16.gmra.mxu0 %v2076
  %v5538 = vpop.f32.mrf.mxu0
  %v5539 = vadd.f32 %v5510, %v5538
  %v5540 = vpop.f32.mrf.mxu0
  %v5541 = vadd.f32 %v5512, %v5540
  %5542 = vdwg.mxu0
  %5543 = vmatpush.bf16.msra.mxu0 %v4328
  %5544 = vmatpush.bf16.msra.mxu0 %v4327
  %5545 = vmatpush.bf16.msra.mxu0 %v4326
  %5546 = vmatpush.bf16.msra.mxu0 %v4325
  %5547 = vmatpush.bf16.msra.mxu0 %v4324
  %5548 = vmatpush.bf16.msra.mxu0 %v4323
  %5549 = vmatpush.bf16.msra.mxu0 %v4322
  %5550 = vmatpush.bf16.msra.mxu0 %v4321
  %5551 = vmatmul.bf16.gmra.mxu0 %v1903
  %v5552 = vpop.f32.mrf.mxu0
  %v5553 = vadd.f32 %v5524, %v5552
  %v5554 = vpop.f32.mrf.mxu0
  %v5555 = vadd.f32 %v5526, %v5554
  %5556 = vmatmul.bf16.gmra.mxu0 %v1961
  %v5557 = vpop.f32.mrf.mxu0
  %v5558 = vadd.f32 %v5529, %v5557
  %v5559 = vpop.f32.mrf.mxu0
  %v5560 = vadd.f32 %v5531, %v5559
  %5561 = vmatmul.bf16.gmra.mxu0 %v2019
  %v5562 = vpop.f32.mrf.mxu0
  %v5563 = vadd.f32 %v5534, %v5562
  %v5564 = vpop.f32.mrf.mxu0
  %v5565 = vadd.f32 %v5536, %v5564
  %5566 = vmatmul.bf16.gmra.mxu0 %v2077
  %v5567 = vpop.f32.mrf.mxu0
  %v5568 = vadd.f32 %v5539, %v5567
  %v5569 = vpop.f32.mrf.mxu0
  %v5570 = vadd.f32 %v5541, %v5569
  %5571 = vdwg.mxu0
  %5572 = vmatpush.bf16.msra.mxu0 %v4336
  %5573 = vmatpush.bf16.msra.mxu0 %v4335
  %5574 = vmatpush.bf16.msra.mxu0 %v4334
  %5575 = vmatpush.bf16.msra.mxu0 %v4333
  %5576 = vmatpush.bf16.msra.mxu0 %v4332
  %5577 = vmatpush.bf16.msra.mxu0 %v4331
  %5578 = vmatpush.bf16.msra.mxu0 %v4330
  %5579 = vmatpush.bf16.msra.mxu0 %v4329
  %5580 = vmatmul.bf16.gmra.mxu0 %v1904
  %v5581 = vpop.f32.mrf.mxu0
  %v5582 = vadd.f32 %v5553, %v5581
  %v5583 = vpop.f32.mrf.mxu0
  %v5584 = vadd.f32 %v5555, %v5583
  %5585 = vmatmul.bf16.gmra.mxu0 %v1962
  %v5586 = vpop.f32.mrf.mxu0
  %v5587 = vadd.f32 %v5558, %v5586
  %v5588 = vpop.f32.mrf.mxu0
  %v5589 = vadd.f32 %v5560, %v5588
  %5590 = vmatmul.bf16.gmra.mxu0 %v2020
  %v5591 = vpop.f32.mrf.mxu0
  %v5592 = vadd.f32 %v5563, %v5591
  %v5593 = vpop.f32.mrf.mxu0
  %v5594 = vadd.f32 %v5565, %v5593
  %5595 = vmatmul.bf16.gmra.mxu0 %v2078
  %v5596 = vpop.f32.mrf.mxu0
  %v5597 = vadd.f32 %v5568, %v5596
  %v5598 = vpop.f32.mrf.mxu0
  %v5599 = vadd.f32 %v5570, %v5598
  %5600 = vdwg.mxu0
  %5601 = vmatpush.bf16.msra.mxu0 %v4344
  %5602 = vmatpush.bf16.msra.mxu0 %v4343
  %5603 = vmatpush.bf16.msra.mxu0 %v4342
  %5604 = vmatpush.bf16.msra.mxu0 %v4341
  %5605 = vmatpush.bf16.msra.mxu0 %v4340
  %5606 = vmatpush.bf16.msra.mxu0 %v4339
  %5607 = vmatpush.bf16.msra.mxu0 %v4338
  %5608 = vmatpush.bf16.msra.mxu0 %v4337
  %5609 = vmatmul.bf16.gmra.mxu0 %v1905
  %v5610 = vpop.f32.mrf.mxu0
  %v5611 = vadd.f32 %v5582, %v5610
  %v5612 = vpop.f32.mrf.mxu0
  %v5613 = vadd.f32 %v5584, %v5612
  %5614 = vmatmul.bf16.gmra.mxu0 %v1963
  %v5615 = vpop.f32.mrf.mxu0
  %v5616 = vadd.f32 %v5587, %v5615
  %v5617 = vpop.f32.mrf.mxu0
  %v5618 = vadd.f32 %v5589, %v5617
  %5619 = vmatmul.bf16.gmra.mxu0 %v2021
  %v5620 = vpop.f32.mrf.mxu0
  %v5621 = vadd.f32 %v5592, %v5620
  %v5622 = vpop.f32.mrf.mxu0
  %v5623 = vadd.f32 %v5594, %v5622
  %5624 = vmatmul.bf16.gmra.mxu0 %v2079
  %v5625 = vpop.f32.mrf.mxu0
  %v5626 = vadd.f32 %v5597, %v5625
  %v5627 = vpop.f32.mrf.mxu0
  %v5628 = vadd.f32 %v5599, %v5627
  %5629 = vdwg.mxu0
  %5630 = vmatpush.bf16.msra.mxu0 %v4352
  %5631 = vmatpush.bf16.msra.mxu0 %v4351
  %5632 = vmatpush.bf16.msra.mxu0 %v4350
  %5633 = vmatpush.bf16.msra.mxu0 %v4349
  %5634 = vmatpush.bf16.msra.mxu0 %v4348
  %5635 = vmatpush.bf16.msra.mxu0 %v4347
  %5636 = vmatpush.bf16.msra.mxu0 %v4346
  %5637 = vmatpush.bf16.msra.mxu0 %v4345
  %5638 = vmatmul.bf16.gmra.mxu0 %v1906
  %v5639 = vpop.f32.mrf.mxu0
  %v5640 = vadd.f32 %v5611, %v5639
  %v5641 = vpop.f32.mrf.mxu0
  %v5642 = vadd.f32 %v5613, %v5641
  %5643 = vmatmul.bf16.gmra.mxu0 %v1964
  %v5644 = vpop.f32.mrf.mxu0
  %v5645 = vadd.f32 %v5616, %v5644
  %v5646 = vpop.f32.mrf.mxu0
  %v5647 = vadd.f32 %v5618, %v5646
  %5648 = vmatmul.bf16.gmra.mxu0 %v2022
  %v5649 = vpop.f32.mrf.mxu0
  %v5650 = vadd.f32 %v5621, %v5649
  %v5651 = vpop.f32.mrf.mxu0
  %v5652 = vadd.f32 %v5623, %v5651
  %5653 = vmatmul.bf16.gmra.mxu0 %v2080
  %v5654 = vpop.f32.mrf.mxu0
  %v5655 = vadd.f32 %v5626, %v5654
  %v5656 = vpop.f32.mrf.mxu0
  %v5657 = vadd.f32 %v5628, %v5656
  %5658 = vdwg.mxu0
  %5659 = vmatpush.bf16.msra.mxu0 %v4360
  %5660 = vmatpush.bf16.msra.mxu0 %v4359
  %5661 = vmatpush.bf16.msra.mxu0 %v4358
  %5662 = vmatpush.bf16.msra.mxu0 %v4357
  %5663 = vmatpush.bf16.msra.mxu0 %v4356
  %5664 = vmatpush.bf16.msra.mxu0 %v4355
  %5665 = vmatpush.bf16.msra.mxu0 %v4354
  %5666 = vmatpush.bf16.msra.mxu0 %v4353
  %5667 = vmatmul.bf16.gmra.mxu0 %v1907
  %v5668 = vpop.f32.mrf.mxu0
  %v5669 = vadd.f32 %v5640, %v5668
  %v5670 = vpop.f32.mrf.mxu0
  %v5671 = vadd.f32 %v5642, %v5670
  %5672 = vmatmul.bf16.gmra.mxu0 %v1965
  %v5673 = vpop.f32.mrf.mxu0
  %v5674 = vadd.f32 %v5645, %v5673
  %v5675 = vpop.f32.mrf.mxu0
  %v5676 = vadd.f32 %v5647, %v5675
  %5677 = vmatmul.bf16.gmra.mxu0 %v2023
  %v5678 = vpop.f32.mrf.mxu0
  %v5679 = vadd.f32 %v5650, %v5678
  %v5680 = vpop.f32.mrf.mxu0
  %v5681 = vadd.f32 %v5652, %v5680
  %5682 = vmatmul.bf16.gmra.mxu0 %v2081
  %v5683 = vpop.f32.mrf.mxu0
  %v5684 = vadd.f32 %v5655, %v5683
  %v5685 = vpop.f32.mrf.mxu0
  %v5686 = vadd.f32 %v5657, %v5685
  %5687 = vdwg.mxu0
  %5688 = vmatpush.bf16.msra.mxu0 %v4368
  %5689 = vmatpush.bf16.msra.mxu0 %v4367
  %5690 = vmatpush.bf16.msra.mxu0 %v4366
  %5691 = vmatpush.bf16.msra.mxu0 %v4365
  %5692 = vmatpush.bf16.msra.mxu0 %v4364
  %5693 = vmatpush.bf16.msra.mxu0 %v4363
  %5694 = vmatpush.bf16.msra.mxu0 %v4362
  %5695 = vmatpush.bf16.msra.mxu0 %v4361
  %5696 = vmatmul.bf16.gmra.mxu0 %v1908
  %v5697 = vpop.f32.mrf.mxu0
  %v5698 = vadd.f32 %v5669, %v5697
  %v5699 = vpop.f32.mrf.mxu0
  %v5700 = vadd.f32 %v5671, %v5699
  %5701 = vmatmul.bf16.gmra.mxu0 %v1966
  %v5702 = vpop.f32.mrf.mxu0
  %v5703 = vadd.f32 %v5674, %v5702
  %v5704 = vpop.f32.mrf.mxu0
  %v5705 = vadd.f32 %v5676, %v5704
  %5706 = vmatmul.bf16.gmra.mxu0 %v2024
  %v5707 = vpop.f32.mrf.mxu0
  %v5708 = vadd.f32 %v5679, %v5707
  %v5709 = vpop.f32.mrf.mxu0
  %v5710 = vadd.f32 %v5681, %v5709
  %5711 = vmatmul.bf16.gmra.mxu0 %v2082
  %v5712 = vpop.f32.mrf.mxu0
  %v5713 = vadd.f32 %v5684, %v5712
  %v5714 = vpop.f32.mrf.mxu0
  %v5715 = vadd.f32 %v5686, %v5714
  %5716 = vdwg.mxu0
  %5717 = vmatpush.bf16.msra.mxu0 %v4376
  %5718 = vmatpush.bf16.msra.mxu0 %v4375
  %5719 = vmatpush.bf16.msra.mxu0 %v4374
  %5720 = vmatpush.bf16.msra.mxu0 %v4373
  %5721 = vmatpush.bf16.msra.mxu0 %v4372
  %5722 = vmatpush.bf16.msra.mxu0 %v4371
  %5723 = vmatpush.bf16.msra.mxu0 %v4370
  %5724 = vmatpush.bf16.msra.mxu0 %v4369
  %5725 = vmatmul.bf16.gmra.mxu0 %v1909
  %v5726 = vpop.f32.mrf.mxu0
  %v5727 = vadd.f32 %v5698, %v5726
  %v5728 = vpop.f32.mrf.mxu0
  %v5729 = vadd.f32 %v5700, %v5728
  %5730 = vmatmul.bf16.gmra.mxu0 %v1967
  %v5731 = vpop.f32.mrf.mxu0
  %v5732 = vadd.f32 %v5703, %v5731
  %v5733 = vpop.f32.mrf.mxu0
  %v5734 = vadd.f32 %v5705, %v5733
  %5735 = vmatmul.bf16.gmra.mxu0 %v2025
  %v5736 = vpop.f32.mrf.mxu0
  %v5737 = vadd.f32 %v5708, %v5736
  %v5738 = vpop.f32.mrf.mxu0
  %v5739 = vadd.f32 %v5710, %v5738
  %5740 = vmatmul.bf16.gmra.mxu0 %v2083
  %v5741 = vpop.f32.mrf.mxu0
  %v5742 = vadd.f32 %v5713, %v5741
  %v5743 = vpop.f32.mrf.mxu0
  %v5744 = vadd.f32 %v5715, %v5743
  %5745 = vdwg.mxu0
  %5746 = vmatpush.bf16.msra.mxu0 %v4384
  %5747 = vmatpush.bf16.msra.mxu0 %v4383
  %5748 = vmatpush.bf16.msra.mxu0 %v4382
  %5749 = vmatpush.bf16.msra.mxu0 %v4381
  %5750 = vmatpush.bf16.msra.mxu0 %v4380
  %5751 = vmatpush.bf16.msra.mxu0 %v4379
  %5752 = vmatpush.bf16.msra.mxu0 %v4378
  %5753 = vmatpush.bf16.msra.mxu0 %v4377
  %5754 = vmatmul.bf16.gmra.mxu0 %v1910
  %v5755 = vpop.f32.mrf.mxu0
  %v5756 = vadd.f32 %v5727, %v5755
  %v5757 = vpop.f32.mrf.mxu0
  %v5758 = vadd.f32 %v5729, %v5757
  %5759 = vmatmul.bf16.gmra.mxu0 %v1968
  %v5760 = vpop.f32.mrf.mxu0
  %v5761 = vadd.f32 %v5732, %v5760
  %v5762 = vpop.f32.mrf.mxu0
  %v5763 = vadd.f32 %v5734, %v5762
  %5764 = vmatmul.bf16.gmra.mxu0 %v2026
  %v5765 = vpop.f32.mrf.mxu0
  %v5766 = vadd.f32 %v5737, %v5765
  %v5767 = vpop.f32.mrf.mxu0
  %v5768 = vadd.f32 %v5739, %v5767
  %5769 = vmatmul.bf16.gmra.mxu0 %v2084
  %v5770 = vpop.f32.mrf.mxu0
  %v5771 = vadd.f32 %v5742, %v5770
  %v5772 = vpop.f32.mrf.mxu0
  %v5773 = vadd.f32 %v5744, %v5772
  %5774 = vdwg.mxu0
  %5775 = vmatpush.bf16.msra.mxu0 %v4392
  %5776 = vmatpush.bf16.msra.mxu0 %v4391
  %5777 = vmatpush.bf16.msra.mxu0 %v4390
  %5778 = vmatpush.bf16.msra.mxu0 %v4389
  %5779 = vmatpush.bf16.msra.mxu0 %v4388
  %5780 = vmatpush.bf16.msra.mxu0 %v4387
  %5781 = vmatpush.bf16.msra.mxu0 %v4386
  %5782 = vmatpush.bf16.msra.mxu0 %v4385
  %5783 = vmatmul.bf16.gmra.mxu0 %v1911
  %v5784 = vpop.f32.mrf.mxu0
  %v5785 = vadd.f32 %v5756, %v5784
  %v5786 = vpop.f32.mrf.mxu0
  %v5787 = vadd.f32 %v5758, %v5786
  %5788 = vmatmul.bf16.gmra.mxu0 %v1969
  %v5789 = vpop.f32.mrf.mxu0
  %v5790 = vadd.f32 %v5761, %v5789
  %v5791 = vpop.f32.mrf.mxu0
  %v5792 = vadd.f32 %v5763, %v5791
  %5793 = vmatmul.bf16.gmra.mxu0 %v2027
  %v5794 = vpop.f32.mrf.mxu0
  %v5795 = vadd.f32 %v5766, %v5794
  %v5796 = vpop.f32.mrf.mxu0
  %v5797 = vadd.f32 %v5768, %v5796
  %5798 = vmatmul.bf16.gmra.mxu0 %v2085
  %v5799 = vpop.f32.mrf.mxu0
  %v5800 = vadd.f32 %v5771, %v5799
  %v5801 = vpop.f32.mrf.mxu0
  %v5802 = vadd.f32 %v5773, %v5801
  %5803 = vdwg.mxu0
  %5804 = vmatpush.bf16.msra.mxu0 %v4400
  %5805 = vmatpush.bf16.msra.mxu0 %v4399
  %5806 = vmatpush.bf16.msra.mxu0 %v4398
  %5807 = vmatpush.bf16.msra.mxu0 %v4397
  %5808 = vmatpush.bf16.msra.mxu0 %v4396
  %5809 = vmatpush.bf16.msra.mxu0 %v4395
  %5810 = vmatpush.bf16.msra.mxu0 %v4394
  %5811 = vmatpush.bf16.msra.mxu0 %v4393
  %5812 = vmatmul.bf16.gmra.mxu0 %v1912
  %v5813 = vpop.f32.mrf.mxu0
  %v5814 = vadd.f32 %v5785, %v5813
  %v5815 = vpop.f32.mrf.mxu0
  %v5816 = vadd.f32 %v5787, %v5815
  %5817 = vmatmul.bf16.gmra.mxu0 %v1970
  %v5818 = vpop.f32.mrf.mxu0
  %v5819 = vadd.f32 %v5790, %v5818
  %v5820 = vpop.f32.mrf.mxu0
  %v5821 = vadd.f32 %v5792, %v5820
  %5822 = vmatmul.bf16.gmra.mxu0 %v2028
  %v5823 = vpop.f32.mrf.mxu0
  %v5824 = vadd.f32 %v5795, %v5823
  %v5825 = vpop.f32.mrf.mxu0
  %v5826 = vadd.f32 %v5797, %v5825
  %5827 = vmatmul.bf16.gmra.mxu0 %v2086
  %v5828 = vpop.f32.mrf.mxu0
  %v5829 = vadd.f32 %v5800, %v5828
  %v5830 = vpop.f32.mrf.mxu0
  %v5831 = vadd.f32 %v5802, %v5830
  %5832 = vdwg.mxu0
  %5833 = vmatpush.bf16.msra.mxu0 %v4408
  %5834 = vmatpush.bf16.msra.mxu0 %v4407
  %5835 = vmatpush.bf16.msra.mxu0 %v4406
  %5836 = vmatpush.bf16.msra.mxu0 %v4405
  %5837 = vmatpush.bf16.msra.mxu0 %v4404
  %5838 = vmatpush.bf16.msra.mxu0 %v4403
  %5839 = vmatpush.bf16.msra.mxu0 %v4402
  %5840 = vmatpush.bf16.msra.mxu0 %v4401
  %5841 = vmatmul.bf16.gmra.mxu0 %v1913
  %v5842 = vpop.f32.mrf.mxu0
  %v5843 = vadd.f32 %v5814, %v5842
  %v5844 = vpop.f32.mrf.mxu0
  %v5845 = vadd.f32 %v5816, %v5844
  %5846 = vmatmul.bf16.gmra.mxu0 %v1971
  %v5847 = vpop.f32.mrf.mxu0
  %v5848 = vadd.f32 %v5819, %v5847
  %v5849 = vpop.f32.mrf.mxu0
  %v5850 = vadd.f32 %v5821, %v5849
  %5851 = vmatmul.bf16.gmra.mxu0 %v2029
  %v5852 = vpop.f32.mrf.mxu0
  %v5853 = vadd.f32 %v5824, %v5852
  %v5854 = vpop.f32.mrf.mxu0
  %v5855 = vadd.f32 %v5826, %v5854
  %5856 = vmatmul.bf16.gmra.mxu0 %v2087
  %v5857 = vpop.f32.mrf.mxu0
  %v5858 = vadd.f32 %v5829, %v5857
  %v5859 = vpop.f32.mrf.mxu0
  %v5860 = vadd.f32 %v5831, %v5859
  %5861 = vdwg.mxu0
  %5862 = vmatpush.bf16.msra.mxu0 %v4416
  %5863 = vmatpush.bf16.msra.mxu0 %v4415
  %5864 = vmatpush.bf16.msra.mxu0 %v4414
  %5865 = vmatpush.bf16.msra.mxu0 %v4413
  %5866 = vmatpush.bf16.msra.mxu0 %v4412
  %5867 = vmatpush.bf16.msra.mxu0 %v4411
  %5868 = vmatpush.bf16.msra.mxu0 %v4410
  %5869 = vmatpush.bf16.msra.mxu0 %v4409
  %5870 = vmatmul.bf16.gmra.mxu0 %v1914
  %v5871 = vpop.f32.mrf.mxu0
  %v5872 = vadd.f32 %v5843, %v5871
  %v5873 = vpop.f32.mrf.mxu0
  %v5874 = vadd.f32 %v5845, %v5873
  %5875 = vmatmul.bf16.gmra.mxu0 %v1972
  %v5876 = vpop.f32.mrf.mxu0
  %v5877 = vadd.f32 %v5848, %v5876
  %v5878 = vpop.f32.mrf.mxu0
  %v5879 = vadd.f32 %v5850, %v5878
  %5880 = vmatmul.bf16.gmra.mxu0 %v2030
  %v5881 = vpop.f32.mrf.mxu0
  %v5882 = vadd.f32 %v5853, %v5881
  %v5883 = vpop.f32.mrf.mxu0
  %v5884 = vadd.f32 %v5855, %v5883
  %5885 = vmatmul.bf16.gmra.mxu0 %v2088
  %v5886 = vpop.f32.mrf.mxu0
  %v5887 = vadd.f32 %v5858, %v5886
  %v5888 = vpop.f32.mrf.mxu0
  %v5889 = vadd.f32 %v5860, %v5888
  %5890 = vdwg.mxu0
  %5891 = vmatpush.bf16.msra.mxu0 %v4424
  %5892 = vmatpush.bf16.msra.mxu0 %v4423
  %5893 = vmatpush.bf16.msra.mxu0 %v4422
  %5894 = vmatpush.bf16.msra.mxu0 %v4421
  %5895 = vmatpush.bf16.msra.mxu0 %v4420
  %5896 = vmatpush.bf16.msra.mxu0 %v4419
  %5897 = vmatpush.bf16.msra.mxu0 %v4418
  %5898 = vmatpush.bf16.msra.mxu0 %v4417
  %5899 = vmatmul.bf16.gmra.mxu0 %v1915
  %v5900 = vpop.f32.mrf.mxu0
  %v5901 = vadd.f32 %v5872, %v5900
  %v5902 = vpop.f32.mrf.mxu0
  %v5903 = vadd.f32 %v5874, %v5902
  %5904 = vmatmul.bf16.gmra.mxu0 %v1973
  %v5905 = vpop.f32.mrf.mxu0
  %v5906 = vadd.f32 %v5877, %v5905
  %v5907 = vpop.f32.mrf.mxu0
  %v5908 = vadd.f32 %v5879, %v5907
  %5909 = vmatmul.bf16.gmra.mxu0 %v2031
  %v5910 = vpop.f32.mrf.mxu0
  %v5911 = vadd.f32 %v5882, %v5910
  %v5912 = vpop.f32.mrf.mxu0
  %v5913 = vadd.f32 %v5884, %v5912
  %5914 = vmatmul.bf16.gmra.mxu0 %v2089
  %v5915 = vpop.f32.mrf.mxu0
  %v5916 = vadd.f32 %v5887, %v5915
  %v5917 = vpop.f32.mrf.mxu0
  %v5918 = vadd.f32 %v5889, %v5917
  %5919 = vdwg.mxu0
  %5920 = vmatpush.bf16.msra.mxu0 %v4432
  %5921 = vmatpush.bf16.msra.mxu0 %v4431
  %5922 = vmatpush.bf16.msra.mxu0 %v4430
  %5923 = vmatpush.bf16.msra.mxu0 %v4429
  %5924 = vmatpush.bf16.msra.mxu0 %v4428
  %5925 = vmatpush.bf16.msra.mxu0 %v4427
  %5926 = vmatpush.bf16.msra.mxu0 %v4426
  %5927 = vmatpush.bf16.msra.mxu0 %v4425
  %5928 = vmatmul.bf16.gmra.mxu0 %v1916
  %v5929 = vpop.f32.mrf.mxu0
  %v5930 = vadd.f32 %v5901, %v5929
  %v5931 = vpop.f32.mrf.mxu0
  %v5932 = vadd.f32 %v5903, %v5931
  %5933 = vmatmul.bf16.gmra.mxu0 %v1974
  %v5934 = vpop.f32.mrf.mxu0
  %v5935 = vadd.f32 %v5906, %v5934
  %v5936 = vpop.f32.mrf.mxu0
  %v5937 = vadd.f32 %v5908, %v5936
  %5938 = vmatmul.bf16.gmra.mxu0 %v2032
  %v5939 = vpop.f32.mrf.mxu0
  %v5940 = vadd.f32 %v5911, %v5939
  %v5941 = vpop.f32.mrf.mxu0
  %v5942 = vadd.f32 %v5913, %v5941
  %5943 = vmatmul.bf16.gmra.mxu0 %v2090
  %v5944 = vpop.f32.mrf.mxu0
  %v5945 = vadd.f32 %v5916, %v5944
  %v5946 = vpop.f32.mrf.mxu0
  %v5947 = vadd.f32 %v5918, %v5946
  %5948 = vdwg.mxu0
  %5949 = vmatpush.bf16.msra.mxu0 %v4440
  %5950 = vmatpush.bf16.msra.mxu0 %v4439
  %5951 = vmatpush.bf16.msra.mxu0 %v4438
  %5952 = vmatpush.bf16.msra.mxu0 %v4437
  %5953 = vmatpush.bf16.msra.mxu0 %v4436
  %5954 = vmatpush.bf16.msra.mxu0 %v4435
  %5955 = vmatpush.bf16.msra.mxu0 %v4434
  %5956 = vmatpush.bf16.msra.mxu0 %v4433
  %5957 = vmatmul.bf16.gmra.mxu0 %v1917
  %v5958 = vpop.f32.mrf.mxu0
  %v5959 = vadd.f32 %v5930, %v5958
  %v5960 = vpop.f32.mrf.mxu0
  %v5961 = vadd.f32 %v5932, %v5960
  %5962 = vmatmul.bf16.gmra.mxu0 %v1975
  %v5963 = vpop.f32.mrf.mxu0
  %v5964 = vadd.f32 %v5935, %v5963
  %v5965 = vpop.f32.mrf.mxu0
  %v5966 = vadd.f32 %v5937, %v5965
  %5967 = vmatmul.bf16.gmra.mxu0 %v2033
  %v5968 = vpop.f32.mrf.mxu0
  %v5969 = vadd.f32 %v5940, %v5968
  %v5970 = vpop.f32.mrf.mxu0
  %v5971 = vadd.f32 %v5942, %v5970
  %5972 = vmatmul.bf16.gmra.mxu0 %v2091
  %v5973 = vpop.f32.mrf.mxu0
  %v5974 = vadd.f32 %v5945, %v5973
  %v5975 = vpop.f32.mrf.mxu0
  %v5976 = vadd.f32 %v5947, %v5975
  %5977 = vdwg.mxu0
  %5978 = vmatpush.bf16.msra.mxu0 %v4448
  %5979 = vmatpush.bf16.msra.mxu0 %v4447
  %5980 = vmatpush.bf16.msra.mxu0 %v4446
  %5981 = vmatpush.bf16.msra.mxu0 %v4445
  %5982 = vmatpush.bf16.msra.mxu0 %v4444
  %5983 = vmatpush.bf16.msra.mxu0 %v4443
  %5984 = vmatpush.bf16.msra.mxu0 %v4442
  %5985 = vmatpush.bf16.msra.mxu0 %v4441
  %5986 = vmatmul.bf16.gmra.mxu0 %v1918
  %v5987 = vpop.f32.mrf.mxu0
  %v5988 = vadd.f32 %v5959, %v5987
  %v5989 = vpop.f32.mrf.mxu0
  %v5990 = vadd.f32 %v5961, %v5989
  %5991 = vmatmul.bf16.gmra.mxu0 %v1976
  %v5992 = vpop.f32.mrf.mxu0
  %v5993 = vadd.f32 %v5964, %v5992
  %v5994 = vpop.f32.mrf.mxu0
  %v5995 = vadd.f32 %v5966, %v5994
  %5996 = vmatmul.bf16.gmra.mxu0 %v2034
  %v5997 = vpop.f32.mrf.mxu0
  %v5998 = vadd.f32 %v5969, %v5997
  %v5999 = vpop.f32.mrf.mxu0
  %v6000 = vadd.f32 %v5971, %v5999
  %6001 = vmatmul.bf16.gmra.mxu0 %v2092
  %v6002 = vpop.f32.mrf.mxu0
  %v6003 = vadd.f32 %v5974, %v6002
  %v6004 = vpop.f32.mrf.mxu0
  %v6005 = vadd.f32 %v5976, %v6004
  %6006 = vdwg.mxu0
  %6007 = vmatpush.bf16.msra.mxu0 %v4456
  %6008 = vmatpush.bf16.msra.mxu0 %v4455
  %6009 = vmatpush.bf16.msra.mxu0 %v4454
  %6010 = vmatpush.bf16.msra.mxu0 %v4453
  %6011 = vmatpush.bf16.msra.mxu0 %v4452
  %6012 = vmatpush.bf16.msra.mxu0 %v4451
  %6013 = vmatpush.bf16.msra.mxu0 %v4450
  %6014 = vmatpush.bf16.msra.mxu0 %v4449
  %6015 = vmatmul.bf16.gmra.mxu0 %v1919
  %v6016 = vpop.f32.mrf.mxu0
  %v6017 = vadd.f32 %v5988, %v6016
  %v6018 = vpop.f32.mrf.mxu0
  %v6019 = vadd.f32 %v5990, %v6018
  %6020 = vmatmul.bf16.gmra.mxu0 %v1977
  %v6021 = vpop.f32.mrf.mxu0
  %v6022 = vadd.f32 %v5993, %v6021
  %v6023 = vpop.f32.mrf.mxu0
  %v6024 = vadd.f32 %v5995, %v6023
  %6025 = vmatmul.bf16.gmra.mxu0 %v2035
  %v6026 = vpop.f32.mrf.mxu0
  %v6027 = vadd.f32 %v5998, %v6026
  %v6028 = vpop.f32.mrf.mxu0
  %v6029 = vadd.f32 %v6000, %v6028
  %6030 = vmatmul.bf16.gmra.mxu0 %v2093
  %v6031 = vpop.f32.mrf.mxu0
  %v6032 = vadd.f32 %v6003, %v6031
  %v6033 = vpop.f32.mrf.mxu0
  %v6034 = vadd.f32 %v6005, %v6033
  %6035 = vdwg.mxu0
  %6036 = vmatpush.bf16.msra.mxu0 %v4464
  %6037 = vmatpush.bf16.msra.mxu0 %v4463
  %6038 = vmatpush.bf16.msra.mxu0 %v4462
  %6039 = vmatpush.bf16.msra.mxu0 %v4461
  %6040 = vmatpush.bf16.msra.mxu0 %v4460
  %6041 = vmatpush.bf16.msra.mxu0 %v4459
  %6042 = vmatpush.bf16.msra.mxu0 %v4458
  %6043 = vmatpush.bf16.msra.mxu0 %v4457
  %6044 = vmatmul.bf16.gmra.mxu0 %v1920
  %v6045 = vpop.f32.mrf.mxu0
  %v6046 = vadd.f32 %v6017, %v6045
  %v6047 = vpop.f32.mrf.mxu0
  %v6048 = vadd.f32 %v6019, %v6047
  %6049 = vmatmul.bf16.gmra.mxu0 %v1978
  %v6050 = vpop.f32.mrf.mxu0
  %v6051 = vadd.f32 %v6022, %v6050
  %v6052 = vpop.f32.mrf.mxu0
  %v6053 = vadd.f32 %v6024, %v6052
  %6054 = vmatmul.bf16.gmra.mxu0 %v2036
  %v6055 = vpop.f32.mrf.mxu0
  %v6056 = vadd.f32 %v6027, %v6055
  %v6057 = vpop.f32.mrf.mxu0
  %v6058 = vadd.f32 %v6029, %v6057
  %6059 = vmatmul.bf16.gmra.mxu0 %v2094
  %v6060 = vpop.f32.mrf.mxu0
  %v6061 = vadd.f32 %v6032, %v6060
  %v6062 = vpop.f32.mrf.mxu0
  %v6063 = vadd.f32 %v6034, %v6062
  %6064 = vdwg.mxu0
  %6065 = vmatpush.bf16.msra.mxu0 %v4472
  %6066 = vmatpush.bf16.msra.mxu0 %v4471
  %6067 = vmatpush.bf16.msra.mxu0 %v4470
  %6068 = vmatpush.bf16.msra.mxu0 %v4469
  %6069 = vmatpush.bf16.msra.mxu0 %v4468
  %6070 = vmatpush.bf16.msra.mxu0 %v4467
  %6071 = vmatpush.bf16.msra.mxu0 %v4466
  %6072 = vmatpush.bf16.msra.mxu0 %v4465
  %6073 = vmatmul.bf16.gmra.mxu0 %v1921
  %v6074 = vpop.f32.mrf.mxu0
  %v6075 = vadd.f32 %v6046, %v6074
  %v6076 = vpop.f32.mrf.mxu0
  %v6077 = vadd.f32 %v6048, %v6076
  %6078 = vmatmul.bf16.gmra.mxu0 %v1979
  %v6079 = vpop.f32.mrf.mxu0
  %v6080 = vadd.f32 %v6051, %v6079
  %v6081 = vpop.f32.mrf.mxu0
  %v6082 = vadd.f32 %v6053, %v6081
  %6083 = vmatmul.bf16.gmra.mxu0 %v2037
  %v6084 = vpop.f32.mrf.mxu0
  %v6085 = vadd.f32 %v6056, %v6084
  %v6086 = vpop.f32.mrf.mxu0
  %v6087 = vadd.f32 %v6058, %v6086
  %6088 = vmatmul.bf16.gmra.mxu0 %v2095
  %v6089 = vpop.f32.mrf.mxu0
  %v6090 = vadd.f32 %v6061, %v6089
  %v6091 = vpop.f32.mrf.mxu0
  %v6092 = vadd.f32 %v6063, %v6091
  %6093 = vdwg.mxu0
  %6094 = vmatpush.bf16.msra.mxu0 %v4480
  %6095 = vmatpush.bf16.msra.mxu0 %v4479
  %6096 = vmatpush.bf16.msra.mxu0 %v4478
  %6097 = vmatpush.bf16.msra.mxu0 %v4477
  %6098 = vmatpush.bf16.msra.mxu0 %v4476
  %6099 = vmatpush.bf16.msra.mxu0 %v4475
  %6100 = vmatpush.bf16.msra.mxu0 %v4474
  %6101 = vmatpush.bf16.msra.mxu0 %v4473
  %6102 = vmatmul.bf16.gmra.mxu0 %v1922
  %v6103 = vpop.f32.mrf.mxu0
  %v6104 = vadd.f32 %v6075, %v6103
  %v6105 = vpop.f32.mrf.mxu0
  %v6106 = vadd.f32 %v6077, %v6105
  %6107 = vmatmul.bf16.gmra.mxu0 %v1980
  %v6108 = vpop.f32.mrf.mxu0
  %v6109 = vadd.f32 %v6080, %v6108
  %v6110 = vpop.f32.mrf.mxu0
  %v6111 = vadd.f32 %v6082, %v6110
  %6112 = vmatmul.bf16.gmra.mxu0 %v2038
  %v6113 = vpop.f32.mrf.mxu0
  %v6114 = vadd.f32 %v6085, %v6113
  %v6115 = vpop.f32.mrf.mxu0
  %v6116 = vadd.f32 %v6087, %v6115
  %6117 = vmatmul.bf16.gmra.mxu0 %v2096
  %v6118 = vpop.f32.mrf.mxu0
  %v6119 = vadd.f32 %v6090, %v6118
  %v6120 = vpop.f32.mrf.mxu0
  %v6121 = vadd.f32 %v6092, %v6120
  %6122 = vdwg.mxu0
  %6123 = vmatpush.bf16.msra.mxu0 %v4488
  %6124 = vmatpush.bf16.msra.mxu0 %v4487
  %6125 = vmatpush.bf16.msra.mxu0 %v4486
  %6126 = vmatpush.bf16.msra.mxu0 %v4485
  %6127 = vmatpush.bf16.msra.mxu0 %v4484
  %6128 = vmatpush.bf16.msra.mxu0 %v4483
  %6129 = vmatpush.bf16.msra.mxu0 %v4482
  %6130 = vmatpush.bf16.msra.mxu0 %v4481
  %6131 = vmatmul.bf16.gmra.mxu0 %v1923
  %v6132 = vpop.f32.mrf.mxu0
  %v6133 = vadd.f32 %v6104, %v6132
  %v6134 = vpop.f32.mrf.mxu0
  %v6135 = vadd.f32 %v6106, %v6134
  %6136 = vmatmul.bf16.gmra.mxu0 %v1981
  %v6137 = vpop.f32.mrf.mxu0
  %v6138 = vadd.f32 %v6109, %v6137
  %v6139 = vpop.f32.mrf.mxu0
  %v6140 = vadd.f32 %v6111, %v6139
  %6141 = vmatmul.bf16.gmra.mxu0 %v2039
  %v6142 = vpop.f32.mrf.mxu0
  %v6143 = vadd.f32 %v6114, %v6142
  %v6144 = vpop.f32.mrf.mxu0
  %v6145 = vadd.f32 %v6116, %v6144
  %6146 = vmatmul.bf16.gmra.mxu0 %v2097
  %v6147 = vpop.f32.mrf.mxu0
  %v6148 = vadd.f32 %v6119, %v6147
  %v6149 = vpop.f32.mrf.mxu0
  %v6150 = vadd.f32 %v6121, %v6149
  %6151 = vdwg.mxu0
  %6152 = vmatpush.bf16.msra.mxu0 %v4496
  %6153 = vmatpush.bf16.msra.mxu0 %v4495
  %6154 = vmatpush.bf16.msra.mxu0 %v4494
  %6155 = vmatpush.bf16.msra.mxu0 %v4493
  %6156 = vmatpush.bf16.msra.mxu0 %v4492
  %6157 = vmatpush.bf16.msra.mxu0 %v4491
  %6158 = vmatpush.bf16.msra.mxu0 %v4490
  %6159 = vmatpush.bf16.msra.mxu0 %v4489
  %6160 = vmatmul.bf16.gmra.mxu0 %v1924
  %v6161 = vpop.f32.mrf.mxu0
  %v6162 = vadd.f32 %v6133, %v6161
  %v6163 = vpop.f32.mrf.mxu0
  %v6164 = vadd.f32 %v6135, %v6163
  %6165 = vmatmul.bf16.gmra.mxu0 %v1982
  %v6166 = vpop.f32.mrf.mxu0
  %v6167 = vadd.f32 %v6138, %v6166
  %v6168 = vpop.f32.mrf.mxu0
  %v6169 = vadd.f32 %v6140, %v6168
  %6170 = vmatmul.bf16.gmra.mxu0 %v2040
  %v6171 = vpop.f32.mrf.mxu0
  %v6172 = vadd.f32 %v6143, %v6171
  %v6173 = vpop.f32.mrf.mxu0
  %v6174 = vadd.f32 %v6145, %v6173
  %6175 = vmatmul.bf16.gmra.mxu0 %v2098
  %v6176 = vpop.f32.mrf.mxu0
  %v6177 = vadd.f32 %v6148, %v6176
  %v6178 = vpop.f32.mrf.mxu0
  %v6179 = vadd.f32 %v6150, %v6178
  %6180 = vdwg.mxu0
  %6181 = vmatpush.bf16.msra.mxu0 %v4504
  %6182 = vmatpush.bf16.msra.mxu0 %v4503
  %6183 = vmatpush.bf16.msra.mxu0 %v4502
  %6184 = vmatpush.bf16.msra.mxu0 %v4501
  %6185 = vmatpush.bf16.msra.mxu0 %v4500
  %6186 = vmatpush.bf16.msra.mxu0 %v4499
  %6187 = vmatpush.bf16.msra.mxu0 %v4498
  %6188 = vmatpush.bf16.msra.mxu0 %v4497
  %6189 = vmatmul.bf16.gmra.mxu0 %v1925
  %v6190 = vpop.f32.mrf.mxu0
  %v6191 = vadd.f32 %v6162, %v6190
  %v6192 = vpop.f32.mrf.mxu0
  %v6193 = vadd.f32 %v6164, %v6192
  %6194 = vmatmul.bf16.gmra.mxu0 %v1983
  %v6195 = vpop.f32.mrf.mxu0
  %v6196 = vadd.f32 %v6167, %v6195
  %v6197 = vpop.f32.mrf.mxu0
  %v6198 = vadd.f32 %v6169, %v6197
  %6199 = vmatmul.bf16.gmra.mxu0 %v2041
  %v6200 = vpop.f32.mrf.mxu0
  %v6201 = vadd.f32 %v6172, %v6200
  %v6202 = vpop.f32.mrf.mxu0
  %v6203 = vadd.f32 %v6174, %v6202
  %6204 = vmatmul.bf16.gmra.mxu0 %v2099
  %v6205 = vpop.f32.mrf.mxu0
  %v6206 = vadd.f32 %v6177, %v6205
  %v6207 = vpop.f32.mrf.mxu0
  %v6208 = vadd.f32 %v6179, %v6207
  %6209 = vdwg.mxu0
  %6210 = vmatpush.bf16.msra.mxu0 %v4512
  %6211 = vmatpush.bf16.msra.mxu0 %v4511
  %6212 = vmatpush.bf16.msra.mxu0 %v4510
  %6213 = vmatpush.bf16.msra.mxu0 %v4509
  %6214 = vmatpush.bf16.msra.mxu0 %v4508
  %6215 = vmatpush.bf16.msra.mxu0 %v4507
  %6216 = vmatpush.bf16.msra.mxu0 %v4506
  %6217 = vmatpush.bf16.msra.mxu0 %v4505
  %6218 = vmatmul.bf16.gmra.mxu0 %v1926
  %v6219 = vpop.f32.mrf.mxu0
  %v6220 = vadd.f32 %v6191, %v6219
  %v6221 = vpop.f32.mrf.mxu0
  %v6222 = vadd.f32 %v6193, %v6221
  %6223 = vmatmul.bf16.gmra.mxu0 %v1984
  %v6224 = vpop.f32.mrf.mxu0
  %v6225 = vadd.f32 %v6196, %v6224
  %v6226 = vpop.f32.mrf.mxu0
  %v6227 = vadd.f32 %v6198, %v6226
  %6228 = vmatmul.bf16.gmra.mxu0 %v2042
  %v6229 = vpop.f32.mrf.mxu0
  %v6230 = vadd.f32 %v6201, %v6229
  %v6231 = vpop.f32.mrf.mxu0
  %v6232 = vadd.f32 %v6203, %v6231
  %6233 = vmatmul.bf16.gmra.mxu0 %v2100
  %v6234 = vpop.f32.mrf.mxu0
  %v6235 = vadd.f32 %v6206, %v6234
  %v6236 = vpop.f32.mrf.mxu0
  %v6237 = vadd.f32 %v6208, %v6236
  %6238 = vdwg.mxu0
  %6239 = vmatpush.bf16.msra.mxu0 %v4520
  %6240 = vmatpush.bf16.msra.mxu0 %v4519
  %6241 = vmatpush.bf16.msra.mxu0 %v4518
  %6242 = vmatpush.bf16.msra.mxu0 %v4517
  %6243 = vmatpush.bf16.msra.mxu0 %v4516
  %6244 = vmatpush.bf16.msra.mxu0 %v4515
  %6245 = vmatpush.bf16.msra.mxu0 %v4514
  %6246 = vmatpush.bf16.msra.mxu0 %v4513
  %6247 = vmatmul.bf16.gmra.mxu0 %v1927
  %v6248 = vpop.f32.mrf.mxu0
  %v6249 = vadd.f32 %v6220, %v6248
  %v6250 = vpop.f32.mrf.mxu0
  %v6251 = vadd.f32 %v6222, %v6250
  %6252 = vmatmul.bf16.gmra.mxu0 %v1985
  %v6253 = vpop.f32.mrf.mxu0
  %v6254 = vadd.f32 %v6225, %v6253
  %v6255 = vpop.f32.mrf.mxu0
  %v6256 = vadd.f32 %v6227, %v6255
  %6257 = vmatmul.bf16.gmra.mxu0 %v2043
  %v6258 = vpop.f32.mrf.mxu0
  %v6259 = vadd.f32 %v6230, %v6258
  %v6260 = vpop.f32.mrf.mxu0
  %v6261 = vadd.f32 %v6232, %v6260
  %6262 = vmatmul.bf16.gmra.mxu0 %v2101
  %v6263 = vpop.f32.mrf.mxu0
  %v6264 = vadd.f32 %v6235, %v6263
  %v6265 = vpop.f32.mrf.mxu0
  %v6266 = vadd.f32 %v6237, %v6265
  %6267 = vdwg.mxu0
  %6268 = vmatpush.bf16.msra.mxu0 %v4528
  %6269 = vmatpush.bf16.msra.mxu0 %v4527
  %6270 = vmatpush.bf16.msra.mxu0 %v4526
  %6271 = vmatpush.bf16.msra.mxu0 %v4525
  %6272 = vmatpush.bf16.msra.mxu0 %v4524
  %6273 = vmatpush.bf16.msra.mxu0 %v4523
  %6274 = vmatpush.bf16.msra.mxu0 %v4522
  %6275 = vmatpush.bf16.msra.mxu0 %v4521
  %6276 = vmatmul.bf16.gmra.mxu0 %v1928
  %v6277 = vpop.f32.mrf.mxu0
  %v6278 = vadd.f32 %v6249, %v6277
  %v6279 = vpop.f32.mrf.mxu0
  %v6280 = vadd.f32 %v6251, %v6279
  %6281 = vmatmul.bf16.gmra.mxu0 %v1986
  %v6282 = vpop.f32.mrf.mxu0
  %v6283 = vadd.f32 %v6254, %v6282
  %v6284 = vpop.f32.mrf.mxu0
  %v6285 = vadd.f32 %v6256, %v6284
  %6286 = vmatmul.bf16.gmra.mxu0 %v2044
  %v6287 = vpop.f32.mrf.mxu0
  %v6288 = vadd.f32 %v6259, %v6287
  %v6289 = vpop.f32.mrf.mxu0
  %v6290 = vadd.f32 %v6261, %v6289
  %6291 = vmatmul.bf16.gmra.mxu0 %v2102
  %v6292 = vpop.f32.mrf.mxu0
  %v6293 = vadd.f32 %v6264, %v6292
  %v6294 = vpop.f32.mrf.mxu0
  %v6295 = vadd.f32 %v6266, %v6294
  %6296 = vdwg.mxu0
  %6297 = vmatpush.bf16.msra.mxu0 %v4536
  %6298 = vmatpush.bf16.msra.mxu0 %v4535
  %6299 = vmatpush.bf16.msra.mxu0 %v4534
  %6300 = vmatpush.bf16.msra.mxu0 %v4533
  %6301 = vmatpush.bf16.msra.mxu0 %v4532
  %6302 = vmatpush.bf16.msra.mxu0 %v4531
  %6303 = vmatpush.bf16.msra.mxu0 %v4530
  %6304 = vmatpush.bf16.msra.mxu0 %v4529
  %6305 = vmatmul.bf16.gmra.mxu0 %v1929
  %v6306 = vpop.f32.mrf.mxu0
  %v6307 = vadd.f32 %v6278, %v6306
  %v6308 = vpop.f32.mrf.mxu0
  %v6309 = vadd.f32 %v6280, %v6308
  %6310 = vmatmul.bf16.gmra.mxu0 %v1987
  %v6311 = vpop.f32.mrf.mxu0
  %v6312 = vadd.f32 %v6283, %v6311
  %v6313 = vpop.f32.mrf.mxu0
  %v6314 = vadd.f32 %v6285, %v6313
  %6315 = vmatmul.bf16.gmra.mxu0 %v2045
  %v6316 = vpop.f32.mrf.mxu0
  %v6317 = vadd.f32 %v6288, %v6316
  %v6318 = vpop.f32.mrf.mxu0
  %v6319 = vadd.f32 %v6290, %v6318
  %6320 = vmatmul.bf16.gmra.mxu0 %v2103
  %v6321 = vpop.f32.mrf.mxu0
  %v6322 = vadd.f32 %v6293, %v6321
  %v6323 = vpop.f32.mrf.mxu0
  %v6324 = vadd.f32 %v6295, %v6323
  %6325 = vdwg.mxu0
  %6326 = vmatpush.bf16.msra.mxu0 %v4544
  %6327 = vmatpush.bf16.msra.mxu0 %v4543
  %6328 = vmatpush.bf16.msra.mxu0 %v4542
  %6329 = vmatpush.bf16.msra.mxu0 %v4541
  %6330 = vmatpush.bf16.msra.mxu0 %v4540
  %6331 = vmatpush.bf16.msra.mxu0 %v4539
  %6332 = vmatpush.bf16.msra.mxu0 %v4538
  %6333 = vmatpush.bf16.msra.mxu0 %v4537
  %6334 = vmatmul.bf16.gmra.mxu0 %v1930
  %v6335 = vpop.f32.mrf.mxu0
  %v6336 = vadd.f32 %v6307, %v6335
  %v6337 = vpop.f32.mrf.mxu0
  %v6338 = vadd.f32 %v6309, %v6337
  %6339 = vmatmul.bf16.gmra.mxu0 %v1988
  %v6340 = vpop.f32.mrf.mxu0
  %v6341 = vadd.f32 %v6312, %v6340
  %v6342 = vpop.f32.mrf.mxu0
  %v6343 = vadd.f32 %v6314, %v6342
  %6344 = vmatmul.bf16.gmra.mxu0 %v2046
  %v6345 = vpop.f32.mrf.mxu0
  %v6346 = vadd.f32 %v6317, %v6345
  %v6347 = vpop.f32.mrf.mxu0
  %v6348 = vadd.f32 %v6319, %v6347
  %6349 = vmatmul.bf16.gmra.mxu0 %v2104
  %v6350 = vpop.f32.mrf.mxu0
  %v6351 = vadd.f32 %v6322, %v6350
  %v6352 = vpop.f32.mrf.mxu0
  %v6353 = vadd.f32 %v6324, %v6352
  %6354 = vdwg.mxu0
  %6355 = vmatpush.bf16.msra.mxu0 %v4552
  %6356 = vmatpush.bf16.msra.mxu0 %v4551
  %6357 = vmatpush.bf16.msra.mxu0 %v4550
  %6358 = vmatpush.bf16.msra.mxu0 %v4549
  %6359 = vmatpush.bf16.msra.mxu0 %v4548
  %6360 = vmatpush.bf16.msra.mxu0 %v4547
  %6361 = vmatpush.bf16.msra.mxu0 %v4546
  %6362 = vmatpush.bf16.msra.mxu0 %v4545
  %6363 = vmatmul.bf16.gmra.mxu0 %v1931
  %v6364 = vpop.f32.mrf.mxu0
  %v6365 = vadd.f32 %v6336, %v6364
  %v6366 = vpop.f32.mrf.mxu0
  %v6367 = vadd.f32 %v6338, %v6366
  %6368 = vmatmul.bf16.gmra.mxu0 %v1989
  %v6369 = vpop.f32.mrf.mxu0
  %v6370 = vadd.f32 %v6341, %v6369
  %v6371 = vpop.f32.mrf.mxu0
  %v6372 = vadd.f32 %v6343, %v6371
  %6373 = vmatmul.bf16.gmra.mxu0 %v2047
  %v6374 = vpop.f32.mrf.mxu0
  %v6375 = vadd.f32 %v6346, %v6374
  %v6376 = vpop.f32.mrf.mxu0
  %v6377 = vadd.f32 %v6348, %v6376
  %6378 = vmatmul.bf16.gmra.mxu0 %v2105
  %v6379 = vpop.f32.mrf.mxu0
  %v6380 = vadd.f32 %v6351, %v6379
  %v6381 = vpop.f32.mrf.mxu0
  %v6382 = vadd.f32 %v6353, %v6381
  %6383 = vdwg.mxu0
  %6384 = vmatpush.bf16.msra.mxu0 %v4560
  %6385 = vmatpush.bf16.msra.mxu0 %v4559
  %6386 = vmatpush.bf16.msra.mxu0 %v4558
  %6387 = vmatpush.bf16.msra.mxu0 %v4557
  %6388 = vmatpush.bf16.msra.mxu0 %v4556
  %6389 = vmatpush.bf16.msra.mxu0 %v4555
  %6390 = vmatpush.bf16.msra.mxu0 %v4554
  %6391 = vmatpush.bf16.msra.mxu0 %v4553
  %6392 = vmatmul.bf16.gmra.mxu0 %v1932
  %v6393 = vpop.f32.mrf.mxu0
  %v6394 = vadd.f32 %v6365, %v6393
  %v6395 = vpop.f32.mrf.mxu0
  %v6396 = vadd.f32 %v6367, %v6395
  %6397 = vmatmul.bf16.gmra.mxu0 %v1990
  %v6398 = vpop.f32.mrf.mxu0
  %v6399 = vadd.f32 %v6370, %v6398
  %v6400 = vpop.f32.mrf.mxu0
  %v6401 = vadd.f32 %v6372, %v6400
  %6402 = vmatmul.bf16.gmra.mxu0 %v2048
  %v6403 = vpop.f32.mrf.mxu0
  %v6404 = vadd.f32 %v6375, %v6403
  %v6405 = vpop.f32.mrf.mxu0
  %v6406 = vadd.f32 %v6377, %v6405
  %6407 = vmatmul.bf16.gmra.mxu0 %v2106
  %v6408 = vpop.f32.mrf.mxu0
  %v6409 = vadd.f32 %v6380, %v6408
  %v6410 = vpop.f32.mrf.mxu0
  %v6411 = vadd.f32 %v6382, %v6410
  %6412 = vdwg.mxu0
  %6413 = vmatpush.bf16.msra.mxu0 %v4568
  %6414 = vmatpush.bf16.msra.mxu0 %v4567
  %6415 = vmatpush.bf16.msra.mxu0 %v4566
  %6416 = vmatpush.bf16.msra.mxu0 %v4565
  %6417 = vmatpush.bf16.msra.mxu0 %v4564
  %6418 = vmatpush.bf16.msra.mxu0 %v4563
  %6419 = vmatpush.bf16.msra.mxu0 %v4562
  %6420 = vmatpush.bf16.msra.mxu0 %v4561
  %6421 = vmatmul.bf16.gmra.mxu0 %v1933
  %v6422 = vpop.f32.mrf.mxu0
  %v6423 = vadd.f32 %v6394, %v6422
  %v6424 = vpop.f32.mrf.mxu0
  %v6425 = vadd.f32 %v6396, %v6424
  %6426 = vmatmul.bf16.gmra.mxu0 %v1991
  %v6427 = vpop.f32.mrf.mxu0
  %v6428 = vadd.f32 %v6399, %v6427
  %v6429 = vpop.f32.mrf.mxu0
  %v6430 = vadd.f32 %v6401, %v6429
  %6431 = vmatmul.bf16.gmra.mxu0 %v2049
  %v6432 = vpop.f32.mrf.mxu0
  %v6433 = vadd.f32 %v6404, %v6432
  %v6434 = vpop.f32.mrf.mxu0
  %v6435 = vadd.f32 %v6406, %v6434
  %6436 = vmatmul.bf16.gmra.mxu0 %v2107
  %v6437 = vpop.f32.mrf.mxu0
  %v6438 = vadd.f32 %v6409, %v6437
  %v6439 = vpop.f32.mrf.mxu0
  %v6440 = vadd.f32 %v6411, %v6439
  %6441 = vdwg.mxu0
  %6442 = vmatpush.bf16.msra.mxu0 %v4576
  %6443 = vmatpush.bf16.msra.mxu0 %v4575
  %6444 = vmatpush.bf16.msra.mxu0 %v4574
  %6445 = vmatpush.bf16.msra.mxu0 %v4573
  %6446 = vmatpush.bf16.msra.mxu0 %v4572
  %6447 = vmatpush.bf16.msra.mxu0 %v4571
  %6448 = vmatpush.bf16.msra.mxu0 %v4570
  %6449 = vmatpush.bf16.msra.mxu0 %v4569
  %6450 = vmatmul.bf16.gmra.mxu0 %v1934
  %v6451 = vpop.f32.mrf.mxu0
  %v6452 = vadd.f32 %v6423, %v6451
  %v6453 = vpop.f32.mrf.mxu0
  %v6454 = vadd.f32 %v6425, %v6453
  %6455 = vmatmul.bf16.gmra.mxu0 %v1992
  %v6456 = vpop.f32.mrf.mxu0
  %v6457 = vadd.f32 %v6428, %v6456
  %v6458 = vpop.f32.mrf.mxu0
  %v6459 = vadd.f32 %v6430, %v6458
  %6460 = vmatmul.bf16.gmra.mxu0 %v2050
  %v6461 = vpop.f32.mrf.mxu0
  %v6462 = vadd.f32 %v6433, %v6461
  %v6463 = vpop.f32.mrf.mxu0
  %v6464 = vadd.f32 %v6435, %v6463
  %6465 = vmatmul.bf16.gmra.mxu0 %v2108
  %v6466 = vpop.f32.mrf.mxu0
  %v6467 = vadd.f32 %v6438, %v6466
  %v6468 = vpop.f32.mrf.mxu0
  %v6469 = vadd.f32 %v6440, %v6468
  %6470 = vdwg.mxu0
  %6471 = vmatpush.bf16.msra.mxu0 %v4584
  %6472 = vmatpush.bf16.msra.mxu0 %v4583
  %6473 = vmatpush.bf16.msra.mxu0 %v4582
  %6474 = vmatpush.bf16.msra.mxu0 %v4581
  %6475 = vmatpush.bf16.msra.mxu0 %v4580
  %6476 = vmatpush.bf16.msra.mxu0 %v4579
  %6477 = vmatpush.bf16.msra.mxu0 %v4578
  %6478 = vmatpush.bf16.msra.mxu0 %v4577
  %6479 = vmatmul.bf16.gmra.mxu0 %v1935
  %v6480 = vpop.f32.mrf.mxu0
  %v6481 = vadd.f32 %v6452, %v6480
  %v6482 = vpop.f32.mrf.mxu0
  %v6483 = vadd.f32 %v6454, %v6482
  %6484 = vmatmul.bf16.gmra.mxu0 %v1993
  %v6485 = vpop.f32.mrf.mxu0
  %v6486 = vadd.f32 %v6457, %v6485
  %v6487 = vpop.f32.mrf.mxu0
  %v6488 = vadd.f32 %v6459, %v6487
  %6489 = vmatmul.bf16.gmra.mxu0 %v2051
  %v6490 = vpop.f32.mrf.mxu0
  %v6491 = vadd.f32 %v6462, %v6490
  %v6492 = vpop.f32.mrf.mxu0
  %v6493 = vadd.f32 %v6464, %v6492
  %6494 = vmatmul.bf16.gmra.mxu0 %v2109
  %v6495 = vpop.f32.mrf.mxu0
  %v6496 = vadd.f32 %v6467, %v6495
  %v6497 = vpop.f32.mrf.mxu0
  %v6498 = vadd.f32 %v6469, %v6497
  %6499 = vdwg.mxu0
  %6500 = vmatpush.bf16.msra.mxu0 %v4592
  %6501 = vmatpush.bf16.msra.mxu0 %v4591
  %6502 = vmatpush.bf16.msra.mxu0 %v4590
  %6503 = vmatpush.bf16.msra.mxu0 %v4589
  %6504 = vmatpush.bf16.msra.mxu0 %v4588
  %6505 = vmatpush.bf16.msra.mxu0 %v4587
  %6506 = vmatpush.bf16.msra.mxu0 %v4586
  %6507 = vmatpush.bf16.msra.mxu0 %v4585
  %6508 = vmatmul.bf16.gmra.mxu0 %v1936
  %v6509 = vpop.f32.mrf.mxu0
  %v6510 = vadd.f32 %v6481, %v6509
  %v6511 = vpop.f32.mrf.mxu0
  %v6512 = vadd.f32 %v6483, %v6511
  %6513 = vmatmul.bf16.gmra.mxu0 %v1994
  %v6514 = vpop.f32.mrf.mxu0
  %v6515 = vadd.f32 %v6486, %v6514
  %v6516 = vpop.f32.mrf.mxu0
  %v6517 = vadd.f32 %v6488, %v6516
  %6518 = vmatmul.bf16.gmra.mxu0 %v2052
  %v6519 = vpop.f32.mrf.mxu0
  %v6520 = vadd.f32 %v6491, %v6519
  %v6521 = vpop.f32.mrf.mxu0
  %v6522 = vadd.f32 %v6493, %v6521
  %6523 = vmatmul.bf16.gmra.mxu0 %v2110
  %v6524 = vpop.f32.mrf.mxu0
  %v6525 = vadd.f32 %v6496, %v6524
  %v6526 = vpop.f32.mrf.mxu0
  %v6527 = vadd.f32 %v6498, %v6526
  %6528 = vdwg.mxu0
  %6529 = vmatpush.bf16.msra.mxu0 %v4600
  %6530 = vmatpush.bf16.msra.mxu0 %v4599
  %6531 = vmatpush.bf16.msra.mxu0 %v4598
  %6532 = vmatpush.bf16.msra.mxu0 %v4597
  %6533 = vmatpush.bf16.msra.mxu0 %v4596
  %6534 = vmatpush.bf16.msra.mxu0 %v4595
  %6535 = vmatpush.bf16.msra.mxu0 %v4594
  %6536 = vmatpush.bf16.msra.mxu0 %v4593
  %6537 = vmatmul.bf16.gmra.mxu0 %v1937
  %v6538 = vpop.f32.mrf.mxu0
  %v6539 = vadd.f32 %v6510, %v6538
  %v6540 = vpop.f32.mrf.mxu0
  %v6541 = vadd.f32 %v6512, %v6540
  %6542 = vmatmul.bf16.gmra.mxu0 %v1995
  %v6543 = vpop.f32.mrf.mxu0
  %v6544 = vadd.f32 %v6515, %v6543
  %v6545 = vpop.f32.mrf.mxu0
  %v6546 = vadd.f32 %v6517, %v6545
  %6547 = vmatmul.bf16.gmra.mxu0 %v2053
  %v6548 = vpop.f32.mrf.mxu0
  %v6549 = vadd.f32 %v6520, %v6548
  %v6550 = vpop.f32.mrf.mxu0
  %v6551 = vadd.f32 %v6522, %v6550
  %6552 = vmatmul.bf16.gmra.mxu0 %v2111
  %v6553 = vpop.f32.mrf.mxu0
  %v6554 = vadd.f32 %v6525, %v6553
  %v6555 = vpop.f32.mrf.mxu0
  %v6556 = vadd.f32 %v6527, %v6555
  %6557 = vdwg.mxu0
  %6558 = vmatpush.bf16.msra.mxu0 %v4608
  %6559 = vmatpush.bf16.msra.mxu0 %v4607
  %6560 = vmatpush.bf16.msra.mxu0 %v4606
  %6561 = vmatpush.bf16.msra.mxu0 %v4605
  %6562 = vmatpush.bf16.msra.mxu0 %v4604
  %6563 = vmatpush.bf16.msra.mxu0 %v4603
  %6564 = vmatpush.bf16.msra.mxu0 %v4602
  %6565 = vmatpush.bf16.msra.mxu0 %v4601
  %6566 = vmatmul.bf16.gmra.mxu0 %v1938
  %v6567 = vpop.f32.mrf.mxu0
  %v6568 = vadd.f32 %v6539, %v6567
  %v6569 = vpop.f32.mrf.mxu0
  %v6570 = vadd.f32 %v6541, %v6569
  %6571 = vmatmul.bf16.gmra.mxu0 %v1996
  %v6572 = vpop.f32.mrf.mxu0
  %v6573 = vadd.f32 %v6544, %v6572
  %v6574 = vpop.f32.mrf.mxu0
  %v6575 = vadd.f32 %v6546, %v6574
  %6576 = vmatmul.bf16.gmra.mxu0 %v2054
  %v6577 = vpop.f32.mrf.mxu0
  %v6578 = vadd.f32 %v6549, %v6577
  %v6579 = vpop.f32.mrf.mxu0
  %v6580 = vadd.f32 %v6551, %v6579
  %6581 = vmatmul.bf16.gmra.mxu0 %v2112
  %v6582 = vpop.f32.mrf.mxu0
  %v6583 = vadd.f32 %v6554, %v6582
  %v6584 = vpop.f32.mrf.mxu0
  %v6585 = vadd.f32 %v6556, %v6584
  %6586 = vdwg.mxu0
  %6587 = vmatpush.bf16.msra.mxu0 %v4616
  %6588 = vmatpush.bf16.msra.mxu0 %v4615
  %6589 = vmatpush.bf16.msra.mxu0 %v4614
  %6590 = vmatpush.bf16.msra.mxu0 %v4613
  %6591 = vmatpush.bf16.msra.mxu0 %v4612
  %6592 = vmatpush.bf16.msra.mxu0 %v4611
  %6593 = vmatpush.bf16.msra.mxu0 %v4610
  %6594 = vmatpush.bf16.msra.mxu0 %v4609
  %6595 = vmatmul.bf16.gmra.mxu0 %v1939
  %v6596 = vpop.f32.mrf.mxu0
  %v6597 = vadd.f32 %v6568, %v6596
  %v6598 = vpop.f32.mrf.mxu0
  %v6599 = vadd.f32 %v6570, %v6598
  %6600 = vmatmul.bf16.gmra.mxu0 %v1997
  %v6601 = vpop.f32.mrf.mxu0
  %v6602 = vadd.f32 %v6573, %v6601
  %v6603 = vpop.f32.mrf.mxu0
  %v6604 = vadd.f32 %v6575, %v6603
  %6605 = vmatmul.bf16.gmra.mxu0 %v2055
  %v6606 = vpop.f32.mrf.mxu0
  %v6607 = vadd.f32 %v6578, %v6606
  %v6608 = vpop.f32.mrf.mxu0
  %v6609 = vadd.f32 %v6580, %v6608
  %6610 = vmatmul.bf16.gmra.mxu0 %v2113
  %v6611 = vpop.f32.mrf.mxu0
  %v6612 = vadd.f32 %v6583, %v6611
  %v6613 = vpop.f32.mrf.mxu0
  %v6614 = vadd.f32 %v6585, %v6613
  %6615 = vdwg.mxu0
  %6616 = vmatpush.bf16.msra.mxu0 %v4624
  %6617 = vmatpush.bf16.msra.mxu0 %v4623
  %6618 = vmatpush.bf16.msra.mxu0 %v4622
  %6619 = vmatpush.bf16.msra.mxu0 %v4621
  %6620 = vmatpush.bf16.msra.mxu0 %v4620
  %6621 = vmatpush.bf16.msra.mxu0 %v4619
  %6622 = vmatpush.bf16.msra.mxu0 %v4618
  %6623 = vmatpush.bf16.msra.mxu0 %v4617
  %6624 = vmatmul.bf16.gmra.mxu0 %v1940
  %v6625 = vpop.f32.mrf.mxu0
  %v6626 = vadd.f32 %v6597, %v6625
  %v6627 = vpop.f32.mrf.mxu0
  %v6628 = vadd.f32 %v6599, %v6627
  %6629 = vmatmul.bf16.gmra.mxu0 %v1998
  %v6630 = vpop.f32.mrf.mxu0
  %v6631 = vadd.f32 %v6602, %v6630
  %v6632 = vpop.f32.mrf.mxu0
  %v6633 = vadd.f32 %v6604, %v6632
  %6634 = vmatmul.bf16.gmra.mxu0 %v2056
  %v6635 = vpop.f32.mrf.mxu0
  %v6636 = vadd.f32 %v6607, %v6635
  %v6637 = vpop.f32.mrf.mxu0
  %v6638 = vadd.f32 %v6609, %v6637
  %6639 = vmatmul.bf16.gmra.mxu0 %v2114
  %v6640 = vpop.f32.mrf.mxu0
  %v6641 = vadd.f32 %v6612, %v6640
  %v6642 = vpop.f32.mrf.mxu0
  %v6643 = vadd.f32 %v6614, %v6642
  %6644 = vdwg.mxu0
  %6645 = vmatpush.bf16.msra.mxu0 %v4632
  %6646 = vmatpush.bf16.msra.mxu0 %v4631
  %6647 = vmatpush.bf16.msra.mxu0 %v4630
  %6648 = vmatpush.bf16.msra.mxu0 %v4629
  %6649 = vmatpush.bf16.msra.mxu0 %v4628
  %6650 = vmatpush.bf16.msra.mxu0 %v4627
  %6651 = vmatpush.bf16.msra.mxu0 %v4626
  %6652 = vmatpush.bf16.msra.mxu0 %v4625
  %6653 = vmatmul.bf16.gmra.mxu0 %v1941
  %v6654 = vpop.f32.mrf.mxu0
  %v6655 = vadd.f32 %v6626, %v6654
  %v6656 = vpop.f32.mrf.mxu0
  %v6657 = vadd.f32 %v6628, %v6656
  %6658 = vmatmul.bf16.gmra.mxu0 %v1999
  %v6659 = vpop.f32.mrf.mxu0
  %v6660 = vadd.f32 %v6631, %v6659
  %v6661 = vpop.f32.mrf.mxu0
  %v6662 = vadd.f32 %v6633, %v6661
  %6663 = vmatmul.bf16.gmra.mxu0 %v2057
  %v6664 = vpop.f32.mrf.mxu0
  %v6665 = vadd.f32 %v6636, %v6664
  %v6666 = vpop.f32.mrf.mxu0
  %v6667 = vadd.f32 %v6638, %v6666
  %6668 = vmatmul.bf16.gmra.mxu0 %v2115
  %v6669 = vpop.f32.mrf.mxu0
  %v6670 = vadd.f32 %v6641, %v6669
  %v6671 = vpop.f32.mrf.mxu0
  %v6672 = vadd.f32 %v6643, %v6671
  %6673 = vdwg.mxu0
  %6674 = vmatpush.bf16.msra.mxu0 %v4640
  %6675 = vmatpush.bf16.msra.mxu0 %v4639
  %6676 = vmatpush.bf16.msra.mxu0 %v4638
  %6677 = vmatpush.bf16.msra.mxu0 %v4637
  %6678 = vmatpush.bf16.msra.mxu0 %v4636
  %6679 = vmatpush.bf16.msra.mxu0 %v4635
  %6680 = vmatpush.bf16.msra.mxu0 %v4634
  %6681 = vmatpush.bf16.msra.mxu0 %v4633
  %6682 = vmatmul.bf16.gmra.mxu0 %v1942
  %v6683 = vpop.f32.mrf.mxu0
  %v6684 = vadd.f32 %v6655, %v6683
  %v6685 = vpop.f32.mrf.mxu0
  %v6686 = vadd.f32 %v6657, %v6685
  %6687 = vmatmul.bf16.gmra.mxu0 %v2000
  %v6688 = vpop.f32.mrf.mxu0
  %v6689 = vadd.f32 %v6660, %v6688
  %v6690 = vpop.f32.mrf.mxu0
  %v6691 = vadd.f32 %v6662, %v6690
  %6692 = vmatmul.bf16.gmra.mxu0 %v2058
  %v6693 = vpop.f32.mrf.mxu0
  %v6694 = vadd.f32 %v6665, %v6693
  %v6695 = vpop.f32.mrf.mxu0
  %v6696 = vadd.f32 %v6667, %v6695
  %6697 = vmatmul.bf16.gmra.mxu0 %v2116
  %v6698 = vpop.f32.mrf.mxu0
  %v6699 = vadd.f32 %v6670, %v6698
  %v6700 = vpop.f32.mrf.mxu0
  %v6701 = vadd.f32 %v6672, %v6700
  %6702 = vdwg.mxu0
  %6703 = vmatpush.bf16.msra.mxu0 %v4648
  %6704 = vmatpush.bf16.msra.mxu0 %v4647
  %6705 = vmatpush.bf16.msra.mxu0 %v4646
  %6706 = vmatpush.bf16.msra.mxu0 %v4645
  %6707 = vmatpush.bf16.msra.mxu0 %v4644
  %6708 = vmatpush.bf16.msra.mxu0 %v4643
  %6709 = vmatpush.bf16.msra.mxu0 %v4642
  %6710 = vmatpush.bf16.msra.mxu0 %v4641
  %6711 = vmatmul.bf16.gmra.mxu0 %v1943
  %v6712 = vpop.f32.mrf.mxu0
  %v6713 = vadd.f32 %v6684, %v6712
  %v6714 = vpop.f32.mrf.mxu0
  %v6715 = vadd.f32 %v6686, %v6714
  %6716 = vmatmul.bf16.gmra.mxu0 %v2001
  %v6717 = vpop.f32.mrf.mxu0
  %v6718 = vadd.f32 %v6689, %v6717
  %v6719 = vpop.f32.mrf.mxu0
  %v6720 = vadd.f32 %v6691, %v6719
  %6721 = vmatmul.bf16.gmra.mxu0 %v2059
  %v6722 = vpop.f32.mrf.mxu0
  %v6723 = vadd.f32 %v6694, %v6722
  %v6724 = vpop.f32.mrf.mxu0
  %v6725 = vadd.f32 %v6696, %v6724
  %6726 = vmatmul.bf16.gmra.mxu0 %v2117
  %v6727 = vpop.f32.mrf.mxu0
  %v6728 = vadd.f32 %v6699, %v6727
  %v6729 = vpop.f32.mrf.mxu0
  %v6730 = vadd.f32 %v6701, %v6729
  %6731 = vdwg.mxu0
  %6732 = vmatpush.bf16.msra.mxu0 %v4656
  %6733 = vmatpush.bf16.msra.mxu0 %v4655
  %6734 = vmatpush.bf16.msra.mxu0 %v4654
  %6735 = vmatpush.bf16.msra.mxu0 %v4653
  %6736 = vmatpush.bf16.msra.mxu0 %v4652
  %6737 = vmatpush.bf16.msra.mxu0 %v4651
  %6738 = vmatpush.bf16.msra.mxu0 %v4650
  %6739 = vmatpush.bf16.msra.mxu0 %v4649
  %6740 = vmatmul.bf16.gmra.mxu0 %v1944
  %v6741 = vpop.f32.mrf.mxu0
  %v6742 = vadd.f32 %v6713, %v6741
  %v6743 = vpop.f32.mrf.mxu0
  %v6744 = vadd.f32 %v6715, %v6743
  %6745 = vmatmul.bf16.gmra.mxu0 %v2002
  %v6746 = vpop.f32.mrf.mxu0
  %v6747 = vadd.f32 %v6718, %v6746
  %v6748 = vpop.f32.mrf.mxu0
  %v6749 = vadd.f32 %v6720, %v6748
  %6750 = vmatmul.bf16.gmra.mxu0 %v2060
  %v6751 = vpop.f32.mrf.mxu0
  %v6752 = vadd.f32 %v6723, %v6751
  %v6753 = vpop.f32.mrf.mxu0
  %v6754 = vadd.f32 %v6725, %v6753
  %6755 = vmatmul.bf16.gmra.mxu0 %v2118
  %v6756 = vpop.f32.mrf.mxu0
  %v6757 = vadd.f32 %v6728, %v6756
  %v6758 = vpop.f32.mrf.mxu0
  %v6759 = vadd.f32 %v6730, %v6758
  %6760 = vdwg.mxu0
  %6761 = vmatpush.bf16.msra.mxu0 %v4664
  %6762 = vmatpush.bf16.msra.mxu0 %v4663
  %6763 = vmatpush.bf16.msra.mxu0 %v4662
  %6764 = vmatpush.bf16.msra.mxu0 %v4661
  %6765 = vmatpush.bf16.msra.mxu0 %v4660
  %6766 = vmatpush.bf16.msra.mxu0 %v4659
  %6767 = vmatpush.bf16.msra.mxu0 %v4658
  %6768 = vmatpush.bf16.msra.mxu0 %v4657
  %6769 = vmatmul.bf16.gmra.mxu0 %v1945
  %v6770 = vpop.f32.mrf.mxu0
  %v6771 = vadd.f32 %v6742, %v6770
  %v6772 = vpop.f32.mrf.mxu0
  %v6773 = vadd.f32 %v6744, %v6772
  %6774 = vmatmul.bf16.gmra.mxu0 %v2003
  %v6775 = vpop.f32.mrf.mxu0
  %v6776 = vadd.f32 %v6747, %v6775
  %v6777 = vpop.f32.mrf.mxu0
  %v6778 = vadd.f32 %v6749, %v6777
  %6779 = vmatmul.bf16.gmra.mxu0 %v2061
  %v6780 = vpop.f32.mrf.mxu0
  %v6781 = vadd.f32 %v6752, %v6780
  %v6782 = vpop.f32.mrf.mxu0
  %v6783 = vadd.f32 %v6754, %v6782
  %6784 = vmatmul.bf16.gmra.mxu0 %v2119
  %v6785 = vpop.f32.mrf.mxu0
  %v6786 = vadd.f32 %v6757, %v6785
  %v6787 = vpop.f32.mrf.mxu0
  %v6788 = vadd.f32 %v6759, %v6787
  %6789 = vdwg.mxu0
  %6790 = vmatpush.bf16.msra.mxu0 %v4672
  %6791 = vmatpush.bf16.msra.mxu0 %v4671
  %6792 = vmatpush.bf16.msra.mxu0 %v4670
  %6793 = vmatpush.bf16.msra.mxu0 %v4669
  %6794 = vmatpush.bf16.msra.mxu0 %v4668
  %6795 = vmatpush.bf16.msra.mxu0 %v4667
  %6796 = vmatpush.bf16.msra.mxu0 %v4666
  %6797 = vmatpush.bf16.msra.mxu0 %v4665
  %6798 = vmatmul.bf16.gmra.mxu0 %v1946
  %v6799 = vpop.f32.mrf.mxu0
  %v6800 = vadd.f32 %v6771, %v6799
  %v6801 = vpop.f32.mrf.mxu0
  %v6802 = vadd.f32 %v6773, %v6801
  %6803 = vmatmul.bf16.gmra.mxu0 %v2004
  %v6804 = vpop.f32.mrf.mxu0
  %v6805 = vadd.f32 %v6776, %v6804
  %v6806 = vpop.f32.mrf.mxu0
  %v6807 = vadd.f32 %v6778, %v6806
  %6808 = vmatmul.bf16.gmra.mxu0 %v2062
  %v6809 = vpop.f32.mrf.mxu0
  %v6810 = vadd.f32 %v6781, %v6809
  %v6811 = vpop.f32.mrf.mxu0
  %v6812 = vadd.f32 %v6783, %v6811
  %6813 = vmatmul.bf16.gmra.mxu0 %v2120
  %v6814 = vpop.f32.mrf.mxu0
  %v6815 = vadd.f32 %v6786, %v6814
  %v6816 = vpop.f32.mrf.mxu0
  %v6817 = vadd.f32 %v6788, %v6816
  %6818 = vdwg.mxu0
  %v6819 = vld [vmem:[%s4] sm:$0x1]
  %v6821 = vperm.slane %v6819, 0
  %v6823 = vmul.f32 %v6800, %v6821
  %v6824 = vmul.f32 %v6802, %v6821
  %v6825 = vmul.f32 %v6805, %v6821
  %v6826 = vmul.f32 %v6807, %v6821
  %v6827 = vmul.f32 %v6810, %v6821
  %v6828 = vmul.f32 %v6812, %v6821
  %v6829 = vmul.f32 %v6815, %v6821
  %v6830 = vmul.f32 %v6817, %v6821
  %v6831 = vld [vmem:[%s5] sm:$0x1]
  %v6833 = vperm.slane %v6831, 0
  %v6835 = vadd.f32 %v6823, %v6833
  %v6836 = vadd.f32 %v6824, %v6833
  %v6837 = vadd.f32 %v6825, %v6833
  %v6838 = vadd.f32 %v6826, %v6833
  %v6839 = vadd.f32 %v6827, %v6833
  %v6840 = vadd.f32 %v6828, %v6833
  %v6841 = vadd.f32 %v6829, %v6833
  %v6842 = vadd.f32 %v6830, %v6833
  %v6843 = vmax.f32 %v6835, 0.0
  %v6844 = vmax.f32 %v6836, 0.0
  %v6845 = vmax.f32 %v6837, 0.0
  %v6846 = vmax.f32 %v6838, 0.0
  %v6847 = vmax.f32 %v6839, 0.0
  %v6848 = vmax.f32 %v6840, 0.0
  %v6849 = vmax.f32 %v6841, 0.0
  %v6850 = vmax.f32 %v6842, 0.0
  %v6851 = vmin.f32 %v6843, 20.0
  %v6852 = vmin.f32 %v6844, 20.0
  %v6853 = vmin.f32 %v6845, 20.0
  %v6854 = vmin.f32 %v6846, 20.0
  %v6855 = vmin.f32 %v6847, 20.0
  %v6856 = vmin.f32 %v6848, 20.0
  %v6857 = vmin.f32 %v6849, 20.0
  %v6858 = vmin.f32 %v6850, 20.0
  %v6859 = vld [vmem:[%s1] sm:$0xf]
  %v6860 = vld [vmem:[%s1 + $0x4] sm:$0xf]
  %v6861 = vld [vmem:[%s1 + $0x8] sm:$0xf]
  %v6862 = vld [vmem:[%s1 + $0xc] sm:$0xf]
  %v6863 = vld [vmem:[%s1 + $0x10] sm:$0xf]
  %v6864 = vld [vmem:[%s1 + $0x14] sm:$0xf]
  %v6865 = vld [vmem:[%s1 + $0x18] sm:$0xf]
  %v6866 = vld [vmem:[%s1 + $0x1c] sm:$0xf]
  %v6867 = vld [vmem:[%s6] sm:$0xf]
  %v6868 = vld [vmem:[%s6 + $0x4] sm:$0xf]
  %v6869 = vld [vmem:[%s6 + $0x8] sm:$0xf]
  %v6870 = vld [vmem:[%s6 + $0xc] sm:$0xf]
  %v6879 = vunpack.c.l.b16 %v6859
  %v6880 = vunpack.c.l.b16 %v6860
  %v6881 = vunpack.c.l.b16 %v6861
  %v6882 = vunpack.c.l.b16 %v6862
  %v6883 = vunpack.c.l.b16 %v6863
  %v6884 = vunpack.c.l.b16 %v6864
  %v6885 = vunpack.c.l.b16 %v6865
  %v6886 = vunpack.c.l.b16 %v6866
  %v6887 = vpack.c.b16 %v6880, %v6879
  %v6888 = vpack.c.b16 %v6882, %v6881
  %v6889 = vpack.c.b16 %v6884, %v6883
  %v6890 = vpack.c.b16 %v6886, %v6885
  %v6895 = vunpack.c.l.b16 %v6867
  %v6896 = vunpack.c.l.b16 %v6868
  %v6897 = vunpack.c.l.b16 %v6869
  %v6898 = vunpack.c.l.b16 %v6870
  %v6899 = vpack.c.b16 %v6896, %v6895
  %v6900 = vpack.c.b16 %v6898, %v6897
  %vm6903 = vcmask 261120
  %v6905 = vsel %vm6903, %v6887, 0
  %v6908 = vsel %vm6903, %v6888, 0
  %v6911 = vsel %vm6903, %v6889, 0
  %v6914 = vsel %vm6903, %v6890, 0
  %6916 = vmatpush.bf16.msra.mxu0 0
  %6917 = vmatpush.bf16.msra.mxu0 0
  %6918 = vmatpush.bf16.msra.mxu0 0
  %6919 = vmatpush.bf16.msra.mxu0 0
  %6920 = vmatpush.bf16.msra.mxu0 0
  %6921 = vmatpush.bf16.msra.mxu0 0
  %6922 = vmatpush.bf16.msra.mxu0 %v6900
  %6923 = vmatpush.bf16.msra.mxu0 %v6899
  %6924 = vmatmul.bf16.gmra.mxu0 %v6905
  %v6925 = vpop.f32.mrf.mxu0
  %v6926 = vadd.f32 0.0, %v6925
  %v6927 = vpop.f32.mrf.mxu0
  %v6928 = vadd.f32 0.0, %v6927
  %6929 = vmatmul.bf16.gmra.mxu0 %v6908
  %v6930 = vpop.f32.mrf.mxu0
  %v6931 = vadd.f32 0.0, %v6930
  %v6932 = vpop.f32.mrf.mxu0
  %v6933 = vadd.f32 0.0, %v6932
  %6934 = vmatmul.bf16.gmra.mxu0 %v6911
  %v6935 = vpop.f32.mrf.mxu0
  %v6936 = vadd.f32 0.0, %v6935
  %v6937 = vpop.f32.mrf.mxu0
  %v6938 = vadd.f32 0.0, %v6937
  %6939 = vmatmul.bf16.gmra.mxu0 %v6914
  %v6940 = vpop.f32.mrf.mxu0
  %v6941 = vadd.f32 0.0, %v6940
  %v6942 = vpop.f32.mrf.mxu0
  %v6943 = vadd.f32 0.0, %v6942
  %6944 = vdwg.mxu0
  %v6945 = vld [vmem:[%s7] sm:$0x1]
  %v6947 = vperm.slane %v6945, 0
  %v6949 = vmul.f32 %v6926, %v6947
  %v6950 = vmul.f32 %v6928, %v6947
  %v6951 = vmul.f32 %v6931, %v6947
  %v6952 = vmul.f32 %v6933, %v6947
  %v6953 = vmul.f32 %v6936, %v6947
  %v6954 = vmul.f32 %v6938, %v6947
  %v6955 = vmul.f32 %v6941, %v6947
  %v6956 = vmul.f32 %v6943, %v6947
  %v6957 = vld [vmem:[%s8] sm:$0x1]
  %v6959 = vperm.slane %v6957, 0
  %v6961 = vadd.f32 %v6949, %v6959
  %v6962 = vadd.f32 %v6950, %v6959
  %v6963 = vadd.f32 %v6951, %v6959
  %v6964 = vadd.f32 %v6952, %v6959
  %v6965 = vadd.f32 %v6953, %v6959
  %v6966 = vadd.f32 %v6954, %v6959
  %v6967 = vadd.f32 %v6955, %v6959
  %v6968 = vadd.f32 %v6956, %v6959
  %v6969 = vmax.f32 %v6961, 0.0
  %v6970 = vmax.f32 %v6962, 0.0
  %v6971 = vmax.f32 %v6963, 0.0
  %v6972 = vmax.f32 %v6964, 0.0
  %v6973 = vmax.f32 %v6965, 0.0
  %v6974 = vmax.f32 %v6966, 0.0
  %v6975 = vmax.f32 %v6967, 0.0
  %v6976 = vmax.f32 %v6968, 0.0
  %v6977 = vmin.f32 %v6969, 20.0
  %v6978 = vmin.f32 %v6970, 20.0
  %v6979 = vmin.f32 %v6971, 20.0
  %v6980 = vmin.f32 %v6972, 20.0
  %v6981 = vmin.f32 %v6973, 20.0
  %v6982 = vmin.f32 %v6974, 20.0
  %v6983 = vmin.f32 %v6975, 20.0
  %v6984 = vmin.f32 %v6976, 20.0
  %v6985 = vadd.f32 %v6851, %v6977
  %v6986 = vadd.f32 %v6852, %v6978
  %v6987 = vadd.f32 %v6853, %v6979
  %v6988 = vadd.f32 %v6854, %v6980
  %v6989 = vadd.f32 %v6855, %v6981
  %v6990 = vadd.f32 %v6856, %v6982
  %v6991 = vadd.f32 %v6857, %v6983
  %v6992 = vadd.f32 %v6858, %v6984
  %v6993 = vld [vmem:[%s2] sm:$0xff]
  %v6994 = vld [vmem:[%s2 + $0x8] sm:$0xff]
  %v6995 = vld [vmem:[%s2 + $0x10] sm:$0xff]
  %v6996 = vld [vmem:[%s2 + $0x18] sm:$0xff]
  %v6997 = vld [vmem:[%s2 + $0x20] sm:$0xff]
  %v6998 = vld [vmem:[%s2 + $0x28] sm:$0xff]
  %v6999 = vld [vmem:[%s2 + $0x30] sm:$0xff]
  %v7000 = vld [vmem:[%s2 + $0x38] sm:$0xff]
  %7002 = vset.pattern.permute.xlu0 0
  %7003 = vperm.xlu0 %7002, %v6993
  %v7004 = vpop.permute.xlu0 %7003
  %7007 = vset.pattern.permute.xlu0 0
  %7008 = vperm.xlu0 %7007, %v6994
  %v7009 = vpop.permute.xlu0 %7008
  %7012 = vset.pattern.permute.xlu0 0
  %7013 = vperm.xlu0 %7012, %v6995
  %v7014 = vpop.permute.xlu0 %7013
  %7017 = vset.pattern.permute.xlu0 0
  %7018 = vperm.xlu0 %7017, %v6996
  %v7019 = vpop.permute.xlu0 %7018
  %7022 = vset.pattern.permute.xlu0 0
  %7023 = vperm.xlu0 %7022, %v6997
  %v7024 = vpop.permute.xlu0 %7023
  %7027 = vset.pattern.permute.xlu0 0
  %7028 = vperm.xlu0 %7027, %v6998
  %v7029 = vpop.permute.xlu0 %7028
  %7032 = vset.pattern.permute.xlu0 0
  %7033 = vperm.xlu0 %7032, %v6999
  %v7034 = vpop.permute.xlu0 %7033
  %7037 = vset.pattern.permute.xlu0 0
  %7038 = vperm.xlu0 %7037, %v7000
  %v7039 = vpop.permute.xlu0 %7038
  %v7041 = vmul.f32 %v6985, %v7004
  %v7042 = vmul.f32 %v6986, %v7009
  %v7043 = vmul.f32 %v6987, %v7014
  %v7044 = vmul.f32 %v6988, %v7019
  %v7045 = vmul.f32 %v6989, %v7024
  %v7046 = vmul.f32 %v6990, %v7029
  %v7047 = vmul.f32 %v6991, %v7034
  %v7048 = vmul.f32 %v6992, %v7039
  %v7049 = vpack.c.bf16 %v7041, %v7041
  %v7050 = vpack.c.bf16 %v7042, %v7042
  %v7051 = vpack.c.bf16 %v7043, %v7043
  %v7052 = vpack.c.bf16 %v7044, %v7044
  %v7053 = vpack.c.bf16 %v7045, %v7045
  %v7054 = vpack.c.bf16 %v7046, %v7046
  %v7055 = vpack.c.bf16 %v7047, %v7047
  %v7056 = vpack.c.bf16 %v7048, %v7048
  %7057 = vst [vmem:[%s9] sm:$0xf] %v7049
  %7058 = vst [vmem:[%s9 + $0x4] sm:$0xf] %v7050
  %7059 = vst [vmem:[%s9 + $0x8] sm:$0xf] %v7051
  %7060 = vst [vmem:[%s9 + $0xc] sm:$0xf] %v7052
  %7061 = vst [vmem:[%s9 + $0x10] sm:$0xf] %v7053
  %7062 = vst [vmem:[%s9 + $0x14] sm:$0xf] %v7054
  %7063 = vst [vmem:[%s9 + $0x18] sm:$0xf] %v7055
  %7064 = vst [vmem:[%s9 + $0x1c] sm:$0xf] %v7056
  // Predicated region
  $region38: #{skip_one_step3_forward.4} parent=0 // pred_check
    _
  $region39: #{skip_one_step3_forward.4} parent=0 // pred_check_branch
    %7066 = sbr.rel (0) target = $region41
  $region40: #{skip_one_step3_forward.4} parent=0 // pred_region
    _
  $region41: #{skip_one_step3_forward.4} parent=0 // pred_fallthru
    _
  // Predicated region
  $region42: #{skip_one_step3_forward.4} parent=0 // pred_check
    _
  $region43: #{skip_one_step3_forward.4} parent=0 // pred_check_branch
    %7068 = sbr.rel (0) target = $region45
  $region44: #{skip_one_step3_forward.4} parent=0 // pred_region
    _
  $region45: #{skip_one_step3_forward.4} parent=0 // pred_fallthru
    _

// kernel: skip_one_step3_forward.5
$region0: #{skip_one_step3_forward.5}
  #allocation0 [shape = 'u32[]', space=smem, size = 0x4, offset = 0x4, fixed_abs, tag = 'smem constant byte address 0x4 - core index']
  #allocation1 [shape = 'u32[72,128]{1,0:T(1,128)}', space=vmem, size = 0x9000, scoped, tag = 'internal scratch']
  %s0 = inlined_call_operand.vmem [shape: bf16[32,7424], index: 0, kind: input, shape index: {}]
  %s1 = inlined_call_operand.vmem [shape: bf16[32,32], index: 1, kind: input, shape index: {}]
  %s2 = inlined_call_operand.vmem [shape: f32[32,1], index: 2, kind: input, shape index: {}]
  %s3 = inlined_call_operand.vmem [shape: bf16[7424,128], index: 3, kind: input, shape index: {}]
  %s4 = inlined_call_operand.vmem [shape: f32[1,128], index: 4, kind: input, shape index: {}]
  %s5 = inlined_call_operand.vmem [shape: f32[1,128], index: 5, kind: input, shape index: {}]
  %s6 = inlined_call_operand.vmem [shape: bf16[32,128], index: 6, kind: input, shape index: {}]
  %s7 = inlined_call_operand.vmem [shape: f32[1,128], index: 7, kind: input, shape index: {}]
  %s8 = inlined_call_operand.vmem [shape: f32[1,128], index: 8, kind: input, shape index: {}]
  %s9 = inlined_call_operand.hbm [shape: f32[32,128], index: 9, kind: output, shape index: {}]
  %s10 = sld [smem:[#allocation0]]
  $region46: #{skip_one_step3_forward.5} parent=0
    _
  %s12 = ssub.s32 1, %s10
  %s13 = scalar_select 0, %s12, %s10
  $region1: #{skip_one_step3_forward.5} parent=0
    #allocation2 [shape = 'u8[16384]{0}', space=vmem, size = 0x4000, scoped, tag = 'output window, operand 0, single buffered']
    #allocation3 [shape = 's32[1]{0}', space=sflag, size = 0x4, scoped, tag = 'scoped memory for skip_one_step3_forward.5']
    %14 = vsyncpa [#allocation3], 0
    // Predicated region
    $region2: #{skip_one_step3_forward.5} parent=1 // pred_check
      _
    $region3: #{skip_one_step3_forward.5} parent=1 // pred_check_branch
      %16 = sbr.rel (0) target = $region5
    $region4: #{skip_one_step3_forward.5} parent=1 // pred_region
      _
    $region5: #{skip_one_step3_forward.5} parent=1 // pred_fallthru
      _
    // Predicated region
    $region6: #{skip_one_step3_forward.5} parent=1 // pred_check
      _
    $region7: #{skip_one_step3_forward.5} parent=1 // pred_check_branch
      %18 = sbr.rel (0) target = $region9
    $region8: #{skip_one_step3_forward.5} parent=1 // pred_region
      _
    $region9: #{skip_one_step3_forward.5} parent=1 // pred_fallthru
      _
    // Predicated region
    $region10: #{skip_one_step3_forward.5} parent=1 // pred_check
      _
    $region11: #{skip_one_step3_forward.5} parent=1 // pred_check_branch
      %20 = sbr.rel (0) target = $region13
    $region12: #{skip_one_step3_forward.5} parent=1 // pred_region
      _
    $region13: #{skip_one_step3_forward.5} parent=1 // pred_fallthru
      _
    // Predicated region
    $region14: #{skip_one_step3_forward.5} parent=1 // pred_check
      _
    $region15: #{skip_one_step3_forward.5} parent=1 // pred_check_branch
      %22 = sbr.rel (0) target = $region17
    $region16: #{skip_one_step3_forward.5} parent=1 // pred_region
      _
    $region17: #{skip_one_step3_forward.5} parent=1 // pred_fallthru
      _
    // Predicated region
    $region18: #{skip_one_step3_forward.5} parent=1 // pred_check
      _
    $region19: #{skip_one_step3_forward.5} parent=1 // pred_check_branch
      %24 = sbr.rel (0) target = $region21
    $region20: #{skip_one_step3_forward.5} parent=1 // pred_region
      _
    $region21: #{skip_one_step3_forward.5} parent=1 // pred_fallthru
      _
    // Predicated region
    $region22: #{skip_one_step3_forward.5} parent=1 // pred_check
      _
    $region23: #{skip_one_step3_forward.5} parent=1 // pred_check_branch
      %26 = sbr.rel (0) target = $region25
    $region24: #{skip_one_step3_forward.5} parent=1 // pred_region
      _
    $region25: #{skip_one_step3_forward.5} parent=1 // pred_fallthru
      _
    // Predicated region
    $region26: #{skip_one_step3_forward.5} parent=1 // pred_check
      _
    $region27: #{skip_one_step3_forward.5} parent=1 // pred_check_branch
      %28 = sbr.rel (0) target = $region29
    $region28: #{skip_one_step3_forward.5} parent=1 // pred_region
      _
    $region29: #{skip_one_step3_forward.5} parent=1 // pred_fallthru
      _
    // Predicated region
    $region30: #{skip_one_step3_forward.5} parent=1 // pred_check
      _
    $region31: #{skip_one_step3_forward.5} parent=1 // pred_check_branch
      %30 = sbr.rel (0) target = $region33
    $region32: #{skip_one_step3_forward.5} parent=1 // pred_region
      _
    $region33: #{skip_one_step3_forward.5} parent=1 // pred_fallthru
      _
    // Predicated region
    $region34: #{skip_one_step3_forward.5} parent=1 // pred_check
      _
    $region35: #{skip_one_step3_forward.5} parent=1 // pred_check_branch
      %32 = sbr.rel (0) target = $region37
    $region36: #{skip_one_step3_forward.5} parent=1 // pred_region
      _
    $region37: #{skip_one_step3_forward.5} parent=1 // pred_fallthru
      _
    %v34 = vld [vmem:[%s0] sm:$0xff]
    %v35 = vld [vmem:[%s0 + $0x8] sm:$0xff]
    %v36 = vld [vmem:[%s0 + $0x10] sm:$0xff]
    %v37 = vld [vmem:[%s0 + $0x18] sm:$0xff]
    %v38 = vld [vmem:[%s0 + $0x20] sm:$0xff]
    %v39 = vld [vmem:[%s0 + $0x28] sm:$0xff]
    %v40 = vld [vmem:[%s0 + $0x30] sm:$0xff]
    %v41 = vld [vmem:[%s0 + $0x38] sm:$0xff]
    %v42 = vld [vmem:[%s0 + $0x40] sm:$0xff]
    %v43 = vld [vmem:[%s0 + $0x48] sm:$0xff]
    %v44 = vld [vmem:[%s0 + $0x50] sm:$0xff]
    %v45 = vld [vmem:[%s0 + $0x58] sm:$0xff]
    %v46 = vld [vmem:[%s0 + $0x60] sm:$0xff]
    %v47 = vld [vmem:[%s0 + $0x68] sm:$0xff]
    %v48 = vld [vmem:[%s0 + $0x70] sm:$0xff]
    %v49 = vld [vmem:[%s0 + $0x78] sm:$0xff]
    %v50 = vld [vmem:[%s0 + $0x80] sm:$0xff]
    %v51 = vld [vmem:[%s0 + $0x88] sm:$0xff]
    %v52 = vld [vmem:[%s0 + $0x90] sm:$0xff]
    %v53 = vld [vmem:[%s0 + $0x98] sm:$0xff]
    %v54 = vld [vmem:[%s0 + $0xa0] sm:$0xff]
    %v55 = vld [vmem:[%s0 + $0xa8] sm:$0xff]
    %v56 = vld [vmem:[%s0 + $0xb0] sm:$0xff]
    %v57 = vld [vmem:[%s0 + $0xb8] sm:$0xff]
    %v58 = vld [vmem:[%s0 + $0xc0] sm:$0xff]
    %v59 = vld [vmem:[%s0 + $0xc8] sm:$0xff]
    %v60 = vld [vmem:[%s0 + $0xd0] sm:$0xff]
    %v61 = vld [vmem:[%s0 + $0xd8] sm:$0xff]
    %v62 = vld [vmem:[%s0 + $0xe0] sm:$0xff]
    %v63 = vld [vmem:[%s0 + $0xe8] sm:$0xff]
    %v64 = vld [vmem:[%s0 + $0xf0] sm:$0xff]
    %v65 = vld [vmem:[%s0 + $0xf8] sm:$0xff]
    %v66 = vld [vmem:[%s0 + $0x100] sm:$0xff]
    %v67 = vld [vmem:[%s0 + $0x108] sm:$0xff]
    %v68 = vld [vmem:[%s0 + $0x110] sm:$0xff]
    %v69 = vld [vmem:[%s0 + $0x118] sm:$0xff]
    %v70 = vld [vmem:[%s0 + $0x120] sm:$0xff]
    %v71 = vld [vmem:[%s0 + $0x128] sm:$0xff]
    %v72 = vld [vmem:[%s0 + $0x130] sm:$0xff]
    %v73 = vld [vmem:[%s0 + $0x138] sm:$0xff]
    %v74 = vld [vmem:[%s0 + $0x140] sm:$0xff]
    %v75 = vld [vmem:[%s0 + $0x148] sm:$0xff]
    %v76 = vld [vmem:[%s0 + $0x150] sm:$0xff]
    %v77 = vld [vmem:[%s0 + $0x158] sm:$0xff]
    %v78 = vld [vmem:[%s0 + $0x160] sm:$0xff]
    %v79 = vld [vmem:[%s0 + $0x168] sm:$0xff]
    %v80 = vld [vmem:[%s0 + $0x170] sm:$0xff]
    %v81 = vld [vmem:[%s0 + $0x178] sm:$0xff]
    %v82 = vld [vmem:[%s0 + $0x180] sm:$0xff]
    %v83 = vld [vmem:[%s0 + $0x188] sm:$0xff]
    %v84 = vld [vmem:[%s0 + $0x190] sm:$0xff]
    %v85 = vld [vmem:[%s0 + $0x198] sm:$0xff]
    %v86 = vld [vmem:[%s0 + $0x1a0] sm:$0xff]
    %v87 = vld [vmem:[%s0 + $0x1a8] sm:$0xff]
    %v88 = vld [vmem:[%s0 + $0x1b0] sm:$0xff]
    %v89 = vld [vmem:[%s0 + $0x1b8] sm:$0xff]
    %v90 = vld [vmem:[%s0 + $0x1c0] sm:$0xff]
    %v91 = vld [vmem:[%s0 + $0x1c8] sm:$0xff]
    %v92 = vld [vmem:[%s0 + $0x1d0] sm:$0xff]
    %v93 = vld [vmem:[%s0 + $0x1d8] sm:$0xff]
    %v94 = vld [vmem:[%s0 + $0x1e0] sm:$0xff]
    %v95 = vld [vmem:[%s0 + $0x1e8] sm:$0xff]
    %v96 = vld [vmem:[%s0 + $0x1f0] sm:$0xff]
    %v97 = vld [vmem:[%s0 + $0x1f8] sm:$0xff]
    %v98 = vld [vmem:[%s0 + $0x200] sm:$0xff]
    %v99 = vld [vmem:[%s0 + $0x208] sm:$0xff]
    %v100 = vld [vmem:[%s0 + $0x210] sm:$0xff]
    %v101 = vld [vmem:[%s0 + $0x218] sm:$0xff]
    %v102 = vld [vmem:[%s0 + $0x220] sm:$0xff]
    %v103 = vld [vmem:[%s0 + $0x228] sm:$0xff]
    %v104 = vld [vmem:[%s0 + $0x230] sm:$0xff]
    %v105 = vld [vmem:[%s0 + $0x238] sm:$0xff]
    %v106 = vld [vmem:[%s0 + $0x240] sm:$0xff]
    %v107 = vld [vmem:[%s0 + $0x248] sm:$0xff]
    %v108 = vld [vmem:[%s0 + $0x250] sm:$0xff]
    %v109 = vld [vmem:[%s0 + $0x258] sm:$0xff]
    %v110 = vld [vmem:[%s0 + $0x260] sm:$0xff]
    %v111 = vld [vmem:[%s0 + $0x268] sm:$0xff]
    %v112 = vld [vmem:[%s0 + $0x270] sm:$0xff]
    %v113 = vld [vmem:[%s0 + $0x278] sm:$0xff]
    %v114 = vld [vmem:[%s0 + $0x280] sm:$0xff]
    %v115 = vld [vmem:[%s0 + $0x288] sm:$0xff]
    %v116 = vld [vmem:[%s0 + $0x290] sm:$0xff]
    %v117 = vld [vmem:[%s0 + $0x298] sm:$0xff]
    %v118 = vld [vmem:[%s0 + $0x2a0] sm:$0xff]
    %v119 = vld [vmem:[%s0 + $0x2a8] sm:$0xff]
    %v120 = vld [vmem:[%s0 + $0x2b0] sm:$0xff]
    %v121 = vld [vmem:[%s0 + $0x2b8] sm:$0xff]
    %v122 = vld [vmem:[%s0 + $0x2c0] sm:$0xff]
    %v123 = vld [vmem:[%s0 + $0x2c8] sm:$0xff]
    %v124 = vld [vmem:[%s0 + $0x2d0] sm:$0xff]
    %v125 = vld [vmem:[%s0 + $0x2d8] sm:$0xff]
    %v126 = vld [vmem:[%s0 + $0x2e0] sm:$0xff]
    %v127 = vld [vmem:[%s0 + $0x2e8] sm:$0xff]
    %v128 = vld [vmem:[%s0 + $0x2f0] sm:$0xff]
    %v129 = vld [vmem:[%s0 + $0x2f8] sm:$0xff]
    %v130 = vld [vmem:[%s0 + $0x300] sm:$0xff]
    %v131 = vld [vmem:[%s0 + $0x308] sm:$0xff]
    %v132 = vld [vmem:[%s0 + $0x310] sm:$0xff]
    %v133 = vld [vmem:[%s0 + $0x318] sm:$0xff]
    %v134 = vld [vmem:[%s0 + $0x320] sm:$0xff]
    %v135 = vld [vmem:[%s0 + $0x328] sm:$0xff]
    %v136 = vld [vmem:[%s0 + $0x330] sm:$0xff]
    %v137 = vld [vmem:[%s0 + $0x338] sm:$0xff]
    %v138 = vld [vmem:[%s0 + $0x340] sm:$0xff]
    %v139 = vld [vmem:[%s0 + $0x348] sm:$0xff]
    %v140 = vld [vmem:[%s0 + $0x350] sm:$0xff]
    %v141 = vld [vmem:[%s0 + $0x358] sm:$0xff]
    %v142 = vld [vmem:[%s0 + $0x360] sm:$0xff]
    %v143 = vld [vmem:[%s0 + $0x368] sm:$0xff]
    %v144 = vld [vmem:[%s0 + $0x370] sm:$0xff]
    %v145 = vld [vmem:[%s0 + $0x378] sm:$0xff]
    %v146 = vld [vmem:[%s0 + $0x380] sm:$0xff]
    %v147 = vld [vmem:[%s0 + $0x388] sm:$0xff]
    %v148 = vld [vmem:[%s0 + $0x390] sm:$0xff]
    %v149 = vld [vmem:[%s0 + $0x398] sm:$0xff]
    %v150 = vld [vmem:[%s3] sm:$0xf]
    %v151 = vld [vmem:[%s3 + $0x4] sm:$0xf]
    %v152 = vld [vmem:[%s3 + $0x8] sm:$0xf]
    %v153 = vld [vmem:[%s3 + $0xc] sm:$0xf]
    %v154 = vld [vmem:[%s3 + $0x10] sm:$0xf]
    %v155 = vld [vmem:[%s3 + $0x14] sm:$0xf]
    %v156 = vld [vmem:[%s3 + $0x18] sm:$0xf]
    %v157 = vld [vmem:[%s3 + $0x1c] sm:$0xf]
    %v158 = vld [vmem:[%s3 + $0x20] sm:$0xf]
    %v159 = vld [vmem:[%s3 + $0x24] sm:$0xf]
    %v160 = vld [vmem:[%s3 + $0x28] sm:$0xf]
    %v161 = vld [vmem:[%s3 + $0x2c] sm:$0xf]
    %v162 = vld [vmem:[%s3 + $0x30] sm:$0xf]
    %v163 = vld [vmem:[%s3 + $0x34] sm:$0xf]
    %v164 = vld [vmem:[%s3 + $0x38] sm:$0xf]
    %v165 = vld [vmem:[%s3 + $0x3c] sm:$0xf]
    %v166 = vld [vmem:[%s3 + $0x40] sm:$0xf]
    %v167 = vld [vmem:[%s3 + $0x44] sm:$0xf]
    %v168 = vld [vmem:[%s3 + $0x48] sm:$0xf]
    %v169 = vld [vmem:[%s3 + $0x4c] sm:$0xf]
    %v170 = vld [vmem:[%s3 + $0x50] sm:$0xf]
    %v171 = vld [vmem:[%s3 + $0x54] sm:$0xf]
    %v172 = vld [vmem:[%s3 + $0x58] sm:$0xf]
    %v173 = vld [vmem:[%s3 + $0x5c] sm:$0xf]
    %v174 = vld [vmem:[%s3 + $0x60] sm:$0xf]
    %v175 = vld [vmem:[%s3 + $0x64] sm:$0xf]
    %v176 = vld [vmem:[%s3 + $0x68] sm:$0xf]
    %v177 = vld [vmem:[%s3 + $0x6c] sm:$0xf]
    %v178 = vld [vmem:[%s3 + $0x70] sm:$0xf]
    %v179 = vld [vmem:[%s3 + $0x74] sm:$0xf]
    %v180 = vld [vmem:[%s3 + $0x78] sm:$0xf]
    %v181 = vld [vmem:[%s3 + $0x7c] sm:$0xf]
    %v182 = vld [vmem:[%s3 + $0x80] sm:$0xf]
    %v183 = vld [vmem:[%s3 + $0x84] sm:$0xf]
    %v184 = vld [vmem:[%s3 + $0x88] sm:$0xf]
    %v185 = vld [vmem:[%s3 + $0x8c] sm:$0xf]
    %v186 = vld [vmem:[%s3 + $0x90] sm:$0xf]
    %v187 = vld [vmem:[%s3 + $0x94] sm:$0xf]
    %v188 = vld [vmem:[%s3 + $0x98] sm:$0xf]
    %v189 = vld [vmem:[%s3 + $0x9c] sm:$0xf]
    %v190 = vld [vmem:[%s3 + $0xa0] sm:$0xf]
    %v191 = vld [vmem:[%s3 + $0xa4] sm:$0xf]
    %v192 = vld [vmem:[%s3 + $0xa8] sm:$0xf]
    %v193 = vld [vmem:[%s3 + $0xac] sm:$0xf]
    %v194 = vld [vmem:[%s3 + $0xb0] sm:$0xf]
    %v195 = vld [vmem:[%s3 + $0xb4] sm:$0xf]
    %v196 = vld [vmem:[%s3 + $0xb8] sm:$0xf]
    %v197 = vld [vmem:[%s3 + $0xbc] sm:$0xf]
    %v198 = vld [vmem:[%s3 + $0xc0] sm:$0xf]
    %v199 = vld [vmem:[%s3 + $0xc4] sm:$0xf]
    %v200 = vld [vmem:[%s3 + $0xc8] sm:$0xf]
    %v201 = vld [vmem:[%s3 + $0xcc] sm:$0xf]
    %v202 = vld [vmem:[%s3 + $0xd0] sm:$0xf]
    %v203 = vld [vmem:[%s3 + $0xd4] sm:$0xf]
    %v204 = vld [vmem:[%s3 + $0xd8] sm:$0xf]
    %v205 = vld [vmem:[%s3 + $0xdc] sm:$0xf]
    %v206 = vld [vmem:[%s3 + $0xe0] sm:$0xf]
    %v207 = vld [vmem:[%s3 + $0xe4] sm:$0xf]
    %v208 = vld [vmem:[%s3 + $0xe8] sm:$0xf]
    %v209 = vld [vmem:[%s3 + $0xec] sm:$0xf]
    %v210 = vld [vmem:[%s3 + $0xf0] sm:$0xf]
    %v211 = vld [vmem:[%s3 + $0xf4] sm:$0xf]
    %v212 = vld [vmem:[%s3 + $0xf8] sm:$0xf]
    %v213 = vld [vmem:[%s3 + $0xfc] sm:$0xf]
    %v214 = vld [vmem:[%s3 + $0x100] sm:$0xf]
    %v215 = vld [vmem:[%s3 + $0x104] sm:$0xf]
    %v216 = vld [vmem:[%s3 + $0x108] sm:$0xf]
    %v217 = vld [vmem:[%s3 + $0x10c] sm:$0xf]
    %v218 = vld [vmem:[%s3 + $0x110] sm:$0xf]
    %v219 = vld [vmem:[%s3 + $0x114] sm:$0xf]
    %v220 = vld [vmem:[%s3 + $0x118] sm:$0xf]
    %v221 = vld [vmem:[%s3 + $0x11c] sm:$0xf]
    %v222 = vld [vmem:[%s3 + $0x120] sm:$0xf]
    %v223 = vld [vmem:[%s3 + $0x124] sm:$0xf]
    %v224 = vld [vmem:[%s3 + $0x128] sm:$0xf]
    %v225 = vld [vmem:[%s3 + $0x12c] sm:$0xf]
    %v226 = vld [vmem:[%s3 + $0x130] sm:$0xf]
    %v227 = vld [vmem:[%s3 + $0x134] sm:$0xf]
    %v228 = vld [vmem:[%s3 + $0x138] sm:$0xf]
    %v229 = vld [vmem:[%s3 + $0x13c] sm:$0xf]
    %v230 = vld [vmem:[%s3 + $0x140] sm:$0xf]
    %v231 = vld [vmem:[%s3 + $0x144] sm:$0xf]
    %v232 = vld [vmem:[%s3 + $0x148] sm:$0xf]
    %v233 = vld [vmem:[%s3 + $0x14c] sm:$0xf]
    %v234 = vld [vmem:[%s3 + $0x150] sm:$0xf]
    %v235 = vld [vmem:[%s3 + $0x154] sm:$0xf]
    %v236 = vld [vmem:[%s3 + $0x158] sm:$0xf]
    %v237 = vld [vmem:[%s3 + $0x15c] sm:$0xf]
    %v238 = vld [vmem:[%s3 + $0x160] sm:$0xf]
    %v239 = vld [vmem:[%s3 + $0x164] sm:$0xf]
    %v240 = vld [vmem:[%s3 + $0x168] sm:$0xf]
    %v241 = vld [vmem:[%s3 + $0x16c] sm:$0xf]
    %v242 = vld [vmem:[%s3 + $0x170] sm:$0xf]
    %v243 = vld [vmem:[%s3 + $0x174] sm:$0xf]
    %v244 = vld [vmem:[%s3 + $0x178] sm:$0xf]
    %v245 = vld [vmem:[%s3 + $0x17c] sm:$0xf]
    %v246 = vld [vmem:[%s3 + $0x180] sm:$0xf]
    %v247 = vld [vmem:[%s3 + $0x184] sm:$0xf]
    %v248 = vld [vmem:[%s3 + $0x188] sm:$0xf]
    %v249 = vld [vmem:[%s3 + $0x18c] sm:$0xf]
    %v250 = vld [vmem:[%s3 + $0x190] sm:$0xf]
    %v251 = vld [vmem:[%s3 + $0x194] sm:$0xf]
    %v252 = vld [vmem:[%s3 + $0x198] sm:$0xf]
    %v253 = vld [vmem:[%s3 + $0x19c] sm:$0xf]
    %v254 = vld [vmem:[%s3 + $0x1a0] sm:$0xf]
    %v255 = vld [vmem:[%s3 + $0x1a4] sm:$0xf]
    %v256 = vld [vmem:[%s3 + $0x1a8] sm:$0xf]
    %v257 = vld [vmem:[%s3 + $0x1ac] sm:$0xf]
    %v258 = vld [vmem:[%s3 + $0x1b0] sm:$0xf]
    %v259 = vld [vmem:[%s3 + $0x1b4] sm:$0xf]
    %v260 = vld [vmem:[%s3 + $0x1b8] sm:$0xf]
    %v261 = vld [vmem:[%s3 + $0x1bc] sm:$0xf]
    %v262 = vld [vmem:[%s3 + $0x1c0] sm:$0xf]
    %v263 = vld [vmem:[%s3 + $0x1c4] sm:$0xf]
    %v264 = vld [vmem:[%s3 + $0x1c8] sm:$0xf]
    %v265 = vld [vmem:[%s3 + $0x1cc] sm:$0xf]
    %v266 = vld [vmem:[%s3 + $0x1d0] sm:$0xf]
    %v267 = vld [vmem:[%s3 + $0x1d4] sm:$0xf]
    %v268 = vld [vmem:[%s3 + $0x1d8] sm:$0xf]
    %v269 = vld [vmem:[%s3 + $0x1dc] sm:$0xf]
    %v270 = vld [vmem:[%s3 + $0x1e0] sm:$0xf]
    %v271 = vld [vmem:[%s3 + $0x1e4] sm:$0xf]
    %v272 = vld [vmem:[%s3 + $0x1e8] sm:$0xf]
    %v273 = vld [vmem:[%s3 + $0x1ec] sm:$0xf]
    %v274 = vld [vmem:[%s3 + $0x1f0] sm:$0xf]
    %v275 = vld [vmem:[%s3 + $0x1f4] sm:$0xf]
    %v276 = vld [vmem:[%s3 + $0x1f8] sm:$0xf]
    %v277 = vld [vmem:[%s3 + $0x1fc] sm:$0xf]
    %v278 = vld [vmem:[%s3 + $0x200] sm:$0xf]
    %v279 = vld [vmem:[%s3 + $0x204] sm:$0xf]
    %v280 = vld [vmem:[%s3 + $0x208] sm:$0xf]
    %v281 = vld [vmem:[%s3 + $0x20c] sm:$0xf]
    %v282 = vld [vmem:[%s3 + $0x210] sm:$0xf]
    %v283 = vld [vmem:[%s3 + $0x214] sm:$0xf]
    %v284 = vld [vmem:[%s3 + $0x218] sm:$0xf]
    %v285 = vld [vmem:[%s3 + $0x21c] sm:$0xf]
    %v286 = vld [vmem:[%s3 + $0x220] sm:$0xf]
    %v287 = vld [vmem:[%s3 + $0x224] sm:$0xf]
    %v288 = vld [vmem:[%s3 + $0x228] sm:$0xf]
    %v289 = vld [vmem:[%s3 + $0x22c] sm:$0xf]
    %v290 = vld [vmem:[%s3 + $0x230] sm:$0xf]
    %v291 = vld [vmem:[%s3 + $0x234] sm:$0xf]
    %v292 = vld [vmem:[%s3 + $0x238] sm:$0xf]
    %v293 = vld [vmem:[%s3 + $0x23c] sm:$0xf]
    %v294 = vld [vmem:[%s3 + $0x240] sm:$0xf]
    %v295 = vld [vmem:[%s3 + $0x244] sm:$0xf]
    %v296 = vld [vmem:[%s3 + $0x248] sm:$0xf]
    %v297 = vld [vmem:[%s3 + $0x24c] sm:$0xf]
    %v298 = vld [vmem:[%s3 + $0x250] sm:$0xf]
    %v299 = vld [vmem:[%s3 + $0x254] sm:$0xf]
    %v300 = vld [vmem:[%s3 + $0x258] sm:$0xf]
    %v301 = vld [vmem:[%s3 + $0x25c] sm:$0xf]
    %v302 = vld [vmem:[%s3 + $0x260] sm:$0xf]
    %v303 = vld [vmem:[%s3 + $0x264] sm:$0xf]
    %v304 = vld [vmem:[%s3 + $0x268] sm:$0xf]
    %v305 = vld [vmem:[%s3 + $0x26c] sm:$0xf]
    %v306 = vld [vmem:[%s3 + $0x270] sm:$0xf]
    %v307 = vld [vmem:[%s3 + $0x274] sm:$0xf]
    %v308 = vld [vmem:[%s3 + $0x278] sm:$0xf]
    %v309 = vld [vmem:[%s3 + $0x27c] sm:$0xf]
    %v310 = vld [vmem:[%s3 + $0x280] sm:$0xf]
    %v311 = vld [vmem:[%s3 + $0x284] sm:$0xf]
    %v312 = vld [vmem:[%s3 + $0x288] sm:$0xf]
    %v313 = vld [vmem:[%s3 + $0x28c] sm:$0xf]
    %v314 = vld [vmem:[%s3 + $0x290] sm:$0xf]
    %v315 = vld [vmem:[%s3 + $0x294] sm:$0xf]
    %v316 = vld [vmem:[%s3 + $0x298] sm:$0xf]
    %v317 = vld [vmem:[%s3 + $0x29c] sm:$0xf]
    %v318 = vld [vmem:[%s3 + $0x2a0] sm:$0xf]
    %v319 = vld [vmem:[%s3 + $0x2a4] sm:$0xf]
    %v320 = vld [vmem:[%s3 + $0x2a8] sm:$0xf]
    %v321 = vld [vmem:[%s3 + $0x2ac] sm:$0xf]
    %v322 = vld [vmem:[%s3 + $0x2b0] sm:$0xf]
    %v323 = vld [vmem:[%s3 + $0x2b4] sm:$0xf]
    %v324 = vld [vmem:[%s3 + $0x2b8] sm:$0xf]
    %v325 = vld [vmem:[%s3 + $0x2bc] sm:$0xf]
    %v326 = vld [vmem:[%s3 + $0x2c0] sm:$0xf]
    %v327 = vld [vmem:[%s3 + $0x2c4] sm:$0xf]
    %v328 = vld [vmem:[%s3 + $0x2c8] sm:$0xf]
    %v329 = vld [vmem:[%s3 + $0x2cc] sm:$0xf]
    %v330 = vld [vmem:[%s3 + $0x2d0] sm:$0xf]
    %v331 = vld [vmem:[%s3 + $0x2d4] sm:$0xf]
    %v332 = vld [vmem:[%s3 + $0x2d8] sm:$0xf]
    %v333 = vld [vmem:[%s3 + $0x2dc] sm:$0xf]
    %v334 = vld [vmem:[%s3 + $0x2e0] sm:$0xf]
    %v335 = vld [vmem:[%s3 + $0x2e4] sm:$0xf]
    %v336 = vld [vmem:[%s3 + $0x2e8] sm:$0xf]
    %v337 = vld [vmem:[%s3 + $0x2ec] sm:$0xf]
    %v338 = vld [vmem:[%s3 + $0x2f0] sm:$0xf]
    %v339 = vld [vmem:[%s3 + $0x2f4] sm:$0xf]
    %v340 = vld [vmem:[%s3 + $0x2f8] sm:$0xf]
    %v341 = vld [vmem:[%s3 + $0x2fc] sm:$0xf]
    %v342 = vld [vmem:[%s3 + $0x300] sm:$0xf]
    %v343 = vld [vmem:[%s3 + $0x304] sm:$0xf]
    %v344 = vld [vmem:[%s3 + $0x308] sm:$0xf]
    %v345 = vld [vmem:[%s3 + $0x30c] sm:$0xf]
    %v346 = vld [vmem:[%s3 + $0x310] sm:$0xf]
    %v347 = vld [vmem:[%s3 + $0x314] sm:$0xf]
    %v348 = vld [vmem:[%s3 + $0x318] sm:$0xf]
    %v349 = vld [vmem:[%s3 + $0x31c] sm:$0xf]
    %v350 = vld [vmem:[%s3 + $0x320] sm:$0xf]
    %v351 = vld [vmem:[%s3 + $0x324] sm:$0xf]
    %v352 = vld [vmem:[%s3 + $0x328] sm:$0xf]
    %v353 = vld [vmem:[%s3 + $0x32c] sm:$0xf]
    %v354 = vld [vmem:[%s3 + $0x330] sm:$0xf]
    %v355 = vld [vmem:[%s3 + $0x334] sm:$0xf]
    %v356 = vld [vmem:[%s3 + $0x338] sm:$0xf]
    %v357 = vld [vmem:[%s3 + $0x33c] sm:$0xf]
    %v358 = vld [vmem:[%s3 + $0x340] sm:$0xf]
    %v359 = vld [vmem:[%s3 + $0x344] sm:$0xf]
    %v360 = vld [vmem:[%s3 + $0x348] sm:$0xf]
    %v361 = vld [vmem:[%s3 + $0x34c] sm:$0xf]
    %v362 = vld [vmem:[%s3 + $0x350] sm:$0xf]
    %v363 = vld [vmem:[%s3 + $0x354] sm:$0xf]
    %v364 = vld [vmem:[%s3 + $0x358] sm:$0xf]
    %v365 = vld [vmem:[%s3 + $0x35c] sm:$0xf]
    %v366 = vld [vmem:[%s3 + $0x360] sm:$0xf]
    %v367 = vld [vmem:[%s3 + $0x364] sm:$0xf]
    %v368 = vld [vmem:[%s3 + $0x368] sm:$0xf]
    %v369 = vld [vmem:[%s3 + $0x36c] sm:$0xf]
    %v370 = vld [vmem:[%s3 + $0x370] sm:$0xf]
    %v371 = vld [vmem:[%s3 + $0x374] sm:$0xf]
    %v372 = vld [vmem:[%s3 + $0x378] sm:$0xf]
    %v373 = vld [vmem:[%s3 + $0x37c] sm:$0xf]
    %v374 = vld [vmem:[%s3 + $0x380] sm:$0xf]
    %v375 = vld [vmem:[%s3 + $0x384] sm:$0xf]
    %v376 = vld [vmem:[%s3 + $0x388] sm:$0xf]
    %v377 = vld [vmem:[%s3 + $0x38c] sm:$0xf]
    %v378 = vld [vmem:[%s3 + $0x390] sm:$0xf]
    %v379 = vld [vmem:[%s3 + $0x394] sm:$0xf]
    %v380 = vld [vmem:[%s3 + $0x398] sm:$0xf]
    %v381 = vld [vmem:[%s3 + $0x39c] sm:$0xf]
    %v382 = vld [vmem:[%s3 + $0x3a0] sm:$0xf]
    %v383 = vld [vmem:[%s3 + $0x3a4] sm:$0xf]
    %v384 = vld [vmem:[%s3 + $0x3a8] sm:$0xf]
    %v385 = vld [vmem:[%s3 + $0x3ac] sm:$0xf]
    %v386 = vld [vmem:[%s3 + $0x3b0] sm:$0xf]
    %v387 = vld [vmem:[%s3 + $0x3b4] sm:$0xf]
    %v388 = vld [vmem:[%s3 + $0x3b8] sm:$0xf]
    %v389 = vld [vmem:[%s3 + $0x3bc] sm:$0xf]
    %v390 = vld [vmem:[%s3 + $0x3c0] sm:$0xf]
    %v391 = vld [vmem:[%s3 + $0x3c4] sm:$0xf]
    %v392 = vld [vmem:[%s3 + $0x3c8] sm:$0xf]
    %v393 = vld [vmem:[%s3 + $0x3cc] sm:$0xf]
    %v394 = vld [vmem:[%s3 + $0x3d0] sm:$0xf]
    %v395 = vld [vmem:[%s3 + $0x3d4] sm:$0xf]
    %v396 = vld [vmem:[%s3 + $0x3d8] sm:$0xf]
    %v397 = vld [vmem:[%s3 + $0x3dc] sm:$0xf]
    %v398 = vld [vmem:[%s3 + $0x3e0] sm:$0xf]
    %v399 = vld [vmem:[%s3 + $0x3e4] sm:$0xf]
    %v400 = vld [vmem:[%s3 + $0x3e8] sm:$0xf]
    %v401 = vld [vmem:[%s3 + $0x3ec] sm:$0xf]
    %v402 = vld [vmem:[%s3 + $0x3f0] sm:$0xf]
    %v403 = vld [vmem:[%s3 + $0x3f4] sm:$0xf]
    %v404 = vld [vmem:[%s3 + $0x3f8] sm:$0xf]
    %v405 = vld [vmem:[%s3 + $0x3fc] sm:$0xf]
    %v406 = vld [vmem:[%s3 + $0x400] sm:$0xf]
    %v407 = vld [vmem:[%s3 + $0x404] sm:$0xf]
    %v408 = vld [vmem:[%s3 + $0x408] sm:$0xf]
    %v409 = vld [vmem:[%s3 + $0x40c] sm:$0xf]
    %v410 = vld [vmem:[%s3 + $0x410] sm:$0xf]
    %v411 = vld [vmem:[%s3 + $0x414] sm:$0xf]
    %v412 = vld [vmem:[%s3 + $0x418] sm:$0xf]
    %v413 = vld [vmem:[%s3 + $0x41c] sm:$0xf]
    %v414 = vld [vmem:[%s3 + $0x420] sm:$0xf]
    %v415 = vld [vmem:[%s3 + $0x424] sm:$0xf]
    %v416 = vld [vmem:[%s3 + $0x428] sm:$0xf]
    %v417 = vld [vmem:[%s3 + $0x42c] sm:$0xf]
    %v418 = vld [vmem:[%s3 + $0x430] sm:$0xf]
    %v419 = vld [vmem:[%s3 + $0x434] sm:$0xf]
    %v420 = vld [vmem:[%s3 + $0x438] sm:$0xf]
    %v421 = vld [vmem:[%s3 + $0x43c] sm:$0xf]
    %v422 = vld [vmem:[%s3 + $0x440] sm:$0xf]
    %v423 = vld [vmem:[%s3 + $0x444] sm:$0xf]
    %v424 = vld [vmem:[%s3 + $0x448] sm:$0xf]
    %v425 = vld [vmem:[%s3 + $0x44c] sm:$0xf]
    %v426 = vld [vmem:[%s3 + $0x450] sm:$0xf]
    %v427 = vld [vmem:[%s3 + $0x454] sm:$0xf]
    %v428 = vld [vmem:[%s3 + $0x458] sm:$0xf]
    %v429 = vld [vmem:[%s3 + $0x45c] sm:$0xf]
    %v430 = vld [vmem:[%s3 + $0x460] sm:$0xf]
    %v431 = vld [vmem:[%s3 + $0x464] sm:$0xf]
    %v432 = vld [vmem:[%s3 + $0x468] sm:$0xf]
    %v433 = vld [vmem:[%s3 + $0x46c] sm:$0xf]
    %v434 = vld [vmem:[%s3 + $0x470] sm:$0xf]
    %v435 = vld [vmem:[%s3 + $0x474] sm:$0xf]
    %v436 = vld [vmem:[%s3 + $0x478] sm:$0xf]
    %v437 = vld [vmem:[%s3 + $0x47c] sm:$0xf]
    %v438 = vld [vmem:[%s3 + $0x480] sm:$0xf]
    %v439 = vld [vmem:[%s3 + $0x484] sm:$0xf]
    %v440 = vld [vmem:[%s3 + $0x488] sm:$0xf]
    %v441 = vld [vmem:[%s3 + $0x48c] sm:$0xf]
    %v442 = vld [vmem:[%s3 + $0x490] sm:$0xf]
    %v443 = vld [vmem:[%s3 + $0x494] sm:$0xf]
    %v444 = vld [vmem:[%s3 + $0x498] sm:$0xf]
    %v445 = vld [vmem:[%s3 + $0x49c] sm:$0xf]
    %v446 = vld [vmem:[%s3 + $0x4a0] sm:$0xf]
    %v447 = vld [vmem:[%s3 + $0x4a4] sm:$0xf]
    %v448 = vld [vmem:[%s3 + $0x4a8] sm:$0xf]
    %v449 = vld [vmem:[%s3 + $0x4ac] sm:$0xf]
    %v450 = vld [vmem:[%s3 + $0x4b0] sm:$0xf]
    %v451 = vld [vmem:[%s3 + $0x4b4] sm:$0xf]
    %v452 = vld [vmem:[%s3 + $0x4b8] sm:$0xf]
    %v453 = vld [vmem:[%s3 + $0x4bc] sm:$0xf]
    %v454 = vld [vmem:[%s3 + $0x4c0] sm:$0xf]
    %v455 = vld [vmem:[%s3 + $0x4c4] sm:$0xf]
    %v456 = vld [vmem:[%s3 + $0x4c8] sm:$0xf]
    %v457 = vld [vmem:[%s3 + $0x4cc] sm:$0xf]
    %v458 = vld [vmem:[%s3 + $0x4d0] sm:$0xf]
    %v459 = vld [vmem:[%s3 + $0x4d4] sm:$0xf]
    %v460 = vld [vmem:[%s3 + $0x4d8] sm:$0xf]
    %v461 = vld [vmem:[%s3 + $0x4dc] sm:$0xf]
    %v462 = vld [vmem:[%s3 + $0x4e0] sm:$0xf]
    %v463 = vld [vmem:[%s3 + $0x4e4] sm:$0xf]
    %v464 = vld [vmem:[%s3 + $0x4e8] sm:$0xf]
    %v465 = vld [vmem:[%s3 + $0x4ec] sm:$0xf]
    %v466 = vld [vmem:[%s3 + $0x4f0] sm:$0xf]
    %v467 = vld [vmem:[%s3 + $0x4f4] sm:$0xf]
    %v468 = vld [vmem:[%s3 + $0x4f8] sm:$0xf]
    %v469 = vld [vmem:[%s3 + $0x4fc] sm:$0xf]
    %v470 = vld [vmem:[%s3 + $0x500] sm:$0xf]
    %v471 = vld [vmem:[%s3 + $0x504] sm:$0xf]
    %v472 = vld [vmem:[%s3 + $0x508] sm:$0xf]
    %v473 = vld [vmem:[%s3 + $0x50c] sm:$0xf]
    %v474 = vld [vmem:[%s3 + $0x510] sm:$0xf]
    %v475 = vld [vmem:[%s3 + $0x514] sm:$0xf]
    %v476 = vld [vmem:[%s3 + $0x518] sm:$0xf]
    %v477 = vld [vmem:[%s3 + $0x51c] sm:$0xf]
    %v478 = vld [vmem:[%s3 + $0x520] sm:$0xf]
    %v479 = vld [vmem:[%s3 + $0x524] sm:$0xf]
    %v480 = vld [vmem:[%s3 + $0x528] sm:$0xf]
    %v481 = vld [vmem:[%s3 + $0x52c] sm:$0xf]
    %v482 = vld [vmem:[%s3 + $0x530] sm:$0xf]
    %v483 = vld [vmem:[%s3 + $0x534] sm:$0xf]
    %v484 = vld [vmem:[%s3 + $0x538] sm:$0xf]
    %v485 = vld [vmem:[%s3 + $0x53c] sm:$0xf]
    %v486 = vld [vmem:[%s3 + $0x540] sm:$0xf]
    %v487 = vld [vmem:[%s3 + $0x544] sm:$0xf]
    %v488 = vld [vmem:[%s3 + $0x548] sm:$0xf]
    %v489 = vld [vmem:[%s3 + $0x54c] sm:$0xf]
    %v490 = vld [vmem:[%s3 + $0x550] sm:$0xf]
    %v491 = vld [vmem:[%s3 + $0x554] sm:$0xf]
    %v492 = vld [vmem:[%s3 + $0x558] sm:$0xf]
    %v493 = vld [vmem:[%s3 + $0x55c] sm:$0xf]
    %v494 = vld [vmem:[%s3 + $0x560] sm:$0xf]
    %v495 = vld [vmem:[%s3 + $0x564] sm:$0xf]
    %v496 = vld [vmem:[%s3 + $0x568] sm:$0xf]
    %v497 = vld [vmem:[%s3 + $0x56c] sm:$0xf]
    %v498 = vld [vmem:[%s3 + $0x570] sm:$0xf]
    %v499 = vld [vmem:[%s3 + $0x574] sm:$0xf]
    %v500 = vld [vmem:[%s3 + $0x578] sm:$0xf]
    %v501 = vld [vmem:[%s3 + $0x57c] sm:$0xf]
    %v502 = vld [vmem:[%s3 + $0x580] sm:$0xf]
    %v503 = vld [vmem:[%s3 + $0x584] sm:$0xf]
    %v504 = vld [vmem:[%s3 + $0x588] sm:$0xf]
    %v505 = vld [vmem:[%s3 + $0x58c] sm:$0xf]
    %v506 = vld [vmem:[%s3 + $0x590] sm:$0xf]
    %v507 = vld [vmem:[%s3 + $0x594] sm:$0xf]
    %v508 = vld [vmem:[%s3 + $0x598] sm:$0xf]
    %v509 = vld [vmem:[%s3 + $0x59c] sm:$0xf]
    %v510 = vld [vmem:[%s3 + $0x5a0] sm:$0xf]
    %v511 = vld [vmem:[%s3 + $0x5a4] sm:$0xf]
    %v512 = vld [vmem:[%s3 + $0x5a8] sm:$0xf]
    %v513 = vld [vmem:[%s3 + $0x5ac] sm:$0xf]
    %v514 = vld [vmem:[%s3 + $0x5b0] sm:$0xf]
    %v515 = vld [vmem:[%s3 + $0x5b4] sm:$0xf]
    %v516 = vld [vmem:[%s3 + $0x5b8] sm:$0xf]
    %v517 = vld [vmem:[%s3 + $0x5bc] sm:$0xf]
    %v518 = vld [vmem:[%s3 + $0x5c0] sm:$0xf]
    %v519 = vld [vmem:[%s3 + $0x5c4] sm:$0xf]
    %v520 = vld [vmem:[%s3 + $0x5c8] sm:$0xf]
    %v521 = vld [vmem:[%s3 + $0x5cc] sm:$0xf]
    %v522 = vld [vmem:[%s3 + $0x5d0] sm:$0xf]
    %v523 = vld [vmem:[%s3 + $0x5d4] sm:$0xf]
    %v524 = vld [vmem:[%s3 + $0x5d8] sm:$0xf]
    %v525 = vld [vmem:[%s3 + $0x5dc] sm:$0xf]
    %v526 = vld [vmem:[%s3 + $0x5e0] sm:$0xf]
    %v527 = vld [vmem:[%s3 + $0x5e4] sm:$0xf]
    %v528 = vld [vmem:[%s3 + $0x5e8] sm:$0xf]
    %v529 = vld [vmem:[%s3 + $0x5ec] sm:$0xf]
    %v530 = vld [vmem:[%s3 + $0x5f0] sm:$0xf]
    %v531 = vld [vmem:[%s3 + $0x5f4] sm:$0xf]
    %v532 = vld [vmem:[%s3 + $0x5f8] sm:$0xf]
    %v533 = vld [vmem:[%s3 + $0x5fc] sm:$0xf]
    %v534 = vld [vmem:[%s3 + $0x600] sm:$0xf]
    %v535 = vld [vmem:[%s3 + $0x604] sm:$0xf]
    %v536 = vld [vmem:[%s3 + $0x608] sm:$0xf]
    %v537 = vld [vmem:[%s3 + $0x60c] sm:$0xf]
    %v538 = vld [vmem:[%s3 + $0x610] sm:$0xf]
    %v539 = vld [vmem:[%s3 + $0x614] sm:$0xf]
    %v540 = vld [vmem:[%s3 + $0x618] sm:$0xf]
    %v541 = vld [vmem:[%s3 + $0x61c] sm:$0xf]
    %v542 = vld [vmem:[%s3 + $0x620] sm:$0xf]
    %v543 = vld [vmem:[%s3 + $0x624] sm:$0xf]
    %v544 = vld [vmem:[%s3 + $0x628] sm:$0xf]
    %v545 = vld [vmem:[%s3 + $0x62c] sm:$0xf]
    %v546 = vld [vmem:[%s3 + $0x630] sm:$0xf]
    %v547 = vld [vmem:[%s3 + $0x634] sm:$0xf]
    %v548 = vld [vmem:[%s3 + $0x638] sm:$0xf]
    %v549 = vld [vmem:[%s3 + $0x63c] sm:$0xf]
    %v550 = vld [vmem:[%s3 + $0x640] sm:$0xf]
    %v551 = vld [vmem:[%s3 + $0x644] sm:$0xf]
    %v552 = vld [vmem:[%s3 + $0x648] sm:$0xf]
    %v553 = vld [vmem:[%s3 + $0x64c] sm:$0xf]
    %v554 = vld [vmem:[%s3 + $0x650] sm:$0xf]
    %v555 = vld [vmem:[%s3 + $0x654] sm:$0xf]
    %v556 = vld [vmem:[%s3 + $0x658] sm:$0xf]
    %v557 = vld [vmem:[%s3 + $0x65c] sm:$0xf]
    %v558 = vld [vmem:[%s3 + $0x660] sm:$0xf]
    %v559 = vld [vmem:[%s3 + $0x664] sm:$0xf]
    %v560 = vld [vmem:[%s3 + $0x668] sm:$0xf]
    %v561 = vld [vmem:[%s3 + $0x66c] sm:$0xf]
    %v562 = vld [vmem:[%s3 + $0x670] sm:$0xf]
    %v563 = vld [vmem:[%s3 + $0x674] sm:$0xf]
    %v564 = vld [vmem:[%s3 + $0x678] sm:$0xf]
    %v565 = vld [vmem:[%s3 + $0x67c] sm:$0xf]
    %v566 = vld [vmem:[%s3 + $0x680] sm:$0xf]
    %v567 = vld [vmem:[%s3 + $0x684] sm:$0xf]
    %v568 = vld [vmem:[%s3 + $0x688] sm:$0xf]
    %v569 = vld [vmem:[%s3 + $0x68c] sm:$0xf]
    %v570 = vld [vmem:[%s3 + $0x690] sm:$0xf]
    %v571 = vld [vmem:[%s3 + $0x694] sm:$0xf]
    %v572 = vld [vmem:[%s3 + $0x698] sm:$0xf]
    %v573 = vld [vmem:[%s3 + $0x69c] sm:$0xf]
    %v574 = vld [vmem:[%s3 + $0x6a0] sm:$0xf]
    %v575 = vld [vmem:[%s3 + $0x6a4] sm:$0xf]
    %v576 = vld [vmem:[%s3 + $0x6a8] sm:$0xf]
    %v577 = vld [vmem:[%s3 + $0x6ac] sm:$0xf]
    %v578 = vld [vmem:[%s3 + $0x6b0] sm:$0xf]
    %v579 = vld [vmem:[%s3 + $0x6b4] sm:$0xf]
    %v580 = vld [vmem:[%s3 + $0x6b8] sm:$0xf]
    %v581 = vld [vmem:[%s3 + $0x6bc] sm:$0xf]
    %v582 = vld [vmem:[%s3 + $0x6c0] sm:$0xf]
    %v583 = vld [vmem:[%s3 + $0x6c4] sm:$0xf]
    %v584 = vld [vmem:[%s3 + $0x6c8] sm:$0xf]
    %v585 = vld [vmem:[%s3 + $0x6cc] sm:$0xf]
    %v586 = vld [vmem:[%s3 + $0x6d0] sm:$0xf]
    %v587 = vld [vmem:[%s3 + $0x6d4] sm:$0xf]
    %v588 = vld [vmem:[%s3 + $0x6d8] sm:$0xf]
    %v589 = vld [vmem:[%s3 + $0x6dc] sm:$0xf]
    %v590 = vld [vmem:[%s3 + $0x6e0] sm:$0xf]
    %v591 = vld [vmem:[%s3 + $0x6e4] sm:$0xf]
    %v592 = vld [vmem:[%s3 + $0x6e8] sm:$0xf]
    %v593 = vld [vmem:[%s3 + $0x6ec] sm:$0xf]
    %v594 = vld [vmem:[%s3 + $0x6f0] sm:$0xf]
    %v595 = vld [vmem:[%s3 + $0x6f4] sm:$0xf]
    %v596 = vld [vmem:[%s3 + $0x6f8] sm:$0xf]
    %v597 = vld [vmem:[%s3 + $0x6fc] sm:$0xf]
    %v598 = vld [vmem:[%s3 + $0x700] sm:$0xf]
    %v599 = vld [vmem:[%s3 + $0x704] sm:$0xf]
    %v600 = vld [vmem:[%s3 + $0x708] sm:$0xf]
    %v601 = vld [vmem:[%s3 + $0x70c] sm:$0xf]
    %v602 = vld [vmem:[%s3 + $0x710] sm:$0xf]
    %v603 = vld [vmem:[%s3 + $0x714] sm:$0xf]
    %v604 = vld [vmem:[%s3 + $0x718] sm:$0xf]
    %v605 = vld [vmem:[%s3 + $0x71c] sm:$0xf]
    %v606 = vld [vmem:[%s3 + $0x720] sm:$0xf]
    %v607 = vld [vmem:[%s3 + $0x724] sm:$0xf]
    %v608 = vld [vmem:[%s3 + $0x728] sm:$0xf]
    %v609 = vld [vmem:[%s3 + $0x72c] sm:$0xf]
    %v610 = vld [vmem:[%s3 + $0x730] sm:$0xf]
    %v611 = vld [vmem:[%s3 + $0x734] sm:$0xf]
    %v612 = vld [vmem:[%s3 + $0x738] sm:$0xf]
    %v613 = vld [vmem:[%s3 + $0x73c] sm:$0xf]
    %v614 = vld [vmem:[%s3 + $0x740] sm:$0xf]
    %v615 = vld [vmem:[%s3 + $0x744] sm:$0xf]
    %v616 = vld [vmem:[%s3 + $0x748] sm:$0xf]
    %v617 = vld [vmem:[%s3 + $0x74c] sm:$0xf]
    %v618 = vld [vmem:[%s3 + $0x750] sm:$0xf]
    %v619 = vld [vmem:[%s3 + $0x754] sm:$0xf]
    %v620 = vld [vmem:[%s3 + $0x758] sm:$0xf]
    %v621 = vld [vmem:[%s3 + $0x75c] sm:$0xf]
    %v622 = vld [vmem:[%s3 + $0x760] sm:$0xf]
    %v623 = vld [vmem:[%s3 + $0x764] sm:$0xf]
    %v624 = vld [vmem:[%s3 + $0x768] sm:$0xf]
    %v625 = vld [vmem:[%s3 + $0x76c] sm:$0xf]
    %v626 = vld [vmem:[%s3 + $0x770] sm:$0xf]
    %v627 = vld [vmem:[%s3 + $0x774] sm:$0xf]
    %v628 = vld [vmem:[%s3 + $0x778] sm:$0xf]
    %v629 = vld [vmem:[%s3 + $0x77c] sm:$0xf]
    %v630 = vld [vmem:[%s3 + $0x780] sm:$0xf]
    %v631 = vld [vmem:[%s3 + $0x784] sm:$0xf]
    %v632 = vld [vmem:[%s3 + $0x788] sm:$0xf]
    %v633 = vld [vmem:[%s3 + $0x78c] sm:$0xf]
    %v634 = vld [vmem:[%s3 + $0x790] sm:$0xf]
    %v635 = vld [vmem:[%s3 + $0x794] sm:$0xf]
    %v636 = vld [vmem:[%s3 + $0x798] sm:$0xf]
    %v637 = vld [vmem:[%s3 + $0x79c] sm:$0xf]
    %v638 = vld [vmem:[%s3 + $0x7a0] sm:$0xf]
    %v639 = vld [vmem:[%s3 + $0x7a4] sm:$0xf]
    %v640 = vld [vmem:[%s3 + $0x7a8] sm:$0xf]
    %v641 = vld [vmem:[%s3 + $0x7ac] sm:$0xf]
    %v642 = vld [vmem:[%s3 + $0x7b0] sm:$0xf]
    %v643 = vld [vmem:[%s3 + $0x7b4] sm:$0xf]
    %v644 = vld [vmem:[%s3 + $0x7b8] sm:$0xf]
    %v645 = vld [vmem:[%s3 + $0x7bc] sm:$0xf]
    %v646 = vld [vmem:[%s3 + $0x7c0] sm:$0xf]
    %v647 = vld [vmem:[%s3 + $0x7c4] sm:$0xf]
    %v648 = vld [vmem:[%s3 + $0x7c8] sm:$0xf]
    %v649 = vld [vmem:[%s3 + $0x7cc] sm:$0xf]
    %v650 = vld [vmem:[%s3 + $0x7d0] sm:$0xf]
    %v651 = vld [vmem:[%s3 + $0x7d4] sm:$0xf]
    %v652 = vld [vmem:[%s3 + $0x7d8] sm:$0xf]
    %v653 = vld [vmem:[%s3 + $0x7dc] sm:$0xf]
    %v654 = vld [vmem:[%s3 + $0x7e0] sm:$0xf]
    %v655 = vld [vmem:[%s3 + $0x7e4] sm:$0xf]
    %v656 = vld [vmem:[%s3 + $0x7e8] sm:$0xf]
    %v657 = vld [vmem:[%s3 + $0x7ec] sm:$0xf]
    %v658 = vld [vmem:[%s3 + $0x7f0] sm:$0xf]
    %v659 = vld [vmem:[%s3 + $0x7f4] sm:$0xf]
    %v660 = vld [vmem:[%s3 + $0x7f8] sm:$0xf]
    %v661 = vld [vmem:[%s3 + $0x7fc] sm:$0xf]
    %v662 = vld [vmem:[%s3 + $0x800] sm:$0xf]
    %v663 = vld [vmem:[%s3 + $0x804] sm:$0xf]
    %v664 = vld [vmem:[%s3 + $0x808] sm:$0xf]
    %v665 = vld [vmem:[%s3 + $0x80c] sm:$0xf]
    %v666 = vld [vmem:[%s3 + $0x810] sm:$0xf]
    %v667 = vld [vmem:[%s3 + $0x814] sm:$0xf]
    %v668 = vld [vmem:[%s3 + $0x818] sm:$0xf]
    %v669 = vld [vmem:[%s3 + $0x81c] sm:$0xf]
    %v670 = vld [vmem:[%s3 + $0x820] sm:$0xf]
    %v671 = vld [vmem:[%s3 + $0x824] sm:$0xf]
    %v672 = vld [vmem:[%s3 + $0x828] sm:$0xf]
    %v673 = vld [vmem:[%s3 + $0x82c] sm:$0xf]
    %v674 = vld [vmem:[%s3 + $0x830] sm:$0xf]
    %v675 = vld [vmem:[%s3 + $0x834] sm:$0xf]
    %v676 = vld [vmem:[%s3 + $0x838] sm:$0xf]
    %v677 = vld [vmem:[%s3 + $0x83c] sm:$0xf]
    %v678 = vld [vmem:[%s3 + $0x840] sm:$0xf]
    %v679 = vld [vmem:[%s3 + $0x844] sm:$0xf]
    %v680 = vld [vmem:[%s3 + $0x848] sm:$0xf]
    %v681 = vld [vmem:[%s3 + $0x84c] sm:$0xf]
    %v682 = vld [vmem:[%s3 + $0x850] sm:$0xf]
    %v683 = vld [vmem:[%s3 + $0x854] sm:$0xf]
    %v684 = vld [vmem:[%s3 + $0x858] sm:$0xf]
    %v685 = vld [vmem:[%s3 + $0x85c] sm:$0xf]
    %v686 = vld [vmem:[%s3 + $0x860] sm:$0xf]
    %v687 = vld [vmem:[%s3 + $0x864] sm:$0xf]
    %v688 = vld [vmem:[%s3 + $0x868] sm:$0xf]
    %v689 = vld [vmem:[%s3 + $0x86c] sm:$0xf]
    %v690 = vld [vmem:[%s3 + $0x870] sm:$0xf]
    %v691 = vld [vmem:[%s3 + $0x874] sm:$0xf]
    %v692 = vld [vmem:[%s3 + $0x878] sm:$0xf]
    %v693 = vld [vmem:[%s3 + $0x87c] sm:$0xf]
    %v694 = vld [vmem:[%s3 + $0x880] sm:$0xf]
    %v695 = vld [vmem:[%s3 + $0x884] sm:$0xf]
    %v696 = vld [vmem:[%s3 + $0x888] sm:$0xf]
    %v697 = vld [vmem:[%s3 + $0x88c] sm:$0xf]
    %v698 = vld [vmem:[%s3 + $0x890] sm:$0xf]
    %v699 = vld [vmem:[%s3 + $0x894] sm:$0xf]
    %v700 = vld [vmem:[%s3 + $0x898] sm:$0xf]
    %v701 = vld [vmem:[%s3 + $0x89c] sm:$0xf]
    %v702 = vld [vmem:[%s3 + $0x8a0] sm:$0xf]
    %v703 = vld [vmem:[%s3 + $0x8a4] sm:$0xf]
    %v704 = vld [vmem:[%s3 + $0x8a8] sm:$0xf]
    %v705 = vld [vmem:[%s3 + $0x8ac] sm:$0xf]
    %v706 = vld [vmem:[%s3 + $0x8b0] sm:$0xf]
    %v707 = vld [vmem:[%s3 + $0x8b4] sm:$0xf]
    %v708 = vld [vmem:[%s3 + $0x8b8] sm:$0xf]
    %v709 = vld [vmem:[%s3 + $0x8bc] sm:$0xf]
    %v710 = vld [vmem:[%s3 + $0x8c0] sm:$0xf]
    %v711 = vld [vmem:[%s3 + $0x8c4] sm:$0xf]
    %v712 = vld [vmem:[%s3 + $0x8c8] sm:$0xf]
    %v713 = vld [vmem:[%s3 + $0x8cc] sm:$0xf]
    %v714 = vld [vmem:[%s3 + $0x8d0] sm:$0xf]
    %v715 = vld [vmem:[%s3 + $0x8d4] sm:$0xf]
    %v716 = vld [vmem:[%s3 + $0x8d8] sm:$0xf]
    %v717 = vld [vmem:[%s3 + $0x8dc] sm:$0xf]
    %v718 = vld [vmem:[%s3 + $0x8e0] sm:$0xf]
    %v719 = vld [vmem:[%s3 + $0x8e4] sm:$0xf]
    %v720 = vld [vmem:[%s3 + $0x8e8] sm:$0xf]
    %v721 = vld [vmem:[%s3 + $0x8ec] sm:$0xf]
    %v722 = vld [vmem:[%s3 + $0x8f0] sm:$0xf]
    %v723 = vld [vmem:[%s3 + $0x8f4] sm:$0xf]
    %v724 = vld [vmem:[%s3 + $0x8f8] sm:$0xf]
    %v725 = vld [vmem:[%s3 + $0x8fc] sm:$0xf]
    %v726 = vld [vmem:[%s3 + $0x900] sm:$0xf]
    %v727 = vld [vmem:[%s3 + $0x904] sm:$0xf]
    %v728 = vld [vmem:[%s3 + $0x908] sm:$0xf]
    %v729 = vld [vmem:[%s3 + $0x90c] sm:$0xf]
    %v730 = vld [vmem:[%s3 + $0x910] sm:$0xf]
    %v731 = vld [vmem:[%s3 + $0x914] sm:$0xf]
    %v732 = vld [vmem:[%s3 + $0x918] sm:$0xf]
    %v733 = vld [vmem:[%s3 + $0x91c] sm:$0xf]
    %v734 = vld [vmem:[%s3 + $0x920] sm:$0xf]
    %v735 = vld [vmem:[%s3 + $0x924] sm:$0xf]
    %v736 = vld [vmem:[%s3 + $0x928] sm:$0xf]
    %v737 = vld [vmem:[%s3 + $0x92c] sm:$0xf]
    %v738 = vld [vmem:[%s3 + $0x930] sm:$0xf]
    %v739 = vld [vmem:[%s3 + $0x934] sm:$0xf]
    %v740 = vld [vmem:[%s3 + $0x938] sm:$0xf]
    %v741 = vld [vmem:[%s3 + $0x93c] sm:$0xf]
    %v742 = vld [vmem:[%s3 + $0x940] sm:$0xf]
    %v743 = vld [vmem:[%s3 + $0x944] sm:$0xf]
    %v744 = vld [vmem:[%s3 + $0x948] sm:$0xf]
    %v745 = vld [vmem:[%s3 + $0x94c] sm:$0xf]
    %v746 = vld [vmem:[%s3 + $0x950] sm:$0xf]
    %v747 = vld [vmem:[%s3 + $0x954] sm:$0xf]
    %v748 = vld [vmem:[%s3 + $0x958] sm:$0xf]
    %v749 = vld [vmem:[%s3 + $0x95c] sm:$0xf]
    %v750 = vld [vmem:[%s3 + $0x960] sm:$0xf]
    %v751 = vld [vmem:[%s3 + $0x964] sm:$0xf]
    %v752 = vld [vmem:[%s3 + $0x968] sm:$0xf]
    %v753 = vld [vmem:[%s3 + $0x96c] sm:$0xf]
    %v754 = vld [vmem:[%s3 + $0x970] sm:$0xf]
    %v755 = vld [vmem:[%s3 + $0x974] sm:$0xf]
    %v756 = vld [vmem:[%s3 + $0x978] sm:$0xf]
    %v757 = vld [vmem:[%s3 + $0x97c] sm:$0xf]
    %v758 = vld [vmem:[%s3 + $0x980] sm:$0xf]
    %v759 = vld [vmem:[%s3 + $0x984] sm:$0xf]
    %v760 = vld [vmem:[%s3 + $0x988] sm:$0xf]
    %v761 = vld [vmem:[%s3 + $0x98c] sm:$0xf]
    %v762 = vld [vmem:[%s3 + $0x990] sm:$0xf]
    %v763 = vld [vmem:[%s3 + $0x994] sm:$0xf]
    %v764 = vld [vmem:[%s3 + $0x998] sm:$0xf]
    %v765 = vld [vmem:[%s3 + $0x99c] sm:$0xf]
    %v766 = vld [vmem:[%s3 + $0x9a0] sm:$0xf]
    %v767 = vld [vmem:[%s3 + $0x9a4] sm:$0xf]
    %v768 = vld [vmem:[%s3 + $0x9a8] sm:$0xf]
    %v769 = vld [vmem:[%s3 + $0x9ac] sm:$0xf]
    %v770 = vld [vmem:[%s3 + $0x9b0] sm:$0xf]
    %v771 = vld [vmem:[%s3 + $0x9b4] sm:$0xf]
    %v772 = vld [vmem:[%s3 + $0x9b8] sm:$0xf]
    %v773 = vld [vmem:[%s3 + $0x9bc] sm:$0xf]
    %v774 = vld [vmem:[%s3 + $0x9c0] sm:$0xf]
    %v775 = vld [vmem:[%s3 + $0x9c4] sm:$0xf]
    %v776 = vld [vmem:[%s3 + $0x9c8] sm:$0xf]
    %v777 = vld [vmem:[%s3 + $0x9cc] sm:$0xf]
    %v778 = vld [vmem:[%s3 + $0x9d0] sm:$0xf]
    %v779 = vld [vmem:[%s3 + $0x9d4] sm:$0xf]
    %v780 = vld [vmem:[%s3 + $0x9d8] sm:$0xf]
    %v781 = vld [vmem:[%s3 + $0x9dc] sm:$0xf]
    %v782 = vld [vmem:[%s3 + $0x9e0] sm:$0xf]
    %v783 = vld [vmem:[%s3 + $0x9e4] sm:$0xf]
    %v784 = vld [vmem:[%s3 + $0x9e8] sm:$0xf]
    %v785 = vld [vmem:[%s3 + $0x9ec] sm:$0xf]
    %v786 = vld [vmem:[%s3 + $0x9f0] sm:$0xf]
    %v787 = vld [vmem:[%s3 + $0x9f4] sm:$0xf]
    %v788 = vld [vmem:[%s3 + $0x9f8] sm:$0xf]
    %v789 = vld [vmem:[%s3 + $0x9fc] sm:$0xf]
    %v790 = vld [vmem:[%s3 + $0xa00] sm:$0xf]
    %v791 = vld [vmem:[%s3 + $0xa04] sm:$0xf]
    %v792 = vld [vmem:[%s3 + $0xa08] sm:$0xf]
    %v793 = vld [vmem:[%s3 + $0xa0c] sm:$0xf]
    %v794 = vld [vmem:[%s3 + $0xa10] sm:$0xf]
    %v795 = vld [vmem:[%s3 + $0xa14] sm:$0xf]
    %v796 = vld [vmem:[%s3 + $0xa18] sm:$0xf]
    %v797 = vld [vmem:[%s3 + $0xa1c] sm:$0xf]
    %v798 = vld [vmem:[%s3 + $0xa20] sm:$0xf]
    %v799 = vld [vmem:[%s3 + $0xa24] sm:$0xf]
    %v800 = vld [vmem:[%s3 + $0xa28] sm:$0xf]
    %v801 = vld [vmem:[%s3 + $0xa2c] sm:$0xf]
    %v802 = vld [vmem:[%s3 + $0xa30] sm:$0xf]
    %v803 = vld [vmem:[%s3 + $0xa34] sm:$0xf]
    %v804 = vld [vmem:[%s3 + $0xa38] sm:$0xf]
    %v805 = vld [vmem:[%s3 + $0xa3c] sm:$0xf]
    %v806 = vld [vmem:[%s3 + $0xa40] sm:$0xf]
    %v807 = vld [vmem:[%s3 + $0xa44] sm:$0xf]
    %v808 = vld [vmem:[%s3 + $0xa48] sm:$0xf]
    %v809 = vld [vmem:[%s3 + $0xa4c] sm:$0xf]
    %v810 = vld [vmem:[%s3 + $0xa50] sm:$0xf]
    %v811 = vld [vmem:[%s3 + $0xa54] sm:$0xf]
    %v812 = vld [vmem:[%s3 + $0xa58] sm:$0xf]
    %v813 = vld [vmem:[%s3 + $0xa5c] sm:$0xf]
    %v814 = vld [vmem:[%s3 + $0xa60] sm:$0xf]
    %v815 = vld [vmem:[%s3 + $0xa64] sm:$0xf]
    %v816 = vld [vmem:[%s3 + $0xa68] sm:$0xf]
    %v817 = vld [vmem:[%s3 + $0xa6c] sm:$0xf]
    %v818 = vld [vmem:[%s3 + $0xa70] sm:$0xf]
    %v819 = vld [vmem:[%s3 + $0xa74] sm:$0xf]
    %v820 = vld [vmem:[%s3 + $0xa78] sm:$0xf]
    %v821 = vld [vmem:[%s3 + $0xa7c] sm:$0xf]
    %v822 = vld [vmem:[%s3 + $0xa80] sm:$0xf]
    %v823 = vld [vmem:[%s3 + $0xa84] sm:$0xf]
    %v824 = vld [vmem:[%s3 + $0xa88] sm:$0xf]
    %v825 = vld [vmem:[%s3 + $0xa8c] sm:$0xf]
    %v826 = vld [vmem:[%s3 + $0xa90] sm:$0xf]
    %v827 = vld [vmem:[%s3 + $0xa94] sm:$0xf]
    %v828 = vld [vmem:[%s3 + $0xa98] sm:$0xf]
    %v829 = vld [vmem:[%s3 + $0xa9c] sm:$0xf]
    %v830 = vld [vmem:[%s3 + $0xaa0] sm:$0xf]
    %v831 = vld [vmem:[%s3 + $0xaa4] sm:$0xf]
    %v832 = vld [vmem:[%s3 + $0xaa8] sm:$0xf]
    %v833 = vld [vmem:[%s3 + $0xaac] sm:$0xf]
    %v834 = vld [vmem:[%s3 + $0xab0] sm:$0xf]
    %v835 = vld [vmem:[%s3 + $0xab4] sm:$0xf]
    %v836 = vld [vmem:[%s3 + $0xab8] sm:$0xf]
    %v837 = vld [vmem:[%s3 + $0xabc] sm:$0xf]
    %v838 = vld [vmem:[%s3 + $0xac0] sm:$0xf]
    %v839 = vld [vmem:[%s3 + $0xac4] sm:$0xf]
    %v840 = vld [vmem:[%s3 + $0xac8] sm:$0xf]
    %v841 = vld [vmem:[%s3 + $0xacc] sm:$0xf]
    %v842 = vld [vmem:[%s3 + $0xad0] sm:$0xf]
    %v843 = vld [vmem:[%s3 + $0xad4] sm:$0xf]
    %v844 = vld [vmem:[%s3 + $0xad8] sm:$0xf]
    %v845 = vld [vmem:[%s3 + $0xadc] sm:$0xf]
    %v846 = vld [vmem:[%s3 + $0xae0] sm:$0xf]
    %v847 = vld [vmem:[%s3 + $0xae4] sm:$0xf]
    %v848 = vld [vmem:[%s3 + $0xae8] sm:$0xf]
    %v849 = vld [vmem:[%s3 + $0xaec] sm:$0xf]
    %v850 = vld [vmem:[%s3 + $0xaf0] sm:$0xf]
    %v851 = vld [vmem:[%s3 + $0xaf4] sm:$0xf]
    %v852 = vld [vmem:[%s3 + $0xaf8] sm:$0xf]
    %v853 = vld [vmem:[%s3 + $0xafc] sm:$0xf]
    %v854 = vld [vmem:[%s3 + $0xb00] sm:$0xf]
    %v855 = vld [vmem:[%s3 + $0xb04] sm:$0xf]
    %v856 = vld [vmem:[%s3 + $0xb08] sm:$0xf]
    %v857 = vld [vmem:[%s3 + $0xb0c] sm:$0xf]
    %v858 = vld [vmem:[%s3 + $0xb10] sm:$0xf]
    %v859 = vld [vmem:[%s3 + $0xb14] sm:$0xf]
    %v860 = vld [vmem:[%s3 + $0xb18] sm:$0xf]
    %v861 = vld [vmem:[%s3 + $0xb1c] sm:$0xf]
    %v862 = vld [vmem:[%s3 + $0xb20] sm:$0xf]
    %v863 = vld [vmem:[%s3 + $0xb24] sm:$0xf]
    %v864 = vld [vmem:[%s3 + $0xb28] sm:$0xf]
    %v865 = vld [vmem:[%s3 + $0xb2c] sm:$0xf]
    %v866 = vld [vmem:[%s3 + $0xb30] sm:$0xf]
    %v867 = vld [vmem:[%s3 + $0xb34] sm:$0xf]
    %v868 = vld [vmem:[%s3 + $0xb38] sm:$0xf]
    %v869 = vld [vmem:[%s3 + $0xb3c] sm:$0xf]
    %v870 = vld [vmem:[%s3 + $0xb40] sm:$0xf]
    %v871 = vld [vmem:[%s3 + $0xb44] sm:$0xf]
    %v872 = vld [vmem:[%s3 + $0xb48] sm:$0xf]
    %v873 = vld [vmem:[%s3 + $0xb4c] sm:$0xf]
    %v874 = vld [vmem:[%s3 + $0xb50] sm:$0xf]
    %v875 = vld [vmem:[%s3 + $0xb54] sm:$0xf]
    %v876 = vld [vmem:[%s3 + $0xb58] sm:$0xf]
    %v877 = vld [vmem:[%s3 + $0xb5c] sm:$0xf]
    %v878 = vld [vmem:[%s3 + $0xb60] sm:$0xf]
    %v879 = vld [vmem:[%s3 + $0xb64] sm:$0xf]
    %v880 = vld [vmem:[%s3 + $0xb68] sm:$0xf]
    %v881 = vld [vmem:[%s3 + $0xb6c] sm:$0xf]
    %v882 = vld [vmem:[%s3 + $0xb70] sm:$0xf]
    %v883 = vld [vmem:[%s3 + $0xb74] sm:$0xf]
    %v884 = vld [vmem:[%s3 + $0xb78] sm:$0xf]
    %v885 = vld [vmem:[%s3 + $0xb7c] sm:$0xf]
    %v886 = vld [vmem:[%s3 + $0xb80] sm:$0xf]
    %v887 = vld [vmem:[%s3 + $0xb84] sm:$0xf]
    %v888 = vld [vmem:[%s3 + $0xb88] sm:$0xf]
    %v889 = vld [vmem:[%s3 + $0xb8c] sm:$0xf]
    %v890 = vld [vmem:[%s3 + $0xb90] sm:$0xf]
    %v891 = vld [vmem:[%s3 + $0xb94] sm:$0xf]
    %v892 = vld [vmem:[%s3 + $0xb98] sm:$0xf]
    %v893 = vld [vmem:[%s3 + $0xb9c] sm:$0xf]
    %v894 = vld [vmem:[%s3 + $0xba0] sm:$0xf]
    %v895 = vld [vmem:[%s3 + $0xba4] sm:$0xf]
    %v896 = vld [vmem:[%s3 + $0xba8] sm:$0xf]
    %v897 = vld [vmem:[%s3 + $0xbac] sm:$0xf]
    %v898 = vld [vmem:[%s3 + $0xbb0] sm:$0xf]
    %v899 = vld [vmem:[%s3 + $0xbb4] sm:$0xf]
    %v900 = vld [vmem:[%s3 + $0xbb8] sm:$0xf]
    %v901 = vld [vmem:[%s3 + $0xbbc] sm:$0xf]
    %v902 = vld [vmem:[%s3 + $0xbc0] sm:$0xf]
    %v903 = vld [vmem:[%s3 + $0xbc4] sm:$0xf]
    %v904 = vld [vmem:[%s3 + $0xbc8] sm:$0xf]
    %v905 = vld [vmem:[%s3 + $0xbcc] sm:$0xf]
    %v906 = vld [vmem:[%s3 + $0xbd0] sm:$0xf]
    %v907 = vld [vmem:[%s3 + $0xbd4] sm:$0xf]
    %v908 = vld [vmem:[%s3 + $0xbd8] sm:$0xf]
    %v909 = vld [vmem:[%s3 + $0xbdc] sm:$0xf]
    %v910 = vld [vmem:[%s3 + $0xbe0] sm:$0xf]
    %v911 = vld [vmem:[%s3 + $0xbe4] sm:$0xf]
    %v912 = vld [vmem:[%s3 + $0xbe8] sm:$0xf]
    %v913 = vld [vmem:[%s3 + $0xbec] sm:$0xf]
    %v914 = vld [vmem:[%s3 + $0xbf0] sm:$0xf]
    %v915 = vld [vmem:[%s3 + $0xbf4] sm:$0xf]
    %v916 = vld [vmem:[%s3 + $0xbf8] sm:$0xf]
    %v917 = vld [vmem:[%s3 + $0xbfc] sm:$0xf]
    %v918 = vld [vmem:[%s3 + $0xc00] sm:$0xf]
    %v919 = vld [vmem:[%s3 + $0xc04] sm:$0xf]
    %v920 = vld [vmem:[%s3 + $0xc08] sm:$0xf]
    %v921 = vld [vmem:[%s3 + $0xc0c] sm:$0xf]
    %v922 = vld [vmem:[%s3 + $0xc10] sm:$0xf]
    %v923 = vld [vmem:[%s3 + $0xc14] sm:$0xf]
    %v924 = vld [vmem:[%s3 + $0xc18] sm:$0xf]
    %v925 = vld [vmem:[%s3 + $0xc1c] sm:$0xf]
    %v926 = vld [vmem:[%s3 + $0xc20] sm:$0xf]
    %v927 = vld [vmem:[%s3 + $0xc24] sm:$0xf]
    %v928 = vld [vmem:[%s3 + $0xc28] sm:$0xf]
    %v929 = vld [vmem:[%s3 + $0xc2c] sm:$0xf]
    %v930 = vld [vmem:[%s3 + $0xc30] sm:$0xf]
    %v931 = vld [vmem:[%s3 + $0xc34] sm:$0xf]
    %v932 = vld [vmem:[%s3 + $0xc38] sm:$0xf]
    %v933 = vld [vmem:[%s3 + $0xc3c] sm:$0xf]
    %v934 = vld [vmem:[%s3 + $0xc40] sm:$0xf]
    %v935 = vld [vmem:[%s3 + $0xc44] sm:$0xf]
    %v936 = vld [vmem:[%s3 + $0xc48] sm:$0xf]
    %v937 = vld [vmem:[%s3 + $0xc4c] sm:$0xf]
    %v938 = vld [vmem:[%s3 + $0xc50] sm:$0xf]
    %v939 = vld [vmem:[%s3 + $0xc54] sm:$0xf]
    %v940 = vld [vmem:[%s3 + $0xc58] sm:$0xf]
    %v941 = vld [vmem:[%s3 + $0xc5c] sm:$0xf]
    %v942 = vld [vmem:[%s3 + $0xc60] sm:$0xf]
    %v943 = vld [vmem:[%s3 + $0xc64] sm:$0xf]
    %v944 = vld [vmem:[%s3 + $0xc68] sm:$0xf]
    %v945 = vld [vmem:[%s3 + $0xc6c] sm:$0xf]
    %v946 = vld [vmem:[%s3 + $0xc70] sm:$0xf]
    %v947 = vld [vmem:[%s3 + $0xc74] sm:$0xf]
    %v948 = vld [vmem:[%s3 + $0xc78] sm:$0xf]
    %v949 = vld [vmem:[%s3 + $0xc7c] sm:$0xf]
    %v950 = vld [vmem:[%s3 + $0xc80] sm:$0xf]
    %v951 = vld [vmem:[%s3 + $0xc84] sm:$0xf]
    %v952 = vld [vmem:[%s3 + $0xc88] sm:$0xf]
    %v953 = vld [vmem:[%s3 + $0xc8c] sm:$0xf]
    %v954 = vld [vmem:[%s3 + $0xc90] sm:$0xf]
    %v955 = vld [vmem:[%s3 + $0xc94] sm:$0xf]
    %v956 = vld [vmem:[%s3 + $0xc98] sm:$0xf]
    %v957 = vld [vmem:[%s3 + $0xc9c] sm:$0xf]
    %v958 = vld [vmem:[%s3 + $0xca0] sm:$0xf]
    %v959 = vld [vmem:[%s3 + $0xca4] sm:$0xf]
    %v960 = vld [vmem:[%s3 + $0xca8] sm:$0xf]
    %v961 = vld [vmem:[%s3 + $0xcac] sm:$0xf]
    %v962 = vld [vmem:[%s3 + $0xcb0] sm:$0xf]
    %v963 = vld [vmem:[%s3 + $0xcb4] sm:$0xf]
    %v964 = vld [vmem:[%s3 + $0xcb8] sm:$0xf]
    %v965 = vld [vmem:[%s3 + $0xcbc] sm:$0xf]
    %v966 = vld [vmem:[%s3 + $0xcc0] sm:$0xf]
    %v967 = vld [vmem:[%s3 + $0xcc4] sm:$0xf]
    %v968 = vld [vmem:[%s3 + $0xcc8] sm:$0xf]
    %v969 = vld [vmem:[%s3 + $0xccc] sm:$0xf]
    %v970 = vld [vmem:[%s3 + $0xcd0] sm:$0xf]
    %v971 = vld [vmem:[%s3 + $0xcd4] sm:$0xf]
    %v972 = vld [vmem:[%s3 + $0xcd8] sm:$0xf]
    %v973 = vld [vmem:[%s3 + $0xcdc] sm:$0xf]
    %v974 = vld [vmem:[%s3 + $0xce0] sm:$0xf]
    %v975 = vld [vmem:[%s3 + $0xce4] sm:$0xf]
    %v976 = vld [vmem:[%s3 + $0xce8] sm:$0xf]
    %v977 = vld [vmem:[%s3 + $0xcec] sm:$0xf]
    %v978 = vld [vmem:[%s3 + $0xcf0] sm:$0xf]
    %v979 = vld [vmem:[%s3 + $0xcf4] sm:$0xf]
    %v980 = vld [vmem:[%s3 + $0xcf8] sm:$0xf]
    %v981 = vld [vmem:[%s3 + $0xcfc] sm:$0xf]
    %v982 = vld [vmem:[%s3 + $0xd00] sm:$0xf]
    %v983 = vld [vmem:[%s3 + $0xd04] sm:$0xf]
    %v984 = vld [vmem:[%s3 + $0xd08] sm:$0xf]
    %v985 = vld [vmem:[%s3 + $0xd0c] sm:$0xf]
    %v986 = vld [vmem:[%s3 + $0xd10] sm:$0xf]
    %v987 = vld [vmem:[%s3 + $0xd14] sm:$0xf]
    %v988 = vld [vmem:[%s3 + $0xd18] sm:$0xf]
    %v989 = vld [vmem:[%s3 + $0xd1c] sm:$0xf]
    %v990 = vld [vmem:[%s3 + $0xd20] sm:$0xf]
    %v991 = vld [vmem:[%s3 + $0xd24] sm:$0xf]
    %v992 = vld [vmem:[%s3 + $0xd28] sm:$0xf]
    %v993 = vld [vmem:[%s3 + $0xd2c] sm:$0xf]
    %v994 = vld [vmem:[%s3 + $0xd30] sm:$0xf]
    %v995 = vld [vmem:[%s3 + $0xd34] sm:$0xf]
    %v996 = vld [vmem:[%s3 + $0xd38] sm:$0xf]
    %v997 = vld [vmem:[%s3 + $0xd3c] sm:$0xf]
    %v998 = vld [vmem:[%s3 + $0xd40] sm:$0xf]
    %v999 = vld [vmem:[%s3 + $0xd44] sm:$0xf]
    %v1000 = vld [vmem:[%s3 + $0xd48] sm:$0xf]
    %v1001 = vld [vmem:[%s3 + $0xd4c] sm:$0xf]
    %v1002 = vld [vmem:[%s3 + $0xd50] sm:$0xf]
    %v1003 = vld [vmem:[%s3 + $0xd54] sm:$0xf]
    %v1004 = vld [vmem:[%s3 + $0xd58] sm:$0xf]
    %v1005 = vld [vmem:[%s3 + $0xd5c] sm:$0xf]
    %v1006 = vld [vmem:[%s3 + $0xd60] sm:$0xf]
    %v1007 = vld [vmem:[%s3 + $0xd64] sm:$0xf]
    %v1008 = vld [vmem:[%s3 + $0xd68] sm:$0xf]
    %v1009 = vld [vmem:[%s3 + $0xd6c] sm:$0xf]
    %v1010 = vld [vmem:[%s3 + $0xd70] sm:$0xf]
    %v1011 = vld [vmem:[%s3 + $0xd74] sm:$0xf]
    %v1012 = vld [vmem:[%s3 + $0xd78] sm:$0xf]
    %v1013 = vld [vmem:[%s3 + $0xd7c] sm:$0xf]
    %v1014 = vld [vmem:[%s3 + $0xd80] sm:$0xf]
    %v1015 = vld [vmem:[%s3 + $0xd84] sm:$0xf]
    %v1016 = vld [vmem:[%s3 + $0xd88] sm:$0xf]
    %v1017 = vld [vmem:[%s3 + $0xd8c] sm:$0xf]
    %v1018 = vld [vmem:[%s3 + $0xd90] sm:$0xf]
    %v1019 = vld [vmem:[%s3 + $0xd94] sm:$0xf]
    %v1020 = vld [vmem:[%s3 + $0xd98] sm:$0xf]
    %v1021 = vld [vmem:[%s3 + $0xd9c] sm:$0xf]
    %v1022 = vld [vmem:[%s3 + $0xda0] sm:$0xf]
    %v1023 = vld [vmem:[%s3 + $0xda4] sm:$0xf]
    %v1024 = vld [vmem:[%s3 + $0xda8] sm:$0xf]
    %v1025 = vld [vmem:[%s3 + $0xdac] sm:$0xf]
    %v1026 = vld [vmem:[%s3 + $0xdb0] sm:$0xf]
    %v1027 = vld [vmem:[%s3 + $0xdb4] sm:$0xf]
    %v1028 = vld [vmem:[%s3 + $0xdb8] sm:$0xf]
    %v1029 = vld [vmem:[%s3 + $0xdbc] sm:$0xf]
    %v1030 = vld [vmem:[%s3 + $0xdc0] sm:$0xf]
    %v1031 = vld [vmem:[%s3 + $0xdc4] sm:$0xf]
    %v1032 = vld [vmem:[%s3 + $0xdc8] sm:$0xf]
    %v1033 = vld [vmem:[%s3 + $0xdcc] sm:$0xf]
    %v1034 = vld [vmem:[%s3 + $0xdd0] sm:$0xf]
    %v1035 = vld [vmem:[%s3 + $0xdd4] sm:$0xf]
    %v1036 = vld [vmem:[%s3 + $0xdd8] sm:$0xf]
    %v1037 = vld [vmem:[%s3 + $0xddc] sm:$0xf]
    %v1038 = vld [vmem:[%s3 + $0xde0] sm:$0xf]
    %v1039 = vld [vmem:[%s3 + $0xde4] sm:$0xf]
    %v1040 = vld [vmem:[%s3 + $0xde8] sm:$0xf]
    %v1041 = vld [vmem:[%s3 + $0xdec] sm:$0xf]
    %v1042 = vld [vmem:[%s3 + $0xdf0] sm:$0xf]
    %v1043 = vld [vmem:[%s3 + $0xdf4] sm:$0xf]
    %v1044 = vld [vmem:[%s3 + $0xdf8] sm:$0xf]
    %v1045 = vld [vmem:[%s3 + $0xdfc] sm:$0xf]
    %v1046 = vld [vmem:[%s3 + $0xe00] sm:$0xf]
    %v1047 = vld [vmem:[%s3 + $0xe04] sm:$0xf]
    %v1048 = vld [vmem:[%s3 + $0xe08] sm:$0xf]
    %v1049 = vld [vmem:[%s3 + $0xe0c] sm:$0xf]
    %v1050 = vld [vmem:[%s3 + $0xe10] sm:$0xf]
    %v1051 = vld [vmem:[%s3 + $0xe14] sm:$0xf]
    %v1052 = vld [vmem:[%s3 + $0xe18] sm:$0xf]
    %v1053 = vld [vmem:[%s3 + $0xe1c] sm:$0xf]
    %v1054 = vld [vmem:[%s3 + $0xe20] sm:$0xf]
    %v1055 = vld [vmem:[%s3 + $0xe24] sm:$0xf]
    %v1056 = vld [vmem:[%s3 + $0xe28] sm:$0xf]
    %v1057 = vld [vmem:[%s3 + $0xe2c] sm:$0xf]
    %v1058 = vld [vmem:[%s3 + $0xe30] sm:$0xf]
    %v1059 = vld [vmem:[%s3 + $0xe34] sm:$0xf]
    %v1060 = vld [vmem:[%s3 + $0xe38] sm:$0xf]
    %v1061 = vld [vmem:[%s3 + $0xe3c] sm:$0xf]
    %v1062 = vld [vmem:[%s3 + $0xe40] sm:$0xf]
    %v1063 = vld [vmem:[%s3 + $0xe44] sm:$0xf]
    %v1064 = vld [vmem:[%s3 + $0xe48] sm:$0xf]
    %v1065 = vld [vmem:[%s3 + $0xe4c] sm:$0xf]
    %v1066 = vld [vmem:[%s3 + $0xe50] sm:$0xf]
    %v1067 = vld [vmem:[%s3 + $0xe54] sm:$0xf]
    %v1068 = vld [vmem:[%s3 + $0xe58] sm:$0xf]
    %v1069 = vld [vmem:[%s3 + $0xe5c] sm:$0xf]
    %v1070 = vld [vmem:[%s3 + $0xe60] sm:$0xf]
    %v1071 = vld [vmem:[%s3 + $0xe64] sm:$0xf]
    %v1072 = vld [vmem:[%s3 + $0xe68] sm:$0xf]
    %v1073 = vld [vmem:[%s3 + $0xe6c] sm:$0xf]
    %v1074 = vld [vmem:[%s3 + $0xe70] sm:$0xf]
    %v1075 = vld [vmem:[%s3 + $0xe74] sm:$0xf]
    %v1076 = vld [vmem:[%s3 + $0xe78] sm:$0xf]
    %v1077 = vld [vmem:[%s3 + $0xe7c] sm:$0xf]
    %v1194 = vunpack.c.l.b16 %v34
    %v1195 = vunpack.c.h.b16 %v34
    %v1196 = vunpack.c.l.b16 %v35
    %v1197 = vunpack.c.h.b16 %v35
    %v1198 = vunpack.c.l.b16 %v36
    %v1199 = vunpack.c.h.b16 %v36
    %v1200 = vunpack.c.l.b16 %v37
    %v1201 = vunpack.c.h.b16 %v37
    %v1202 = vunpack.c.l.b16 %v38
    %v1203 = vunpack.c.h.b16 %v38
    %v1204 = vunpack.c.l.b16 %v39
    %v1205 = vunpack.c.h.b16 %v39
    %v1206 = vunpack.c.l.b16 %v40
    %v1207 = vunpack.c.h.b16 %v40
    %v1208 = vunpack.c.l.b16 %v41
    %v1209 = vunpack.c.h.b16 %v41
    %v1210 = vunpack.c.l.b16 %v42
    %v1211 = vunpack.c.h.b16 %v42
    %v1212 = vunpack.c.l.b16 %v43
    %v1213 = vunpack.c.h.b16 %v43
    %v1214 = vunpack.c.l.b16 %v44
    %v1215 = vunpack.c.h.b16 %v44
    %v1216 = vunpack.c.l.b16 %v45
    %v1217 = vunpack.c.h.b16 %v45
    %v1218 = vunpack.c.l.b16 %v46
    %v1219 = vunpack.c.h.b16 %v46
    %v1220 = vunpack.c.l.b16 %v47
    %v1221 = vunpack.c.h.b16 %v47
    %v1222 = vunpack.c.l.b16 %v48
    %v1223 = vunpack.c.h.b16 %v48
    %v1224 = vunpack.c.l.b16 %v49
    %v1225 = vunpack.c.h.b16 %v49
    %v1226 = vunpack.c.l.b16 %v50
    %v1227 = vunpack.c.h.b16 %v50
    %v1228 = vunpack.c.l.b16 %v51
    %v1229 = vunpack.c.h.b16 %v51
    %v1230 = vunpack.c.l.b16 %v52
    %v1231 = vunpack.c.h.b16 %v52
    %v1232 = vunpack.c.l.b16 %v53
    %v1233 = vunpack.c.h.b16 %v53
    %v1234 = vunpack.c.l.b16 %v54
    %v1235 = vunpack.c.h.b16 %v54
    %v1236 = vunpack.c.l.b16 %v55
    %v1237 = vunpack.c.h.b16 %v55
    %v1238 = vunpack.c.l.b16 %v56
    %v1239 = vunpack.c.h.b16 %v56
    %v1240 = vunpack.c.l.b16 %v57
    %v1241 = vunpack.c.h.b16 %v57
    %v1242 = vunpack.c.l.b16 %v58
    %v1243 = vunpack.c.h.b16 %v58
    %v1244 = vunpack.c.l.b16 %v59
    %v1245 = vunpack.c.h.b16 %v59
    %v1246 = vunpack.c.l.b16 %v60
    %v1247 = vunpack.c.h.b16 %v60
    %v1248 = vunpack.c.l.b16 %v61
    %v1249 = vunpack.c.h.b16 %v61
    %v1250 = vunpack.c.l.b16 %v62
    %v1251 = vunpack.c.h.b16 %v62
    %v1252 = vunpack.c.l.b16 %v63
    %v1253 = vunpack.c.h.b16 %v63
    %v1254 = vunpack.c.l.b16 %v64
    %v1255 = vunpack.c.h.b16 %v64
    %v1256 = vunpack.c.l.b16 %v65
    %v1257 = vunpack.c.h.b16 %v65
    %v1258 = vunpack.c.l.b16 %v66
    %v1259 = vunpack.c.h.b16 %v66
    %v1260 = vunpack.c.l.b16 %v67
    %v1261 = vunpack.c.h.b16 %v67
    %v1262 = vunpack.c.l.b16 %v68
    %v1263 = vunpack.c.h.b16 %v68
    %v1264 = vunpack.c.l.b16 %v69
    %v1265 = vunpack.c.h.b16 %v69
    %v1266 = vunpack.c.l.b16 %v70
    %v1267 = vunpack.c.h.b16 %v70
    %v1268 = vunpack.c.l.b16 %v71
    %v1269 = vunpack.c.h.b16 %v71
    %v1270 = vunpack.c.l.b16 %v72
    %v1271 = vunpack.c.h.b16 %v72
    %v1272 = vunpack.c.l.b16 %v73
    %v1273 = vunpack.c.h.b16 %v73
    %v1274 = vunpack.c.l.b16 %v74
    %v1275 = vunpack.c.h.b16 %v74
    %v1276 = vunpack.c.l.b16 %v75
    %v1277 = vunpack.c.h.b16 %v75
    %v1278 = vunpack.c.l.b16 %v76
    %v1279 = vunpack.c.h.b16 %v76
    %v1280 = vunpack.c.l.b16 %v77
    %v1281 = vunpack.c.h.b16 %v77
    %v1282 = vunpack.c.l.b16 %v78
    %v1283 = vunpack.c.h.b16 %v78
    %v1284 = vunpack.c.l.b16 %v79
    %v1285 = vunpack.c.h.b16 %v79
    %v1286 = vunpack.c.l.b16 %v80
    %v1287 = vunpack.c.h.b16 %v80
    %v1288 = vunpack.c.l.b16 %v81
    %v1289 = vunpack.c.h.b16 %v81
    %v1290 = vunpack.c.l.b16 %v82
    %v1291 = vunpack.c.h.b16 %v82
    %v1292 = vunpack.c.l.b16 %v83
    %v1293 = vunpack.c.h.b16 %v83
    %v1294 = vunpack.c.l.b16 %v84
    %v1295 = vunpack.c.h.b16 %v84
    %v1296 = vunpack.c.l.b16 %v85
    %v1297 = vunpack.c.h.b16 %v85
    %v1298 = vunpack.c.l.b16 %v86
    %v1299 = vunpack.c.h.b16 %v86
    %v1300 = vunpack.c.l.b16 %v87
    %v1301 = vunpack.c.h.b16 %v87
    %v1302 = vunpack.c.l.b16 %v88
    %v1303 = vunpack.c.h.b16 %v88
    %v1304 = vunpack.c.l.b16 %v89
    %v1305 = vunpack.c.h.b16 %v89
    %v1306 = vunpack.c.l.b16 %v90
    %v1307 = vunpack.c.h.b16 %v90
    %v1308 = vunpack.c.l.b16 %v91
    %v1309 = vunpack.c.h.b16 %v91
    %v1310 = vunpack.c.l.b16 %v92
    %v1311 = vunpack.c.h.b16 %v92
    %v1312 = vunpack.c.l.b16 %v93
    %v1313 = vunpack.c.h.b16 %v93
    %v1314 = vunpack.c.l.b16 %v94
    %v1315 = vunpack.c.h.b16 %v94
    %v1316 = vunpack.c.l.b16 %v95
    %v1317 = vunpack.c.h.b16 %v95
    %v1318 = vunpack.c.l.b16 %v96
    %v1319 = vunpack.c.h.b16 %v96
    %v1320 = vunpack.c.l.b16 %v97
    %v1321 = vunpack.c.h.b16 %v97
    %v1322 = vunpack.c.l.b16 %v98
    %v1323 = vunpack.c.h.b16 %v98
    %v1324 = vunpack.c.l.b16 %v99
    %v1325 = vunpack.c.h.b16 %v99
    %v1326 = vunpack.c.l.b16 %v100
    %v1327 = vunpack.c.h.b16 %v100
    %v1328 = vunpack.c.l.b16 %v101
    %v1329 = vunpack.c.h.b16 %v101
    %v1330 = vunpack.c.l.b16 %v102
    %v1331 = vunpack.c.h.b16 %v102
    %v1332 = vunpack.c.l.b16 %v103
    %v1333 = vunpack.c.h.b16 %v103
    %v1334 = vunpack.c.l.b16 %v104
    %v1335 = vunpack.c.h.b16 %v104
    %v1336 = vunpack.c.l.b16 %v105
    %v1337 = vunpack.c.h.b16 %v105
    %v1338 = vunpack.c.l.b16 %v106
    %v1339 = vunpack.c.h.b16 %v106
    %v1340 = vunpack.c.l.b16 %v107
    %v1341 = vunpack.c.h.b16 %v107
    %v1342 = vunpack.c.l.b16 %v108
    %v1343 = vunpack.c.h.b16 %v108
    %v1344 = vunpack.c.l.b16 %v109
    %v1345 = vunpack.c.h.b16 %v109
    %v1346 = vunpack.c.l.b16 %v110
    %v1347 = vunpack.c.h.b16 %v110
    %v1348 = vunpack.c.l.b16 %v111
    %v1349 = vunpack.c.h.b16 %v111
    %v1350 = vunpack.c.l.b16 %v112
    %v1351 = vunpack.c.h.b16 %v112
    %v1352 = vunpack.c.l.b16 %v113
    %v1353 = vunpack.c.h.b16 %v113
    %v1354 = vunpack.c.l.b16 %v114
    %v1355 = vunpack.c.h.b16 %v114
    %v1356 = vunpack.c.l.b16 %v115
    %v1357 = vunpack.c.h.b16 %v115
    %v1358 = vunpack.c.l.b16 %v116
    %v1359 = vunpack.c.h.b16 %v116
    %v1360 = vunpack.c.l.b16 %v117
    %v1361 = vunpack.c.h.b16 %v117
    %v1362 = vunpack.c.l.b16 %v118
    %v1363 = vunpack.c.h.b16 %v118
    %v1364 = vunpack.c.l.b16 %v119
    %v1365 = vunpack.c.h.b16 %v119
    %v1366 = vunpack.c.l.b16 %v120
    %v1367 = vunpack.c.h.b16 %v120
    %v1368 = vunpack.c.l.b16 %v121
    %v1369 = vunpack.c.h.b16 %v121
    %v1370 = vunpack.c.l.b16 %v122
    %v1371 = vunpack.c.h.b16 %v122
    %v1372 = vunpack.c.l.b16 %v123
    %v1373 = vunpack.c.h.b16 %v123
    %v1374 = vunpack.c.l.b16 %v124
    %v1375 = vunpack.c.h.b16 %v124
    %v1376 = vunpack.c.l.b16 %v125
    %v1377 = vunpack.c.h.b16 %v125
    %v1378 = vunpack.c.l.b16 %v126
    %v1379 = vunpack.c.h.b16 %v126
    %v1380 = vunpack.c.l.b16 %v127
    %v1381 = vunpack.c.h.b16 %v127
    %v1382 = vunpack.c.l.b16 %v128
    %v1383 = vunpack.c.h.b16 %v128
    %v1384 = vunpack.c.l.b16 %v129
    %v1385 = vunpack.c.h.b16 %v129
    %v1386 = vunpack.c.l.b16 %v130
    %v1387 = vunpack.c.h.b16 %v130
    %v1388 = vunpack.c.l.b16 %v131
    %v1389 = vunpack.c.h.b16 %v131
    %v1390 = vunpack.c.l.b16 %v132
    %v1391 = vunpack.c.h.b16 %v132
    %v1392 = vunpack.c.l.b16 %v133
    %v1393 = vunpack.c.h.b16 %v133
    %v1394 = vunpack.c.l.b16 %v134
    %v1395 = vunpack.c.h.b16 %v134
    %v1396 = vunpack.c.l.b16 %v135
    %v1397 = vunpack.c.h.b16 %v135
    %v1398 = vunpack.c.l.b16 %v136
    %v1399 = vunpack.c.h.b16 %v136
    %v1400 = vunpack.c.l.b16 %v137
    %v1401 = vunpack.c.h.b16 %v137
    %v1402 = vunpack.c.l.b16 %v138
    %v1403 = vunpack.c.h.b16 %v138
    %v1404 = vunpack.c.l.b16 %v139
    %v1405 = vunpack.c.h.b16 %v139
    %v1406 = vunpack.c.l.b16 %v140
    %v1407 = vunpack.c.h.b16 %v140
    %v1408 = vunpack.c.l.b16 %v141
    %v1409 = vunpack.c.h.b16 %v141
    %v1410 = vunpack.c.l.b16 %v142
    %v1411 = vunpack.c.h.b16 %v142
    %v1412 = vunpack.c.l.b16 %v143
    %v1413 = vunpack.c.h.b16 %v143
    %v1414 = vunpack.c.l.b16 %v144
    %v1415 = vunpack.c.h.b16 %v144
    %v1416 = vunpack.c.l.b16 %v145
    %v1417 = vunpack.c.h.b16 %v145
    %v1418 = vunpack.c.l.b16 %v146
    %v1419 = vunpack.c.h.b16 %v146
    %v1420 = vunpack.c.l.b16 %v147
    %v1421 = vunpack.c.h.b16 %v147
    %v1422 = vunpack.c.l.b16 %v148
    %v1423 = vunpack.c.h.b16 %v148
    %v1424 = vunpack.c.l.b16 %v149
    %v1425 = vunpack.c.h.b16 %v149
    %v1426 = vpack.c.b16 %v1252, %v1194
    %v1427 = vpack.c.b16 %v1253, %v1195
    %v1428 = vpack.c.b16 %v1254, %v1196
    %v1429 = vpack.c.b16 %v1255, %v1197
    %v1430 = vpack.c.b16 %v1256, %v1198
    %v1431 = vpack.c.b16 %v1257, %v1199
    %v1432 = vpack.c.b16 %v1258, %v1200
    %v1433 = vpack.c.b16 %v1259, %v1201
    %v1434 = vpack.c.b16 %v1260, %v1202
    %v1435 = vpack.c.b16 %v1261, %v1203
    %v1436 = vpack.c.b16 %v1262, %v1204
    %v1437 = vpack.c.b16 %v1263, %v1205
    %v1438 = vpack.c.b16 %v1264, %v1206
    %v1439 = vpack.c.b16 %v1265, %v1207
    %v1440 = vpack.c.b16 %v1266, %v1208
    %v1441 = vpack.c.b16 %v1267, %v1209
    %v1442 = vpack.c.b16 %v1268, %v1210
    %v1443 = vpack.c.b16 %v1269, %v1211
    %v1444 = vpack.c.b16 %v1270, %v1212
    %v1445 = vpack.c.b16 %v1271, %v1213
    %v1446 = vpack.c.b16 %v1272, %v1214
    %v1447 = vpack.c.b16 %v1273, %v1215
    %v1448 = vpack.c.b16 %v1274, %v1216
    %v1449 = vpack.c.b16 %v1275, %v1217
    %v1450 = vpack.c.b16 %v1276, %v1218
    %v1451 = vpack.c.b16 %v1277, %v1219
    %v1452 = vpack.c.b16 %v1278, %v1220
    %v1453 = vpack.c.b16 %v1279, %v1221
    %v1454 = vpack.c.b16 %v1280, %v1222
    %v1455 = vpack.c.b16 %v1281, %v1223
    %v1456 = vpack.c.b16 %v1282, %v1224
    %v1457 = vpack.c.b16 %v1283, %v1225
    %v1458 = vpack.c.b16 %v1284, %v1226
    %v1459 = vpack.c.b16 %v1285, %v1227
    %v1460 = vpack.c.b16 %v1286, %v1228
    %v1461 = vpack.c.b16 %v1287, %v1229
    %v1462 = vpack.c.b16 %v1288, %v1230
    %v1463 = vpack.c.b16 %v1289, %v1231
    %v1464 = vpack.c.b16 %v1290, %v1232
    %v1465 = vpack.c.b16 %v1291, %v1233
    %v1466 = vpack.c.b16 %v1292, %v1234
    %v1467 = vpack.c.b16 %v1293, %v1235
    %v1468 = vpack.c.b16 %v1294, %v1236
    %v1469 = vpack.c.b16 %v1295, %v1237
    %v1470 = vpack.c.b16 %v1296, %v1238
    %v1471 = vpack.c.b16 %v1297, %v1239
    %v1472 = vpack.c.b16 %v1298, %v1240
    %v1473 = vpack.c.b16 %v1299, %v1241
    %v1474 = vpack.c.b16 %v1300, %v1242
    %v1475 = vpack.c.b16 %v1301, %v1243
    %v1476 = vpack.c.b16 %v1302, %v1244
    %v1477 = vpack.c.b16 %v1303, %v1245
    %v1478 = vpack.c.b16 %v1304, %v1246
    %v1479 = vpack.c.b16 %v1305, %v1247
    %v1480 = vpack.c.b16 %v1306, %v1248
    %v1481 = vpack.c.b16 %v1307, %v1249
    %v1482 = vpack.c.b16 %v1308, %v1250
    %v1483 = vpack.c.b16 %v1309, %v1251
    %v1484 = vpack.c.b16 %v1368, %v1310
    %v1485 = vpack.c.b16 %v1369, %v1311
    %v1486 = vpack.c.b16 %v1370, %v1312
    %v1487 = vpack.c.b16 %v1371, %v1313
    %v1488 = vpack.c.b16 %v1372, %v1314
    %v1489 = vpack.c.b16 %v1373, %v1315
    %v1490 = vpack.c.b16 %v1374, %v1316
    %v1491 = vpack.c.b16 %v1375, %v1317
    %v1492 = vpack.c.b16 %v1376, %v1318
    %v1493 = vpack.c.b16 %v1377, %v1319
    %v1494 = vpack.c.b16 %v1378, %v1320
    %v1495 = vpack.c.b16 %v1379, %v1321
    %v1496 = vpack.c.b16 %v1380, %v1322
    %v1497 = vpack.c.b16 %v1381, %v1323
    %v1498 = vpack.c.b16 %v1382, %v1324
    %v1499 = vpack.c.b16 %v1383, %v1325
    %v1500 = vpack.c.b16 %v1384, %v1326
    %v1501 = vpack.c.b16 %v1385, %v1327
    %v1502 = vpack.c.b16 %v1386, %v1328
    %v1503 = vpack.c.b16 %v1387, %v1329
    %v1504 = vpack.c.b16 %v1388, %v1330
    %v1505 = vpack.c.b16 %v1389, %v1331
    %v1506 = vpack.c.b16 %v1390, %v1332
    %v1507 = vpack.c.b16 %v1391, %v1333
    %v1508 = vpack.c.b16 %v1392, %v1334
    %v1509 = vpack.c.b16 %v1393, %v1335
    %v1510 = vpack.c.b16 %v1394, %v1336
    %v1511 = vpack.c.b16 %v1395, %v1337
    %v1512 = vpack.c.b16 %v1396, %v1338
    %v1513 = vpack.c.b16 %v1397, %v1339
    %v1514 = vpack.c.b16 %v1398, %v1340
    %v1515 = vpack.c.b16 %v1399, %v1341
    %v1516 = vpack.c.b16 %v1400, %v1342
    %v1517 = vpack.c.b16 %v1401, %v1343
    %v1518 = vpack.c.b16 %v1402, %v1344
    %v1519 = vpack.c.b16 %v1403, %v1345
    %v1520 = vpack.c.b16 %v1404, %v1346
    %v1521 = vpack.c.b16 %v1405, %v1347
    %v1522 = vpack.c.b16 %v1406, %v1348
    %v1523 = vpack.c.b16 %v1407, %v1349
    %v1524 = vpack.c.b16 %v1408, %v1350
    %v1525 = vpack.c.b16 %v1409, %v1351
    %v1526 = vpack.c.b16 %v1410, %v1352
    %v1527 = vpack.c.b16 %v1411, %v1353
    %v1528 = vpack.c.b16 %v1412, %v1354
    %v1529 = vpack.c.b16 %v1413, %v1355
    %v1530 = vpack.c.b16 %v1414, %v1356
    %v1531 = vpack.c.b16 %v1415, %v1357
    %v1532 = vpack.c.b16 %v1416, %v1358
    %v1533 = vpack.c.b16 %v1417, %v1359
    %v1534 = vpack.c.b16 %v1418, %v1360
    %v1535 = vpack.c.b16 %v1419, %v1361
    %v1536 = vpack.c.b16 %v1420, %v1362
    %v1537 = vpack.c.b16 %v1421, %v1363
    %v1538 = vpack.c.b16 %v1422, %v1364
    %v1539 = vpack.c.b16 %v1423, %v1365
    %v1540 = vpack.c.b16 %v1424, %v1366
    %v1541 = vpack.c.b16 %v1425, %v1367
    %v2586 = vunpack.c.l.b16 %v150
    %v2587 = vunpack.c.l.b16 %v151
    %v2588 = vunpack.c.l.b16 %v152
    %v2589 = vunpack.c.l.b16 %v153
    %v2590 = vunpack.c.l.b16 %v154
    %v2591 = vunpack.c.l.b16 %v155
    %v2592 = vunpack.c.l.b16 %v156
    %v2593 = vunpack.c.l.b16 %v157
    %v2594 = vunpack.c.l.b16 %v158
    %v2595 = vunpack.c.l.b16 %v159
    %v2596 = vunpack.c.l.b16 %v160
    %v2597 = vunpack.c.l.b16 %v161
    %v2598 = vunpack.c.l.b16 %v162
    %v2599 = vunpack.c.l.b16 %v163
    %v2600 = vunpack.c.l.b16 %v164
    %v2601 = vunpack.c.l.b16 %v165
    %v2602 = vunpack.c.l.b16 %v166
    %v2603 = vunpack.c.l.b16 %v167
    %v2604 = vunpack.c.l.b16 %v168
    %v2605 = vunpack.c.l.b16 %v169
    %v2606 = vunpack.c.l.b16 %v170
    %v2607 = vunpack.c.l.b16 %v171
    %v2608 = vunpack.c.l.b16 %v172
    %v2609 = vunpack.c.l.b16 %v173
    %v2610 = vunpack.c.l.b16 %v174
    %v2611 = vunpack.c.l.b16 %v175
    %v2612 = vunpack.c.l.b16 %v176
    %v2613 = vunpack.c.l.b16 %v177
    %v2614 = vunpack.c.l.b16 %v178
    %v2615 = vunpack.c.l.b16 %v179
    %v2616 = vunpack.c.l.b16 %v180
    %v2617 = vunpack.c.l.b16 %v181
    %v2618 = vunpack.c.l.b16 %v182
    %v2619 = vunpack.c.l.b16 %v183
    %v2620 = vunpack.c.l.b16 %v184
    %v2621 = vunpack.c.l.b16 %v185
    %v2622 = vunpack.c.l.b16 %v186
    %v2623 = vunpack.c.l.b16 %v187
    %v2624 = vunpack.c.l.b16 %v188
    %v2625 = vunpack.c.l.b16 %v189
    %v2626 = vunpack.c.l.b16 %v190
    %v2627 = vunpack.c.l.b16 %v191
    %v2628 = vunpack.c.l.b16 %v192
    %v2629 = vunpack.c.l.b16 %v193
    %v2630 = vunpack.c.l.b16 %v194
    %v2631 = vunpack.c.l.b16 %v195
    %v2632 = vunpack.c.l.b16 %v196
    %v2633 = vunpack.c.l.b16 %v197
    %v2634 = vunpack.c.l.b16 %v198
    %v2635 = vunpack.c.l.b16 %v199
    %v2636 = vunpack.c.l.b16 %v200
    %v2637 = vunpack.c.l.b16 %v201
    %v2638 = vunpack.c.l.b16 %v202
    %v2639 = vunpack.c.l.b16 %v203
    %v2640 = vunpack.c.l.b16 %v204
    %v2641 = vunpack.c.l.b16 %v205
    %v2642 = vunpack.c.l.b16 %v206
    %v2643 = vunpack.c.l.b16 %v207
    %v2644 = vunpack.c.l.b16 %v208
    %v2645 = vunpack.c.l.b16 %v209
    %v2646 = vunpack.c.l.b16 %v210
    %v2647 = vunpack.c.l.b16 %v211
    %v2648 = vunpack.c.l.b16 %v212
    %v2649 = vunpack.c.l.b16 %v213
    %v2650 = vunpack.c.l.b16 %v214
    %v2651 = vunpack.c.l.b16 %v215
    %v2652 = vunpack.c.l.b16 %v216
    %v2653 = vunpack.c.l.b16 %v217
    %v2654 = vunpack.c.l.b16 %v218
    %v2655 = vunpack.c.l.b16 %v219
    %v2656 = vunpack.c.l.b16 %v220
    %v2657 = vunpack.c.l.b16 %v221
    %v2658 = vunpack.c.l.b16 %v222
    %v2659 = vunpack.c.l.b16 %v223
    %v2660 = vunpack.c.l.b16 %v224
    %v2661 = vunpack.c.l.b16 %v225
    %v2662 = vunpack.c.l.b16 %v226
    %v2663 = vunpack.c.l.b16 %v227
    %v2664 = vunpack.c.l.b16 %v228
    %v2665 = vunpack.c.l.b16 %v229
    %v2666 = vunpack.c.l.b16 %v230
    %v2667 = vunpack.c.l.b16 %v231
    %v2668 = vunpack.c.l.b16 %v232
    %v2669 = vunpack.c.l.b16 %v233
    %v2670 = vunpack.c.l.b16 %v234
    %v2671 = vunpack.c.l.b16 %v235
    %v2672 = vunpack.c.l.b16 %v236
    %v2673 = vunpack.c.l.b16 %v237
    %v2674 = vunpack.c.l.b16 %v238
    %v2675 = vunpack.c.l.b16 %v239
    %v2676 = vunpack.c.l.b16 %v240
    %v2677 = vunpack.c.l.b16 %v241
    %v2678 = vunpack.c.l.b16 %v242
    %v2679 = vunpack.c.l.b16 %v243
    %v2680 = vunpack.c.l.b16 %v244
    %v2681 = vunpack.c.l.b16 %v245
    %v2682 = vunpack.c.l.b16 %v246
    %v2683 = vunpack.c.l.b16 %v247
    %v2684 = vunpack.c.l.b16 %v248
    %v2685 = vunpack.c.l.b16 %v249
    %v2686 = vunpack.c.l.b16 %v250
    %v2687 = vunpack.c.l.b16 %v251
    %v2688 = vunpack.c.l.b16 %v252
    %v2689 = vunpack.c.l.b16 %v253
    %v2690 = vunpack.c.l.b16 %v254
    %v2691 = vunpack.c.l.b16 %v255
    %v2692 = vunpack.c.l.b16 %v256
    %v2693 = vunpack.c.l.b16 %v257
    %v2694 = vunpack.c.l.b16 %v258
    %v2695 = vunpack.c.l.b16 %v259
    %v2696 = vunpack.c.l.b16 %v260
    %v2697 = vunpack.c.l.b16 %v261
    %v2698 = vunpack.c.l.b16 %v262
    %v2699 = vunpack.c.l.b16 %v263
    %v2700 = vunpack.c.l.b16 %v264
    %v2701 = vunpack.c.l.b16 %v265
    %v2702 = vunpack.c.l.b16 %v266
    %v2703 = vunpack.c.l.b16 %v267
    %v2704 = vunpack.c.l.b16 %v268
    %v2705 = vunpack.c.l.b16 %v269
    %v2706 = vunpack.c.l.b16 %v270
    %v2707 = vunpack.c.l.b16 %v271
    %v2708 = vunpack.c.l.b16 %v272
    %v2709 = vunpack.c.l.b16 %v273
    %v2710 = vunpack.c.l.b16 %v274
    %v2711 = vunpack.c.l.b16 %v275
    %v2712 = vunpack.c.l.b16 %v276
    %v2713 = vunpack.c.l.b16 %v277
    %v2714 = vunpack.c.l.b16 %v278
    %v2715 = vunpack.c.l.b16 %v279
    %v2716 = vunpack.c.l.b16 %v280
    %v2717 = vunpack.c.l.b16 %v281
    %v2718 = vunpack.c.l.b16 %v282
    %v2719 = vunpack.c.l.b16 %v283
    %v2720 = vunpack.c.l.b16 %v284
    %v2721 = vunpack.c.l.b16 %v285
    %v2722 = vunpack.c.l.b16 %v286
    %v2723 = vunpack.c.l.b16 %v287
    %v2724 = vunpack.c.l.b16 %v288
    %v2725 = vunpack.c.l.b16 %v289
    %v2726 = vunpack.c.l.b16 %v290
    %v2727 = vunpack.c.l.b16 %v291
    %v2728 = vunpack.c.l.b16 %v292
    %v2729 = vunpack.c.l.b16 %v293
    %v2730 = vunpack.c.l.b16 %v294
    %v2731 = vunpack.c.l.b16 %v295
    %v2732 = vunpack.c.l.b16 %v296
    %v2733 = vunpack.c.l.b16 %v297
    %v2734 = vunpack.c.l.b16 %v298
    %v2735 = vunpack.c.l.b16 %v299
    %v2736 = vunpack.c.l.b16 %v300
    %v2737 = vunpack.c.l.b16 %v301
    %v2738 = vunpack.c.l.b16 %v302
    %v2739 = vunpack.c.l.b16 %v303
    %v2740 = vunpack.c.l.b16 %v304
    %v2741 = vunpack.c.l.b16 %v305
    %v2742 = vunpack.c.l.b16 %v306
    %v2743 = vunpack.c.l.b16 %v307
    %v2744 = vunpack.c.l.b16 %v308
    %v2745 = vunpack.c.l.b16 %v309
    %v2746 = vunpack.c.l.b16 %v310
    %v2747 = vunpack.c.l.b16 %v311
    %v2748 = vunpack.c.l.b16 %v312
    %v2749 = vunpack.c.l.b16 %v313
    %v2750 = vunpack.c.l.b16 %v314
    %v2751 = vunpack.c.l.b16 %v315
    %v2752 = vunpack.c.l.b16 %v316
    %v2753 = vunpack.c.l.b16 %v317
    %v2754 = vunpack.c.l.b16 %v318
    %v2755 = vunpack.c.l.b16 %v319
    %v2756 = vunpack.c.l.b16 %v320
    %v2757 = vunpack.c.l.b16 %v321
    %v2758 = vunpack.c.l.b16 %v322
    %v2759 = vunpack.c.l.b16 %v323
    %v2760 = vunpack.c.l.b16 %v324
    %v2761 = vunpack.c.l.b16 %v325
    %v2762 = vunpack.c.l.b16 %v326
    %v2763 = vunpack.c.l.b16 %v327
    %v2764 = vunpack.c.l.b16 %v328
    %v2765 = vunpack.c.l.b16 %v329
    %v2766 = vunpack.c.l.b16 %v330
    %v2767 = vunpack.c.l.b16 %v331
    %v2768 = vunpack.c.l.b16 %v332
    %v2769 = vunpack.c.l.b16 %v333
    %v2770 = vunpack.c.l.b16 %v334
    %v2771 = vunpack.c.l.b16 %v335
    %v2772 = vunpack.c.l.b16 %v336
    %v2773 = vunpack.c.l.b16 %v337
    %v2774 = vunpack.c.l.b16 %v338
    %v2775 = vunpack.c.l.b16 %v339
    %v2776 = vunpack.c.l.b16 %v340
    %v2777 = vunpack.c.l.b16 %v341
    %v2778 = vunpack.c.l.b16 %v342
    %v2779 = vunpack.c.l.b16 %v343
    %v2780 = vunpack.c.l.b16 %v344
    %v2781 = vunpack.c.l.b16 %v345
    %v2782 = vunpack.c.l.b16 %v346
    %v2783 = vunpack.c.l.b16 %v347
    %v2784 = vunpack.c.l.b16 %v348
    %v2785 = vunpack.c.l.b16 %v349
    %v2786 = vunpack.c.l.b16 %v350
    %v2787 = vunpack.c.l.b16 %v351
    %v2788 = vunpack.c.l.b16 %v352
    %v2789 = vunpack.c.l.b16 %v353
    %v2790 = vunpack.c.l.b16 %v354
    %v2791 = vunpack.c.l.b16 %v355
    %v2792 = vunpack.c.l.b16 %v356
    %v2793 = vunpack.c.l.b16 %v357
    %v2794 = vunpack.c.l.b16 %v358
    %v2795 = vunpack.c.l.b16 %v359
    %v2796 = vunpack.c.l.b16 %v360
    %v2797 = vunpack.c.l.b16 %v361
    %v2798 = vunpack.c.l.b16 %v362
    %v2799 = vunpack.c.l.b16 %v363
    %v2800 = vunpack.c.l.b16 %v364
    %v2801 = vunpack.c.l.b16 %v365
    %v2802 = vunpack.c.l.b16 %v366
    %v2803 = vunpack.c.l.b16 %v367
    %v2804 = vunpack.c.l.b16 %v368
    %v2805 = vunpack.c.l.b16 %v369
    %v2806 = vunpack.c.l.b16 %v370
    %v2807 = vunpack.c.l.b16 %v371
    %v2808 = vunpack.c.l.b16 %v372
    %v2809 = vunpack.c.l.b16 %v373
    %v2810 = vunpack.c.l.b16 %v374
    %v2811 = vunpack.c.l.b16 %v375
    %v2812 = vunpack.c.l.b16 %v376
    %v2813 = vunpack.c.l.b16 %v377
    %v2814 = vunpack.c.l.b16 %v378
    %v2815 = vunpack.c.l.b16 %v379
    %v2816 = vunpack.c.l.b16 %v380
    %v2817 = vunpack.c.l.b16 %v381
    %v2818 = vunpack.c.l.b16 %v382
    %v2819 = vunpack.c.l.b16 %v383
    %v2820 = vunpack.c.l.b16 %v384
    %v2821 = vunpack.c.l.b16 %v385
    %v2822 = vunpack.c.l.b16 %v386
    %v2823 = vunpack.c.l.b16 %v387
    %v2824 = vunpack.c.l.b16 %v388
    %v2825 = vunpack.c.l.b16 %v389
    %v2826 = vunpack.c.l.b16 %v390
    %v2827 = vunpack.c.l.b16 %v391
    %v2828 = vunpack.c.l.b16 %v392
    %v2829 = vunpack.c.l.b16 %v393
    %v2830 = vunpack.c.l.b16 %v394
    %v2831 = vunpack.c.l.b16 %v395
    %v2832 = vunpack.c.l.b16 %v396
    %v2833 = vunpack.c.l.b16 %v397
    %v2834 = vunpack.c.l.b16 %v398
    %v2835 = vunpack.c.l.b16 %v399
    %v2836 = vunpack.c.l.b16 %v400
    %v2837 = vunpack.c.l.b16 %v401
    %v2838 = vunpack.c.l.b16 %v402
    %v2839 = vunpack.c.l.b16 %v403
    %v2840 = vunpack.c.l.b16 %v404
    %v2841 = vunpack.c.l.b16 %v405
    %v2842 = vunpack.c.l.b16 %v406
    %v2843 = vunpack.c.l.b16 %v407
    %v2844 = vunpack.c.l.b16 %v408
    %v2845 = vunpack.c.l.b16 %v409
    %v2846 = vunpack.c.l.b16 %v410
    %v2847 = vunpack.c.l.b16 %v411
    %v2848 = vunpack.c.l.b16 %v412
    %v2849 = vunpack.c.l.b16 %v413
    %v2850 = vunpack.c.l.b16 %v414
    %v2851 = vunpack.c.l.b16 %v415
    %v2852 = vunpack.c.l.b16 %v416
    %v2853 = vunpack.c.l.b16 %v417
    %v2854 = vunpack.c.l.b16 %v418
    %v2855 = vunpack.c.l.b16 %v419
    %v2856 = vunpack.c.l.b16 %v420
    %v2857 = vunpack.c.l.b16 %v421
    %v2858 = vunpack.c.l.b16 %v422
    %v2859 = vunpack.c.l.b16 %v423
    %v2860 = vunpack.c.l.b16 %v424
    %v2861 = vunpack.c.l.b16 %v425
    %v2862 = vunpack.c.l.b16 %v426
    %v2863 = vunpack.c.l.b16 %v427
    %v2864 = vunpack.c.l.b16 %v428
    %v2865 = vunpack.c.l.b16 %v429
    %v2866 = vunpack.c.l.b16 %v430
    %v2867 = vunpack.c.l.b16 %v431
    %v2868 = vunpack.c.l.b16 %v432
    %v2869 = vunpack.c.l.b16 %v433
    %v2870 = vunpack.c.l.b16 %v434
    %v2871 = vunpack.c.l.b16 %v435
    %v2872 = vunpack.c.l.b16 %v436
    %v2873 = vunpack.c.l.b16 %v437
    %v2874 = vunpack.c.l.b16 %v438
    %v2875 = vunpack.c.l.b16 %v439
    %v2876 = vunpack.c.l.b16 %v440
    %v2877 = vunpack.c.l.b16 %v441
    %v2878 = vunpack.c.l.b16 %v442
    %v2879 = vunpack.c.l.b16 %v443
    %v2880 = vunpack.c.l.b16 %v444
    %v2881 = vunpack.c.l.b16 %v445
    %v2882 = vunpack.c.l.b16 %v446
    %v2883 = vunpack.c.l.b16 %v447
    %v2884 = vunpack.c.l.b16 %v448
    %v2885 = vunpack.c.l.b16 %v449
    %v2886 = vunpack.c.l.b16 %v450
    %v2887 = vunpack.c.l.b16 %v451
    %v2888 = vunpack.c.l.b16 %v452
    %v2889 = vunpack.c.l.b16 %v453
    %v2890 = vunpack.c.l.b16 %v454
    %v2891 = vunpack.c.l.b16 %v455
    %v2892 = vunpack.c.l.b16 %v456
    %v2893 = vunpack.c.l.b16 %v457
    %v2894 = vunpack.c.l.b16 %v458
    %v2895 = vunpack.c.l.b16 %v459
    %v2896 = vunpack.c.l.b16 %v460
    %v2897 = vunpack.c.l.b16 %v461
    %v2898 = vunpack.c.l.b16 %v462
    %v2899 = vunpack.c.l.b16 %v463
    %v2900 = vunpack.c.l.b16 %v464
    %v2901 = vunpack.c.l.b16 %v465
    %v2902 = vunpack.c.l.b16 %v466
    %v2903 = vunpack.c.l.b16 %v467
    %v2904 = vunpack.c.l.b16 %v468
    %v2905 = vunpack.c.l.b16 %v469
    %v2906 = vunpack.c.l.b16 %v470
    %v2907 = vunpack.c.l.b16 %v471
    %v2908 = vunpack.c.l.b16 %v472
    %v2909 = vunpack.c.l.b16 %v473
    %v2910 = vunpack.c.l.b16 %v474
    %v2911 = vunpack.c.l.b16 %v475
    %v2912 = vunpack.c.l.b16 %v476
    %v2913 = vunpack.c.l.b16 %v477
    %v2914 = vunpack.c.l.b16 %v478
    %v2915 = vunpack.c.l.b16 %v479
    %v2916 = vunpack.c.l.b16 %v480
    %v2917 = vunpack.c.l.b16 %v481
    %v2918 = vunpack.c.l.b16 %v482
    %v2919 = vunpack.c.l.b16 %v483
    %v2920 = vunpack.c.l.b16 %v484
    %v2921 = vunpack.c.l.b16 %v485
    %v2922 = vunpack.c.l.b16 %v486
    %v2923 = vunpack.c.l.b16 %v487
    %v2924 = vunpack.c.l.b16 %v488
    %v2925 = vunpack.c.l.b16 %v489
    %v2926 = vunpack.c.l.b16 %v490
    %v2927 = vunpack.c.l.b16 %v491
    %v2928 = vunpack.c.l.b16 %v492
    %v2929 = vunpack.c.l.b16 %v493
    %v2930 = vunpack.c.l.b16 %v494
    %v2931 = vunpack.c.l.b16 %v495
    %v2932 = vunpack.c.l.b16 %v496
    %v2933 = vunpack.c.l.b16 %v497
    %v2934 = vunpack.c.l.b16 %v498
    %v2935 = vunpack.c.l.b16 %v499
    %v2936 = vunpack.c.l.b16 %v500
    %v2937 = vunpack.c.l.b16 %v501
    %v2938 = vunpack.c.l.b16 %v502
    %v2939 = vunpack.c.l.b16 %v503
    %v2940 = vunpack.c.l.b16 %v504
    %v2941 = vunpack.c.l.b16 %v505
    %v2942 = vunpack.c.l.b16 %v506
    %v2943 = vunpack.c.l.b16 %v507
    %v2944 = vunpack.c.l.b16 %v508
    %v2945 = vunpack.c.l.b16 %v509
    %v2946 = vunpack.c.l.b16 %v510
    %v2947 = vunpack.c.l.b16 %v511
    %v2948 = vunpack.c.l.b16 %v512
    %v2949 = vunpack.c.l.b16 %v513
    %v2950 = vunpack.c.l.b16 %v514
    %v2951 = vunpack.c.l.b16 %v515
    %v2952 = vunpack.c.l.b16 %v516
    %v2953 = vunpack.c.l.b16 %v517
    %v2954 = vunpack.c.l.b16 %v518
    %v2955 = vunpack.c.l.b16 %v519
    %v2956 = vunpack.c.l.b16 %v520
    %v2957 = vunpack.c.l.b16 %v521
    %v2958 = vunpack.c.l.b16 %v522
    %v2959 = vunpack.c.l.b16 %v523
    %v2960 = vunpack.c.l.b16 %v524
    %v2961 = vunpack.c.l.b16 %v525
    %v2962 = vunpack.c.l.b16 %v526
    %v2963 = vunpack.c.l.b16 %v527
    %v2964 = vunpack.c.l.b16 %v528
    %v2965 = vunpack.c.l.b16 %v529
    %v2966 = vunpack.c.l.b16 %v530
    %v2967 = vunpack.c.l.b16 %v531
    %v2968 = vunpack.c.l.b16 %v532
    %v2969 = vunpack.c.l.b16 %v533
    %v2970 = vunpack.c.l.b16 %v534
    %v2971 = vunpack.c.l.b16 %v535
    %v2972 = vunpack.c.l.b16 %v536
    %v2973 = vunpack.c.l.b16 %v537
    %v2974 = vunpack.c.l.b16 %v538
    %v2975 = vunpack.c.l.b16 %v539
    %v2976 = vunpack.c.l.b16 %v540
    %v2977 = vunpack.c.l.b16 %v541
    %v2978 = vunpack.c.l.b16 %v542
    %v2979 = vunpack.c.l.b16 %v543
    %v2980 = vunpack.c.l.b16 %v544
    %v2981 = vunpack.c.l.b16 %v545
    %v2982 = vunpack.c.l.b16 %v546
    %v2983 = vunpack.c.l.b16 %v547
    %v2984 = vunpack.c.l.b16 %v548
    %v2985 = vunpack.c.l.b16 %v549
    %v2986 = vunpack.c.l.b16 %v550
    %v2987 = vunpack.c.l.b16 %v551
    %v2988 = vunpack.c.l.b16 %v552
    %v2989 = vunpack.c.l.b16 %v553
    %v2990 = vunpack.c.l.b16 %v554
    %v2991 = vunpack.c.l.b16 %v555
    %v2992 = vunpack.c.l.b16 %v556
    %v2993 = vunpack.c.l.b16 %v557
    %v2994 = vunpack.c.l.b16 %v558
    %v2995 = vunpack.c.l.b16 %v559
    %v2996 = vunpack.c.l.b16 %v560
    %v2997 = vunpack.c.l.b16 %v561
    %v2998 = vunpack.c.l.b16 %v562
    %v2999 = vunpack.c.l.b16 %v563
    %v3000 = vunpack.c.l.b16 %v564
    %v3001 = vunpack.c.l.b16 %v565
    %v3002 = vunpack.c.l.b16 %v566
    %v3003 = vunpack.c.l.b16 %v567
    %v3004 = vunpack.c.l.b16 %v568
    %v3005 = vunpack.c.l.b16 %v569
    %v3006 = vunpack.c.l.b16 %v570
    %v3007 = vunpack.c.l.b16 %v571
    %v3008 = vunpack.c.l.b16 %v572
    %v3009 = vunpack.c.l.b16 %v573
    %v3010 = vunpack.c.l.b16 %v574
    %v3011 = vunpack.c.l.b16 %v575
    %v3012 = vunpack.c.l.b16 %v576
    %v3013 = vunpack.c.l.b16 %v577
    %v3014 = vunpack.c.l.b16 %v578
    %v3015 = vunpack.c.l.b16 %v579
    %v3016 = vunpack.c.l.b16 %v580
    %v3017 = vunpack.c.l.b16 %v581
    %v3018 = vunpack.c.l.b16 %v582
    %v3019 = vunpack.c.l.b16 %v583
    %v3020 = vunpack.c.l.b16 %v584
    %v3021 = vunpack.c.l.b16 %v585
    %v3022 = vunpack.c.l.b16 %v586
    %v3023 = vunpack.c.l.b16 %v587
    %v3024 = vunpack.c.l.b16 %v588
    %v3025 = vunpack.c.l.b16 %v589
    %v3026 = vunpack.c.l.b16 %v590
    %v3027 = vunpack.c.l.b16 %v591
    %v3028 = vunpack.c.l.b16 %v592
    %v3029 = vunpack.c.l.b16 %v593
    %v3030 = vunpack.c.l.b16 %v594
    %v3031 = vunpack.c.l.b16 %v595
    %v3032 = vunpack.c.l.b16 %v596
    %v3033 = vunpack.c.l.b16 %v597
    %v3034 = vunpack.c.l.b16 %v598
    %v3035 = vunpack.c.l.b16 %v599
    %v3036 = vunpack.c.l.b16 %v600
    %v3037 = vunpack.c.l.b16 %v601
    %v3038 = vunpack.c.l.b16 %v602
    %v3039 = vunpack.c.l.b16 %v603
    %v3040 = vunpack.c.l.b16 %v604
    %v3041 = vunpack.c.l.b16 %v605
    %v3042 = vunpack.c.l.b16 %v606
    %v3043 = vunpack.c.l.b16 %v607
    %v3044 = vunpack.c.l.b16 %v608
    %v3045 = vunpack.c.l.b16 %v609
    %v3046 = vunpack.c.l.b16 %v610
    %v3047 = vunpack.c.l.b16 %v611
    %v3048 = vunpack.c.l.b16 %v612
    %v3049 = vunpack.c.l.b16 %v613
    %v3050 = vunpack.c.l.b16 %v614
    %v3051 = vunpack.c.l.b16 %v615
    %v3052 = vunpack.c.l.b16 %v616
    %v3053 = vunpack.c.l.b16 %v617
    %v3054 = vunpack.c.l.b16 %v618
    %v3055 = vunpack.c.l.b16 %v619
    %v3056 = vunpack.c.l.b16 %v620
    %v3057 = vunpack.c.l.b16 %v621
    %v3058 = vunpack.c.l.b16 %v622
    %v3059 = vunpack.c.l.b16 %v623
    %v3060 = vunpack.c.l.b16 %v624
    %v3061 = vunpack.c.l.b16 %v625
    %v3062 = vunpack.c.l.b16 %v626
    %v3063 = vunpack.c.l.b16 %v627
    %v3064 = vunpack.c.l.b16 %v628
    %v3065 = vunpack.c.l.b16 %v629
    %v3066 = vunpack.c.l.b16 %v630
    %v3067 = vunpack.c.l.b16 %v631
    %v3068 = vunpack.c.l.b16 %v632
    %v3069 = vunpack.c.l.b16 %v633
    %v3070 = vunpack.c.l.b16 %v634
    %v3071 = vunpack.c.l.b16 %v635
    %v3072 = vunpack.c.l.b16 %v636
    %v3073 = vunpack.c.l.b16 %v637
    %v3074 = vunpack.c.l.b16 %v638
    %v3075 = vunpack.c.l.b16 %v639
    %v3076 = vunpack.c.l.b16 %v640
    %v3077 = vunpack.c.l.b16 %v641
    %v3078 = vunpack.c.l.b16 %v642
    %v3079 = vunpack.c.l.b16 %v643
    %v3080 = vunpack.c.l.b16 %v644
    %v3081 = vunpack.c.l.b16 %v645
    %v3082 = vunpack.c.l.b16 %v646
    %v3083 = vunpack.c.l.b16 %v647
    %v3084 = vunpack.c.l.b16 %v648
    %v3085 = vunpack.c.l.b16 %v649
    %v3086 = vunpack.c.l.b16 %v650
    %v3087 = vunpack.c.l.b16 %v651
    %v3088 = vunpack.c.l.b16 %v652
    %v3089 = vunpack.c.l.b16 %v653
    %v3090 = vunpack.c.l.b16 %v654
    %v3091 = vunpack.c.l.b16 %v655
    %v3092 = vunpack.c.l.b16 %v656
    %v3093 = vunpack.c.l.b16 %v657
    %v3094 = vunpack.c.l.b16 %v658
    %v3095 = vunpack.c.l.b16 %v659
    %v3096 = vunpack.c.l.b16 %v660
    %v3097 = vunpack.c.l.b16 %v661
    %v3098 = vunpack.c.l.b16 %v662
    %v3099 = vunpack.c.l.b16 %v663
    %v3100 = vunpack.c.l.b16 %v664
    %v3101 = vunpack.c.l.b16 %v665
    %v3102 = vunpack.c.l.b16 %v666
    %v3103 = vunpack.c.l.b16 %v667
    %v3104 = vunpack.c.l.b16 %v668
    %v3105 = vunpack.c.l.b16 %v669
    %v3106 = vunpack.c.l.b16 %v670
    %v3107 = vunpack.c.l.b16 %v671
    %v3108 = vunpack.c.l.b16 %v672
    %v3109 = vunpack.c.l.b16 %v673
    %v3110 = vunpack.c.l.b16 %v674
    %v3111 = vunpack.c.l.b16 %v675
    %v3112 = vunpack.c.l.b16 %v676
    %v3113 = vunpack.c.l.b16 %v677
    %v3114 = vunpack.c.l.b16 %v678
    %v3115 = vunpack.c.l.b16 %v679
    %v3116 = vunpack.c.l.b16 %v680
    %v3117 = vunpack.c.l.b16 %v681
    %v3118 = vunpack.c.l.b16 %v682
    %v3119 = vunpack.c.l.b16 %v683
    %v3120 = vunpack.c.l.b16 %v684
    %v3121 = vunpack.c.l.b16 %v685
    %v3122 = vunpack.c.l.b16 %v686
    %v3123 = vunpack.c.l.b16 %v687
    %v3124 = vunpack.c.l.b16 %v688
    %v3125 = vunpack.c.l.b16 %v689
    %v3126 = vunpack.c.l.b16 %v690
    %v3127 = vunpack.c.l.b16 %v691
    %v3128 = vunpack.c.l.b16 %v692
    %v3129 = vunpack.c.l.b16 %v693
    %v3130 = vunpack.c.l.b16 %v694
    %v3131 = vunpack.c.l.b16 %v695
    %v3132 = vunpack.c.l.b16 %v696
    %v3133 = vunpack.c.l.b16 %v697
    %v3134 = vunpack.c.l.b16 %v698
    %v3135 = vunpack.c.l.b16 %v699
    %v3136 = vunpack.c.l.b16 %v700
    %v3137 = vunpack.c.l.b16 %v701
    %v3138 = vunpack.c.l.b16 %v702
    %v3139 = vunpack.c.l.b16 %v703
    %v3140 = vunpack.c.l.b16 %v704
    %v3141 = vunpack.c.l.b16 %v705
    %v3142 = vunpack.c.l.b16 %v706
    %v3143 = vunpack.c.l.b16 %v707
    %v3144 = vunpack.c.l.b16 %v708
    %v3145 = vunpack.c.l.b16 %v709
    %v3146 = vunpack.c.l.b16 %v710
    %v3147 = vunpack.c.l.b16 %v711
    %v3148 = vunpack.c.l.b16 %v712
    %v3149 = vunpack.c.l.b16 %v713
    %v3150 = vunpack.c.l.b16 %v714
    %v3151 = vunpack.c.l.b16 %v715
    %v3152 = vunpack.c.l.b16 %v716
    %v3153 = vunpack.c.l.b16 %v717
    %v3154 = vunpack.c.l.b16 %v718
    %v3155 = vunpack.c.l.b16 %v719
    %v3156 = vunpack.c.l.b16 %v720
    %v3157 = vunpack.c.l.b16 %v721
    %v3158 = vunpack.c.l.b16 %v722
    %v3159 = vunpack.c.l.b16 %v723
    %v3160 = vunpack.c.l.b16 %v724
    %v3161 = vunpack.c.l.b16 %v725
    %v3162 = vunpack.c.l.b16 %v726
    %v3163 = vunpack.c.l.b16 %v727
    %v3164 = vunpack.c.l.b16 %v728
    %v3165 = vunpack.c.l.b16 %v729
    %v3166 = vunpack.c.l.b16 %v730
    %v3167 = vunpack.c.l.b16 %v731
    %v3168 = vunpack.c.l.b16 %v732
    %v3169 = vunpack.c.l.b16 %v733
    %v3170 = vunpack.c.l.b16 %v734
    %v3171 = vunpack.c.l.b16 %v735
    %v3172 = vunpack.c.l.b16 %v736
    %v3173 = vunpack.c.l.b16 %v737
    %v3174 = vunpack.c.l.b16 %v738
    %v3175 = vunpack.c.l.b16 %v739
    %v3176 = vunpack.c.l.b16 %v740
    %v3177 = vunpack.c.l.b16 %v741
    %v3178 = vunpack.c.l.b16 %v742
    %v3179 = vunpack.c.l.b16 %v743
    %v3180 = vunpack.c.l.b16 %v744
    %v3181 = vunpack.c.l.b16 %v745
    %v3182 = vunpack.c.l.b16 %v746
    %v3183 = vunpack.c.l.b16 %v747
    %v3184 = vunpack.c.l.b16 %v748
    %v3185 = vunpack.c.l.b16 %v749
    %v3186 = vunpack.c.l.b16 %v750
    %v3187 = vunpack.c.l.b16 %v751
    %v3188 = vunpack.c.l.b16 %v752
    %v3189 = vunpack.c.l.b16 %v753
    %v3190 = vunpack.c.l.b16 %v754
    %v3191 = vunpack.c.l.b16 %v755
    %v3192 = vunpack.c.l.b16 %v756
    %v3193 = vunpack.c.l.b16 %v757
    %v3194 = vunpack.c.l.b16 %v758
    %v3195 = vunpack.c.l.b16 %v759
    %v3196 = vunpack.c.l.b16 %v760
    %v3197 = vunpack.c.l.b16 %v761
    %v3198 = vunpack.c.l.b16 %v762
    %v3199 = vunpack.c.l.b16 %v763
    %v3200 = vunpack.c.l.b16 %v764
    %v3201 = vunpack.c.l.b16 %v765
    %v3202 = vunpack.c.l.b16 %v766
    %v3203 = vunpack.c.l.b16 %v767
    %v3204 = vunpack.c.l.b16 %v768
    %v3205 = vunpack.c.l.b16 %v769
    %v3206 = vunpack.c.l.b16 %v770
    %v3207 = vunpack.c.l.b16 %v771
    %v3208 = vunpack.c.l.b16 %v772
    %v3209 = vunpack.c.l.b16 %v773
    %v3210 = vunpack.c.l.b16 %v774
    %v3211 = vunpack.c.l.b16 %v775
    %v3212 = vunpack.c.l.b16 %v776
    %v3213 = vunpack.c.l.b16 %v777
    %v3214 = vunpack.c.l.b16 %v778
    %v3215 = vunpack.c.l.b16 %v779
    %v3216 = vunpack.c.l.b16 %v780
    %v3217 = vunpack.c.l.b16 %v781
    %v3218 = vunpack.c.l.b16 %v782
    %v3219 = vunpack.c.l.b16 %v783
    %v3220 = vunpack.c.l.b16 %v784
    %v3221 = vunpack.c.l.b16 %v785
    %v3222 = vunpack.c.l.b16 %v786
    %v3223 = vunpack.c.l.b16 %v787
    %v3224 = vunpack.c.l.b16 %v788
    %v3225 = vunpack.c.l.b16 %v789
    %v3226 = vunpack.c.l.b16 %v790
    %v3227 = vunpack.c.l.b16 %v791
    %v3228 = vunpack.c.l.b16 %v792
    %v3229 = vunpack.c.l.b16 %v793
    %v3230 = vunpack.c.l.b16 %v794
    %v3231 = vunpack.c.l.b16 %v795
    %v3232 = vunpack.c.l.b16 %v796
    %v3233 = vunpack.c.l.b16 %v797
    %v3234 = vunpack.c.l.b16 %v798
    %v3235 = vunpack.c.l.b16 %v799
    %v3236 = vunpack.c.l.b16 %v800
    %v3237 = vunpack.c.l.b16 %v801
    %v3238 = vunpack.c.l.b16 %v802
    %v3239 = vunpack.c.l.b16 %v803
    %v3240 = vunpack.c.l.b16 %v804
    %v3241 = vunpack.c.l.b16 %v805
    %v3242 = vunpack.c.l.b16 %v806
    %v3243 = vunpack.c.l.b16 %v807
    %v3244 = vunpack.c.l.b16 %v808
    %v3245 = vunpack.c.l.b16 %v809
    %v3246 = vunpack.c.l.b16 %v810
    %v3247 = vunpack.c.l.b16 %v811
    %v3248 = vunpack.c.l.b16 %v812
    %v3249 = vunpack.c.l.b16 %v813
    %v3250 = vunpack.c.l.b16 %v814
    %v3251 = vunpack.c.l.b16 %v815
    %v3252 = vunpack.c.l.b16 %v816
    %v3253 = vunpack.c.l.b16 %v817
    %v3254 = vunpack.c.l.b16 %v818
    %v3255 = vunpack.c.l.b16 %v819
    %v3256 = vunpack.c.l.b16 %v820
    %v3257 = vunpack.c.l.b16 %v821
    %v3258 = vunpack.c.l.b16 %v822
    %v3259 = vunpack.c.l.b16 %v823
    %v3260 = vunpack.c.l.b16 %v824
    %v3261 = vunpack.c.l.b16 %v825
    %v3262 = vunpack.c.l.b16 %v826
    %v3263 = vunpack.c.l.b16 %v827
    %v3264 = vunpack.c.l.b16 %v828
    %v3265 = vunpack.c.l.b16 %v829
    %v3266 = vunpack.c.l.b16 %v830
    %v3267 = vunpack.c.l.b16 %v831
    %v3268 = vunpack.c.l.b16 %v832
    %v3269 = vunpack.c.l.b16 %v833
    %v3270 = vunpack.c.l.b16 %v834
    %v3271 = vunpack.c.l.b16 %v835
    %v3272 = vunpack.c.l.b16 %v836
    %v3273 = vunpack.c.l.b16 %v837
    %v3274 = vunpack.c.l.b16 %v838
    %v3275 = vunpack.c.l.b16 %v839
    %v3276 = vunpack.c.l.b16 %v840
    %v3277 = vunpack.c.l.b16 %v841
    %v3278 = vunpack.c.l.b16 %v842
    %v3279 = vunpack.c.l.b16 %v843
    %v3280 = vunpack.c.l.b16 %v844
    %v3281 = vunpack.c.l.b16 %v845
    %v3282 = vunpack.c.l.b16 %v846
    %v3283 = vunpack.c.l.b16 %v847
    %v3284 = vunpack.c.l.b16 %v848
    %v3285 = vunpack.c.l.b16 %v849
    %v3286 = vunpack.c.l.b16 %v850
    %v3287 = vunpack.c.l.b16 %v851
    %v3288 = vunpack.c.l.b16 %v852
    %v3289 = vunpack.c.l.b16 %v853
    %v3290 = vunpack.c.l.b16 %v854
    %v3291 = vunpack.c.l.b16 %v855
    %v3292 = vunpack.c.l.b16 %v856
    %v3293 = vunpack.c.l.b16 %v857
    %v3294 = vunpack.c.l.b16 %v858
    %v3295 = vunpack.c.l.b16 %v859
    %v3296 = vunpack.c.l.b16 %v860
    %v3297 = vunpack.c.l.b16 %v861
    %v3298 = vunpack.c.l.b16 %v862
    %v3299 = vunpack.c.l.b16 %v863
    %v3300 = vunpack.c.l.b16 %v864
    %v3301 = vunpack.c.l.b16 %v865
    %v3302 = vunpack.c.l.b16 %v866
    %v3303 = vunpack.c.l.b16 %v867
    %v3304 = vunpack.c.l.b16 %v868
    %v3305 = vunpack.c.l.b16 %v869
    %v3306 = vunpack.c.l.b16 %v870
    %v3307 = vunpack.c.l.b16 %v871
    %v3308 = vunpack.c.l.b16 %v872
    %v3309 = vunpack.c.l.b16 %v873
    %v3310 = vunpack.c.l.b16 %v874
    %v3311 = vunpack.c.l.b16 %v875
    %v3312 = vunpack.c.l.b16 %v876
    %v3313 = vunpack.c.l.b16 %v877
    %v3314 = vunpack.c.l.b16 %v878
    %v3315 = vunpack.c.l.b16 %v879
    %v3316 = vunpack.c.l.b16 %v880
    %v3317 = vunpack.c.l.b16 %v881
    %v3318 = vunpack.c.l.b16 %v882
    %v3319 = vunpack.c.l.b16 %v883
    %v3320 = vunpack.c.l.b16 %v884
    %v3321 = vunpack.c.l.b16 %v885
    %v3322 = vunpack.c.l.b16 %v886
    %v3323 = vunpack.c.l.b16 %v887
    %v3324 = vunpack.c.l.b16 %v888
    %v3325 = vunpack.c.l.b16 %v889
    %v3326 = vunpack.c.l.b16 %v890
    %v3327 = vunpack.c.l.b16 %v891
    %v3328 = vunpack.c.l.b16 %v892
    %v3329 = vunpack.c.l.b16 %v893
    %v3330 = vunpack.c.l.b16 %v894
    %v3331 = vunpack.c.l.b16 %v895
    %v3332 = vunpack.c.l.b16 %v896
    %v3333 = vunpack.c.l.b16 %v897
    %v3334 = vunpack.c.l.b16 %v898
    %v3335 = vunpack.c.l.b16 %v899
    %v3336 = vunpack.c.l.b16 %v900
    %v3337 = vunpack.c.l.b16 %v901
    %v3338 = vunpack.c.l.b16 %v902
    %v3339 = vunpack.c.l.b16 %v903
    %v3340 = vunpack.c.l.b16 %v904
    %v3341 = vunpack.c.l.b16 %v905
    %v3342 = vunpack.c.l.b16 %v906
    %v3343 = vunpack.c.l.b16 %v907
    %v3344 = vunpack.c.l.b16 %v908
    %v3345 = vunpack.c.l.b16 %v909
    %v3346 = vunpack.c.l.b16 %v910
    %v3347 = vunpack.c.l.b16 %v911
    %v3348 = vunpack.c.l.b16 %v912
    %v3349 = vunpack.c.l.b16 %v913
    %v3350 = vunpack.c.l.b16 %v914
    %v3351 = vunpack.c.l.b16 %v915
    %v3352 = vunpack.c.l.b16 %v916
    %v3353 = vunpack.c.l.b16 %v917
    %v3354 = vunpack.c.l.b16 %v918
    %v3355 = vunpack.c.l.b16 %v919
    %v3356 = vunpack.c.l.b16 %v920
    %v3357 = vunpack.c.l.b16 %v921
    %v3358 = vunpack.c.l.b16 %v922
    %v3359 = vunpack.c.l.b16 %v923
    %v3360 = vunpack.c.l.b16 %v924
    %v3361 = vunpack.c.l.b16 %v925
    %v3362 = vunpack.c.l.b16 %v926
    %v3363 = vunpack.c.l.b16 %v927
    %v3364 = vunpack.c.l.b16 %v928
    %v3365 = vunpack.c.l.b16 %v929
    %v3366 = vunpack.c.l.b16 %v930
    %v3367 = vunpack.c.l.b16 %v931
    %v3368 = vunpack.c.l.b16 %v932
    %v3369 = vunpack.c.l.b16 %v933
    %v3370 = vunpack.c.l.b16 %v934
    %v3371 = vunpack.c.l.b16 %v935
    %v3372 = vunpack.c.l.b16 %v936
    %v3373 = vunpack.c.l.b16 %v937
    %v3374 = vunpack.c.l.b16 %v938
    %v3375 = vunpack.c.l.b16 %v939
    %v3376 = vunpack.c.l.b16 %v940
    %v3377 = vunpack.c.l.b16 %v941
    %v3378 = vunpack.c.l.b16 %v942
    %v3379 = vunpack.c.l.b16 %v943
    %v3380 = vunpack.c.l.b16 %v944
    %v3381 = vunpack.c.l.b16 %v945
    %v3382 = vunpack.c.l.b16 %v946
    %v3383 = vunpack.c.l.b16 %v947
    %v3384 = vunpack.c.l.b16 %v948
    %v3385 = vunpack.c.l.b16 %v949
    %v3386 = vunpack.c.l.b16 %v950
    %v3387 = vunpack.c.l.b16 %v951
    %v3388 = vunpack.c.l.b16 %v952
    %v3389 = vunpack.c.l.b16 %v953
    %v3390 = vunpack.c.l.b16 %v954
    %v3391 = vunpack.c.l.b16 %v955
    %v3392 = vunpack.c.l.b16 %v956
    %v3393 = vunpack.c.l.b16 %v957
    %v3394 = vunpack.c.l.b16 %v958
    %v3395 = vunpack.c.l.b16 %v959
    %v3396 = vunpack.c.l.b16 %v960
    %v3397 = vunpack.c.l.b16 %v961
    %v3398 = vunpack.c.l.b16 %v962
    %v3399 = vunpack.c.l.b16 %v963
    %v3400 = vunpack.c.l.b16 %v964
    %v3401 = vunpack.c.l.b16 %v965
    %v3402 = vunpack.c.l.b16 %v966
    %v3403 = vunpack.c.l.b16 %v967
    %v3404 = vunpack.c.l.b16 %v968
    %v3405 = vunpack.c.l.b16 %v969
    %v3406 = vunpack.c.l.b16 %v970
    %v3407 = vunpack.c.l.b16 %v971
    %v3408 = vunpack.c.l.b16 %v972
    %v3409 = vunpack.c.l.b16 %v973
    %v3410 = vunpack.c.l.b16 %v974
    %v3411 = vunpack.c.l.b16 %v975
    %v3412 = vunpack.c.l.b16 %v976
    %v3413 = vunpack.c.l.b16 %v977
    %v3414 = vunpack.c.l.b16 %v978
    %v3415 = vunpack.c.l.b16 %v979
    %v3416 = vunpack.c.l.b16 %v980
    %v3417 = vunpack.c.l.b16 %v981
    %v3418 = vunpack.c.l.b16 %v982
    %v3419 = vunpack.c.l.b16 %v983
    %v3420 = vunpack.c.l.b16 %v984
    %v3421 = vunpack.c.l.b16 %v985
    %v3422 = vunpack.c.l.b16 %v986
    %v3423 = vunpack.c.l.b16 %v987
    %v3424 = vunpack.c.l.b16 %v988
    %v3425 = vunpack.c.l.b16 %v989
    %v3426 = vunpack.c.l.b16 %v990
    %v3427 = vunpack.c.l.b16 %v991
    %v3428 = vunpack.c.l.b16 %v992
    %v3429 = vunpack.c.l.b16 %v993
    %v3430 = vunpack.c.l.b16 %v994
    %v3431 = vunpack.c.l.b16 %v995
    %v3432 = vunpack.c.l.b16 %v996
    %v3433 = vunpack.c.l.b16 %v997
    %v3434 = vunpack.c.l.b16 %v998
    %v3435 = vunpack.c.l.b16 %v999
    %v3436 = vunpack.c.l.b16 %v1000
    %v3437 = vunpack.c.l.b16 %v1001
    %v3438 = vunpack.c.l.b16 %v1002
    %v3439 = vunpack.c.l.b16 %v1003
    %v3440 = vunpack.c.l.b16 %v1004
    %v3441 = vunpack.c.l.b16 %v1005
    %v3442 = vunpack.c.l.b16 %v1006
    %v3443 = vunpack.c.l.b16 %v1007
    %v3444 = vunpack.c.l.b16 %v1008
    %v3445 = vunpack.c.l.b16 %v1009
    %v3446 = vunpack.c.l.b16 %v1010
    %v3447 = vunpack.c.l.b16 %v1011
    %v3448 = vunpack.c.l.b16 %v1012
    %v3449 = vunpack.c.l.b16 %v1013
    %v3450 = vunpack.c.l.b16 %v1014
    %v3451 = vunpack.c.l.b16 %v1015
    %v3452 = vunpack.c.l.b16 %v1016
    %v3453 = vunpack.c.l.b16 %v1017
    %v3454 = vunpack.c.l.b16 %v1018
    %v3455 = vunpack.c.l.b16 %v1019
    %v3456 = vunpack.c.l.b16 %v1020
    %v3457 = vunpack.c.l.b16 %v1021
    %v3458 = vunpack.c.l.b16 %v1022
    %v3459 = vunpack.c.l.b16 %v1023
    %v3460 = vunpack.c.l.b16 %v1024
    %v3461 = vunpack.c.l.b16 %v1025
    %v3462 = vunpack.c.l.b16 %v1026
    %v3463 = vunpack.c.l.b16 %v1027
    %v3464 = vunpack.c.l.b16 %v1028
    %v3465 = vunpack.c.l.b16 %v1029
    %v3466 = vunpack.c.l.b16 %v1030
    %v3467 = vunpack.c.l.b16 %v1031
    %v3468 = vunpack.c.l.b16 %v1032
    %v3469 = vunpack.c.l.b16 %v1033
    %v3470 = vunpack.c.l.b16 %v1034
    %v3471 = vunpack.c.l.b16 %v1035
    %v3472 = vunpack.c.l.b16 %v1036
    %v3473 = vunpack.c.l.b16 %v1037
    %v3474 = vunpack.c.l.b16 %v1038
    %v3475 = vunpack.c.l.b16 %v1039
    %v3476 = vunpack.c.l.b16 %v1040
    %v3477 = vunpack.c.l.b16 %v1041
    %v3478 = vunpack.c.l.b16 %v1042
    %v3479 = vunpack.c.l.b16 %v1043
    %v3480 = vunpack.c.l.b16 %v1044
    %v3481 = vunpack.c.l.b16 %v1045
    %v3482 = vunpack.c.l.b16 %v1046
    %v3483 = vunpack.c.l.b16 %v1047
    %v3484 = vunpack.c.l.b16 %v1048
    %v3485 = vunpack.c.l.b16 %v1049
    %v3486 = vunpack.c.l.b16 %v1050
    %v3487 = vunpack.c.l.b16 %v1051
    %v3488 = vunpack.c.l.b16 %v1052
    %v3489 = vunpack.c.l.b16 %v1053
    %v3490 = vunpack.c.l.b16 %v1054
    %v3491 = vunpack.c.l.b16 %v1055
    %v3492 = vunpack.c.l.b16 %v1056
    %v3493 = vunpack.c.l.b16 %v1057
    %v3494 = vunpack.c.l.b16 %v1058
    %v3495 = vunpack.c.l.b16 %v1059
    %v3496 = vunpack.c.l.b16 %v1060
    %v3497 = vunpack.c.l.b16 %v1061
    %v3498 = vunpack.c.l.b16 %v1062
    %v3499 = vunpack.c.l.b16 %v1063
    %v3500 = vunpack.c.l.b16 %v1064
    %v3501 = vunpack.c.l.b16 %v1065
    %v3502 = vunpack.c.l.b16 %v1066
    %v3503 = vunpack.c.l.b16 %v1067
    %v3504 = vunpack.c.l.b16 %v1068
    %v3505 = vunpack.c.l.b16 %v1069
    %v3506 = vunpack.c.l.b16 %v1070
    %v3507 = vunpack.c.l.b16 %v1071
    %v3508 = vunpack.c.l.b16 %v1072
    %v3509 = vunpack.c.l.b16 %v1073
    %v3510 = vunpack.c.l.b16 %v1074
    %v3511 = vunpack.c.l.b16 %v1075
    %v3512 = vunpack.c.l.b16 %v1076
    %v3513 = vunpack.c.l.b16 %v1077
    %v3514 = vpack.c.b16 %v2587, %v2586
    %v3515 = vpack.c.b16 %v2589, %v2588
    %v3516 = vpack.c.b16 %v2591, %v2590
    %v3517 = vpack.c.b16 %v2593, %v2592
    %v3518 = vpack.c.b16 %v2595, %v2594
    %v3519 = vpack.c.b16 %v2597, %v2596
    %v3520 = vpack.c.b16 %v2599, %v2598
    %v3521 = vpack.c.b16 %v2601, %v2600
    %v3522 = vpack.c.b16 %v2603, %v2602
    %v3523 = vpack.c.b16 %v2605, %v2604
    %v3524 = vpack.c.b16 %v2607, %v2606
    %v3525 = vpack.c.b16 %v2609, %v2608
    %v3526 = vpack.c.b16 %v2611, %v2610
    %v3527 = vpack.c.b16 %v2613, %v2612
    %v3528 = vpack.c.b16 %v2615, %v2614
    %v3529 = vpack.c.b16 %v2617, %v2616
    %v3530 = vpack.c.b16 %v2619, %v2618
    %v3531 = vpack.c.b16 %v2621, %v2620
    %v3532 = vpack.c.b16 %v2623, %v2622
    %v3533 = vpack.c.b16 %v2625, %v2624
    %v3534 = vpack.c.b16 %v2627, %v2626
    %v3535 = vpack.c.b16 %v2629, %v2628
    %v3536 = vpack.c.b16 %v2631, %v2630
    %v3537 = vpack.c.b16 %v2633, %v2632
    %v3538 = vpack.c.b16 %v2635, %v2634
    %v3539 = vpack.c.b16 %v2637, %v2636
    %v3540 = vpack.c.b16 %v2639, %v2638
    %v3541 = vpack.c.b16 %v2641, %v2640
    %v3542 = vpack.c.b16 %v2643, %v2642
    %v3543 = vpack.c.b16 %v2645, %v2644
    %v3544 = vpack.c.b16 %v2647, %v2646
    %v3545 = vpack.c.b16 %v2649, %v2648
    %v3546 = vpack.c.b16 %v2651, %v2650
    %v3547 = vpack.c.b16 %v2653, %v2652
    %v3548 = vpack.c.b16 %v2655, %v2654
    %v3549 = vpack.c.b16 %v2657, %v2656
    %v3550 = vpack.c.b16 %v2659, %v2658
    %v3551 = vpack.c.b16 %v2661, %v2660
    %v3552 = vpack.c.b16 %v2663, %v2662
    %v3553 = vpack.c.b16 %v2665, %v2664
    %v3554 = vpack.c.b16 %v2667, %v2666
    %v3555 = vpack.c.b16 %v2669, %v2668
    %v3556 = vpack.c.b16 %v2671, %v2670
    %v3557 = vpack.c.b16 %v2673, %v2672
    %v3558 = vpack.c.b16 %v2675, %v2674
    %v3559 = vpack.c.b16 %v2677, %v2676
    %v3560 = vpack.c.b16 %v2679, %v2678
    %v3561 = vpack.c.b16 %v2681, %v2680
    %v3562 = vpack.c.b16 %v2683, %v2682
    %v3563 = vpack.c.b16 %v2685, %v2684
    %v3564 = vpack.c.b16 %v2687, %v2686
    %v3565 = vpack.c.b16 %v2689, %v2688
    %v3566 = vpack.c.b16 %v2691, %v2690
    %v3567 = vpack.c.b16 %v2693, %v2692
    %v3568 = vpack.c.b16 %v2695, %v2694
    %v3569 = vpack.c.b16 %v2697, %v2696
    %v3570 = vpack.c.b16 %v2699, %v2698
    %v3571 = vpack.c.b16 %v2701, %v2700
    %v3572 = vpack.c.b16 %v2703, %v2702
    %v3573 = vpack.c.b16 %v2705, %v2704
    %v3574 = vpack.c.b16 %v2707, %v2706
    %v3575 = vpack.c.b16 %v2709, %v2708
    %v3576 = vpack.c.b16 %v2711, %v2710
    %v3577 = vpack.c.b16 %v2713, %v2712
    %v3578 = vpack.c.b16 %v2715, %v2714
    %v3579 = vpack.c.b16 %v2717, %v2716
    %v3580 = vpack.c.b16 %v2719, %v2718
    %v3581 = vpack.c.b16 %v2721, %v2720
    %v3582 = vpack.c.b16 %v2723, %v2722
    %v3583 = vpack.c.b16 %v2725, %v2724
    %v3584 = vpack.c.b16 %v2727, %v2726
    %v3585 = vpack.c.b16 %v2729, %v2728
    %v3586 = vpack.c.b16 %v2731, %v2730
    %v3587 = vpack.c.b16 %v2733, %v2732
    %v3588 = vpack.c.b16 %v2735, %v2734
    %v3589 = vpack.c.b16 %v2737, %v2736
    %v3590 = vpack.c.b16 %v2739, %v2738
    %v3591 = vpack.c.b16 %v2741, %v2740
    %v3592 = vpack.c.b16 %v2743, %v2742
    %v3593 = vpack.c.b16 %v2745, %v2744
    %v3594 = vpack.c.b16 %v2747, %v2746
    %v3595 = vpack.c.b16 %v2749, %v2748
    %v3596 = vpack.c.b16 %v2751, %v2750
    %v3597 = vpack.c.b16 %v2753, %v2752
    %v3598 = vpack.c.b16 %v2755, %v2754
    %v3599 = vpack.c.b16 %v2757, %v2756
    %v3600 = vpack.c.b16 %v2759, %v2758
    %v3601 = vpack.c.b16 %v2761, %v2760
    %v3602 = vpack.c.b16 %v2763, %v2762
    %v3603 = vpack.c.b16 %v2765, %v2764
    %v3604 = vpack.c.b16 %v2767, %v2766
    %v3605 = vpack.c.b16 %v2769, %v2768
    %v3606 = vpack.c.b16 %v2771, %v2770
    %v3607 = vpack.c.b16 %v2773, %v2772
    %v3608 = vpack.c.b16 %v2775, %v2774
    %v3609 = vpack.c.b16 %v2777, %v2776
    %v3610 = vpack.c.b16 %v2779, %v2778
    %v3611 = vpack.c.b16 %v2781, %v2780
    %v3612 = vpack.c.b16 %v2783, %v2782
    %v3613 = vpack.c.b16 %v2785, %v2784
    %v3614 = vpack.c.b16 %v2787, %v2786
    %v3615 = vpack.c.b16 %v2789, %v2788
    %v3616 = vpack.c.b16 %v2791, %v2790
    %v3617 = vpack.c.b16 %v2793, %v2792
    %v3618 = vpack.c.b16 %v2795, %v2794
    %v3619 = vpack.c.b16 %v2797, %v2796
    %v3620 = vpack.c.b16 %v2799, %v2798
    %v3621 = vpack.c.b16 %v2801, %v2800
    %v3622 = vpack.c.b16 %v2803, %v2802
    %v3623 = vpack.c.b16 %v2805, %v2804
    %v3624 = vpack.c.b16 %v2807, %v2806
    %v3625 = vpack.c.b16 %v2809, %v2808
    %v3626 = vpack.c.b16 %v2811, %v2810
    %v3627 = vpack.c.b16 %v2813, %v2812
    %v3628 = vpack.c.b16 %v2815, %v2814
    %v3629 = vpack.c.b16 %v2817, %v2816
    %v3630 = vpack.c.b16 %v2819, %v2818
    %v3631 = vpack.c.b16 %v2821, %v2820
    %v3632 = vpack.c.b16 %v2823, %v2822
    %v3633 = vpack.c.b16 %v2825, %v2824
    %v3634 = vpack.c.b16 %v2827, %v2826
    %v3635 = vpack.c.b16 %v2829, %v2828
    %v3636 = vpack.c.b16 %v2831, %v2830
    %v3637 = vpack.c.b16 %v2833, %v2832
    %v3638 = vpack.c.b16 %v2835, %v2834
    %v3639 = vpack.c.b16 %v2837, %v2836
    %v3640 = vpack.c.b16 %v2839, %v2838
    %v3641 = vpack.c.b16 %v2841, %v2840
    %v3642 = vpack.c.b16 %v2843, %v2842
    %v3643 = vpack.c.b16 %v2845, %v2844
    %v3644 = vpack.c.b16 %v2847, %v2846
    %v3645 = vpack.c.b16 %v2849, %v2848
    %v3646 = vpack.c.b16 %v2851, %v2850
    %v3647 = vpack.c.b16 %v2853, %v2852
    %v3648 = vpack.c.b16 %v2855, %v2854
    %v3649 = vpack.c.b16 %v2857, %v2856
    %v3650 = vpack.c.b16 %v2859, %v2858
    %v3651 = vpack.c.b16 %v2861, %v2860
    %v3652 = vpack.c.b16 %v2863, %v2862
    %v3653 = vpack.c.b16 %v2865, %v2864
    %v3654 = vpack.c.b16 %v2867, %v2866
    %v3655 = vpack.c.b16 %v2869, %v2868
    %v3656 = vpack.c.b16 %v2871, %v2870
    %v3657 = vpack.c.b16 %v2873, %v2872
    %v3658 = vpack.c.b16 %v2875, %v2874
    %v3659 = vpack.c.b16 %v2877, %v2876
    %v3660 = vpack.c.b16 %v2879, %v2878
    %v3661 = vpack.c.b16 %v2881, %v2880
    %v3662 = vpack.c.b16 %v2883, %v2882
    %v3663 = vpack.c.b16 %v2885, %v2884
    %v3664 = vpack.c.b16 %v2887, %v2886
    %v3665 = vpack.c.b16 %v2889, %v2888
    %v3666 = vpack.c.b16 %v2891, %v2890
    %v3667 = vpack.c.b16 %v2893, %v2892
    %v3668 = vpack.c.b16 %v2895, %v2894
    %v3669 = vpack.c.b16 %v2897, %v2896
    %v3670 = vpack.c.b16 %v2899, %v2898
    %v3671 = vpack.c.b16 %v2901, %v2900
    %v3672 = vpack.c.b16 %v2903, %v2902
    %v3673 = vpack.c.b16 %v2905, %v2904
    %v3674 = vpack.c.b16 %v2907, %v2906
    %v3675 = vpack.c.b16 %v2909, %v2908
    %v3676 = vpack.c.b16 %v2911, %v2910
    %v3677 = vpack.c.b16 %v2913, %v2912
    %v3678 = vpack.c.b16 %v2915, %v2914
    %v3679 = vpack.c.b16 %v2917, %v2916
    %v3680 = vpack.c.b16 %v2919, %v2918
    %v3681 = vpack.c.b16 %v2921, %v2920
    %v3682 = vpack.c.b16 %v2923, %v2922
    %v3683 = vpack.c.b16 %v2925, %v2924
    %v3684 = vpack.c.b16 %v2927, %v2926
    %v3685 = vpack.c.b16 %v2929, %v2928
    %v3686 = vpack.c.b16 %v2931, %v2930
    %v3687 = vpack.c.b16 %v2933, %v2932
    %v3688 = vpack.c.b16 %v2935, %v2934
    %v3689 = vpack.c.b16 %v2937, %v2936
    %v3690 = vpack.c.b16 %v2939, %v2938
    %v3691 = vpack.c.b16 %v2941, %v2940
    %v3692 = vpack.c.b16 %v2943, %v2942
    %v3693 = vpack.c.b16 %v2945, %v2944
    %v3694 = vpack.c.b16 %v2947, %v2946
    %v3695 = vpack.c.b16 %v2949, %v2948
    %v3696 = vpack.c.b16 %v2951, %v2950
    %v3697 = vpack.c.b16 %v2953, %v2952
    %v3698 = vpack.c.b16 %v2955, %v2954
    %v3699 = vpack.c.b16 %v2957, %v2956
    %v3700 = vpack.c.b16 %v2959, %v2958
    %v3701 = vpack.c.b16 %v2961, %v2960
    %v3702 = vpack.c.b16 %v2963, %v2962
    %v3703 = vpack.c.b16 %v2965, %v2964
    %v3704 = vpack.c.b16 %v2967, %v2966
    %v3705 = vpack.c.b16 %v2969, %v2968
    %v3706 = vpack.c.b16 %v2971, %v2970
    %v3707 = vpack.c.b16 %v2973, %v2972
    %v3708 = vpack.c.b16 %v2975, %v2974
    %v3709 = vpack.c.b16 %v2977, %v2976
    %v3710 = vpack.c.b16 %v2979, %v2978
    %v3711 = vpack.c.b16 %v2981, %v2980
    %v3712 = vpack.c.b16 %v2983, %v2982
    %v3713 = vpack.c.b16 %v2985, %v2984
    %v3714 = vpack.c.b16 %v2987, %v2986
    %v3715 = vpack.c.b16 %v2989, %v2988
    %v3716 = vpack.c.b16 %v2991, %v2990
    %v3717 = vpack.c.b16 %v2993, %v2992
    %v3718 = vpack.c.b16 %v2995, %v2994
    %v3719 = vpack.c.b16 %v2997, %v2996
    %v3720 = vpack.c.b16 %v2999, %v2998
    %v3721 = vpack.c.b16 %v3001, %v3000
    %v3722 = vpack.c.b16 %v3003, %v3002
    %v3723 = vpack.c.b16 %v3005, %v3004
    %v3724 = vpack.c.b16 %v3007, %v3006
    %v3725 = vpack.c.b16 %v3009, %v3008
    %v3726 = vpack.c.b16 %v3011, %v3010
    %v3727 = vpack.c.b16 %v3013, %v3012
    %v3728 = vpack.c.b16 %v3015, %v3014
    %v3729 = vpack.c.b16 %v3017, %v3016
    %v3730 = vpack.c.b16 %v3019, %v3018
    %v3731 = vpack.c.b16 %v3021, %v3020
    %v3732 = vpack.c.b16 %v3023, %v3022
    %v3733 = vpack.c.b16 %v3025, %v3024
    %v3734 = vpack.c.b16 %v3027, %v3026
    %v3735 = vpack.c.b16 %v3029, %v3028
    %v3736 = vpack.c.b16 %v3031, %v3030
    %v3737 = vpack.c.b16 %v3033, %v3032
    %v3738 = vpack.c.b16 %v3035, %v3034
    %v3739 = vpack.c.b16 %v3037, %v3036
    %v3740 = vpack.c.b16 %v3039, %v3038
    %v3741 = vpack.c.b16 %v3041, %v3040
    %v3742 = vpack.c.b16 %v3043, %v3042
    %v3743 = vpack.c.b16 %v3045, %v3044
    %v3744 = vpack.c.b16 %v3047, %v3046
    %v3745 = vpack.c.b16 %v3049, %v3048
    %v3746 = vpack.c.b16 %v3051, %v3050
    %v3747 = vpack.c.b16 %v3053, %v3052
    %v3748 = vpack.c.b16 %v3055, %v3054
    %v3749 = vpack.c.b16 %v3057, %v3056
    %v3750 = vpack.c.b16 %v3059, %v3058
    %v3751 = vpack.c.b16 %v3061, %v3060
    %v3752 = vpack.c.b16 %v3063, %v3062
    %v3753 = vpack.c.b16 %v3065, %v3064
    %v3754 = vpack.c.b16 %v3067, %v3066
    %v3755 = vpack.c.b16 %v3069, %v3068
    %v3756 = vpack.c.b16 %v3071, %v3070
    %v3757 = vpack.c.b16 %v3073, %v3072
    %v3758 = vpack.c.b16 %v3075, %v3074
    %v3759 = vpack.c.b16 %v3077, %v3076
    %v3760 = vpack.c.b16 %v3079, %v3078
    %v3761 = vpack.c.b16 %v3081, %v3080
    %v3762 = vpack.c.b16 %v3083, %v3082
    %v3763 = vpack.c.b16 %v3085, %v3084
    %v3764 = vpack.c.b16 %v3087, %v3086
    %v3765 = vpack.c.b16 %v3089, %v3088
    %v3766 = vpack.c.b16 %v3091, %v3090
    %v3767 = vpack.c.b16 %v3093, %v3092
    %v3768 = vpack.c.b16 %v3095, %v3094
    %v3769 = vpack.c.b16 %v3097, %v3096
    %v3770 = vpack.c.b16 %v3099, %v3098
    %v3771 = vpack.c.b16 %v3101, %v3100
    %v3772 = vpack.c.b16 %v3103, %v3102
    %v3773 = vpack.c.b16 %v3105, %v3104
    %v3774 = vpack.c.b16 %v3107, %v3106
    %v3775 = vpack.c.b16 %v3109, %v3108
    %v3776 = vpack.c.b16 %v3111, %v3110
    %v3777 = vpack.c.b16 %v3113, %v3112
    %v3778 = vpack.c.b16 %v3115, %v3114
    %v3779 = vpack.c.b16 %v3117, %v3116
    %v3780 = vpack.c.b16 %v3119, %v3118
    %v3781 = vpack.c.b16 %v3121, %v3120
    %v3782 = vpack.c.b16 %v3123, %v3122
    %v3783 = vpack.c.b16 %v3125, %v3124
    %v3784 = vpack.c.b16 %v3127, %v3126
    %v3785 = vpack.c.b16 %v3129, %v3128
    %v3786 = vpack.c.b16 %v3131, %v3130
    %v3787 = vpack.c.b16 %v3133, %v3132
    %v3788 = vpack.c.b16 %v3135, %v3134
    %v3789 = vpack.c.b16 %v3137, %v3136
    %v3790 = vpack.c.b16 %v3139, %v3138
    %v3791 = vpack.c.b16 %v3141, %v3140
    %v3792 = vpack.c.b16 %v3143, %v3142
    %v3793 = vpack.c.b16 %v3145, %v3144
    %v3794 = vpack.c.b16 %v3147, %v3146
    %v3795 = vpack.c.b16 %v3149, %v3148
    %v3796 = vpack.c.b16 %v3151, %v3150
    %v3797 = vpack.c.b16 %v3153, %v3152
    %v3798 = vpack.c.b16 %v3155, %v3154
    %v3799 = vpack.c.b16 %v3157, %v3156
    %v3800 = vpack.c.b16 %v3159, %v3158
    %v3801 = vpack.c.b16 %v3161, %v3160
    %v3802 = vpack.c.b16 %v3163, %v3162
    %v3803 = vpack.c.b16 %v3165, %v3164
    %v3804 = vpack.c.b16 %v3167, %v3166
    %v3805 = vpack.c.b16 %v3169, %v3168
    %v3806 = vpack.c.b16 %v3171, %v3170
    %v3807 = vpack.c.b16 %v3173, %v3172
    %v3808 = vpack.c.b16 %v3175, %v3174
    %v3809 = vpack.c.b16 %v3177, %v3176
    %v3810 = vpack.c.b16 %v3179, %v3178
    %v3811 = vpack.c.b16 %v3181, %v3180
    %v3812 = vpack.c.b16 %v3183, %v3182
    %v3813 = vpack.c.b16 %v3185, %v3184
    %v3814 = vpack.c.b16 %v3187, %v3186
    %v3815 = vpack.c.b16 %v3189, %v3188
    %v3816 = vpack.c.b16 %v3191, %v3190
    %v3817 = vpack.c.b16 %v3193, %v3192
    %v3818 = vpack.c.b16 %v3195, %v3194
    %v3819 = vpack.c.b16 %v3197, %v3196
    %v3820 = vpack.c.b16 %v3199, %v3198
    %v3821 = vpack.c.b16 %v3201, %v3200
    %v3822 = vpack.c.b16 %v3203, %v3202
    %v3823 = vpack.c.b16 %v3205, %v3204
    %v3824 = vpack.c.b16 %v3207, %v3206
    %v3825 = vpack.c.b16 %v3209, %v3208
    %v3826 = vpack.c.b16 %v3211, %v3210
    %v3827 = vpack.c.b16 %v3213, %v3212
    %v3828 = vpack.c.b16 %v3215, %v3214
    %v3829 = vpack.c.b16 %v3217, %v3216
    %v3830 = vpack.c.b16 %v3219, %v3218
    %v3831 = vpack.c.b16 %v3221, %v3220
    %v3832 = vpack.c.b16 %v3223, %v3222
    %v3833 = vpack.c.b16 %v3225, %v3224
    %v3834 = vpack.c.b16 %v3227, %v3226
    %v3835 = vpack.c.b16 %v3229, %v3228
    %v3836 = vpack.c.b16 %v3231, %v3230
    %v3837 = vpack.c.b16 %v3233, %v3232
    %v3838 = vpack.c.b16 %v3235, %v3234
    %v3839 = vpack.c.b16 %v3237, %v3236
    %v3840 = vpack.c.b16 %v3239, %v3238
    %v3841 = vpack.c.b16 %v3241, %v3240
    %v3842 = vpack.c.b16 %v3243, %v3242
    %v3843 = vpack.c.b16 %v3245, %v3244
    %v3844 = vpack.c.b16 %v3247, %v3246
    %v3845 = vpack.c.b16 %v3249, %v3248
    %v3846 = vpack.c.b16 %v3251, %v3250
    %v3847 = vpack.c.b16 %v3253, %v3252
    %v3848 = vpack.c.b16 %v3255, %v3254
    %v3849 = vpack.c.b16 %v3257, %v3256
    %v3850 = vpack.c.b16 %v3259, %v3258
    %v3851 = vpack.c.b16 %v3261, %v3260
    %v3852 = vpack.c.b16 %v3263, %v3262
    %v3853 = vpack.c.b16 %v3265, %v3264
    %v3854 = vpack.c.b16 %v3267, %v3266
    %v3855 = vpack.c.b16 %v3269, %v3268
    %v3856 = vpack.c.b16 %v3271, %v3270
    %v3857 = vpack.c.b16 %v3273, %v3272
    %v3858 = vpack.c.b16 %v3275, %v3274
    %v3859 = vpack.c.b16 %v3277, %v3276
    %v3860 = vpack.c.b16 %v3279, %v3278
    %v3861 = vpack.c.b16 %v3281, %v3280
    %v3862 = vpack.c.b16 %v3283, %v3282
    %v3863 = vpack.c.b16 %v3285, %v3284
    %v3864 = vpack.c.b16 %v3287, %v3286
    %v3865 = vpack.c.b16 %v3289, %v3288
    %v3866 = vpack.c.b16 %v3291, %v3290
    %v3867 = vpack.c.b16 %v3293, %v3292
    %v3868 = vpack.c.b16 %v3295, %v3294
    %v3869 = vpack.c.b16 %v3297, %v3296
    %v3870 = vpack.c.b16 %v3299, %v3298
    %v3871 = vpack.c.b16 %v3301, %v3300
    %v3872 = vpack.c.b16 %v3303, %v3302
    %v3873 = vpack.c.b16 %v3305, %v3304
    %v3874 = vpack.c.b16 %v3307, %v3306
    %v3875 = vpack.c.b16 %v3309, %v3308
    %v3876 = vpack.c.b16 %v3311, %v3310
    %v3877 = vpack.c.b16 %v3313, %v3312
    %v3878 = vpack.c.b16 %v3315, %v3314
    %v3879 = vpack.c.b16 %v3317, %v3316
    %v3880 = vpack.c.b16 %v3319, %v3318
    %v3881 = vpack.c.b16 %v3321, %v3320
    %v3882 = vpack.c.b16 %v3323, %v3322
    %v3883 = vpack.c.b16 %v3325, %v3324
    %v3884 = vpack.c.b16 %v3327, %v3326
    %v3885 = vpack.c.b16 %v3329, %v3328
    %v3886 = vpack.c.b16 %v3331, %v3330
    %v3887 = vpack.c.b16 %v3333, %v3332
    %v3888 = vpack.c.b16 %v3335, %v3334
    %v3889 = vpack.c.b16 %v3337, %v3336
    %v3890 = vpack.c.b16 %v3339, %v3338
    %v3891 = vpack.c.b16 %v3341, %v3340
    %v3892 = vpack.c.b16 %v3343, %v3342
    %v3893 = vpack.c.b16 %v3345, %v3344
    %v3894 = vpack.c.b16 %v3347, %v3346
    %v3895 = vpack.c.b16 %v3349, %v3348
    %v3896 = vpack.c.b16 %v3351, %v3350
    %v3897 = vpack.c.b16 %v3353, %v3352
    %v3898 = vpack.c.b16 %v3355, %v3354
    %v3899 = vpack.c.b16 %v3357, %v3356
    %v3900 = vpack.c.b16 %v3359, %v3358
    %v3901 = vpack.c.b16 %v3361, %v3360
    %v3902 = vpack.c.b16 %v3363, %v3362
    %v3903 = vpack.c.b16 %v3365, %v3364
    %v3904 = vpack.c.b16 %v3367, %v3366
    %v3905 = vpack.c.b16 %v3369, %v3368
    %v3906 = vpack.c.b16 %v3371, %v3370
    %v3907 = vpack.c.b16 %v3373, %v3372
    %v3908 = vpack.c.b16 %v3375, %v3374
    %v3909 = vpack.c.b16 %v3377, %v3376
    %v3910 = vpack.c.b16 %v3379, %v3378
    %v3911 = vpack.c.b16 %v3381, %v3380
    %v3912 = vpack.c.b16 %v3383, %v3382
    %v3913 = vpack.c.b16 %v3385, %v3384
    %v3914 = vpack.c.b16 %v3387, %v3386
    %v3915 = vpack.c.b16 %v3389, %v3388
    %v3916 = vpack.c.b16 %v3391, %v3390
    %v3917 = vpack.c.b16 %v3393, %v3392
    %v3918 = vpack.c.b16 %v3395, %v3394
    %v3919 = vpack.c.b16 %v3397, %v3396
    %v3920 = vpack.c.b16 %v3399, %v3398
    %v3921 = vpack.c.b16 %v3401, %v3400
    %v3922 = vpack.c.b16 %v3403, %v3402
    %v3923 = vpack.c.b16 %v3405, %v3404
    %v3924 = vpack.c.b16 %v3407, %v3406
    %v3925 = vpack.c.b16 %v3409, %v3408
    %v3926 = vpack.c.b16 %v3411, %v3410
    %v3927 = vpack.c.b16 %v3413, %v3412
    %v3928 = vpack.c.b16 %v3415, %v3414
    %v3929 = vpack.c.b16 %v3417, %v3416
    %v3930 = vpack.c.b16 %v3419, %v3418
    %v3931 = vpack.c.b16 %v3421, %v3420
    %v3932 = vpack.c.b16 %v3423, %v3422
    %v3933 = vpack.c.b16 %v3425, %v3424
    %v3934 = vpack.c.b16 %v3427, %v3426
    %v3935 = vpack.c.b16 %v3429, %v3428
    %v3936 = vpack.c.b16 %v3431, %v3430
    %v3937 = vpack.c.b16 %v3433, %v3432
    %v3938 = vpack.c.b16 %v3435, %v3434
    %v3939 = vpack.c.b16 %v3437, %v3436
    %v3940 = vpack.c.b16 %v3439, %v3438
    %v3941 = vpack.c.b16 %v3441, %v3440
    %v3942 = vpack.c.b16 %v3443, %v3442
    %v3943 = vpack.c.b16 %v3445, %v3444
    %v3944 = vpack.c.b16 %v3447, %v3446
    %v3945 = vpack.c.b16 %v3449, %v3448
    %v3946 = vpack.c.b16 %v3451, %v3450
    %v3947 = vpack.c.b16 %v3453, %v3452
    %v3948 = vpack.c.b16 %v3455, %v3454
    %v3949 = vpack.c.b16 %v3457, %v3456
    %v3950 = vpack.c.b16 %v3459, %v3458
    %v3951 = vpack.c.b16 %v3461, %v3460
    %v3952 = vpack.c.b16 %v3463, %v3462
    %v3953 = vpack.c.b16 %v3465, %v3464
    %v3954 = vpack.c.b16 %v3467, %v3466
    %v3955 = vpack.c.b16 %v3469, %v3468
    %v3956 = vpack.c.b16 %v3471, %v3470
    %v3957 = vpack.c.b16 %v3473, %v3472
    %v3958 = vpack.c.b16 %v3475, %v3474
    %v3959 = vpack.c.b16 %v3477, %v3476
    %v3960 = vpack.c.b16 %v3479, %v3478
    %v3961 = vpack.c.b16 %v3481, %v3480
    %v3962 = vpack.c.b16 %v3483, %v3482
    %v3963 = vpack.c.b16 %v3485, %v3484
    %v3964 = vpack.c.b16 %v3487, %v3486
    %v3965 = vpack.c.b16 %v3489, %v3488
    %v3966 = vpack.c.b16 %v3491, %v3490
    %v3967 = vpack.c.b16 %v3493, %v3492
    %v3968 = vpack.c.b16 %v3495, %v3494
    %v3969 = vpack.c.b16 %v3497, %v3496
    %v3970 = vpack.c.b16 %v3499, %v3498
    %v3971 = vpack.c.b16 %v3501, %v3500
    %v3972 = vpack.c.b16 %v3503, %v3502
    %v3973 = vpack.c.b16 %v3505, %v3504
    %v3974 = vpack.c.b16 %v3507, %v3506
    %v3975 = vpack.c.b16 %v3509, %v3508
    %v3976 = vpack.c.b16 %v3511, %v3510
    %v3977 = vpack.c.b16 %v3513, %v3512
    %4442 = vmatpush.bf16.msra.mxu0 %v3521
    %4443 = vmatpush.bf16.msra.mxu0 %v3520
    %4444 = vmatpush.bf16.msra.mxu0 %v3519
    %4445 = vmatpush.bf16.msra.mxu0 %v3518
    %4446 = vmatpush.bf16.msra.mxu0 %v3517
    %4447 = vmatpush.bf16.msra.mxu0 %v3516
    %4448 = vmatpush.bf16.msra.mxu0 %v3515
    %4449 = vmatpush.bf16.msra.mxu0 %v3514
    %4450 = vmatmul.bf16.gmra.mxu0 %v1426
    %v4451 = vpop.f32.mrf.mxu0
    %v4452 = vadd.f32 0.0, %v4451
    %v4453 = vpop.f32.mrf.mxu0
    %v4454 = vadd.f32 0.0, %v4453
    %4455 = vmatmul.bf16.gmra.mxu0 %v1484
    %v4456 = vpop.f32.mrf.mxu0
    %v4457 = vadd.f32 0.0, %v4456
    %v4458 = vpop.f32.mrf.mxu0
    %v4459 = vadd.f32 0.0, %v4458
    %4460 = vdwg.mxu0
    %4461 = vmatpush.bf16.msra.mxu0 %v3529
    %4462 = vmatpush.bf16.msra.mxu0 %v3528
    %4463 = vmatpush.bf16.msra.mxu0 %v3527
    %4464 = vmatpush.bf16.msra.mxu0 %v3526
    %4465 = vmatpush.bf16.msra.mxu0 %v3525
    %4466 = vmatpush.bf16.msra.mxu0 %v3524
    %4467 = vmatpush.bf16.msra.mxu0 %v3523
    %4468 = vmatpush.bf16.msra.mxu0 %v3522
    %4469 = vmatmul.bf16.gmra.mxu0 %v1427
    %v4470 = vpop.f32.mrf.mxu0
    %v4471 = vadd.f32 %v4452, %v4470
    %v4472 = vpop.f32.mrf.mxu0
    %v4473 = vadd.f32 %v4454, %v4472
    %4474 = vmatmul.bf16.gmra.mxu0 %v1485
    %v4475 = vpop.f32.mrf.mxu0
    %v4476 = vadd.f32 %v4457, %v4475
    %v4477 = vpop.f32.mrf.mxu0
    %v4478 = vadd.f32 %v4459, %v4477
    %4479 = vdwg.mxu0
    %4480 = vmatpush.bf16.msra.mxu0 %v3537
    %4481 = vmatpush.bf16.msra.mxu0 %v3536
    %4482 = vmatpush.bf16.msra.mxu0 %v3535
    %4483 = vmatpush.bf16.msra.mxu0 %v3534
    %4484 = vmatpush.bf16.msra.mxu0 %v3533
    %4485 = vmatpush.bf16.msra.mxu0 %v3532
    %4486 = vmatpush.bf16.msra.mxu0 %v3531
    %4487 = vmatpush.bf16.msra.mxu0 %v3530
    %4488 = vmatmul.bf16.gmra.mxu0 %v1428
    %v4489 = vpop.f32.mrf.mxu0
    %v4490 = vadd.f32 %v4471, %v4489
    %v4491 = vpop.f32.mrf.mxu0
    %v4492 = vadd.f32 %v4473, %v4491
    %4493 = vmatmul.bf16.gmra.mxu0 %v1486
    %v4494 = vpop.f32.mrf.mxu0
    %v4495 = vadd.f32 %v4476, %v4494
    %v4496 = vpop.f32.mrf.mxu0
    %v4497 = vadd.f32 %v4478, %v4496
    %4498 = vdwg.mxu0
    %4499 = vmatpush.bf16.msra.mxu0 %v3545
    %4500 = vmatpush.bf16.msra.mxu0 %v3544
    %4501 = vmatpush.bf16.msra.mxu0 %v3543
    %4502 = vmatpush.bf16.msra.mxu0 %v3542
    %4503 = vmatpush.bf16.msra.mxu0 %v3541
    %4504 = vmatpush.bf16.msra.mxu0 %v3540
    %4505 = vmatpush.bf16.msra.mxu0 %v3539
    %4506 = vmatpush.bf16.msra.mxu0 %v3538
    %4507 = vmatmul.bf16.gmra.mxu0 %v1429
    %v4508 = vpop.f32.mrf.mxu0
    %v4509 = vadd.f32 %v4490, %v4508
    %v4510 = vpop.f32.mrf.mxu0
    %v4511 = vadd.f32 %v4492, %v4510
    %4512 = vmatmul.bf16.gmra.mxu0 %v1487
    %v4513 = vpop.f32.mrf.mxu0
    %v4514 = vadd.f32 %v4495, %v4513
    %v4515 = vpop.f32.mrf.mxu0
    %v4516 = vadd.f32 %v4497, %v4515
    %4517 = vdwg.mxu0
    %4518 = vmatpush.bf16.msra.mxu0 %v3553
    %4519 = vmatpush.bf16.msra.mxu0 %v3552
    %4520 = vmatpush.bf16.msra.mxu0 %v3551
    %4521 = vmatpush.bf16.msra.mxu0 %v3550
    %4522 = vmatpush.bf16.msra.mxu0 %v3549
    %4523 = vmatpush.bf16.msra.mxu0 %v3548
    %4524 = vmatpush.bf16.msra.mxu0 %v3547
    %4525 = vmatpush.bf16.msra.mxu0 %v3546
    %4526 = vmatmul.bf16.gmra.mxu0 %v1430
    %v4527 = vpop.f32.mrf.mxu0
    %v4528 = vadd.f32 %v4509, %v4527
    %v4529 = vpop.f32.mrf.mxu0
    %v4530 = vadd.f32 %v4511, %v4529
    %4531 = vmatmul.bf16.gmra.mxu0 %v1488
    %v4532 = vpop.f32.mrf.mxu0
    %v4533 = vadd.f32 %v4514, %v4532
    %v4534 = vpop.f32.mrf.mxu0
    %v4535 = vadd.f32 %v4516, %v4534
    %4536 = vdwg.mxu0
    %4537 = vmatpush.bf16.msra.mxu0 %v3561
    %4538 = vmatpush.bf16.msra.mxu0 %v3560
    %4539 = vmatpush.bf16.msra.mxu0 %v3559
    %4540 = vmatpush.bf16.msra.mxu0 %v3558
    %4541 = vmatpush.bf16.msra.mxu0 %v3557
    %4542 = vmatpush.bf16.msra.mxu0 %v3556
    %4543 = vmatpush.bf16.msra.mxu0 %v3555
    %4544 = vmatpush.bf16.msra.mxu0 %v3554
    %4545 = vmatmul.bf16.gmra.mxu0 %v1431
    %v4546 = vpop.f32.mrf.mxu0
    %v4547 = vadd.f32 %v4528, %v4546
    %v4548 = vpop.f32.mrf.mxu0
    %v4549 = vadd.f32 %v4530, %v4548
    %4550 = vmatmul.bf16.gmra.mxu0 %v1489
    %v4551 = vpop.f32.mrf.mxu0
    %v4552 = vadd.f32 %v4533, %v4551
    %v4553 = vpop.f32.mrf.mxu0
    %v4554 = vadd.f32 %v4535, %v4553
    %4555 = vdwg.mxu0
    %4556 = vmatpush.bf16.msra.mxu0 %v3569
    %4557 = vmatpush.bf16.msra.mxu0 %v3568
    %4558 = vmatpush.bf16.msra.mxu0 %v3567
    %4559 = vmatpush.bf16.msra.mxu0 %v3566
    %4560 = vmatpush.bf16.msra.mxu0 %v3565
    %4561 = vmatpush.bf16.msra.mxu0 %v3564
    %4562 = vmatpush.bf16.msra.mxu0 %v3563
    %4563 = vmatpush.bf16.msra.mxu0 %v3562
    %4564 = vmatmul.bf16.gmra.mxu0 %v1432
    %v4565 = vpop.f32.mrf.mxu0
    %v4566 = vadd.f32 %v4547, %v4565
    %v4567 = vpop.f32.mrf.mxu0
    %v4568 = vadd.f32 %v4549, %v4567
    %4569 = vmatmul.bf16.gmra.mxu0 %v1490
    %v4570 = vpop.f32.mrf.mxu0
    %v4571 = vadd.f32 %v4552, %v4570
    %v4572 = vpop.f32.mrf.mxu0
    %v4573 = vadd.f32 %v4554, %v4572
    %4574 = vdwg.mxu0
    %4575 = vmatpush.bf16.msra.mxu0 %v3577
    %4576 = vmatpush.bf16.msra.mxu0 %v3576
    %4577 = vmatpush.bf16.msra.mxu0 %v3575
    %4578 = vmatpush.bf16.msra.mxu0 %v3574
    %4579 = vmatpush.bf16.msra.mxu0 %v3573
    %4580 = vmatpush.bf16.msra.mxu0 %v3572
    %4581 = vmatpush.bf16.msra.mxu0 %v3571
    %4582 = vmatpush.bf16.msra.mxu0 %v3570
    %4583 = vmatmul.bf16.gmra.mxu0 %v1433
    %v4584 = vpop.f32.mrf.mxu0
    %v4585 = vadd.f32 %v4566, %v4584
    %v4586 = vpop.f32.mrf.mxu0
    %v4587 = vadd.f32 %v4568, %v4586
    %4588 = vmatmul.bf16.gmra.mxu0 %v1491
    %v4589 = vpop.f32.mrf.mxu0
    %v4590 = vadd.f32 %v4571, %v4589
    %v4591 = vpop.f32.mrf.mxu0
    %v4592 = vadd.f32 %v4573, %v4591
    %4593 = vdwg.mxu0
    %4594 = vmatpush.bf16.msra.mxu0 %v3585
    %4595 = vmatpush.bf16.msra.mxu0 %v3584
    %4596 = vmatpush.bf16.msra.mxu0 %v3583
    %4597 = vmatpush.bf16.msra.mxu0 %v3582
    %4598 = vmatpush.bf16.msra.mxu0 %v3581
    %4599 = vmatpush.bf16.msra.mxu0 %v3580
    %4600 = vmatpush.bf16.msra.mxu0 %v3579
    %4601 = vmatpush.bf16.msra.mxu0 %v3578
    %4602 = vmatmul.bf16.gmra.mxu0 %v1434
    %v4603 = vpop.f32.mrf.mxu0
    %v4604 = vadd.f32 %v4585, %v4603
    %v4605 = vpop.f32.mrf.mxu0
    %v4606 = vadd.f32 %v4587, %v4605
    %4607 = vmatmul.bf16.gmra.mxu0 %v1492
    %v4608 = vpop.f32.mrf.mxu0
    %v4609 = vadd.f32 %v4590, %v4608
    %v4610 = vpop.f32.mrf.mxu0
    %v4611 = vadd.f32 %v4592, %v4610
    %4612 = vdwg.mxu0
    %4613 = vmatpush.bf16.msra.mxu0 %v3593
    %4614 = vmatpush.bf16.msra.mxu0 %v3592
    %4615 = vmatpush.bf16.msra.mxu0 %v3591
    %4616 = vmatpush.bf16.msra.mxu0 %v3590
    %4617 = vmatpush.bf16.msra.mxu0 %v3589
    %4618 = vmatpush.bf16.msra.mxu0 %v3588
    %4619 = vmatpush.bf16.msra.mxu0 %v3587
    %4620 = vmatpush.bf16.msra.mxu0 %v3586
    %4621 = vmatmul.bf16.gmra.mxu0 %v1435
    %v4622 = vpop.f32.mrf.mxu0
    %v4623 = vadd.f32 %v4604, %v4622
    %v4624 = vpop.f32.mrf.mxu0
    %v4625 = vadd.f32 %v4606, %v4624
    %4626 = vmatmul.bf16.gmra.mxu0 %v1493
    %v4627 = vpop.f32.mrf.mxu0
    %v4628 = vadd.f32 %v4609, %v4627
    %v4629 = vpop.f32.mrf.mxu0
    %v4630 = vadd.f32 %v4611, %v4629
    %4631 = vdwg.mxu0
    %4632 = vmatpush.bf16.msra.mxu0 %v3601
    %4633 = vmatpush.bf16.msra.mxu0 %v3600
    %4634 = vmatpush.bf16.msra.mxu0 %v3599
    %4635 = vmatpush.bf16.msra.mxu0 %v3598
    %4636 = vmatpush.bf16.msra.mxu0 %v3597
    %4637 = vmatpush.bf16.msra.mxu0 %v3596
    %4638 = vmatpush.bf16.msra.mxu0 %v3595
    %4639 = vmatpush.bf16.msra.mxu0 %v3594
    %4640 = vmatmul.bf16.gmra.mxu0 %v1436
    %v4641 = vpop.f32.mrf.mxu0
    %v4642 = vadd.f32 %v4623, %v4641
    %v4643 = vpop.f32.mrf.mxu0
    %v4644 = vadd.f32 %v4625, %v4643
    %4645 = vmatmul.bf16.gmra.mxu0 %v1494
    %v4646 = vpop.f32.mrf.mxu0
    %v4647 = vadd.f32 %v4628, %v4646
    %v4648 = vpop.f32.mrf.mxu0
    %v4649 = vadd.f32 %v4630, %v4648
    %4650 = vdwg.mxu0
    %4651 = vmatpush.bf16.msra.mxu0 %v3609
    %4652 = vmatpush.bf16.msra.mxu0 %v3608
    %4653 = vmatpush.bf16.msra.mxu0 %v3607
    %4654 = vmatpush.bf16.msra.mxu0 %v3606
    %4655 = vmatpush.bf16.msra.mxu0 %v3605
    %4656 = vmatpush.bf16.msra.mxu0 %v3604
    %4657 = vmatpush.bf16.msra.mxu0 %v3603
    %4658 = vmatpush.bf16.msra.mxu0 %v3602
    %4659 = vmatmul.bf16.gmra.mxu0 %v1437
    %v4660 = vpop.f32.mrf.mxu0
    %v4661 = vadd.f32 %v4642, %v4660
    %v4662 = vpop.f32.mrf.mxu0
    %v4663 = vadd.f32 %v4644, %v4662
    %4664 = vmatmul.bf16.gmra.mxu0 %v1495
    %v4665 = vpop.f32.mrf.mxu0
    %v4666 = vadd.f32 %v4647, %v4665
    %v4667 = vpop.f32.mrf.mxu0
    %v4668 = vadd.f32 %v4649, %v4667
    %4669 = vdwg.mxu0
    %4670 = vmatpush.bf16.msra.mxu0 %v3617
    %4671 = vmatpush.bf16.msra.mxu0 %v3616
    %4672 = vmatpush.bf16.msra.mxu0 %v3615
    %4673 = vmatpush.bf16.msra.mxu0 %v3614
    %4674 = vmatpush.bf16.msra.mxu0 %v3613
    %4675 = vmatpush.bf16.msra.mxu0 %v3612
    %4676 = vmatpush.bf16.msra.mxu0 %v3611
    %4677 = vmatpush.bf16.msra.mxu0 %v3610
    %4678 = vmatmul.bf16.gmra.mxu0 %v1438
    %v4679 = vpop.f32.mrf.mxu0
    %v4680 = vadd.f32 %v4661, %v4679
    %v4681 = vpop.f32.mrf.mxu0
    %v4682 = vadd.f32 %v4663, %v4681
    %4683 = vmatmul.bf16.gmra.mxu0 %v1496
    %v4684 = vpop.f32.mrf.mxu0
    %v4685 = vadd.f32 %v4666, %v4684
    %v4686 = vpop.f32.mrf.mxu0
    %v4687 = vadd.f32 %v4668, %v4686
    %4688 = vdwg.mxu0
    %4689 = vmatpush.bf16.msra.mxu0 %v3625
    %4690 = vmatpush.bf16.msra.mxu0 %v3624
    %4691 = vmatpush.bf16.msra.mxu0 %v3623
    %4692 = vmatpush.bf16.msra.mxu0 %v3622
    %4693 = vmatpush.bf16.msra.mxu0 %v3621
    %4694 = vmatpush.bf16.msra.mxu0 %v3620
    %4695 = vmatpush.bf16.msra.mxu0 %v3619
    %4696 = vmatpush.bf16.msra.mxu0 %v3618
    %4697 = vmatmul.bf16.gmra.mxu0 %v1439
    %v4698 = vpop.f32.mrf.mxu0
    %v4699 = vadd.f32 %v4680, %v4698
    %v4700 = vpop.f32.mrf.mxu0
    %v4701 = vadd.f32 %v4682, %v4700
    %4702 = vmatmul.bf16.gmra.mxu0 %v1497
    %v4703 = vpop.f32.mrf.mxu0
    %v4704 = vadd.f32 %v4685, %v4703
    %v4705 = vpop.f32.mrf.mxu0
    %v4706 = vadd.f32 %v4687, %v4705
    %4707 = vdwg.mxu0
    %4708 = vmatpush.bf16.msra.mxu0 %v3633
    %4709 = vmatpush.bf16.msra.mxu0 %v3632
    %4710 = vmatpush.bf16.msra.mxu0 %v3631
    %4711 = vmatpush.bf16.msra.mxu0 %v3630
    %4712 = vmatpush.bf16.msra.mxu0 %v3629
    %4713 = vmatpush.bf16.msra.mxu0 %v3628
    %4714 = vmatpush.bf16.msra.mxu0 %v3627
    %4715 = vmatpush.bf16.msra.mxu0 %v3626
    %4716 = vmatmul.bf16.gmra.mxu0 %v1440
    %v4717 = vpop.f32.mrf.mxu0
    %v4718 = vadd.f32 %v4699, %v4717
    %v4719 = vpop.f32.mrf.mxu0
    %v4720 = vadd.f32 %v4701, %v4719
    %4721 = vmatmul.bf16.gmra.mxu0 %v1498
    %v4722 = vpop.f32.mrf.mxu0
    %v4723 = vadd.f32 %v4704, %v4722
    %v4724 = vpop.f32.mrf.mxu0
    %v4725 = vadd.f32 %v4706, %v4724
    %4726 = vdwg.mxu0
    %4727 = vmatpush.bf16.msra.mxu0 %v3641
    %4728 = vmatpush.bf16.msra.mxu0 %v3640
    %4729 = vmatpush.bf16.msra.mxu0 %v3639
    %4730 = vmatpush.bf16.msra.mxu0 %v3638
    %4731 = vmatpush.bf16.msra.mxu0 %v3637
    %4732 = vmatpush.bf16.msra.mxu0 %v3636
    %4733 = vmatpush.bf16.msra.mxu0 %v3635
    %4734 = vmatpush.bf16.msra.mxu0 %v3634
    %4735 = vmatmul.bf16.gmra.mxu0 %v1441
    %v4736 = vpop.f32.mrf.mxu0
    %v4737 = vadd.f32 %v4718, %v4736
    %v4738 = vpop.f32.mrf.mxu0
    %v4739 = vadd.f32 %v4720, %v4738
    %4740 = vmatmul.bf16.gmra.mxu0 %v1499
    %v4741 = vpop.f32.mrf.mxu0
    %v4742 = vadd.f32 %v4723, %v4741
    %v4743 = vpop.f32.mrf.mxu0
    %v4744 = vadd.f32 %v4725, %v4743
    %4745 = vdwg.mxu0
    %4746 = vmatpush.bf16.msra.mxu0 %v3649
    %4747 = vmatpush.bf16.msra.mxu0 %v3648
    %4748 = vmatpush.bf16.msra.mxu0 %v3647
    %4749 = vmatpush.bf16.msra.mxu0 %v3646
    %4750 = vmatpush.bf16.msra.mxu0 %v3645
    %4751 = vmatpush.bf16.msra.mxu0 %v3644
    %4752 = vmatpush.bf16.msra.mxu0 %v3643
    %4753 = vmatpush.bf16.msra.mxu0 %v3642
    %4754 = vmatmul.bf16.gmra.mxu0 %v1442
    %v4755 = vpop.f32.mrf.mxu0
    %v4756 = vadd.f32 %v4737, %v4755
    %v4757 = vpop.f32.mrf.mxu0
    %v4758 = vadd.f32 %v4739, %v4757
    %4759 = vmatmul.bf16.gmra.mxu0 %v1500
    %v4760 = vpop.f32.mrf.mxu0
    %v4761 = vadd.f32 %v4742, %v4760
    %v4762 = vpop.f32.mrf.mxu0
    %v4763 = vadd.f32 %v4744, %v4762
    %4764 = vdwg.mxu0
    %4765 = vmatpush.bf16.msra.mxu0 %v3657
    %4766 = vmatpush.bf16.msra.mxu0 %v3656
    %4767 = vmatpush.bf16.msra.mxu0 %v3655
    %4768 = vmatpush.bf16.msra.mxu0 %v3654
    %4769 = vmatpush.bf16.msra.mxu0 %v3653
    %4770 = vmatpush.bf16.msra.mxu0 %v3652
    %4771 = vmatpush.bf16.msra.mxu0 %v3651
    %4772 = vmatpush.bf16.msra.mxu0 %v3650
    %4773 = vmatmul.bf16.gmra.mxu0 %v1443
    %v4774 = vpop.f32.mrf.mxu0
    %v4775 = vadd.f32 %v4756, %v4774
    %v4776 = vpop.f32.mrf.mxu0
    %v4777 = vadd.f32 %v4758, %v4776
    %4778 = vmatmul.bf16.gmra.mxu0 %v1501
    %v4779 = vpop.f32.mrf.mxu0
    %v4780 = vadd.f32 %v4761, %v4779
    %v4781 = vpop.f32.mrf.mxu0
    %v4782 = vadd.f32 %v4763, %v4781
    %4783 = vdwg.mxu0
    %4784 = vmatpush.bf16.msra.mxu0 %v3665
    %4785 = vmatpush.bf16.msra.mxu0 %v3664
    %4786 = vmatpush.bf16.msra.mxu0 %v3663
    %4787 = vmatpush.bf16.msra.mxu0 %v3662
    %4788 = vmatpush.bf16.msra.mxu0 %v3661
    %4789 = vmatpush.bf16.msra.mxu0 %v3660
    %4790 = vmatpush.bf16.msra.mxu0 %v3659
    %4791 = vmatpush.bf16.msra.mxu0 %v3658
    %4792 = vmatmul.bf16.gmra.mxu0 %v1444
    %v4793 = vpop.f32.mrf.mxu0
    %v4794 = vadd.f32 %v4775, %v4793
    %v4795 = vpop.f32.mrf.mxu0
    %v4796 = vadd.f32 %v4777, %v4795
    %4797 = vmatmul.bf16.gmra.mxu0 %v1502
    %v4798 = vpop.f32.mrf.mxu0
    %v4799 = vadd.f32 %v4780, %v4798
    %v4800 = vpop.f32.mrf.mxu0
    %v4801 = vadd.f32 %v4782, %v4800
    %4802 = vdwg.mxu0
    %4803 = vmatpush.bf16.msra.mxu0 %v3673
    %4804 = vmatpush.bf16.msra.mxu0 %v3672
    %4805 = vmatpush.bf16.msra.mxu0 %v3671
    %4806 = vmatpush.bf16.msra.mxu0 %v3670
    %4807 = vmatpush.bf16.msra.mxu0 %v3669
    %4808 = vmatpush.bf16.msra.mxu0 %v3668
    %4809 = vmatpush.bf16.msra.mxu0 %v3667
    %4810 = vmatpush.bf16.msra.mxu0 %v3666
    %4811 = vmatmul.bf16.gmra.mxu0 %v1445
    %v4812 = vpop.f32.mrf.mxu0
    %v4813 = vadd.f32 %v4794, %v4812
    %v4814 = vpop.f32.mrf.mxu0
    %v4815 = vadd.f32 %v4796, %v4814
    %4816 = vmatmul.bf16.gmra.mxu0 %v1503
    %v4817 = vpop.f32.mrf.mxu0
    %v4818 = vadd.f32 %v4799, %v4817
    %v4819 = vpop.f32.mrf.mxu0
    %v4820 = vadd.f32 %v4801, %v4819
    %4821 = vdwg.mxu0
    %4822 = vmatpush.bf16.msra.mxu0 %v3681
    %4823 = vmatpush.bf16.msra.mxu0 %v3680
    %4824 = vmatpush.bf16.msra.mxu0 %v3679
    %4825 = vmatpush.bf16.msra.mxu0 %v3678
    %4826 = vmatpush.bf16.msra.mxu0 %v3677
    %4827 = vmatpush.bf16.msra.mxu0 %v3676
    %4828 = vmatpush.bf16.msra.mxu0 %v3675
    %4829 = vmatpush.bf16.msra.mxu0 %v3674
    %4830 = vmatmul.bf16.gmra.mxu0 %v1446
    %v4831 = vpop.f32.mrf.mxu0
    %v4832 = vadd.f32 %v4813, %v4831
    %v4833 = vpop.f32.mrf.mxu0
    %v4834 = vadd.f32 %v4815, %v4833
    %4835 = vmatmul.bf16.gmra.mxu0 %v1504
    %v4836 = vpop.f32.mrf.mxu0
    %v4837 = vadd.f32 %v4818, %v4836
    %v4838 = vpop.f32.mrf.mxu0
    %v4839 = vadd.f32 %v4820, %v4838
    %4840 = vdwg.mxu0
    %4841 = vmatpush.bf16.msra.mxu0 %v3689
    %4842 = vmatpush.bf16.msra.mxu0 %v3688
    %4843 = vmatpush.bf16.msra.mxu0 %v3687
    %4844 = vmatpush.bf16.msra.mxu0 %v3686
    %4845 = vmatpush.bf16.msra.mxu0 %v3685
    %4846 = vmatpush.bf16.msra.mxu0 %v3684
    %4847 = vmatpush.bf16.msra.mxu0 %v3683
    %4848 = vmatpush.bf16.msra.mxu0 %v3682
    %4849 = vmatmul.bf16.gmra.mxu0 %v1447
    %v4850 = vpop.f32.mrf.mxu0
    %v4851 = vadd.f32 %v4832, %v4850
    %v4852 = vpop.f32.mrf.mxu0
    %v4853 = vadd.f32 %v4834, %v4852
    %4854 = vmatmul.bf16.gmra.mxu0 %v1505
    %v4855 = vpop.f32.mrf.mxu0
    %v4856 = vadd.f32 %v4837, %v4855
    %v4857 = vpop.f32.mrf.mxu0
    %v4858 = vadd.f32 %v4839, %v4857
    %4859 = vdwg.mxu0
    %4860 = vmatpush.bf16.msra.mxu0 %v3697
    %4861 = vmatpush.bf16.msra.mxu0 %v3696
    %4862 = vmatpush.bf16.msra.mxu0 %v3695
    %4863 = vmatpush.bf16.msra.mxu0 %v3694
    %4864 = vmatpush.bf16.msra.mxu0 %v3693
    %4865 = vmatpush.bf16.msra.mxu0 %v3692
    %4866 = vmatpush.bf16.msra.mxu0 %v3691
    %4867 = vmatpush.bf16.msra.mxu0 %v3690
    %4868 = vmatmul.bf16.gmra.mxu0 %v1448
    %v4869 = vpop.f32.mrf.mxu0
    %v4870 = vadd.f32 %v4851, %v4869
    %v4871 = vpop.f32.mrf.mxu0
    %v4872 = vadd.f32 %v4853, %v4871
    %4873 = vmatmul.bf16.gmra.mxu0 %v1506
    %v4874 = vpop.f32.mrf.mxu0
    %v4875 = vadd.f32 %v4856, %v4874
    %v4876 = vpop.f32.mrf.mxu0
    %v4877 = vadd.f32 %v4858, %v4876
    %4878 = vdwg.mxu0
    %4879 = vmatpush.bf16.msra.mxu0 %v3705
    %4880 = vmatpush.bf16.msra.mxu0 %v3704
    %4881 = vmatpush.bf16.msra.mxu0 %v3703
    %4882 = vmatpush.bf16.msra.mxu0 %v3702
    %4883 = vmatpush.bf16.msra.mxu0 %v3701
    %4884 = vmatpush.bf16.msra.mxu0 %v3700
    %4885 = vmatpush.bf16.msra.mxu0 %v3699
    %4886 = vmatpush.bf16.msra.mxu0 %v3698
    %4887 = vmatmul.bf16.gmra.mxu0 %v1449
    %v4888 = vpop.f32.mrf.mxu0
    %v4889 = vadd.f32 %v4870, %v4888
    %v4890 = vpop.f32.mrf.mxu0
    %v4891 = vadd.f32 %v4872, %v4890
    %4892 = vmatmul.bf16.gmra.mxu0 %v1507
    %v4893 = vpop.f32.mrf.mxu0
    %v4894 = vadd.f32 %v4875, %v4893
    %v4895 = vpop.f32.mrf.mxu0
    %v4896 = vadd.f32 %v4877, %v4895
    %4897 = vdwg.mxu0
    %4898 = vmatpush.bf16.msra.mxu0 %v3713
    %4899 = vmatpush.bf16.msra.mxu0 %v3712
    %4900 = vmatpush.bf16.msra.mxu0 %v3711
    %4901 = vmatpush.bf16.msra.mxu0 %v3710
    %4902 = vmatpush.bf16.msra.mxu0 %v3709
    %4903 = vmatpush.bf16.msra.mxu0 %v3708
    %4904 = vmatpush.bf16.msra.mxu0 %v3707
    %4905 = vmatpush.bf16.msra.mxu0 %v3706
    %4906 = vmatmul.bf16.gmra.mxu0 %v1450
    %v4907 = vpop.f32.mrf.mxu0
    %v4908 = vadd.f32 %v4889, %v4907
    %v4909 = vpop.f32.mrf.mxu0
    %v4910 = vadd.f32 %v4891, %v4909
    %4911 = vmatmul.bf16.gmra.mxu0 %v1508
    %v4912 = vpop.f32.mrf.mxu0
    %v4913 = vadd.f32 %v4894, %v4912
    %v4914 = vpop.f32.mrf.mxu0
    %v4915 = vadd.f32 %v4896, %v4914
    %4916 = vdwg.mxu0
    %4917 = vmatpush.bf16.msra.mxu0 %v3721
    %4918 = vmatpush.bf16.msra.mxu0 %v3720
    %4919 = vmatpush.bf16.msra.mxu0 %v3719
    %4920 = vmatpush.bf16.msra.mxu0 %v3718
    %4921 = vmatpush.bf16.msra.mxu0 %v3717
    %4922 = vmatpush.bf16.msra.mxu0 %v3716
    %4923 = vmatpush.bf16.msra.mxu0 %v3715
    %4924 = vmatpush.bf16.msra.mxu0 %v3714
    %4925 = vmatmul.bf16.gmra.mxu0 %v1451
    %v4926 = vpop.f32.mrf.mxu0
    %v4927 = vadd.f32 %v4908, %v4926
    %v4928 = vpop.f32.mrf.mxu0
    %v4929 = vadd.f32 %v4910, %v4928
    %4930 = vmatmul.bf16.gmra.mxu0 %v1509
    %v4931 = vpop.f32.mrf.mxu0
    %v4932 = vadd.f32 %v4913, %v4931
    %v4933 = vpop.f32.mrf.mxu0
    %v4934 = vadd.f32 %v4915, %v4933
    %4935 = vdwg.mxu0
    %4936 = vmatpush.bf16.msra.mxu0 %v3729
    %4937 = vmatpush.bf16.msra.mxu0 %v3728
    %4938 = vmatpush.bf16.msra.mxu0 %v3727
    %4939 = vmatpush.bf16.msra.mxu0 %v3726
    %4940 = vmatpush.bf16.msra.mxu0 %v3725
    %4941 = vmatpush.bf16.msra.mxu0 %v3724
    %4942 = vmatpush.bf16.msra.mxu0 %v3723
    %4943 = vmatpush.bf16.msra.mxu0 %v3722
    %4944 = vmatmul.bf16.gmra.mxu0 %v1452
    %v4945 = vpop.f32.mrf.mxu0
    %v4946 = vadd.f32 %v4927, %v4945
    %v4947 = vpop.f32.mrf.mxu0
    %v4948 = vadd.f32 %v4929, %v4947
    %4949 = vmatmul.bf16.gmra.mxu0 %v1510
    %v4950 = vpop.f32.mrf.mxu0
    %v4951 = vadd.f32 %v4932, %v4950
    %v4952 = vpop.f32.mrf.mxu0
    %v4953 = vadd.f32 %v4934, %v4952
    %4954 = vdwg.mxu0
    %4955 = vmatpush.bf16.msra.mxu0 %v3737
    %4956 = vmatpush.bf16.msra.mxu0 %v3736
    %4957 = vmatpush.bf16.msra.mxu0 %v3735
    %4958 = vmatpush.bf16.msra.mxu0 %v3734
    %4959 = vmatpush.bf16.msra.mxu0 %v3733
    %4960 = vmatpush.bf16.msra.mxu0 %v3732
    %4961 = vmatpush.bf16.msra.mxu0 %v3731
    %4962 = vmatpush.bf16.msra.mxu0 %v3730
    %4963 = vmatmul.bf16.gmra.mxu0 %v1453
    %v4964 = vpop.f32.mrf.mxu0
    %v4965 = vadd.f32 %v4946, %v4964
    %v4966 = vpop.f32.mrf.mxu0
    %v4967 = vadd.f32 %v4948, %v4966
    %4968 = vmatmul.bf16.gmra.mxu0 %v1511
    %v4969 = vpop.f32.mrf.mxu0
    %v4970 = vadd.f32 %v4951, %v4969
    %v4971 = vpop.f32.mrf.mxu0
    %v4972 = vadd.f32 %v4953, %v4971
    %4973 = vdwg.mxu0
    %4974 = vmatpush.bf16.msra.mxu0 %v3745
    %4975 = vmatpush.bf16.msra.mxu0 %v3744
    %4976 = vmatpush.bf16.msra.mxu0 %v3743
    %4977 = vmatpush.bf16.msra.mxu0 %v3742
    %4978 = vmatpush.bf16.msra.mxu0 %v3741
    %4979 = vmatpush.bf16.msra.mxu0 %v3740
    %4980 = vmatpush.bf16.msra.mxu0 %v3739
    %4981 = vmatpush.bf16.msra.mxu0 %v3738
    %4982 = vmatmul.bf16.gmra.mxu0 %v1454
    %v4983 = vpop.f32.mrf.mxu0
    %v4984 = vadd.f32 %v4965, %v4983
    %v4985 = vpop.f32.mrf.mxu0
    %v4986 = vadd.f32 %v4967, %v4985
    %4987 = vmatmul.bf16.gmra.mxu0 %v1512
    %v4988 = vpop.f32.mrf.mxu0
    %v4989 = vadd.f32 %v4970, %v4988
    %v4990 = vpop.f32.mrf.mxu0
    %v4991 = vadd.f32 %v4972, %v4990
    %4992 = vdwg.mxu0
    %4993 = vmatpush.bf16.msra.mxu0 %v3753
    %4994 = vmatpush.bf16.msra.mxu0 %v3752
    %4995 = vmatpush.bf16.msra.mxu0 %v3751
    %4996 = vmatpush.bf16.msra.mxu0 %v3750
    %4997 = vmatpush.bf16.msra.mxu0 %v3749
    %4998 = vmatpush.bf16.msra.mxu0 %v3748
    %4999 = vmatpush.bf16.msra.mxu0 %v3747
    %5000 = vmatpush.bf16.msra.mxu0 %v3746
    %5001 = vmatmul.bf16.gmra.mxu0 %v1455
    %v5002 = vpop.f32.mrf.mxu0
    %v5003 = vadd.f32 %v4984, %v5002
    %v5004 = vpop.f32.mrf.mxu0
    %v5005 = vadd.f32 %v4986, %v5004
    %5006 = vmatmul.bf16.gmra.mxu0 %v1513
    %v5007 = vpop.f32.mrf.mxu0
    %v5008 = vadd.f32 %v4989, %v5007
    %v5009 = vpop.f32.mrf.mxu0
    %v5010 = vadd.f32 %v4991, %v5009
    %5011 = vdwg.mxu0
    %5012 = vmatpush.bf16.msra.mxu0 %v3761
    %5013 = vmatpush.bf16.msra.mxu0 %v3760
    %5014 = vmatpush.bf16.msra.mxu0 %v3759
    %5015 = vmatpush.bf16.msra.mxu0 %v3758
    %5016 = vmatpush.bf16.msra.mxu0 %v3757
    %5017 = vmatpush.bf16.msra.mxu0 %v3756
    %5018 = vmatpush.bf16.msra.mxu0 %v3755
    %5019 = vmatpush.bf16.msra.mxu0 %v3754
    %5020 = vmatmul.bf16.gmra.mxu0 %v1456
    %v5021 = vpop.f32.mrf.mxu0
    %v5022 = vadd.f32 %v5003, %v5021
    %v5023 = vpop.f32.mrf.mxu0
    %v5024 = vadd.f32 %v5005, %v5023
    %5025 = vmatmul.bf16.gmra.mxu0 %v1514
    %v5026 = vpop.f32.mrf.mxu0
    %v5027 = vadd.f32 %v5008, %v5026
    %v5028 = vpop.f32.mrf.mxu0
    %v5029 = vadd.f32 %v5010, %v5028
    %5030 = vdwg.mxu0
    %5031 = vmatpush.bf16.msra.mxu0 %v3769
    %5032 = vmatpush.bf16.msra.mxu0 %v3768
    %5033 = vmatpush.bf16.msra.mxu0 %v3767
    %5034 = vmatpush.bf16.msra.mxu0 %v3766
    %5035 = vmatpush.bf16.msra.mxu0 %v3765
    %5036 = vmatpush.bf16.msra.mxu0 %v3764
    %5037 = vmatpush.bf16.msra.mxu0 %v3763
    %5038 = vmatpush.bf16.msra.mxu0 %v3762
    %5039 = vmatmul.bf16.gmra.mxu0 %v1457
    %v5040 = vpop.f32.mrf.mxu0
    %v5041 = vadd.f32 %v5022, %v5040
    %v5042 = vpop.f32.mrf.mxu0
    %v5043 = vadd.f32 %v5024, %v5042
    %5044 = vmatmul.bf16.gmra.mxu0 %v1515
    %v5045 = vpop.f32.mrf.mxu0
    %v5046 = vadd.f32 %v5027, %v5045
    %v5047 = vpop.f32.mrf.mxu0
    %v5048 = vadd.f32 %v5029, %v5047
    %5049 = vdwg.mxu0
    %5050 = vmatpush.bf16.msra.mxu0 %v3777
    %5051 = vmatpush.bf16.msra.mxu0 %v3776
    %5052 = vmatpush.bf16.msra.mxu0 %v3775
    %5053 = vmatpush.bf16.msra.mxu0 %v3774
    %5054 = vmatpush.bf16.msra.mxu0 %v3773
    %5055 = vmatpush.bf16.msra.mxu0 %v3772
    %5056 = vmatpush.bf16.msra.mxu0 %v3771
    %5057 = vmatpush.bf16.msra.mxu0 %v3770
    %5058 = vmatmul.bf16.gmra.mxu0 %v1458
    %v5059 = vpop.f32.mrf.mxu0
    %v5060 = vadd.f32 %v5041, %v5059
    %v5061 = vpop.f32.mrf.mxu0
    %v5062 = vadd.f32 %v5043, %v5061
    %5063 = vmatmul.bf16.gmra.mxu0 %v1516
    %v5064 = vpop.f32.mrf.mxu0
    %v5065 = vadd.f32 %v5046, %v5064
    %v5066 = vpop.f32.mrf.mxu0
    %v5067 = vadd.f32 %v5048, %v5066
    %5068 = vdwg.mxu0
    %5069 = vmatpush.bf16.msra.mxu0 %v3785
    %5070 = vmatpush.bf16.msra.mxu0 %v3784
    %5071 = vmatpush.bf16.msra.mxu0 %v3783
    %5072 = vmatpush.bf16.msra.mxu0 %v3782
    %5073 = vmatpush.bf16.msra.mxu0 %v3781
    %5074 = vmatpush.bf16.msra.mxu0 %v3780
    %5075 = vmatpush.bf16.msra.mxu0 %v3779
    %5076 = vmatpush.bf16.msra.mxu0 %v3778
    %5077 = vmatmul.bf16.gmra.mxu0 %v1459
    %v5078 = vpop.f32.mrf.mxu0
    %v5079 = vadd.f32 %v5060, %v5078
    %v5080 = vpop.f32.mrf.mxu0
    %v5081 = vadd.f32 %v5062, %v5080
    %5082 = vmatmul.bf16.gmra.mxu0 %v1517
    %v5083 = vpop.f32.mrf.mxu0
    %v5084 = vadd.f32 %v5065, %v5083
    %v5085 = vpop.f32.mrf.mxu0
    %v5086 = vadd.f32 %v5067, %v5085
    %5087 = vdwg.mxu0
    %5088 = vmatpush.bf16.msra.mxu0 %v3793
    %5089 = vmatpush.bf16.msra.mxu0 %v3792
    %5090 = vmatpush.bf16.msra.mxu0 %v3791
    %5091 = vmatpush.bf16.msra.mxu0 %v3790
    %5092 = vmatpush.bf16.msra.mxu0 %v3789
    %5093 = vmatpush.bf16.msra.mxu0 %v3788
    %5094 = vmatpush.bf16.msra.mxu0 %v3787
    %5095 = vmatpush.bf16.msra.mxu0 %v3786
    %5096 = vmatmul.bf16.gmra.mxu0 %v1460
    %v5097 = vpop.f32.mrf.mxu0
    %v5098 = vadd.f32 %v5079, %v5097
    %v5099 = vpop.f32.mrf.mxu0
    %v5100 = vadd.f32 %v5081, %v5099
    %5101 = vmatmul.bf16.gmra.mxu0 %v1518
    %v5102 = vpop.f32.mrf.mxu0
    %v5103 = vadd.f32 %v5084, %v5102
    %v5104 = vpop.f32.mrf.mxu0
    %v5105 = vadd.f32 %v5086, %v5104
    %5106 = vdwg.mxu0
    %5107 = vmatpush.bf16.msra.mxu0 %v3801
    %5108 = vmatpush.bf16.msra.mxu0 %v3800
    %5109 = vmatpush.bf16.msra.mxu0 %v3799
    %5110 = vmatpush.bf16.msra.mxu0 %v3798
    %5111 = vmatpush.bf16.msra.mxu0 %v3797
    %5112 = vmatpush.bf16.msra.mxu0 %v3796
    %5113 = vmatpush.bf16.msra.mxu0 %v3795
    %5114 = vmatpush.bf16.msra.mxu0 %v3794
    %5115 = vmatmul.bf16.gmra.mxu0 %v1461
    %v5116 = vpop.f32.mrf.mxu0
    %v5117 = vadd.f32 %v5098, %v5116
    %v5118 = vpop.f32.mrf.mxu0
    %v5119 = vadd.f32 %v5100, %v5118
    %5120 = vmatmul.bf16.gmra.mxu0 %v1519
    %v5121 = vpop.f32.mrf.mxu0
    %v5122 = vadd.f32 %v5103, %v5121
    %v5123 = vpop.f32.mrf.mxu0
    %v5124 = vadd.f32 %v5105, %v5123
    %5125 = vdwg.mxu0
    %5126 = vmatpush.bf16.msra.mxu0 %v3809
    %5127 = vmatpush.bf16.msra.mxu0 %v3808
    %5128 = vmatpush.bf16.msra.mxu0 %v3807
    %5129 = vmatpush.bf16.msra.mxu0 %v3806
    %5130 = vmatpush.bf16.msra.mxu0 %v3805
    %5131 = vmatpush.bf16.msra.mxu0 %v3804
    %5132 = vmatpush.bf16.msra.mxu0 %v3803
    %5133 = vmatpush.bf16.msra.mxu0 %v3802
    %5134 = vmatmul.bf16.gmra.mxu0 %v1462
    %v5135 = vpop.f32.mrf.mxu0
    %v5136 = vadd.f32 %v5117, %v5135
    %v5137 = vpop.f32.mrf.mxu0
    %v5138 = vadd.f32 %v5119, %v5137
    %5139 = vmatmul.bf16.gmra.mxu0 %v1520
    %v5140 = vpop.f32.mrf.mxu0
    %v5141 = vadd.f32 %v5122, %v5140
    %v5142 = vpop.f32.mrf.mxu0
    %v5143 = vadd.f32 %v5124, %v5142
    %5144 = vdwg.mxu0
    %5145 = vmatpush.bf16.msra.mxu0 %v3817
    %5146 = vmatpush.bf16.msra.mxu0 %v3816
    %5147 = vmatpush.bf16.msra.mxu0 %v3815
    %5148 = vmatpush.bf16.msra.mxu0 %v3814
    %5149 = vmatpush.bf16.msra.mxu0 %v3813
    %5150 = vmatpush.bf16.msra.mxu0 %v3812
    %5151 = vmatpush.bf16.msra.mxu0 %v3811
    %5152 = vmatpush.bf16.msra.mxu0 %v3810
    %5153 = vmatmul.bf16.gmra.mxu0 %v1463
    %v5154 = vpop.f32.mrf.mxu0
    %v5155 = vadd.f32 %v5136, %v5154
    %v5156 = vpop.f32.mrf.mxu0
    %v5157 = vadd.f32 %v5138, %v5156
    %5158 = vmatmul.bf16.gmra.mxu0 %v1521
    %v5159 = vpop.f32.mrf.mxu0
    %v5160 = vadd.f32 %v5141, %v5159
    %v5161 = vpop.f32.mrf.mxu0
    %v5162 = vadd.f32 %v5143, %v5161
    %5163 = vdwg.mxu0
    %5164 = vmatpush.bf16.msra.mxu0 %v3825
    %5165 = vmatpush.bf16.msra.mxu0 %v3824
    %5166 = vmatpush.bf16.msra.mxu0 %v3823
    %5167 = vmatpush.bf16.msra.mxu0 %v3822
    %5168 = vmatpush.bf16.msra.mxu0 %v3821
    %5169 = vmatpush.bf16.msra.mxu0 %v3820
    %5170 = vmatpush.bf16.msra.mxu0 %v3819
    %5171 = vmatpush.bf16.msra.mxu0 %v3818
    %5172 = vmatmul.bf16.gmra.mxu0 %v1464
    %v5173 = vpop.f32.mrf.mxu0
    %v5174 = vadd.f32 %v5155, %v5173
    %v5175 = vpop.f32.mrf.mxu0
    %v5176 = vadd.f32 %v5157, %v5175
    %5177 = vmatmul.bf16.gmra.mxu0 %v1522
    %v5178 = vpop.f32.mrf.mxu0
    %v5179 = vadd.f32 %v5160, %v5178
    %v5180 = vpop.f32.mrf.mxu0
    %v5181 = vadd.f32 %v5162, %v5180
    %5182 = vdwg.mxu0
    %5183 = vmatpush.bf16.msra.mxu0 %v3833
    %5184 = vmatpush.bf16.msra.mxu0 %v3832
    %5185 = vmatpush.bf16.msra.mxu0 %v3831
    %5186 = vmatpush.bf16.msra.mxu0 %v3830
    %5187 = vmatpush.bf16.msra.mxu0 %v3829
    %5188 = vmatpush.bf16.msra.mxu0 %v3828
    %5189 = vmatpush.bf16.msra.mxu0 %v3827
    %5190 = vmatpush.bf16.msra.mxu0 %v3826
    %5191 = vmatmul.bf16.gmra.mxu0 %v1465
    %v5192 = vpop.f32.mrf.mxu0
    %v5193 = vadd.f32 %v5174, %v5192
    %v5194 = vpop.f32.mrf.mxu0
    %v5195 = vadd.f32 %v5176, %v5194
    %5196 = vmatmul.bf16.gmra.mxu0 %v1523
    %v5197 = vpop.f32.mrf.mxu0
    %v5198 = vadd.f32 %v5179, %v5197
    %v5199 = vpop.f32.mrf.mxu0
    %v5200 = vadd.f32 %v5181, %v5199
    %5201 = vdwg.mxu0
    %5202 = vmatpush.bf16.msra.mxu0 %v3841
    %5203 = vmatpush.bf16.msra.mxu0 %v3840
    %5204 = vmatpush.bf16.msra.mxu0 %v3839
    %5205 = vmatpush.bf16.msra.mxu0 %v3838
    %5206 = vmatpush.bf16.msra.mxu0 %v3837
    %5207 = vmatpush.bf16.msra.mxu0 %v3836
    %5208 = vmatpush.bf16.msra.mxu0 %v3835
    %5209 = vmatpush.bf16.msra.mxu0 %v3834
    %5210 = vmatmul.bf16.gmra.mxu0 %v1466
    %v5211 = vpop.f32.mrf.mxu0
    %v5212 = vadd.f32 %v5193, %v5211
    %v5213 = vpop.f32.mrf.mxu0
    %v5214 = vadd.f32 %v5195, %v5213
    %5215 = vmatmul.bf16.gmra.mxu0 %v1524
    %v5216 = vpop.f32.mrf.mxu0
    %v5217 = vadd.f32 %v5198, %v5216
    %v5218 = vpop.f32.mrf.mxu0
    %v5219 = vadd.f32 %v5200, %v5218
    %5220 = vdwg.mxu0
    %5221 = vmatpush.bf16.msra.mxu0 %v3849
    %5222 = vmatpush.bf16.msra.mxu0 %v3848
    %5223 = vmatpush.bf16.msra.mxu0 %v3847
    %5224 = vmatpush.bf16.msra.mxu0 %v3846
    %5225 = vmatpush.bf16.msra.mxu0 %v3845
    %5226 = vmatpush.bf16.msra.mxu0 %v3844
    %5227 = vmatpush.bf16.msra.mxu0 %v3843
    %5228 = vmatpush.bf16.msra.mxu0 %v3842
    %5229 = vmatmul.bf16.gmra.mxu0 %v1467
    %v5230 = vpop.f32.mrf.mxu0
    %v5231 = vadd.f32 %v5212, %v5230
    %v5232 = vpop.f32.mrf.mxu0
    %v5233 = vadd.f32 %v5214, %v5232
    %5234 = vmatmul.bf16.gmra.mxu0 %v1525
    %v5235 = vpop.f32.mrf.mxu0
    %v5236 = vadd.f32 %v5217, %v5235
    %v5237 = vpop.f32.mrf.mxu0
    %v5238 = vadd.f32 %v5219, %v5237
    %5239 = vdwg.mxu0
    %5240 = vmatpush.bf16.msra.mxu0 %v3857
    %5241 = vmatpush.bf16.msra.mxu0 %v3856
    %5242 = vmatpush.bf16.msra.mxu0 %v3855
    %5243 = vmatpush.bf16.msra.mxu0 %v3854
    %5244 = vmatpush.bf16.msra.mxu0 %v3853
    %5245 = vmatpush.bf16.msra.mxu0 %v3852
    %5246 = vmatpush.bf16.msra.mxu0 %v3851
    %5247 = vmatpush.bf16.msra.mxu0 %v3850
    %5248 = vmatmul.bf16.gmra.mxu0 %v1468
    %v5249 = vpop.f32.mrf.mxu0
    %v5250 = vadd.f32 %v5231, %v5249
    %v5251 = vpop.f32.mrf.mxu0
    %v5252 = vadd.f32 %v5233, %v5251
    %5253 = vmatmul.bf16.gmra.mxu0 %v1526
    %v5254 = vpop.f32.mrf.mxu0
    %v5255 = vadd.f32 %v5236, %v5254
    %v5256 = vpop.f32.mrf.mxu0
    %v5257 = vadd.f32 %v5238, %v5256
    %5258 = vdwg.mxu0
    %5259 = vmatpush.bf16.msra.mxu0 %v3865
    %5260 = vmatpush.bf16.msra.mxu0 %v3864
    %5261 = vmatpush.bf16.msra.mxu0 %v3863
    %5262 = vmatpush.bf16.msra.mxu0 %v3862
    %5263 = vmatpush.bf16.msra.mxu0 %v3861
    %5264 = vmatpush.bf16.msra.mxu0 %v3860
    %5265 = vmatpush.bf16.msra.mxu0 %v3859
    %5266 = vmatpush.bf16.msra.mxu0 %v3858
    %5267 = vmatmul.bf16.gmra.mxu0 %v1469
    %v5268 = vpop.f32.mrf.mxu0
    %v5269 = vadd.f32 %v5250, %v5268
    %v5270 = vpop.f32.mrf.mxu0
    %v5271 = vadd.f32 %v5252, %v5270
    %5272 = vmatmul.bf16.gmra.mxu0 %v1527
    %v5273 = vpop.f32.mrf.mxu0
    %v5274 = vadd.f32 %v5255, %v5273
    %v5275 = vpop.f32.mrf.mxu0
    %v5276 = vadd.f32 %v5257, %v5275
    %5277 = vdwg.mxu0
    %5278 = vmatpush.bf16.msra.mxu0 %v3873
    %5279 = vmatpush.bf16.msra.mxu0 %v3872
    %5280 = vmatpush.bf16.msra.mxu0 %v3871
    %5281 = vmatpush.bf16.msra.mxu0 %v3870
    %5282 = vmatpush.bf16.msra.mxu0 %v3869
    %5283 = vmatpush.bf16.msra.mxu0 %v3868
    %5284 = vmatpush.bf16.msra.mxu0 %v3867
    %5285 = vmatpush.bf16.msra.mxu0 %v3866
    %5286 = vmatmul.bf16.gmra.mxu0 %v1470
    %v5287 = vpop.f32.mrf.mxu0
    %v5288 = vadd.f32 %v5269, %v5287
    %v5289 = vpop.f32.mrf.mxu0
    %v5290 = vadd.f32 %v5271, %v5289
    %5291 = vmatmul.bf16.gmra.mxu0 %v1528
    %v5292 = vpop.f32.mrf.mxu0
    %v5293 = vadd.f32 %v5274, %v5292
    %v5294 = vpop.f32.mrf.mxu0
    %v5295 = vadd.f32 %v5276, %v5294
    %5296 = vdwg.mxu0
    %5297 = vmatpush.bf16.msra.mxu0 %v3881
    %5298 = vmatpush.bf16.msra.mxu0 %v3880
    %5299 = vmatpush.bf16.msra.mxu0 %v3879
    %5300 = vmatpush.bf16.msra.mxu0 %v3878
    %5301 = vmatpush.bf16.msra.mxu0 %v3877
    %5302 = vmatpush.bf16.msra.mxu0 %v3876
    %5303 = vmatpush.bf16.msra.mxu0 %v3875
    %5304 = vmatpush.bf16.msra.mxu0 %v3874
    %5305 = vmatmul.bf16.gmra.mxu0 %v1471
    %v5306 = vpop.f32.mrf.mxu0
    %v5307 = vadd.f32 %v5288, %v5306
    %v5308 = vpop.f32.mrf.mxu0
    %v5309 = vadd.f32 %v5290, %v5308
    %5310 = vmatmul.bf16.gmra.mxu0 %v1529
    %v5311 = vpop.f32.mrf.mxu0
    %v5312 = vadd.f32 %v5293, %v5311
    %v5313 = vpop.f32.mrf.mxu0
    %v5314 = vadd.f32 %v5295, %v5313
    %5315 = vdwg.mxu0
    %5316 = vmatpush.bf16.msra.mxu0 %v3889
    %5317 = vmatpush.bf16.msra.mxu0 %v3888
    %5318 = vmatpush.bf16.msra.mxu0 %v3887
    %5319 = vmatpush.bf16.msra.mxu0 %v3886
    %5320 = vmatpush.bf16.msra.mxu0 %v3885
    %5321 = vmatpush.bf16.msra.mxu0 %v3884
    %5322 = vmatpush.bf16.msra.mxu0 %v3883
    %5323 = vmatpush.bf16.msra.mxu0 %v3882
    %5324 = vmatmul.bf16.gmra.mxu0 %v1472
    %v5325 = vpop.f32.mrf.mxu0
    %v5326 = vadd.f32 %v5307, %v5325
    %v5327 = vpop.f32.mrf.mxu0
    %v5328 = vadd.f32 %v5309, %v5327
    %5329 = vmatmul.bf16.gmra.mxu0 %v1530
    %v5330 = vpop.f32.mrf.mxu0
    %v5331 = vadd.f32 %v5312, %v5330
    %v5332 = vpop.f32.mrf.mxu0
    %v5333 = vadd.f32 %v5314, %v5332
    %5334 = vdwg.mxu0
    %5335 = vmatpush.bf16.msra.mxu0 %v3897
    %5336 = vmatpush.bf16.msra.mxu0 %v3896
    %5337 = vmatpush.bf16.msra.mxu0 %v3895
    %5338 = vmatpush.bf16.msra.mxu0 %v3894
    %5339 = vmatpush.bf16.msra.mxu0 %v3893
    %5340 = vmatpush.bf16.msra.mxu0 %v3892
    %5341 = vmatpush.bf16.msra.mxu0 %v3891
    %5342 = vmatpush.bf16.msra.mxu0 %v3890
    %5343 = vmatmul.bf16.gmra.mxu0 %v1473
    %v5344 = vpop.f32.mrf.mxu0
    %v5345 = vadd.f32 %v5326, %v5344
    %v5346 = vpop.f32.mrf.mxu0
    %v5347 = vadd.f32 %v5328, %v5346
    %5348 = vmatmul.bf16.gmra.mxu0 %v1531
    %v5349 = vpop.f32.mrf.mxu0
    %v5350 = vadd.f32 %v5331, %v5349
    %v5351 = vpop.f32.mrf.mxu0
    %v5352 = vadd.f32 %v5333, %v5351
    %5353 = vdwg.mxu0
    %5354 = vmatpush.bf16.msra.mxu0 %v3905
    %5355 = vmatpush.bf16.msra.mxu0 %v3904
    %5356 = vmatpush.bf16.msra.mxu0 %v3903
    %5357 = vmatpush.bf16.msra.mxu0 %v3902
    %5358 = vmatpush.bf16.msra.mxu0 %v3901
    %5359 = vmatpush.bf16.msra.mxu0 %v3900
    %5360 = vmatpush.bf16.msra.mxu0 %v3899
    %5361 = vmatpush.bf16.msra.mxu0 %v3898
    %5362 = vmatmul.bf16.gmra.mxu0 %v1474
    %v5363 = vpop.f32.mrf.mxu0
    %v5364 = vadd.f32 %v5345, %v5363
    %v5365 = vpop.f32.mrf.mxu0
    %v5366 = vadd.f32 %v5347, %v5365
    %5367 = vmatmul.bf16.gmra.mxu0 %v1532
    %v5368 = vpop.f32.mrf.mxu0
    %v5369 = vadd.f32 %v5350, %v5368
    %v5370 = vpop.f32.mrf.mxu0
    %v5371 = vadd.f32 %v5352, %v5370
    %5372 = vdwg.mxu0
    %5373 = vmatpush.bf16.msra.mxu0 %v3913
    %5374 = vmatpush.bf16.msra.mxu0 %v3912
    %5375 = vmatpush.bf16.msra.mxu0 %v3911
    %5376 = vmatpush.bf16.msra.mxu0 %v3910
    %5377 = vmatpush.bf16.msra.mxu0 %v3909
    %5378 = vmatpush.bf16.msra.mxu0 %v3908
    %5379 = vmatpush.bf16.msra.mxu0 %v3907
    %5380 = vmatpush.bf16.msra.mxu0 %v3906
    %5381 = vmatmul.bf16.gmra.mxu0 %v1475
    %v5382 = vpop.f32.mrf.mxu0
    %v5383 = vadd.f32 %v5364, %v5382
    %v5384 = vpop.f32.mrf.mxu0
    %v5385 = vadd.f32 %v5366, %v5384
    %5386 = vmatmul.bf16.gmra.mxu0 %v1533
    %v5387 = vpop.f32.mrf.mxu0
    %v5388 = vadd.f32 %v5369, %v5387
    %v5389 = vpop.f32.mrf.mxu0
    %v5390 = vadd.f32 %v5371, %v5389
    %5391 = vdwg.mxu0
    %5392 = vmatpush.bf16.msra.mxu0 %v3921
    %5393 = vmatpush.bf16.msra.mxu0 %v3920
    %5394 = vmatpush.bf16.msra.mxu0 %v3919
    %5395 = vmatpush.bf16.msra.mxu0 %v3918
    %5396 = vmatpush.bf16.msra.mxu0 %v3917
    %5397 = vmatpush.bf16.msra.mxu0 %v3916
    %5398 = vmatpush.bf16.msra.mxu0 %v3915
    %5399 = vmatpush.bf16.msra.mxu0 %v3914
    %5400 = vmatmul.bf16.gmra.mxu0 %v1476
    %v5401 = vpop.f32.mrf.mxu0
    %v5402 = vadd.f32 %v5383, %v5401
    %v5403 = vpop.f32.mrf.mxu0
    %v5404 = vadd.f32 %v5385, %v5403
    %5405 = vmatmul.bf16.gmra.mxu0 %v1534
    %v5406 = vpop.f32.mrf.mxu0
    %v5407 = vadd.f32 %v5388, %v5406
    %v5408 = vpop.f32.mrf.mxu0
    %v5409 = vadd.f32 %v5390, %v5408
    %5410 = vdwg.mxu0
    %5411 = vmatpush.bf16.msra.mxu0 %v3929
    %5412 = vmatpush.bf16.msra.mxu0 %v3928
    %5413 = vmatpush.bf16.msra.mxu0 %v3927
    %5414 = vmatpush.bf16.msra.mxu0 %v3926
    %5415 = vmatpush.bf16.msra.mxu0 %v3925
    %5416 = vmatpush.bf16.msra.mxu0 %v3924
    %5417 = vmatpush.bf16.msra.mxu0 %v3923
    %5418 = vmatpush.bf16.msra.mxu0 %v3922
    %5419 = vmatmul.bf16.gmra.mxu0 %v1477
    %v5420 = vpop.f32.mrf.mxu0
    %v5421 = vadd.f32 %v5402, %v5420
    %v5422 = vpop.f32.mrf.mxu0
    %v5423 = vadd.f32 %v5404, %v5422
    %5424 = vmatmul.bf16.gmra.mxu0 %v1535
    %v5425 = vpop.f32.mrf.mxu0
    %v5426 = vadd.f32 %v5407, %v5425
    %v5427 = vpop.f32.mrf.mxu0
    %v5428 = vadd.f32 %v5409, %v5427
    %5429 = vdwg.mxu0
    %5430 = vmatpush.bf16.msra.mxu0 %v3937
    %5431 = vmatpush.bf16.msra.mxu0 %v3936
    %5432 = vmatpush.bf16.msra.mxu0 %v3935
    %5433 = vmatpush.bf16.msra.mxu0 %v3934
    %5434 = vmatpush.bf16.msra.mxu0 %v3933
    %5435 = vmatpush.bf16.msra.mxu0 %v3932
    %5436 = vmatpush.bf16.msra.mxu0 %v3931
    %5437 = vmatpush.bf16.msra.mxu0 %v3930
    %5438 = vmatmul.bf16.gmra.mxu0 %v1478
    %v5439 = vpop.f32.mrf.mxu0
    %v5440 = vadd.f32 %v5421, %v5439
    %v5441 = vpop.f32.mrf.mxu0
    %v5442 = vadd.f32 %v5423, %v5441
    %5443 = vmatmul.bf16.gmra.mxu0 %v1536
    %v5444 = vpop.f32.mrf.mxu0
    %v5445 = vadd.f32 %v5426, %v5444
    %v5446 = vpop.f32.mrf.mxu0
    %v5447 = vadd.f32 %v5428, %v5446
    %5448 = vdwg.mxu0
    %5449 = vmatpush.bf16.msra.mxu0 %v3945
    %5450 = vmatpush.bf16.msra.mxu0 %v3944
    %5451 = vmatpush.bf16.msra.mxu0 %v3943
    %5452 = vmatpush.bf16.msra.mxu0 %v3942
    %5453 = vmatpush.bf16.msra.mxu0 %v3941
    %5454 = vmatpush.bf16.msra.mxu0 %v3940
    %5455 = vmatpush.bf16.msra.mxu0 %v3939
    %5456 = vmatpush.bf16.msra.mxu0 %v3938
    %5457 = vmatmul.bf16.gmra.mxu0 %v1479
    %v5458 = vpop.f32.mrf.mxu0
    %v5459 = vadd.f32 %v5440, %v5458
    %v5460 = vpop.f32.mrf.mxu0
    %v5461 = vadd.f32 %v5442, %v5460
    %5462 = vmatmul.bf16.gmra.mxu0 %v1537
    %v5463 = vpop.f32.mrf.mxu0
    %v5464 = vadd.f32 %v5445, %v5463
    %v5465 = vpop.f32.mrf.mxu0
    %v5466 = vadd.f32 %v5447, %v5465
    %5467 = vdwg.mxu0
    %5468 = vmatpush.bf16.msra.mxu0 %v3953
    %5469 = vmatpush.bf16.msra.mxu0 %v3952
    %5470 = vmatpush.bf16.msra.mxu0 %v3951
    %5471 = vmatpush.bf16.msra.mxu0 %v3950
    %5472 = vmatpush.bf16.msra.mxu0 %v3949
    %5473 = vmatpush.bf16.msra.mxu0 %v3948
    %5474 = vmatpush.bf16.msra.mxu0 %v3947
    %5475 = vmatpush.bf16.msra.mxu0 %v3946
    %5476 = vmatmul.bf16.gmra.mxu0 %v1480
    %v5477 = vpop.f32.mrf.mxu0
    %v5478 = vadd.f32 %v5459, %v5477
    %v5479 = vpop.f32.mrf.mxu0
    %v5480 = vadd.f32 %v5461, %v5479
    %5481 = vmatmul.bf16.gmra.mxu0 %v1538
    %v5482 = vpop.f32.mrf.mxu0
    %v5483 = vadd.f32 %v5464, %v5482
    %v5484 = vpop.f32.mrf.mxu0
    %v5485 = vadd.f32 %v5466, %v5484
    %5486 = vdwg.mxu0
    %5487 = vmatpush.bf16.msra.mxu0 %v3961
    %5488 = vmatpush.bf16.msra.mxu0 %v3960
    %5489 = vmatpush.bf16.msra.mxu0 %v3959
    %5490 = vmatpush.bf16.msra.mxu0 %v3958
    %5491 = vmatpush.bf16.msra.mxu0 %v3957
    %5492 = vmatpush.bf16.msra.mxu0 %v3956
    %5493 = vmatpush.bf16.msra.mxu0 %v3955
    %5494 = vmatpush.bf16.msra.mxu0 %v3954
    %5495 = vmatmul.bf16.gmra.mxu0 %v1481
    %v5496 = vpop.f32.mrf.mxu0
    %v5497 = vadd.f32 %v5478, %v5496
    %v5498 = vpop.f32.mrf.mxu0
    %v5499 = vadd.f32 %v5480, %v5498
    %5500 = vmatmul.bf16.gmra.mxu0 %v1539
    %v5501 = vpop.f32.mrf.mxu0
    %v5502 = vadd.f32 %v5483, %v5501
    %v5503 = vpop.f32.mrf.mxu0
    %v5504 = vadd.f32 %v5485, %v5503
    %5505 = vdwg.mxu0
    %5506 = vmatpush.bf16.msra.mxu0 %v3969
    %5507 = vmatpush.bf16.msra.mxu0 %v3968
    %5508 = vmatpush.bf16.msra.mxu0 %v3967
    %5509 = vmatpush.bf16.msra.mxu0 %v3966
    %5510 = vmatpush.bf16.msra.mxu0 %v3965
    %5511 = vmatpush.bf16.msra.mxu0 %v3964
    %5512 = vmatpush.bf16.msra.mxu0 %v3963
    %5513 = vmatpush.bf16.msra.mxu0 %v3962
    %5514 = vmatmul.bf16.gmra.mxu0 %v1482
    %v5515 = vpop.f32.mrf.mxu0
    %v5516 = vadd.f32 %v5497, %v5515
    %v5517 = vpop.f32.mrf.mxu0
    %v5518 = vadd.f32 %v5499, %v5517
    %5519 = vmatmul.bf16.gmra.mxu0 %v1540
    %v5520 = vpop.f32.mrf.mxu0
    %v5521 = vadd.f32 %v5502, %v5520
    %v5522 = vpop.f32.mrf.mxu0
    %v5523 = vadd.f32 %v5504, %v5522
    %5524 = vdwg.mxu0
    %5525 = vmatpush.bf16.msra.mxu0 %v3977
    %5526 = vmatpush.bf16.msra.mxu0 %v3976
    %5527 = vmatpush.bf16.msra.mxu0 %v3975
    %5528 = vmatpush.bf16.msra.mxu0 %v3974
    %5529 = vmatpush.bf16.msra.mxu0 %v3973
    %5530 = vmatpush.bf16.msra.mxu0 %v3972
    %5531 = vmatpush.bf16.msra.mxu0 %v3971
    %5532 = vmatpush.bf16.msra.mxu0 %v3970
    %5533 = vmatmul.bf16.gmra.mxu0 %v1483
    %v5534 = vpop.f32.mrf.mxu0
    %v5535 = vadd.f32 %v5516, %v5534
    %v5536 = vpop.f32.mrf.mxu0
    %v5537 = vadd.f32 %v5518, %v5536
    %5538 = vmatmul.bf16.gmra.mxu0 %v1541
    %v5539 = vpop.f32.mrf.mxu0
    %v5540 = vadd.f32 %v5521, %v5539
    %v5541 = vpop.f32.mrf.mxu0
    %v5542 = vadd.f32 %v5523, %v5541
    %5543 = vdwg.mxu0
    %v5544 = vld [vmem:[%s4] sm:$0x1]
    %v5546 = vperm.slane %v5544, 0
    %v5548 = vmul.f32 %v5535, %v5546
    %v5549 = vmul.f32 %v5537, %v5546
    %v5550 = vmul.f32 %v5540, %v5546
    %v5551 = vmul.f32 %v5542, %v5546
    %v5552 = vld [vmem:[%s5] sm:$0x1]
    %v5554 = vperm.slane %v5552, 0
    %v5556 = vadd.f32 %v5548, %v5554
    %v5557 = vadd.f32 %v5549, %v5554
    %v5558 = vadd.f32 %v5550, %v5554
    %v5559 = vadd.f32 %v5551, %v5554
    %v5560 = vmax.f32 %v5556, 0.0
    %v5561 = vmax.f32 %v5557, 0.0
    %v5562 = vmax.f32 %v5558, 0.0
    %v5563 = vmax.f32 %v5559, 0.0
    %v5564 = vmin.f32 %v5560, 20.0
    %v5565 = vmin.f32 %v5561, 20.0
    %v5566 = vmin.f32 %v5562, 20.0
    %v5567 = vmin.f32 %v5563, 20.0
    %v5568 = vld [vmem:[%s1] sm:$0xf]
    %v5569 = vld [vmem:[%s1 + $0x4] sm:$0xf]
    %v5570 = vld [vmem:[%s1 + $0x8] sm:$0xf]
    %v5571 = vld [vmem:[%s1 + $0xc] sm:$0xf]
    %v5572 = vld [vmem:[%s6] sm:$0xf]
    %v5573 = vld [vmem:[%s6 + $0x4] sm:$0xf]
    %v5574 = vld [vmem:[%s6 + $0x8] sm:$0xf]
    %v5575 = vld [vmem:[%s6 + $0xc] sm:$0xf]
    %v5580 = vunpack.c.l.b16 %v5568
    %v5581 = vunpack.c.l.b16 %v5569
    %v5582 = vunpack.c.l.b16 %v5570
    %v5583 = vunpack.c.l.b16 %v5571
    %v5584 = vpack.c.b16 %v5581, %v5580
    %v5585 = vpack.c.b16 %v5583, %v5582
    %v5590 = vunpack.c.l.b16 %v5572
    %v5591 = vunpack.c.l.b16 %v5573
    %v5592 = vunpack.c.l.b16 %v5574
    %v5593 = vunpack.c.l.b16 %v5575
    %v5594 = vpack.c.b16 %v5591, %v5590
    %v5595 = vpack.c.b16 %v5593, %v5592
    %vm5598 = vcmask 261120
    %v5600 = vsel %vm5598, %v5584, 0
    %v5603 = vsel %vm5598, %v5585, 0
    %5605 = vmatpush.bf16.msra.mxu0 0
    %5606 = vmatpush.bf16.msra.mxu0 0
    %5607 = vmatpush.bf16.msra.mxu0 0
    %5608 = vmatpush.bf16.msra.mxu0 0
    %5609 = vmatpush.bf16.msra.mxu0 0
    %5610 = vmatpush.bf16.msra.mxu0 0
    %5611 = vmatpush.bf16.msra.mxu0 %v5595
    %5612 = vmatpush.bf16.msra.mxu0 %v5594
    %5613 = vmatmul.bf16.gmra.mxu0 %v5600
    %v5614 = vpop.f32.mrf.mxu0
    %v5615 = vadd.f32 0.0, %v5614
    %v5616 = vpop.f32.mrf.mxu0
    %v5617 = vadd.f32 0.0, %v5616
    %5618 = vmatmul.bf16.gmra.mxu0 %v5603
    %v5619 = vpop.f32.mrf.mxu0
    %v5620 = vadd.f32 0.0, %v5619
    %v5621 = vpop.f32.mrf.mxu0
    %v5622 = vadd.f32 0.0, %v5621
    %5623 = vdwg.mxu0
    %v5624 = vld [vmem:[%s7] sm:$0x1]
    %v5626 = vperm.slane %v5624, 0
    %v5628 = vmul.f32 %v5615, %v5626
    %v5629 = vmul.f32 %v5617, %v5626
    %v5630 = vmul.f32 %v5620, %v5626
    %v5631 = vmul.f32 %v5622, %v5626
    %v5632 = vld [vmem:[%s8] sm:$0x1]
    %v5634 = vperm.slane %v5632, 0
    %v5636 = vadd.f32 %v5628, %v5634
    %v5637 = vadd.f32 %v5629, %v5634
    %v5638 = vadd.f32 %v5630, %v5634
    %v5639 = vadd.f32 %v5631, %v5634
    %v5640 = vmax.f32 %v5636, 0.0
    %v5641 = vmax.f32 %v5637, 0.0
    %v5642 = vmax.f32 %v5638, 0.0
    %v5643 = vmax.f32 %v5639, 0.0
    %v5644 = vmin.f32 %v5640, 20.0
    %v5645 = vmin.f32 %v5641, 20.0
    %v5646 = vmin.f32 %v5642, 20.0
    %v5647 = vmin.f32 %v5643, 20.0
    %v5648 = vadd.f32 %v5564, %v5644
    %v5649 = vadd.f32 %v5565, %v5645
    %v5650 = vadd.f32 %v5566, %v5646
    %v5651 = vadd.f32 %v5567, %v5647
    %v5652 = vld [vmem:[%s2] sm:$0xff]
    %v5653 = vld [vmem:[%s2 + $0x8] sm:$0xff]
    %v5654 = vld [vmem:[%s2 + $0x10] sm:$0xff]
    %v5655 = vld [vmem:[%s2 + $0x18] sm:$0xff]
    %5657 = vset.pattern.permute.xlu0 0
    %5658 = vperm.xlu0 %5657, %v5652
    %v5659 = vpop.permute.xlu0 %5658
    %5662 = vset.pattern.permute.xlu0 0
    %5663 = vperm.xlu0 %5662, %v5653
    %v5664 = vpop.permute.xlu0 %5663
    %5667 = vset.pattern.permute.xlu0 0
    %5668 = vperm.xlu0 %5667, %v5654
    %v5669 = vpop.permute.xlu0 %5668
    %5672 = vset.pattern.permute.xlu0 0
    %5673 = vperm.xlu0 %5672, %v5655
    %v5674 = vpop.permute.xlu0 %5673
    %v5676 = vmul.f32 %v5648, %v5659
    %v5677 = vmul.f32 %v5649, %v5664
    %v5678 = vmul.f32 %v5650, %v5669
    %v5679 = vmul.f32 %v5651, %v5674
    %5680 = vst [vmem:[#allocation2] sm:$0xff] %v5676
    %5681 = vst [vmem:[#allocation2 + $0x8] sm:$0xff] %v5677
    %5682 = vst [vmem:[#allocation2 + $0x10] sm:$0xff] %v5678
    %5683 = vst [vmem:[#allocation2 + $0x18] sm:$0xff] %v5679
    // Predicated region
    $region38: #{skip_one_step3_forward.5} parent=1 // pred_check
      _
    $region39: #{skip_one_step3_forward.5} parent=1 // pred_check_branch
      %5685 = sbr.rel (0) target = $region41
    $region40: #{skip_one_step3_forward.5} parent=1 // pred_region
      %5687 = vsyncadd [#allocation3], 0
      %s5688 = sshll.u32 [#allocation2], 4
      %s5689 = int_to_ptr.vmem [resolvable:$true] %s5688
      %s5690 = sshll.u32 %s9, 4
      %s5691 = int_to_ptr.hbm [resolvable:$true] %s5690
      %5696 = dma.vmem_to_hbm [thread:$0]  %s5689, 512, %s5691, [#allocation3], 128, 128, 8
    $region41: #{skip_one_step3_forward.5} parent=1 // pred_fallthru
      _
    // Predicated region
    $region42: #{skip_one_step3_forward.5} parent=1 // pred_check
      _
    $region43: #{skip_one_step3_forward.5} parent=1 // pred_check_branch
      %5698 = sbr.rel (0) target = $region45
    $region44: #{skip_one_step3_forward.5} parent=1 // pred_region
      %5700 = dma.done [#allocation3], 512
    $region45: #{skip_one_step3_forward.5} parent=1 // pred_fallthru
      _
    %5701 = vsyncpa [#allocation3], 1

</llo_original>
